<compile_context>
chip_gen: v6e
topology: v6e:2x2x1
jax: 0.10.0
libtpu: 0.0.40
codegen_flags: <defaults>
</compile_context>

<pallas_src>
import math
import functools

import jax
import jax.numpy as jnp
from jax.experimental import pallas as pl
from jax.experimental.pallas import tpu as pltpu


LANE = 128   # channel lane padding (Cin/Cout/classes all padded to 128)
TAPS = 9     # 3x3 conv taps folded into K


# ------------------------------ fused kernel ------------------------------

def _vgg_fused_kernel(x_ref, w_ref, b_ref, fcw_ref, fcb_ref, o_ref, *scratch, plan):
    """Entire eb_arch VGG forward for one image (one grid step), VMEM-resident.

    x_ref  : (1, H0*W0, 128) bf16  -- input image, channels lane-padded
    w_ref  : (L, 9*128, 128) bf16  -- per-layer conv weights, taps folded into K
    b_ref  : (L, 1, 128)     f32
    fcw_ref: (128, 128)      bf16  -- classifier weight (feat-dim x classes, padded)
    fcb_ref: (1, 128)        f32
    o_ref  : (1, 1, 128)     f32
    scratch: [pad_0 .. pad_{L-1}] bf16 padded-activation buffers (one per layer),
             col_ref (M_max, 9*128) bf16 im2col buffer,
             act_ref (M_max, 128)  f32 post-bias/ReLU buffer.

    plan   : static tuple of (H, W, pool) per conv layer.
    """
    n_layers = len(plan)
    pads = scratch[:n_layers]
    col_ref = scratch[n_layers]
    act_ref = scratch[n_layers + 1]
    C = LANE

    # ---- in-kernel zero padding: borders stay zero, interiors rewritten below.
    for p in pads:
        p[...] = jnp.zeros_like(p)

    # ---- network input -> interior of the first padded buffer.
    H0, W0, _ = plan[0]
    Wp0 = W0 + 2
    for h in range(H0):
        pads[0][pl.ds((h + 1) * Wp0 + 1, W0), :] = x_ref[0, pl.ds(h * W0, W0), :]

    feat = None
    for l, (H, W, pool) in enumerate(plan):
        Wp = W + 2
        M = H * Wp                      # conv output rows (incl. 2 junk cols/row)
        is_last = l == n_layers - 1

        # ---- im2col: fold the 9 taps into K. Tap (dy,dx) of output row r sits
        #      at padded flat row r + dy*Wp + dx (junk columns never read later).
        for dy in range(3):
            for dx in range(3):
                t = dy * 3 + dx
                col_ref[pl.ds(0, M), pl.ds(t * C, C)] = \
                    pads[l][pl.ds(dy * Wp + dx, M), :]

        # ---- one long-K MXU dot (K = 9*128), f32 accumulation, bias + ReLU.
        acc = jnp.dot(col_ref[pl.ds(0, M), :], w_ref[l],
                      preferred_element_type=jnp.float32)
        acc = jnp.maximum(acc + b_ref[l], 0.0)
        act_ref[pl.ds(0, M), :] = acc

        if not is_last:
            WpN = plan[l + 1][1] + 2    # next layer's padded width
            if pool:
                # fused 2x2 / stride-2 maxpool, written straight into the next
                # layer's padded-buffer interior.
                Ho, Wo = H // 2, W // 2
                for h2 in range(Ho):
                    r0 = 2 * h2 * Wp
                    t00 = act_ref[pl.ds(r0,          Wo, 2), :]
                    t01 = act_ref[pl.ds(r0 + 1,      Wo, 2), :]
                    t10 = act_ref[pl.ds(r0 + Wp,     Wo, 2), :]
                    t11 = act_ref[pl.ds(r0 + Wp + 1, Wo, 2), :]
                    m = jnp.maximum(jnp.maximum(t00, t01), jnp.maximum(t10, t11))
                    pads[l + 1][pl.ds((h2 + 1) * WpN + 1, Wo), :] = \
                        m.astype(pads[l + 1].dtype)
            else:
                for h in range(H):
                    pads[l + 1][pl.ds((h + 1) * WpN + 1, W), :] = \
                        act_ref[pl.ds(h * Wp, W), :].astype(pads[l + 1].dtype)
        else:
            # Final conv is 2x2 / no pool (asserted in wrapper): AvgPool2d(2)
            # -> 1x1 == mean of the 4 real pixels at rows {0, 1, Wp, Wp+1}.
            feat = (act_ref[pl.ds(0, 1), :] + act_ref[pl.ds(1, 1), :]
                    + act_ref[pl.ds(Wp, 1), :] + act_ref[pl.ds(Wp + 1, 1), :]) * 0.25

    # ---- flatten + Linear (classes lane-padded to 128, sliced in the wrapper).
    logits = jnp.dot(feat.astype(jnp.bfloat16), fcw_ref[...],
                     preferred_element_type=jnp.float32) + fcb_ref[...]
    o_ref[0] = logits


# ------------------------------- VGG model --------------------------------

class VGGPallas:
    """eb_arch (custom_cfg) path of the PyTorch VGG module, one fused Pallas kernel."""

    def __init__(self, cfg, in_channels=3, num_classes=10,
                 key=jax.random.PRNGKey(0)):
        self.cfg = list(cfg)
        self.num_classes = num_classes
        conv_cfg = [v for v in self.cfg if v != "M"]
        assert in_channels <= LANE and num_classes <= LANE
        assert all(v <= LANE for v in conv_cfg), \
            "TODO(synk): channel counts > 128 need Cin/Cout tiling"

        # --- f32 parameters with the PyTorch initialisation (reference truth) ---
        self.conv_params = []
        c = in_channels
        for v in conv_cfg:
            key, k = jax.random.split(key)
            # kaiming_normal_(mode='fan_out', nonlinearity='relu'), bias = 0
            std = math.sqrt(2.0 / (v * 9))
            w = jax.random.normal(k, (3, 3, c, v), jnp.float32) * std
            self.conv_params.append((w, jnp.zeros((v,), jnp.float32)))
            c = v
        key, k = jax.random.split(key)
        # nn.Linear: normal(0, 0.01) weight, zero bias
        self.fc_w = jax.random.normal(k, (self.cfg[-1], num_classes), jnp.float32) * 0.01
        self.fc_b = jnp.zeros((num_classes,), jnp.float32)

        # --- kernel-side params: bf16, channels zero-padded to 128 lanes, taps
        #     folded into K, all conv layers stacked into one (L, 1152, 128) slab.
        wk_list, bk_list = [], []
        for (w, b) in self.conv_params:
            _, _, cin, cout = w.shape
            wk = jnp.zeros((3, 3, LANE, LANE), jnp.float32).at[:, :, :cin, :cout].set(w)
            wk_list.append(wk.reshape(TAPS * LANE, LANE).astype(jnp.bfloat16))
            bk_list.append(jnp.zeros((1, LANE), jnp.float32).at[0, :cout].set(b))
        self.kw = jnp.stack(wk_list)           # (L, 1152, 128) bf16
        self.kb = jnp.stack(bk_list)           # (L, 1, 128)    f32

        # classifier: lane-pad both the feature dim and the class dim to 128.
        self.kfc_w = (jnp.zeros((LANE, LANE), jnp.float32)
                      .at[:self.cfg[-1], :num_classes].set(self.fc_w)
                      .astype(jnp.bfloat16))
        self.kfc_b = jnp.zeros((1, LANE), jnp.float32).at[0, :num_classes].set(self.fc_b)

    def _layer_plan(self, H, W):
        plan, h, w, i = [], H, W, 0
        while i < len(self.cfg):
            v = self.cfg[i]
            assert v != "M", "'M' must follow a conv layer in custom_cfg"
            pool = i + 1 < len(self.cfg) and self.cfg[i + 1] == "M"
            plan.append((h, w, pool))
            if pool:
                assert h % 2 == 0 and w % 2 == 0
                h, w = h // 2, w // 2
                i += 2
            else:
                i += 1
        # eb_arch classifier: AvgPool2d(2) -> 1x1, flatten dim == cfg[-1]
        assert (h, w) == (2, 2) and not plan[-1][2], \
            "TODO(synk): only a pool-free 2x2 final conv layer is supported"
        return tuple(plan)

    def __call__(self, x_nchw):
        B, Cin, H, W = x_nchw.shape
        plan = self._layer_plan(H, W)
        L = len(plan)

        # One tiny wrapper-side prep of the *network input* only (16x16x3):
        # NCHW -> NHWC, channels lane-padded to 128, bf16, spatial flattened.
        x = jnp.transpose(x_nchw, (0, 2, 3, 1))
        x = jnp.pad(x, ((0, 0), (0, 0), (0, 0), (0, LANE - Cin))).astype(jnp.bfloat16)
        x = x.reshape(B, H * W, LANE)

        m_max = max(h * (w + 2) for (h, w, _) in plan)
        scratch = [pltpu.VMEM(((h + 3) * (w + 2), LANE), jnp.bfloat16)
                   for (h, w, _) in plan]
        scratch += [pltpu.VMEM((m_max, TAPS * LANE), jnp.bfloat16),   # im2col
                    pltpu.VMEM((m_max, LANE), jnp.float32)]           # post-ReLU

        out = pl.pallas_call(
            functools.partial(_vgg_fused_kernel, plan=plan),
            out_shape=jax.ShapeDtypeStruct((B, 1, LANE), jnp.float32),
            grid=(B,),
            in_specs=[
                pl.BlockSpec((1, H * W, LANE), lambda i: (i, 0, 0)),
                pl.BlockSpec((L, TAPS * LANE, LANE), lambda i: (0, 0, 0)),
                pl.BlockSpec((L, 1, LANE), lambda i: (0, 0, 0)),
                pl.BlockSpec((LANE, LANE), lambda i: (0, 0)),
                pl.BlockSpec((1, LANE), lambda i: (0, 0)),
            ],
            out_specs=pl.BlockSpec((1, 1, LANE), lambda i: (i, 0, 0)),
            scratch_shapes=scratch,
            compiler_params=pltpu.CompilerParams(
                dimension_semantics=("parallel",)),   # B>=2 steps -> both v7x TCs busy
        )(x, self.kw, self.kb, self.kfc_w, self.kfc_b)

        return out.reshape(B, LANE)[:, :self.num_classes]


# ---------------------------- pure-JAX reference ---------------------------

def reference_forward(model, x_nchw):
    x = jnp.transpose(x_nchw, (0, 2, 3, 1)).astype(jnp.float32)
    ci = 0
    for v in model.cfg:
        if v == "M":
            B, H, W, C = x.shape
            x = x.reshape(B, H // 2, 2, W // 2, 2, C).max(axis=(2, 4))
        else:
            w, b = model.conv_params[ci]
            ci += 1
            x = jax.lax.conv_general_dilated(
                x, w, window_strides=(1, 1), padding="SAME",
                dimension_numbers=("NHWC", "HWIO", "NHWC"))
            x = jnp.maximum(x + b.reshape(1, 1, 1, -1), 0.0)
    B, H, W, C = x.shape
    x = x.reshape(B, H // 2, 2, W // 2, 2, C).mean(axis=(2, 4)).reshape(B, -1)
    return x @ model.fc_w + model.fc_b.reshape(1, -1)


# ----------------------------------- main ----------------------------------

if __name__ == "__main__":
    key = jax.random.PRNGKey(0)
    kx, kp = jax.random.split(key)

    # PyTorch-convention NCHW input (batch=2, channels=3, 16x16 spatial).
    x = jax.random.normal(kx, (2, 3, 16, 16), jnp.float32)

    # custom_cfg: convs at 16x16 / 8x8 / 4x4 / 2x2; features end at 2x2 spatial,
    # so AvgPool2d(2) -> 1x1 and flatten dim == custom_cfg[-1] == 64.
    cfg = [16, "M", 32, "M", 64, "M", 64]
    model = VGGPallas(cfg, in_channels=3, num_classes=10, key=kp)

    fwd = jax.jit(model.__call__)
    out = jax.block_until_ready(fwd(x))
    assert out.shape == (2, 10), out.shape

    ref = reference_forward(model, x)
    rel_err = jnp.max(jnp.abs(out - ref)) / (jnp.max(jnp.abs(ref)) + 1e-8)
    # bf16 activations/weights with f32 accumulation vs. all-f32 reference.
    assert bool(rel_err < 3e-2), f"mismatch vs reference: rel_err={rel_err}"

    print("KERNEL_OK")
</pallas_src>

<mosaic_0001>
module attributes {stable_mosaic.version = 11 : i64} {
  func.func @_vgg_fused_kernel(%arg0: i32, %arg1: memref<1x256x128xbf16, #tpu.memory_space<vmem>>, %arg2: memref<4x1152x128xbf16, #tpu.memory_space<vmem>>, %arg3: memref<4x1x128xf32, #tpu.memory_space<vmem>>, %arg4: memref<128x128xbf16, #tpu.memory_space<vmem>>, %arg5: memref<1x128xf32, #tpu.memory_space<vmem>>, %arg6: memref<1x1x128xf32, #tpu.memory_space<vmem>>, %arg7: memref<342x128xbf16, #tpu.memory_space<vmem>>, %arg8: memref<110x128xbf16, #tpu.memory_space<vmem>>, %arg9: memref<42x128xbf16, #tpu.memory_space<vmem>>, %arg10: memref<20x128xbf16, #tpu.memory_space<vmem>>, %arg11: memref<288x1152xbf16, #tpu.memory_space<vmem>>, %arg12: memref<288x128xf32, #tpu.memory_space<vmem>>) attributes {dimension_semantics = [#tpu.dimension_semantics<parallel>], iteration_bounds = array<i64: 2>, scalar_prefetch = 0 : i64, scratch_operands = 6 : i64, tpu.core_type = #tpu.core_type<tc>, window_params = [{transform_indices = @transform_0, window_bounds = array<i64: 1, 256, 128>}, {pipeline_mode = #tpu.pipeline_mode<synchronous>, transform_indices = @transform_1, window_bounds = array<i64: 4, 1152, 128>}, {pipeline_mode = #tpu.pipeline_mode<synchronous>, transform_indices = @transform_2, window_bounds = array<i64: 4, 1, 128>}, {pipeline_mode = #tpu.pipeline_mode<synchronous>, transform_indices = @transform_3, window_bounds = array<i64: 128, 128>}, {pipeline_mode = #tpu.pipeline_mode<synchronous>, transform_indices = @transform_4, window_bounds = array<i64: 1, 128>}, {transform_indices = @transform_5, window_bounds = array<i64: 1, 1, 128>}]} {
    %cst = arith.constant 0.000000e+00 : bf16
    %0 = vector.broadcast %cst : bf16 to vector<342x128xbf16>
    %c0 = arith.constant 0 : index
    %c0_0 = arith.constant 0 : index
    %1 = vector.load %arg7[%c0, %c0_0] : memref<342x128xbf16, #tpu.memory_space<vmem>>, vector<342x128xbf16>
    tpu.vector_store %arg7[%c0, %c0_0], %0 {strides = array<i32>} : memref<342x128xbf16, #tpu.memory_space<vmem>>, vector<342x128xbf16>,
    %cst_1 = arith.constant 0.000000e+00 : bf16
    %2 = vector.broadcast %cst_1 : bf16 to vector<110x128xbf16>
    %c0_2 = arith.constant 0 : index
    %c0_3 = arith.constant 0 : index
    %3 = vector.load %arg8[%c0_2, %c0_3] : memref<110x128xbf16, #tpu.memory_space<vmem>>, vector<110x128xbf16>
    tpu.vector_store %arg8[%c0_2, %c0_3], %2 {strides = array<i32>} : memref<110x128xbf16, #tpu.memory_space<vmem>>, vector<110x128xbf16>,
    %cst_4 = arith.constant 0.000000e+00 : bf16
    %4 = vector.broadcast %cst_4 : bf16 to vector<42x128xbf16>
    %c0_5 = arith.constant 0 : index
    %c0_6 = arith.constant 0 : index
    %5 = vector.load %arg9[%c0_5, %c0_6] : memref<42x128xbf16, #tpu.memory_space<vmem>>, vector<42x128xbf16>
    tpu.vector_store %arg9[%c0_5, %c0_6], %4 {strides = array<i32>} : memref<42x128xbf16, #tpu.memory_space<vmem>>, vector<42x128xbf16>,
    %cst_7 = arith.constant 0.000000e+00 : bf16
    %6 = vector.broadcast %cst_7 : bf16 to vector<20x128xbf16>
    %c0_8 = arith.constant 0 : index
    %c0_9 = arith.constant 0 : index
    %7 = vector.load %arg10[%c0_8, %c0_9] : memref<20x128xbf16, #tpu.memory_space<vmem>>, vector<20x128xbf16>
    tpu.vector_store %arg10[%c0_8, %c0_9], %6 {strides = array<i32>} : memref<20x128xbf16, #tpu.memory_space<vmem>>, vector<20x128xbf16>,
    %c0_10 = arith.constant 0 : index
    %c0_11 = arith.constant 0 : index
    %c0_12 = arith.constant 0 : index
    %8 = vector.load %arg1[%c0_10, %c0_11, %c0_12] : memref<1x256x128xbf16, #tpu.memory_space<vmem>>, vector<1x16x128xbf16>
    %9 = vector.shape_cast %8 : vector<1x16x128xbf16> to vector<16x128xbf16>
    %c19 = arith.constant 19 : index
    %c0_13 = arith.constant 0 : index
    %10 = vector.load %arg7[%c19, %c0_13] : memref<342x128xbf16, #tpu.memory_space<vmem>>, vector<16x128xbf16>
    tpu.vector_store %arg7[%c19, %c0_13], %9 {strides = array<i32>} : memref<342x128xbf16, #tpu.memory_space<vmem>>, vector<16x128xbf16>,
    %c0_14 = arith.constant 0 : index
    %c16 = arith.constant 16 : index
    %c0_15 = arith.constant 0 : index
    %11 = vector.load %arg1[%c0_14, %c16, %c0_15] : memref<1x256x128xbf16, #tpu.memory_space<vmem>>, vector<1x16x128xbf16>
    %12 = vector.shape_cast %11 : vector<1x16x128xbf16> to vector<16x128xbf16>
    %c37 = arith.constant 37 : index
    %c0_16 = arith.constant 0 : index
    %13 = vector.load %arg7[%c37, %c0_16] : memref<342x128xbf16, #tpu.memory_space<vmem>>, vector<16x128xbf16>
    tpu.vector_store %arg7[%c37, %c0_16], %12 {strides = array<i32>} : memref<342x128xbf16, #tpu.memory_space<vmem>>, vector<16x128xbf16>,
    %c0_17 = arith.constant 0 : index
    %c32 = arith.constant 32 : index
    %c0_18 = arith.constant 0 : index
    %14 = vector.load %arg1[%c0_17, %c32, %c0_18] : memref<1x256x128xbf16, #tpu.memory_space<vmem>>, vector<1x16x128xbf16>
    %15 = vector.shape_cast %14 : vector<1x16x128xbf16> to vector<16x128xbf16>
    %c55 = arith.constant 55 : index
    %c0_19 = arith.constant 0 : index
    %16 = vector.load %arg7[%c55, %c0_19] : memref<342x128xbf16, #tpu.memory_space<vmem>>, vector<16x128xbf16>
    tpu.vector_store %arg7[%c55, %c0_19], %15 {strides = array<i32>} : memref<342x128xbf16, #tpu.memory_space<vmem>>, vector<16x128xbf16>,
    %c0_20 = arith.constant 0 : index
    %c48 = arith.constant 48 : index
    %c0_21 = arith.constant 0 : index
    %17 = vector.load %arg1[%c0_20, %c48, %c0_21] : memref<1x256x128xbf16, #tpu.memory_space<vmem>>, vector<1x16x128xbf16>
    %18 = vector.shape_cast %17 : vector<1x16x128xbf16> to vector<16x128xbf16>
    %c73 = arith.constant 73 : index
    %c0_22 = arith.constant 0 : index
    %19 = vector.load %arg7[%c73, %c0_22] : memref<342x128xbf16, #tpu.memory_space<vmem>>, vector<16x128xbf16>
    tpu.vector_store %arg7[%c73, %c0_22], %18 {strides = array<i32>} : memref<342x128xbf16, #tpu.memory_space<vmem>>, vector<16x128xbf16>,
    %c0_23 = arith.constant 0 : index
    %c64 = arith.constant 64 : index
    %c0_24 = arith.constant 0 : index
    %20 = vector.load %arg1[%c0_23, %c64, %c0_24] : memref<1x256x128xbf16, #tpu.memory_space<vmem>>, vector<1x16x128xbf16>
    %21 = vector.shape_cast %20 : vector<1x16x128xbf16> to vector<16x128xbf16>
    %c91 = arith.constant 91 : index
    %c0_25 = arith.constant 0 : index
    %22 = vector.load %arg7[%c91, %c0_25] : memref<342x128xbf16, #tpu.memory_space<vmem>>, vector<16x128xbf16>
    tpu.vector_store %arg7[%c91, %c0_25], %21 {strides = array<i32>} : memref<342x128xbf16, #tpu.memory_space<vmem>>, vector<16x128xbf16>,
    %c0_26 = arith.constant 0 : index
    %c80 = arith.constant 80 : index
    %c0_27 = arith.constant 0 : index
    %23 = vector.load %arg1[%c0_26, %c80, %c0_27] : memref<1x256x128xbf16, #tpu.memory_space<vmem>>, vector<1x16x128xbf16>
    %24 = vector.shape_cast %23 : vector<1x16x128xbf16> to vector<16x128xbf16>
    %c109 = arith.constant 109 : index
    %c0_28 = arith.constant 0 : index
    %25 = vector.load %arg7[%c109, %c0_28] : memref<342x128xbf16, #tpu.memory_space<vmem>>, vector<16x128xbf16>
    tpu.vector_store %arg7[%c109, %c0_28], %24 {strides = array<i32>} : memref<342x128xbf16, #tpu.memory_space<vmem>>, vector<16x128xbf16>,
    %c0_29 = arith.constant 0 : index
    %c96 = arith.constant 96 : index
    %c0_30 = arith.constant 0 : index
    %26 = vector.load %arg1[%c0_29, %c96, %c0_30] : memref<1x256x128xbf16, #tpu.memory_space<vmem>>, vector<1x16x128xbf16>
    %27 = vector.shape_cast %26 : vector<1x16x128xbf16> to vector<16x128xbf16>
    %c127 = arith.constant 127 : index
    %c0_31 = arith.constant 0 : index
    %28 = vector.load %arg7[%c127, %c0_31] : memref<342x128xbf16, #tpu.memory_space<vmem>>, vector<16x128xbf16>
    tpu.vector_store %arg7[%c127, %c0_31], %27 {strides = array<i32>} : memref<342x128xbf16, #tpu.memory_space<vmem>>, vector<16x128xbf16>,
    %c0_32 = arith.constant 0 : index
    %c112 = arith.constant 112 : index
    %c0_33 = arith.constant 0 : index
    %29 = vector.load %arg1[%c0_32, %c112, %c0_33] : memref<1x256x128xbf16, #tpu.memory_space<vmem>>, vector<1x16x128xbf16>
    %30 = vector.shape_cast %29 : vector<1x16x128xbf16> to vector<16x128xbf16>
    %c145 = arith.constant 145 : index
    %c0_34 = arith.constant 0 : index
    %31 = vector.load %arg7[%c145, %c0_34] : memref<342x128xbf16, #tpu.memory_space<vmem>>, vector<16x128xbf16>
    tpu.vector_store %arg7[%c145, %c0_34], %30 {strides = array<i32>} : memref<342x128xbf16, #tpu.memory_space<vmem>>, vector<16x128xbf16>,
    %c0_35 = arith.constant 0 : index
    %c128 = arith.constant 128 : index
    %c0_36 = arith.constant 0 : index
    %32 = vector.load %arg1[%c0_35, %c128, %c0_36] : memref<1x256x128xbf16, #tpu.memory_space<vmem>>, vector<1x16x128xbf16>
    %33 = vector.shape_cast %32 : vector<1x16x128xbf16> to vector<16x128xbf16>
    %c163 = arith.constant 163 : index
    %c0_37 = arith.constant 0 : index
    %34 = vector.load %arg7[%c163, %c0_37] : memref<342x128xbf16, #tpu.memory_space<vmem>>, vector<16x128xbf16>
    tpu.vector_store %arg7[%c163, %c0_37], %33 {strides = array<i32>} : memref<342x128xbf16, #tpu.memory_space<vmem>>, vector<16x128xbf16>,
    %c0_38 = arith.constant 0 : index
    %c144 = arith.constant 144 : index
    %c0_39 = arith.constant 0 : index
    %35 = vector.load %arg1[%c0_38, %c144, %c0_39] : memref<1x256x128xbf16, #tpu.memory_space<vmem>>, vector<1x16x128xbf16>
    %36 = vector.shape_cast %35 : vector<1x16x128xbf16> to vector<16x128xbf16>
    %c181 = arith.constant 181 : index
    %c0_40 = arith.constant 0 : index
    %37 = vector.load %arg7[%c181, %c0_40] : memref<342x128xbf16, #tpu.memory_space<vmem>>, vector<16x128xbf16>
    tpu.vector_store %arg7[%c181, %c0_40], %36 {strides = array<i32>} : memref<342x128xbf16, #tpu.memory_space<vmem>>, vector<16x128xbf16>,
    %c0_41 = arith.constant 0 : index
    %c160 = arith.constant 160 : index
    %c0_42 = arith.constant 0 : index
    %38 = vector.load %arg1[%c0_41, %c160, %c0_42] : memref<1x256x128xbf16, #tpu.memory_space<vmem>>, vector<1x16x128xbf16>
    %39 = vector.shape_cast %38 : vector<1x16x128xbf16> to vector<16x128xbf16>
    %c199 = arith.constant 199 : index
    %c0_43 = arith.constant 0 : index
    %40 = vector.load %arg7[%c199, %c0_43] : memref<342x128xbf16, #tpu.memory_space<vmem>>, vector<16x128xbf16>
    tpu.vector_store %arg7[%c199, %c0_43], %39 {strides = array<i32>} : memref<342x128xbf16, #tpu.memory_space<vmem>>, vector<16x128xbf16>,
    %c0_44 = arith.constant 0 : index
    %c176 = arith.constant 176 : index
    %c0_45 = arith.constant 0 : index
    %41 = vector.load %arg1[%c0_44, %c176, %c0_45] : memref<1x256x128xbf16, #tpu.memory_space<vmem>>, vector<1x16x128xbf16>
    %42 = vector.shape_cast %41 : vector<1x16x128xbf16> to vector<16x128xbf16>
    %c217 = arith.constant 217 : index
    %c0_46 = arith.constant 0 : index
    %43 = vector.load %arg7[%c217, %c0_46] : memref<342x128xbf16, #tpu.memory_space<vmem>>, vector<16x128xbf16>
    tpu.vector_store %arg7[%c217, %c0_46], %42 {strides = array<i32>} : memref<342x128xbf16, #tpu.memory_space<vmem>>, vector<16x128xbf16>,
    %c0_47 = arith.constant 0 : index
    %c192 = arith.constant 192 : index
    %c0_48 = arith.constant 0 : index
    %44 = vector.load %arg1[%c0_47, %c192, %c0_48] : memref<1x256x128xbf16, #tpu.memory_space<vmem>>, vector<1x16x128xbf16>
    %45 = vector.shape_cast %44 : vector<1x16x128xbf16> to vector<16x128xbf16>
    %c235 = arith.constant 235 : index
    %c0_49 = arith.constant 0 : index
    %46 = vector.load %arg7[%c235, %c0_49] : memref<342x128xbf16, #tpu.memory_space<vmem>>, vector<16x128xbf16>
    tpu.vector_store %arg7[%c235, %c0_49], %45 {strides = array<i32>} : memref<342x128xbf16, #tpu.memory_space<vmem>>, vector<16x128xbf16>,
    %c0_50 = arith.constant 0 : index
    %c208 = arith.constant 208 : index
    %c0_51 = arith.constant 0 : index
    %47 = vector.load %arg1[%c0_50, %c208, %c0_51] : memref<1x256x128xbf16, #tpu.memory_space<vmem>>, vector<1x16x128xbf16>
    %48 = vector.shape_cast %47 : vector<1x16x128xbf16> to vector<16x128xbf16>
    %c253 = arith.constant 253 : index
    %c0_52 = arith.constant 0 : index
    %49 = vector.load %arg7[%c253, %c0_52] : memref<342x128xbf16, #tpu.memory_space<vmem>>, vector<16x128xbf16>
    tpu.vector_store %arg7[%c253, %c0_52], %48 {strides = array<i32>} : memref<342x128xbf16, #tpu.memory_space<vmem>>, vector<16x128xbf16>,
    %c0_53 = arith.constant 0 : index
    %c224 = arith.constant 224 : index
    %c0_54 = arith.constant 0 : index
    %50 = vector.load %arg1[%c0_53, %c224, %c0_54] : memref<1x256x128xbf16, #tpu.memory_space<vmem>>, vector<1x16x128xbf16>
    %51 = vector.shape_cast %50 : vector<1x16x128xbf16> to vector<16x128xbf16>
    %c271 = arith.constant 271 : index
    %c0_55 = arith.constant 0 : index
    %52 = vector.load %arg7[%c271, %c0_55] : memref<342x128xbf16, #tpu.memory_space<vmem>>, vector<16x128xbf16>
    tpu.vector_store %arg7[%c271, %c0_55], %51 {strides = array<i32>} : memref<342x128xbf16, #tpu.memory_space<vmem>>, vector<16x128xbf16>,
    %c0_56 = arith.constant 0 : index
    %c240 = arith.constant 240 : index
    %c0_57 = arith.constant 0 : index
    %53 = vector.load %arg1[%c0_56, %c240, %c0_57] : memref<1x256x128xbf16, #tpu.memory_space<vmem>>, vector<1x16x128xbf16>
    %54 = vector.shape_cast %53 : vector<1x16x128xbf16> to vector<16x128xbf16>
    %c289 = arith.constant 289 : index
    %c0_58 = arith.constant 0 : index
    %55 = vector.load %arg7[%c289, %c0_58] : memref<342x128xbf16, #tpu.memory_space<vmem>>, vector<16x128xbf16>
    tpu.vector_store %arg7[%c289, %c0_58], %54 {strides = array<i32>} : memref<342x128xbf16, #tpu.memory_space<vmem>>, vector<16x128xbf16>,
    %c0_59 = arith.constant 0 : index
    %c0_60 = arith.constant 0 : index
    %56 = vector.load %arg7[%c0_59, %c0_60] : memref<342x128xbf16, #tpu.memory_space<vmem>>, vector<288x128xbf16>
    %c0_61 = arith.constant 0 : index
    %c0_62 = arith.constant 0 : index
    %57 = vector.load %arg11[%c0_61, %c0_62] : memref<288x1152xbf16, #tpu.memory_space<vmem>>, vector<288x128xbf16>
    tpu.vector_store %arg11[%c0_61, %c0_62], %56 {strides = array<i32>} : memref<288x1152xbf16, #tpu.memory_space<vmem>>, vector<288x128xbf16>,
    %c1 = arith.constant 1 : index
    %c0_63 = arith.constant 0 : index
    %58 = vector.load %arg7[%c1, %c0_63] : memref<342x128xbf16, #tpu.memory_space<vmem>>, vector<288x128xbf16>
    %c0_64 = arith.constant 0 : index
    %c128_65 = arith.constant 128 : index
    %59 = vector.load %arg11[%c0_64, %c128_65] : memref<288x1152xbf16, #tpu.memory_space<vmem>>, vector<288x128xbf16>
    tpu.vector_store %arg11[%c0_64, %c128_65], %58 {strides = array<i32>} : memref<288x1152xbf16, #tpu.memory_space<vmem>>, vector<288x128xbf16>,
    %c2 = arith.constant 2 : index
    %c0_66 = arith.constant 0 : index
    %60 = vector.load %arg7[%c2, %c0_66] : memref<342x128xbf16, #tpu.memory_space<vmem>>, vector<288x128xbf16>
    %c0_67 = arith.constant 0 : index
    %c256 = arith.constant 256 : index
    %61 = vector.load %arg11[%c0_67, %c256] : memref<288x1152xbf16, #tpu.memory_space<vmem>>, vector<288x128xbf16>
    tpu.vector_store %arg11[%c0_67, %c256], %60 {strides = array<i32>} : memref<288x1152xbf16, #tpu.memory_space<vmem>>, vector<288x128xbf16>,
    %c18 = arith.constant 18 : index
    %c0_68 = arith.constant 0 : index
    %62 = vector.load %arg7[%c18, %c0_68] : memref<342x128xbf16, #tpu.memory_space<vmem>>, vector<288x128xbf16>
    %c0_69 = arith.constant 0 : index
    %c384 = arith.constant 384 : index
    %63 = vector.load %arg11[%c0_69, %c384] : memref<288x1152xbf16, #tpu.memory_space<vmem>>, vector<288x128xbf16>
    tpu.vector_store %arg11[%c0_69, %c384], %62 {strides = array<i32>} : memref<288x1152xbf16, #tpu.memory_space<vmem>>, vector<288x128xbf16>,
    %c19_70 = arith.constant 19 : index
    %c0_71 = arith.constant 0 : index
    %64 = vector.load %arg7[%c19_70, %c0_71] : memref<342x128xbf16, #tpu.memory_space<vmem>>, vector<288x128xbf16>
    %c0_72 = arith.constant 0 : index
    %c512 = arith.constant 512 : index
    %65 = vector.load %arg11[%c0_72, %c512] : memref<288x1152xbf16, #tpu.memory_space<vmem>>, vector<288x128xbf16>
    tpu.vector_store %arg11[%c0_72, %c512], %64 {strides = array<i32>} : memref<288x1152xbf16, #tpu.memory_space<vmem>>, vector<288x128xbf16>,
    %c20 = arith.constant 20 : index
    %c0_73 = arith.constant 0 : index
    %66 = vector.load %arg7[%c20, %c0_73] : memref<342x128xbf16, #tpu.memory_space<vmem>>, vector<288x128xbf16>
    %c0_74 = arith.constant 0 : index
    %c640 = arith.constant 640 : index
    %67 = vector.load %arg11[%c0_74, %c640] : memref<288x1152xbf16, #tpu.memory_space<vmem>>, vector<288x128xbf16>
    tpu.vector_store %arg11[%c0_74, %c640], %66 {strides = array<i32>} : memref<288x1152xbf16, #tpu.memory_space<vmem>>, vector<288x128xbf16>,
    %c36 = arith.constant 36 : index
    %c0_75 = arith.constant 0 : index
    %68 = vector.load %arg7[%c36, %c0_75] : memref<342x128xbf16, #tpu.memory_space<vmem>>, vector<288x128xbf16>
    %c0_76 = arith.constant 0 : index
    %c768 = arith.constant 768 : index
    %69 = vector.load %arg11[%c0_76, %c768] : memref<288x1152xbf16, #tpu.memory_space<vmem>>, vector<288x128xbf16>
    tpu.vector_store %arg11[%c0_76, %c768], %68 {strides = array<i32>} : memref<288x1152xbf16, #tpu.memory_space<vmem>>, vector<288x128xbf16>,
    %c37_77 = arith.constant 37 : index
    %c0_78 = arith.constant 0 : index
    %70 = vector.load %arg7[%c37_77, %c0_78] : memref<342x128xbf16, #tpu.memory_space<vmem>>, vector<288x128xbf16>
    %c0_79 = arith.constant 0 : index
    %c896 = arith.constant 896 : index
    %71 = vector.load %arg11[%c0_79, %c896] : memref<288x1152xbf16, #tpu.memory_space<vmem>>, vector<288x128xbf16>
    tpu.vector_store %arg11[%c0_79, %c896], %70 {strides = array<i32>} : memref<288x1152xbf16, #tpu.memory_space<vmem>>, vector<288x128xbf16>,
    %c38 = arith.constant 38 : index
    %c0_80 = arith.constant 0 : index
    %72 = vector.load %arg7[%c38, %c0_80] : memref<342x128xbf16, #tpu.memory_space<vmem>>, vector<288x128xbf16>
    %c0_81 = arith.constant 0 : index
    %c1024 = arith.constant 1024 : index
    %73 = vector.load %arg11[%c0_81, %c1024] : memref<288x1152xbf16, #tpu.memory_space<vmem>>, vector<288x128xbf16>
    tpu.vector_store %arg11[%c0_81, %c1024], %72 {strides = array<i32>} : memref<288x1152xbf16, #tpu.memory_space<vmem>>, vector<288x128xbf16>,
    %c0_82 = arith.constant 0 : index
    %c0_83 = arith.constant 0 : index
    %74 = vector.load %arg11[%c0_82, %c0_83] : memref<288x1152xbf16, #tpu.memory_space<vmem>>, vector<288x1152xbf16>
    %c0_84 = arith.constant 0 : index
    %c0_85 = arith.constant 0 : index
    %c0_86 = arith.constant 0 : index
    %75 = vector.load %arg2[%c0_84, %c0_85, %c0_86] : memref<4x1152x128xbf16, #tpu.memory_space<vmem>>, vector<1x1152x128xbf16>
    %76 = vector.shape_cast %75 : vector<1x1152x128xbf16> to vector<1152x128xbf16>
    %cst_87 = arith.constant dense<0.000000e+00> : vector<288x128xf32>
    %77 = tpu.matmul %74, %76, %cst_87 {dimension_numbers = #tpu.dot_dimension_numbers<[1], [0], [0], [1], [0, 0, 1, 1], [], []>} : vector<288x1152xbf16>, vector<1152x128xbf16>, vector<288x128xf32> -> vector<288x128xf32>
    %c0_88 = arith.constant 0 : index
    %c0_89 = arith.constant 0 : index
    %c0_90 = arith.constant 0 : index
    %78 = vector.load %arg3[%c0_88, %c0_89, %c0_90] : memref<4x1x128xf32, #tpu.memory_space<vmem>>, vector<1x1x128xf32>
    %79 = vector.shape_cast %78 : vector<1x1x128xf32> to vector<1x128xf32>
    %80 = vector.broadcast %79 : vector<1x128xf32> to vector<288x128xf32>
    %81 = arith.addf %77, %80 : vector<288x128xf32>
    %cst_91 = arith.constant 0.000000e+00 : f32
    %82 = vector.broadcast %cst_91 : f32 to vector<288x128xf32>
    %83 = arith.maximumf %81, %82 : vector<288x128xf32>
    %c0_92 = arith.constant 0 : index
    %c0_93 = arith.constant 0 : index
    %84 = vector.load %arg12[%c0_92, %c0_93] : memref<288x128xf32, #tpu.memory_space<vmem>>, vector<288x128xf32>
    tpu.vector_store %arg12[%c0_92, %c0_93], %83 {strides = array<i32>} : memref<288x128xf32, #tpu.memory_space<vmem>>, vector<288x128xf32>,
    %c0_94 = arith.constant 0 : index
    %c0_95 = arith.constant 0 : index
    %85 = tpu.strided_load %arg12[%c0_94, %c0_95] {strides = array<i32: 2, 1>} : memref<288x128xf32, #tpu.memory_space<vmem>>, vector<8x128xf32>
    %c1_96 = arith.constant 1 : index
    %c0_97 = arith.constant 0 : index
    %86 = tpu.strided_load %arg12[%c1_96, %c0_97] {strides = array<i32: 2, 1>} : memref<288x128xf32, #tpu.memory_space<vmem>>, vector<8x128xf32>
    %c18_98 = arith.constant 18 : index
    %c0_99 = arith.constant 0 : index
    %87 = tpu.strided_load %arg12[%c18_98, %c0_99] {strides = array<i32: 2, 1>} : memref<288x128xf32, #tpu.memory_space<vmem>>, vector<8x128xf32>
    %c19_100 = arith.constant 19 : index
    %c0_101 = arith.constant 0 : index
    %88 = tpu.strided_load %arg12[%c19_100, %c0_101] {strides = array<i32: 2, 1>} : memref<288x128xf32, #tpu.memory_space<vmem>>, vector<8x128xf32>
    %89 = arith.maximumf %85, %86 : vector<8x128xf32>
    %90 = arith.maximumf %87, %88 : vector<8x128xf32>
    %91 = arith.maximumf %89, %90 : vector<8x128xf32>
    %92 = arith.truncf %91 : vector<8x128xf32> to vector<8x128xbf16>
    %c11 = arith.constant 11 : index
    %c0_102 = arith.constant 0 : index
    %93 = vector.load %arg8[%c11, %c0_102] : memref<110x128xbf16, #tpu.memory_space<vmem>>, vector<8x128xbf16>
    tpu.vector_store %arg8[%c11, %c0_102], %92 {strides = array<i32>} : memref<110x128xbf16, #tpu.memory_space<vmem>>, vector<8x128xbf16>,
    %c36_103 = arith.constant 36 : index
    %c0_104 = arith.constant 0 : index
    %94 = tpu.strided_load %arg12[%c36_103, %c0_104] {strides = array<i32: 2, 1>} : memref<288x128xf32, #tpu.memory_space<vmem>>, vector<8x128xf32>
    %c37_105 = arith.constant 37 : index
    %c0_106 = arith.constant 0 : index
    %95 = tpu.strided_load %arg12[%c37_105, %c0_106] {strides = array<i32: 2, 1>} : memref<288x128xf32, #tpu.memory_space<vmem>>, vector<8x128xf32>
    %c54 = arith.constant 54 : index
    %c0_107 = arith.constant 0 : index
    %96 = tpu.strided_load %arg12[%c54, %c0_107] {strides = array<i32: 2, 1>} : memref<288x128xf32, #tpu.memory_space<vmem>>, vector<8x128xf32>
    %c55_108 = arith.constant 55 : index
    %c0_109 = arith.constant 0 : index
    %97 = tpu.strided_load %arg12[%c55_108, %c0_109] {strides = array<i32: 2, 1>} : memref<288x128xf32, #tpu.memory_space<vmem>>, vector<8x128xf32>
    %98 = arith.maximumf %94, %95 : vector<8x128xf32>
    %99 = arith.maximumf %96, %97 : vector<8x128xf32>
    %100 = arith.maximumf %98, %99 : vector<8x128xf32>
    %101 = arith.truncf %100 : vector<8x128xf32> to vector<8x128xbf16>
    %c21 = arith.constant 21 : index
    %c0_110 = arith.constant 0 : index
    %102 = vector.load %arg8[%c21, %c0_110] : memref<110x128xbf16, #tpu.memory_space<vmem>>, vector<8x128xbf16>
    tpu.vector_store %arg8[%c21, %c0_110], %101 {strides = array<i32>} : memref<110x128xbf16, #tpu.memory_space<vmem>>, vector<8x128xbf16>,
    %c72 = arith.constant 72 : index
    %c0_111 = arith.constant 0 : index
    %103 = tpu.strided_load %arg12[%c72, %c0_111] {strides = array<i32: 2, 1>} : memref<288x128xf32, #tpu.memory_space<vmem>>, vector<8x128xf32>
    %c73_112 = arith.constant 73 : index
    %c0_113 = arith.constant 0 : index
    %104 = tpu.strided_load %arg12[%c73_112, %c0_113] {strides = array<i32: 2, 1>} : memref<288x128xf32, #tpu.memory_space<vmem>>, vector<8x128xf32>
    %c90 = arith.constant 90 : index
    %c0_114 = arith.constant 0 : index
    %105 = tpu.strided_load %arg12[%c90, %c0_114] {strides = array<i32: 2, 1>} : memref<288x128xf32, #tpu.memory_space<vmem>>, vector<8x128xf32>
    %c91_115 = arith.constant 91 : index
    %c0_116 = arith.constant 0 : index
    %106 = tpu.strided_load %arg12[%c91_115, %c0_116] {strides = array<i32: 2, 1>} : memref<288x128xf32, #tpu.memory_space<vmem>>, vector<8x128xf32>
    %107 = arith.maximumf %103, %104 : vector<8x128xf32>
    %108 = arith.maximumf %105, %106 : vector<8x128xf32>
    %109 = arith.maximumf %107, %108 : vector<8x128xf32>
    %110 = arith.truncf %109 : vector<8x128xf32> to vector<8x128xbf16>
    %c31 = arith.constant 31 : index
    %c0_117 = arith.constant 0 : index
    %111 = vector.load %arg8[%c31, %c0_117] : memref<110x128xbf16, #tpu.memory_space<vmem>>, vector<8x128xbf16>
    tpu.vector_store %arg8[%c31, %c0_117], %110 {strides = array<i32>} : memref<110x128xbf16, #tpu.memory_space<vmem>>, vector<8x128xbf16>,
    %c108 = arith.constant 108 : index
    %c0_118 = arith.constant 0 : index
    %112 = tpu.strided_load %arg12[%c108, %c0_118] {strides = array<i32: 2, 1>} : memref<288x128xf32, #tpu.memory_space<vmem>>, vector<8x128xf32>
    %c109_119 = arith.constant 109 : index
    %c0_120 = arith.constant 0 : index
    %113 = tpu.strided_load %arg12[%c109_119, %c0_120] {strides = array<i32: 2, 1>} : memref<288x128xf32, #tpu.memory_space<vmem>>, vector<8x128xf32>
    %c126 = arith.constant 126 : index
    %c0_121 = arith.constant 0 : index
    %114 = tpu.strided_load %arg12[%c126, %c0_121] {strides = array<i32: 2, 1>} : memref<288x128xf32, #tpu.memory_space<vmem>>, vector<8x128xf32>
    %c127_122 = arith.constant 127 : index
    %c0_123 = arith.constant 0 : index
    %115 = tpu.strided_load %arg12[%c127_122, %c0_123] {strides = array<i32: 2, 1>} : memref<288x128xf32, #tpu.memory_space<vmem>>, vector<8x128xf32>
    %116 = arith.maximumf %112, %113 : vector<8x128xf32>
    %117 = arith.maximumf %114, %115 : vector<8x128xf32>
    %118 = arith.maximumf %116, %117 : vector<8x128xf32>
    %119 = arith.truncf %118 : vector<8x128xf32> to vector<8x128xbf16>
    %c41 = arith.constant 41 : index
    %c0_124 = arith.constant 0 : index
    %120 = vector.load %arg8[%c41, %c0_124] : memref<110x128xbf16, #tpu.memory_space<vmem>>, vector<8x128xbf16>
    tpu.vector_store %arg8[%c41, %c0_124], %119 {strides = array<i32>} : memref<110x128xbf16, #tpu.memory_space<vmem>>, vector<8x128xbf16>,
    %c144_125 = arith.constant 144 : index
    %c0_126 = arith.constant 0 : index
    %121 = tpu.strided_load %arg12[%c144_125, %c0_126] {strides = array<i32: 2, 1>} : memref<288x128xf32, #tpu.memory_space<vmem>>, vector<8x128xf32>
    %c145_127 = arith.constant 145 : index
    %c0_128 = arith.constant 0 : index
    %122 = tpu.strided_load %arg12[%c145_127, %c0_128] {strides = array<i32: 2, 1>} : memref<288x128xf32, #tpu.memory_space<vmem>>, vector<8x128xf32>
    %c162 = arith.constant 162 : index
    %c0_129 = arith.constant 0 : index
    %123 = tpu.strided_load %arg12[%c162, %c0_129] {strides = array<i32: 2, 1>} : memref<288x128xf32, #tpu.memory_space<vmem>>, vector<8x128xf32>
    %c163_130 = arith.constant 163 : index
    %c0_131 = arith.constant 0 : index
    %124 = tpu.strided_load %arg12[%c163_130, %c0_131] {strides = array<i32: 2, 1>} : memref<288x128xf32, #tpu.memory_space<vmem>>, vector<8x128xf32>
    %125 = arith.maximumf %121, %122 : vector<8x128xf32>
    %126 = arith.maximumf %123, %124 : vector<8x128xf32>
    %127 = arith.maximumf %125, %126 : vector<8x128xf32>
    %128 = arith.truncf %127 : vector<8x128xf32> to vector<8x128xbf16>
    %c51 = arith.constant 51 : index
    %c0_132 = arith.constant 0 : index
    %129 = vector.load %arg8[%c51, %c0_132] : memref<110x128xbf16, #tpu.memory_space<vmem>>, vector<8x128xbf16>
    tpu.vector_store %arg8[%c51, %c0_132], %128 {strides = array<i32>} : memref<110x128xbf16, #tpu.memory_space<vmem>>, vector<8x128xbf16>,
    %c180 = arith.constant 180 : index
    %c0_133 = arith.constant 0 : index
    %130 = tpu.strided_load %arg12[%c180, %c0_133] {strides = array<i32: 2, 1>} : memref<288x128xf32, #tpu.memory_space<vmem>>, vector<8x128xf32>
    %c181_134 = arith.constant 181 : index
    %c0_135 = arith.constant 0 : index
    %131 = tpu.strided_load %arg12[%c181_134, %c0_135] {strides = array<i32: 2, 1>} : memref<288x128xf32, #tpu.memory_space<vmem>>, vector<8x128xf32>
    %c198 = arith.constant 198 : index
    %c0_136 = arith.constant 0 : index
    %132 = tpu.strided_load %arg12[%c198, %c0_136] {strides = array<i32: 2, 1>} : memref<288x128xf32, #tpu.memory_space<vmem>>, vector<8x128xf32>
    %c199_137 = arith.constant 199 : index
    %c0_138 = arith.constant 0 : index
    %133 = tpu.strided_load %arg12[%c199_137, %c0_138] {strides = array<i32: 2, 1>} : memref<288x128xf32, #tpu.memory_space<vmem>>, vector<8x128xf32>
    %134 = arith.maximumf %130, %131 : vector<8x128xf32>
    %135 = arith.maximumf %132, %133 : vector<8x128xf32>
    %136 = arith.maximumf %134, %135 : vector<8x128xf32>
    %137 = arith.truncf %136 : vector<8x128xf32> to vector<8x128xbf16>
    %c61 = arith.constant 61 : index
    %c0_139 = arith.constant 0 : index
    %138 = vector.load %arg8[%c61, %c0_139] : memref<110x128xbf16, #tpu.memory_space<vmem>>, vector<8x128xbf16>
    tpu.vector_store %arg8[%c61, %c0_139], %137 {strides = array<i32>} : memref<110x128xbf16, #tpu.memory_space<vmem>>, vector<8x128xbf16>,
    %c216 = arith.constant 216 : index
    %c0_140 = arith.constant 0 : index
    %139 = tpu.strided_load %arg12[%c216, %c0_140] {strides = array<i32: 2, 1>} : memref<288x128xf32, #tpu.memory_space<vmem>>, vector<8x128xf32>
    %c217_141 = arith.constant 217 : index
    %c0_142 = arith.constant 0 : index
    %140 = tpu.strided_load %arg12[%c217_141, %c0_142] {strides = array<i32: 2, 1>} : memref<288x128xf32, #tpu.memory_space<vmem>>, vector<8x128xf32>
    %c234 = arith.constant 234 : index
    %c0_143 = arith.constant 0 : index
    %141 = tpu.strided_load %arg12[%c234, %c0_143] {strides = array<i32: 2, 1>} : memref<288x128xf32, #tpu.memory_space<vmem>>, vector<8x128xf32>
    %c235_144 = arith.constant 235 : index
    %c0_145 = arith.constant 0 : index
    %142 = tpu.strided_load %arg12[%c235_144, %c0_145] {strides = array<i32: 2, 1>} : memref<288x128xf32, #tpu.memory_space<vmem>>, vector<8x128xf32>
    %143 = arith.maximumf %139, %140 : vector<8x128xf32>
    %144 = arith.maximumf %141, %142 : vector<8x128xf32>
    %145 = arith.maximumf %143, %144 : vector<8x128xf32>
    %146 = arith.truncf %145 : vector<8x128xf32> to vector<8x128xbf16>
    %c71 = arith.constant 71 : index
    %c0_146 = arith.constant 0 : index
    %147 = vector.load %arg8[%c71, %c0_146] : memref<110x128xbf16, #tpu.memory_space<vmem>>, vector<8x128xbf16>
    tpu.vector_store %arg8[%c71, %c0_146], %146 {strides = array<i32>} : memref<110x128xbf16, #tpu.memory_space<vmem>>, vector<8x128xbf16>,
    %c252 = arith.constant 252 : index
    %c0_147 = arith.constant 0 : index
    %148 = tpu.strided_load %arg12[%c252, %c0_147] {strides = array<i32: 2, 1>} : memref<288x128xf32, #tpu.memory_space<vmem>>, vector<8x128xf32>
    %c253_148 = arith.constant 253 : index
    %c0_149 = arith.constant 0 : index
    %149 = tpu.strided_load %arg12[%c253_148, %c0_149] {strides = array<i32: 2, 1>} : memref<288x128xf32, #tpu.memory_space<vmem>>, vector<8x128xf32>
    %c270 = arith.constant 270 : index
    %c0_150 = arith.constant 0 : index
    %150 = tpu.strided_load %arg12[%c270, %c0_150] {strides = array<i32: 2, 1>} : memref<288x128xf32, #tpu.memory_space<vmem>>, vector<8x128xf32>
    %c271_151 = arith.constant 271 : index
    %c0_152 = arith.constant 0 : index
    %151 = tpu.strided_load %arg12[%c271_151, %c0_152] {strides = array<i32: 2, 1>} : memref<288x128xf32, #tpu.memory_space<vmem>>, vector<8x128xf32>
    %152 = arith.maximumf %148, %149 : vector<8x128xf32>
    %153 = arith.maximumf %150, %151 : vector<8x128xf32>
    %154 = arith.maximumf %152, %153 : vector<8x128xf32>
    %155 = arith.truncf %154 : vector<8x128xf32> to vector<8x128xbf16>
    %c81 = arith.constant 81 : index
    %c0_153 = arith.constant 0 : index
    %156 = vector.load %arg8[%c81, %c0_153] : memref<110x128xbf16, #tpu.memory_space<vmem>>, vector<8x128xbf16>
    tpu.vector_store %arg8[%c81, %c0_153], %155 {strides = array<i32>} : memref<110x128xbf16, #tpu.memory_space<vmem>>, vector<8x128xbf16>,
    %c0_154 = arith.constant 0 : index
    %c0_155 = arith.constant 0 : index
    %157 = vector.load %arg8[%c0_154, %c0_155] : memref<110x128xbf16, #tpu.memory_space<vmem>>, vector<80x128xbf16>
    %c0_156 = arith.constant 0 : index
    %c0_157 = arith.constant 0 : index
    %158 = vector.load %arg11[%c0_156, %c0_157] : memref<288x1152xbf16, #tpu.memory_space<vmem>>, vector<80x128xbf16>
    tpu.vector_store %arg11[%c0_156, %c0_157], %157 {strides = array<i32>} : memref<288x1152xbf16, #tpu.memory_space<vmem>>, vector<80x128xbf16>,
    %c1_158 = arith.constant 1 : index
    %c0_159 = arith.constant 0 : index
    %159 = vector.load %arg8[%c1_158, %c0_159] : memref<110x128xbf16, #tpu.memory_space<vmem>>, vector<80x128xbf16>
    %c0_160 = arith.constant 0 : index
    %c128_161 = arith.constant 128 : index
    %160 = vector.load %arg11[%c0_160, %c128_161] : memref<288x1152xbf16, #tpu.memory_space<vmem>>, vector<80x128xbf16>
    tpu.vector_store %arg11[%c0_160, %c128_161], %159 {strides = array<i32>} : memref<288x1152xbf16, #tpu.memory_space<vmem>>, vector<80x128xbf16>,
    %c2_162 = arith.constant 2 : index
    %c0_163 = arith.constant 0 : index
    %161 = vector.load %arg8[%c2_162, %c0_163] : memref<110x128xbf16, #tpu.memory_space<vmem>>, vector<80x128xbf16>
    %c0_164 = arith.constant 0 : index
    %c256_165 = arith.constant 256 : index
    %162 = vector.load %arg11[%c0_164, %c256_165] : memref<288x1152xbf16, #tpu.memory_space<vmem>>, vector<80x128xbf16>
    tpu.vector_store %arg11[%c0_164, %c256_165], %161 {strides = array<i32>} : memref<288x1152xbf16, #tpu.memory_space<vmem>>, vector<80x128xbf16>,
    %c10 = arith.constant 10 : index
    %c0_166 = arith.constant 0 : index
    %163 = vector.load %arg8[%c10, %c0_166] : memref<110x128xbf16, #tpu.memory_space<vmem>>, vector<80x128xbf16>
    %c0_167 = arith.constant 0 : index
    %c384_168 = arith.constant 384 : index
    %164 = vector.load %arg11[%c0_167, %c384_168] : memref<288x1152xbf16, #tpu.memory_space<vmem>>, vector<80x128xbf16>
    tpu.vector_store %arg11[%c0_167, %c384_168], %163 {strides = array<i32>} : memref<288x1152xbf16, #tpu.memory_space<vmem>>, vector<80x128xbf16>,
    %c11_169 = arith.constant 11 : index
    %c0_170 = arith.constant 0 : index
    %165 = vector.load %arg8[%c11_169, %c0_170] : memref<110x128xbf16, #tpu.memory_space<vmem>>, vector<80x128xbf16>
    %c0_171 = arith.constant 0 : index
    %c512_172 = arith.constant 512 : index
    %166 = vector.load %arg11[%c0_171, %c512_172] : memref<288x1152xbf16, #tpu.memory_space<vmem>>, vector<80x128xbf16>
    tpu.vector_store %arg11[%c0_171, %c512_172], %165 {strides = array<i32>} : memref<288x1152xbf16, #tpu.memory_space<vmem>>, vector<80x128xbf16>,
    %c12 = arith.constant 12 : index
    %c0_173 = arith.constant 0 : index
    %167 = vector.load %arg8[%c12, %c0_173] : memref<110x128xbf16, #tpu.memory_space<vmem>>, vector<80x128xbf16>
    %c0_174 = arith.constant 0 : index
    %c640_175 = arith.constant 640 : index
    %168 = vector.load %arg11[%c0_174, %c640_175] : memref<288x1152xbf16, #tpu.memory_space<vmem>>, vector<80x128xbf16>
    tpu.vector_store %arg11[%c0_174, %c640_175], %167 {strides = array<i32>} : memref<288x1152xbf16, #tpu.memory_space<vmem>>, vector<80x128xbf16>,
    %c20_176 = arith.constant 20 : index
    %c0_177 = arith.constant 0 : index
    %169 = vector.load %arg8[%c20_176, %c0_177] : memref<110x128xbf16, #tpu.memory_space<vmem>>, vector<80x128xbf16>
    %c0_178 = arith.constant 0 : index
    %c768_179 = arith.constant 768 : index
    %170 = vector.load %arg11[%c0_178, %c768_179] : memref<288x1152xbf16, #tpu.memory_space<vmem>>, vector<80x128xbf16>
    tpu.vector_store %arg11[%c0_178, %c768_179], %169 {strides = array<i32>} : memref<288x1152xbf16, #tpu.memory_space<vmem>>, vector<80x128xbf16>,
    %c21_180 = arith.constant 21 : index
    %c0_181 = arith.constant 0 : index
    %171 = vector.load %arg8[%c21_180, %c0_181] : memref<110x128xbf16, #tpu.memory_space<vmem>>, vector<80x128xbf16>
    %c0_182 = arith.constant 0 : index
    %c896_183 = arith.constant 896 : index
    %172 = vector.load %arg11[%c0_182, %c896_183] : memref<288x1152xbf16, #tpu.memory_space<vmem>>, vector<80x128xbf16>
    tpu.vector_store %arg11[%c0_182, %c896_183], %171 {strides = array<i32>} : memref<288x1152xbf16, #tpu.memory_space<vmem>>, vector<80x128xbf16>,
    %c22 = arith.constant 22 : index
    %c0_184 = arith.constant 0 : index
    %173 = vector.load %arg8[%c22, %c0_184] : memref<110x128xbf16, #tpu.memory_space<vmem>>, vector<80x128xbf16>
    %c0_185 = arith.constant 0 : index
    %c1024_186 = arith.constant 1024 : index
    %174 = vector.load %arg11[%c0_185, %c1024_186] : memref<288x1152xbf16, #tpu.memory_space<vmem>>, vector<80x128xbf16>
    tpu.vector_store %arg11[%c0_185, %c1024_186], %173 {strides = array<i32>} : memref<288x1152xbf16, #tpu.memory_space<vmem>>, vector<80x128xbf16>,
    %c0_187 = arith.constant 0 : index
    %c0_188 = arith.constant 0 : index
    %175 = vector.load %arg11[%c0_187, %c0_188] : memref<288x1152xbf16, #tpu.memory_space<vmem>>, vector<80x1152xbf16>
    %c1_189 = arith.constant 1 : index
    %c0_190 = arith.constant 0 : index
    %c0_191 = arith.constant 0 : index
    %176 = vector.load %arg2[%c1_189, %c0_190, %c0_191] : memref<4x1152x128xbf16, #tpu.memory_space<vmem>>, vector<1x1152x128xbf16>
    %177 = vector.shape_cast %176 : vector<1x1152x128xbf16> to vector<1152x128xbf16>
    %cst_192 = arith.constant dense<0.000000e+00> : vector<80x128xf32>
    %178 = tpu.matmul %175, %177, %cst_192 {dimension_numbers = #tpu.dot_dimension_numbers<[1], [0], [0], [1], [0, 0, 1, 1], [], []>} : vector<80x1152xbf16>, vector<1152x128xbf16>, vector<80x128xf32> -> vector<80x128xf32>
    %c1_193 = arith.constant 1 : index
    %c0_194 = arith.constant 0 : index
    %c0_195 = arith.constant 0 : index
    %179 = vector.load %arg3[%c1_193, %c0_194, %c0_195] : memref<4x1x128xf32, #tpu.memory_space<vmem>>, vector<1x1x128xf32>
    %180 = vector.shape_cast %179 : vector<1x1x128xf32> to vector<1x128xf32>
    %181 = vector.broadcast %180 : vector<1x128xf32> to vector<80x128xf32>
    %182 = arith.addf %178, %181 : vector<80x128xf32>
    %cst_196 = arith.constant 0.000000e+00 : f32
    %183 = vector.broadcast %cst_196 : f32 to vector<80x128xf32>
    %184 = arith.maximumf %182, %183 : vector<80x128xf32>
    %c0_197 = arith.constant 0 : index
    %c0_198 = arith.constant 0 : index
    %185 = vector.load %arg12[%c0_197, %c0_198] : memref<288x128xf32, #tpu.memory_space<vmem>>, vector<80x128xf32>
    tpu.vector_store %arg12[%c0_197, %c0_198], %184 {strides = array<i32>} : memref<288x128xf32, #tpu.memory_space<vmem>>, vector<80x128xf32>,
    %c0_199 = arith.constant 0 : index
    %c0_200 = arith.constant 0 : index
    %186 = tpu.strided_load %arg12[%c0_199, %c0_200] {strides = array<i32: 2, 1>} : memref<288x128xf32, #tpu.memory_space<vmem>>, vector<4x128xf32>
    %c1_201 = arith.constant 1 : index
    %c0_202 = arith.constant 0 : index
    %187 = tpu.strided_load %arg12[%c1_201, %c0_202] {strides = array<i32: 2, 1>} : memref<288x128xf32, #tpu.memory_space<vmem>>, vector<4x128xf32>
    %c10_203 = arith.constant 10 : index
    %c0_204 = arith.constant 0 : index
    %188 = tpu.strided_load %arg12[%c10_203, %c0_204] {strides = array<i32: 2, 1>} : memref<288x128xf32, #tpu.memory_space<vmem>>, vector<4x128xf32>
    %c11_205 = arith.constant 11 : index
    %c0_206 = arith.constant 0 : index
    %189 = tpu.strided_load %arg12[%c11_205, %c0_206] {strides = array<i32: 2, 1>} : memref<288x128xf32, #tpu.memory_space<vmem>>, vector<4x128xf32>
    %190 = arith.maximumf %186, %187 : vector<4x128xf32>
    %191 = arith.maximumf %188, %189 : vector<4x128xf32>
    %192 = arith.maximumf %190, %191 : vector<4x128xf32>
    %193 = arith.truncf %192 : vector<4x128xf32> to vector<4x128xbf16>
    %c7 = arith.constant 7 : index
    %c0_207 = arith.constant 0 : index
    %194 = vector.load %arg9[%c7, %c0_207] : memref<42x128xbf16, #tpu.memory_space<vmem>>, vector<4x128xbf16>
    tpu.vector_store %arg9[%c7, %c0_207], %193 {strides = array<i32>} : memref<42x128xbf16, #tpu.memory_space<vmem>>, vector<4x128xbf16>,
    %c20_208 = arith.constant 20 : index
    %c0_209 = arith.constant 0 : index
    %195 = tpu.strided_load %arg12[%c20_208, %c0_209] {strides = array<i32: 2, 1>} : memref<288x128xf32, #tpu.memory_space<vmem>>, vector<4x128xf32>
    %c21_210 = arith.constant 21 : index
    %c0_211 = arith.constant 0 : index
    %196 = tpu.strided_load %arg12[%c21_210, %c0_211] {strides = array<i32: 2, 1>} : memref<288x128xf32, #tpu.memory_space<vmem>>, vector<4x128xf32>
    %c30 = arith.constant 30 : index
    %c0_212 = arith.constant 0 : index
    %197 = tpu.strided_load %arg12[%c30, %c0_212] {strides = array<i32: 2, 1>} : memref<288x128xf32, #tpu.memory_space<vmem>>, vector<4x128xf32>
    %c31_213 = arith.constant 31 : index
    %c0_214 = arith.constant 0 : index
    %198 = tpu.strided_load %arg12[%c31_213, %c0_214] {strides = array<i32: 2, 1>} : memref<288x128xf32, #tpu.memory_space<vmem>>, vector<4x128xf32>
    %199 = arith.maximumf %195, %196 : vector<4x128xf32>
    %200 = arith.maximumf %197, %198 : vector<4x128xf32>
    %201 = arith.maximumf %199, %200 : vector<4x128xf32>
    %202 = arith.truncf %201 : vector<4x128xf32> to vector<4x128xbf16>
    %c13 = arith.constant 13 : index
    %c0_215 = arith.constant 0 : index
    %203 = vector.load %arg9[%c13, %c0_215] : memref<42x128xbf16, #tpu.memory_space<vmem>>, vector<4x128xbf16>
    tpu.vector_store %arg9[%c13, %c0_215], %202 {strides = array<i32>} : memref<42x128xbf16, #tpu.memory_space<vmem>>, vector<4x128xbf16>,
    %c40 = arith.constant 40 : index
    %c0_216 = arith.constant 0 : index
    %204 = tpu.strided_load %arg12[%c40, %c0_216] {strides = array<i32: 2, 1>} : memref<288x128xf32, #tpu.memory_space<vmem>>, vector<4x128xf32>
    %c41_217 = arith.constant 41 : index
    %c0_218 = arith.constant 0 : index
    %205 = tpu.strided_load %arg12[%c41_217, %c0_218] {strides = array<i32: 2, 1>} : memref<288x128xf32, #tpu.memory_space<vmem>>, vector<4x128xf32>
    %c50 = arith.constant 50 : index
    %c0_219 = arith.constant 0 : index
    %206 = tpu.strided_load %arg12[%c50, %c0_219] {strides = array<i32: 2, 1>} : memref<288x128xf32, #tpu.memory_space<vmem>>, vector<4x128xf32>
    %c51_220 = arith.constant 51 : index
    %c0_221 = arith.constant 0 : index
    %207 = tpu.strided_load %arg12[%c51_220, %c0_221] {strides = array<i32: 2, 1>} : memref<288x128xf32, #tpu.memory_space<vmem>>, vector<4x128xf32>
    %208 = arith.maximumf %204, %205 : vector<4x128xf32>
    %209 = arith.maximumf %206, %207 : vector<4x128xf32>
    %210 = arith.maximumf %208, %209 : vector<4x128xf32>
    %211 = arith.truncf %210 : vector<4x128xf32> to vector<4x128xbf16>
    %c19_222 = arith.constant 19 : index
    %c0_223 = arith.constant 0 : index
    %212 = vector.load %arg9[%c19_222, %c0_223] : memref<42x128xbf16, #tpu.memory_space<vmem>>, vector<4x128xbf16>
    tpu.vector_store %arg9[%c19_222, %c0_223], %211 {strides = array<i32>} : memref<42x128xbf16, #tpu.memory_space<vmem>>, vector<4x128xbf16>,
    %c60 = arith.constant 60 : index
    %c0_224 = arith.constant 0 : index
    %213 = tpu.strided_load %arg12[%c60, %c0_224] {strides = array<i32: 2, 1>} : memref<288x128xf32, #tpu.memory_space<vmem>>, vector<4x128xf32>
    %c61_225 = arith.constant 61 : index
    %c0_226 = arith.constant 0 : index
    %214 = tpu.strided_load %arg12[%c61_225, %c0_226] {strides = array<i32: 2, 1>} : memref<288x128xf32, #tpu.memory_space<vmem>>, vector<4x128xf32>
    %c70 = arith.constant 70 : index
    %c0_227 = arith.constant 0 : index
    %215 = tpu.strided_load %arg12[%c70, %c0_227] {strides = array<i32: 2, 1>} : memref<288x128xf32, #tpu.memory_space<vmem>>, vector<4x128xf32>
    %c71_228 = arith.constant 71 : index
    %c0_229 = arith.constant 0 : index
    %216 = tpu.strided_load %arg12[%c71_228, %c0_229] {strides = array<i32: 2, 1>} : memref<288x128xf32, #tpu.memory_space<vmem>>, vector<4x128xf32>
    %217 = arith.maximumf %213, %214 : vector<4x128xf32>
    %218 = arith.maximumf %215, %216 : vector<4x128xf32>
    %219 = arith.maximumf %217, %218 : vector<4x128xf32>
    %220 = arith.truncf %219 : vector<4x128xf32> to vector<4x128xbf16>
    %c25 = arith.constant 25 : index
    %c0_230 = arith.constant 0 : index
    %221 = vector.load %arg9[%c25, %c0_230] : memref<42x128xbf16, #tpu.memory_space<vmem>>, vector<4x128xbf16>
    tpu.vector_store %arg9[%c25, %c0_230], %220 {strides = array<i32>} : memref<42x128xbf16, #tpu.memory_space<vmem>>, vector<4x128xbf16>,
    %c0_231 = arith.constant 0 : index
    %c0_232 = arith.constant 0 : index
    %222 = vector.load %arg9[%c0_231, %c0_232] : memref<42x128xbf16, #tpu.memory_space<vmem>>, vector<24x128xbf16>
    %c0_233 = arith.constant 0 : index
    %c0_234 = arith.constant 0 : index
    %223 = vector.load %arg11[%c0_233, %c0_234] : memref<288x1152xbf16, #tpu.memory_space<vmem>>, vector<24x128xbf16>
    tpu.vector_store %arg11[%c0_233, %c0_234], %222 {strides = array<i32>} : memref<288x1152xbf16, #tpu.memory_space<vmem>>, vector<24x128xbf16>,
    %c1_235 = arith.constant 1 : index
    %c0_236 = arith.constant 0 : index
    %224 = vector.load %arg9[%c1_235, %c0_236] : memref<42x128xbf16, #tpu.memory_space<vmem>>, vector<24x128xbf16>
    %c0_237 = arith.constant 0 : index
    %c128_238 = arith.constant 128 : index
    %225 = vector.load %arg11[%c0_237, %c128_238] : memref<288x1152xbf16, #tpu.memory_space<vmem>>, vector<24x128xbf16>
    tpu.vector_store %arg11[%c0_237, %c128_238], %224 {strides = array<i32>} : memref<288x1152xbf16, #tpu.memory_space<vmem>>, vector<24x128xbf16>,
    %c2_239 = arith.constant 2 : index
    %c0_240 = arith.constant 0 : index
    %226 = vector.load %arg9[%c2_239, %c0_240] : memref<42x128xbf16, #tpu.memory_space<vmem>>, vector<24x128xbf16>
    %c0_241 = arith.constant 0 : index
    %c256_242 = arith.constant 256 : index
    %227 = vector.load %arg11[%c0_241, %c256_242] : memref<288x1152xbf16, #tpu.memory_space<vmem>>, vector<24x128xbf16>
    tpu.vector_store %arg11[%c0_241, %c256_242], %226 {strides = array<i32>} : memref<288x1152xbf16, #tpu.memory_space<vmem>>, vector<24x128xbf16>,
    %c6 = arith.constant 6 : index
    %c0_243 = arith.constant 0 : index
    %228 = vector.load %arg9[%c6, %c0_243] : memref<42x128xbf16, #tpu.memory_space<vmem>>, vector<24x128xbf16>
    %c0_244 = arith.constant 0 : index
    %c384_245 = arith.constant 384 : index
    %229 = vector.load %arg11[%c0_244, %c384_245] : memref<288x1152xbf16, #tpu.memory_space<vmem>>, vector<24x128xbf16>
    tpu.vector_store %arg11[%c0_244, %c384_245], %228 {strides = array<i32>} : memref<288x1152xbf16, #tpu.memory_space<vmem>>, vector<24x128xbf16>,
    %c7_246 = arith.constant 7 : index
    %c0_247 = arith.constant 0 : index
    %230 = vector.load %arg9[%c7_246, %c0_247] : memref<42x128xbf16, #tpu.memory_space<vmem>>, vector<24x128xbf16>
    %c0_248 = arith.constant 0 : index
    %c512_249 = arith.constant 512 : index
    %231 = vector.load %arg11[%c0_248, %c512_249] : memref<288x1152xbf16, #tpu.memory_space<vmem>>, vector<24x128xbf16>
    tpu.vector_store %arg11[%c0_248, %c512_249], %230 {strides = array<i32>} : memref<288x1152xbf16, #tpu.memory_space<vmem>>, vector<24x128xbf16>,
    %c8 = arith.constant 8 : index
    %c0_250 = arith.constant 0 : index
    %232 = vector.load %arg9[%c8, %c0_250] : memref<42x128xbf16, #tpu.memory_space<vmem>>, vector<24x128xbf16>
    %c0_251 = arith.constant 0 : index
    %c640_252 = arith.constant 640 : index
    %233 = vector.load %arg11[%c0_251, %c640_252] : memref<288x1152xbf16, #tpu.memory_space<vmem>>, vector<24x128xbf16>
    tpu.vector_store %arg11[%c0_251, %c640_252], %232 {strides = array<i32>} : memref<288x1152xbf16, #tpu.memory_space<vmem>>, vector<24x128xbf16>,
    %c12_253 = arith.constant 12 : index
    %c0_254 = arith.constant 0 : index
    %234 = vector.load %arg9[%c12_253, %c0_254] : memref<42x128xbf16, #tpu.memory_space<vmem>>, vector<24x128xbf16>
    %c0_255 = arith.constant 0 : index
    %c768_256 = arith.constant 768 : index
    %235 = vector.load %arg11[%c0_255, %c768_256] : memref<288x1152xbf16, #tpu.memory_space<vmem>>, vector<24x128xbf16>
    tpu.vector_store %arg11[%c0_255, %c768_256], %234 {strides = array<i32>} : memref<288x1152xbf16, #tpu.memory_space<vmem>>, vector<24x128xbf16>,
    %c13_257 = arith.constant 13 : index
    %c0_258 = arith.constant 0 : index
    %236 = vector.load %arg9[%c13_257, %c0_258] : memref<42x128xbf16, #tpu.memory_space<vmem>>, vector<24x128xbf16>
    %c0_259 = arith.constant 0 : index
    %c896_260 = arith.constant 896 : index
    %237 = vector.load %arg11[%c0_259, %c896_260] : memref<288x1152xbf16, #tpu.memory_space<vmem>>, vector<24x128xbf16>
    tpu.vector_store %arg11[%c0_259, %c896_260], %236 {strides = array<i32>} : memref<288x1152xbf16, #tpu.memory_space<vmem>>, vector<24x128xbf16>,
    %c14 = arith.constant 14 : index
    %c0_261 = arith.constant 0 : index
    %238 = vector.load %arg9[%c14, %c0_261] : memref<42x128xbf16, #tpu.memory_space<vmem>>, vector<24x128xbf16>
    %c0_262 = arith.constant 0 : index
    %c1024_263 = arith.constant 1024 : index
    %239 = vector.load %arg11[%c0_262, %c1024_263] : memref<288x1152xbf16, #tpu.memory_space<vmem>>, vector<24x128xbf16>
    tpu.vector_store %arg11[%c0_262, %c1024_263], %238 {strides = array<i32>} : memref<288x1152xbf16, #tpu.memory_space<vmem>>, vector<24x128xbf16>,
    %c0_264 = arith.constant 0 : index
    %c0_265 = arith.constant 0 : index
    %240 = vector.load %arg11[%c0_264, %c0_265] : memref<288x1152xbf16, #tpu.memory_space<vmem>>, vector<24x1152xbf16>
    %c2_266 = arith.constant 2 : index
    %c0_267 = arith.constant 0 : index
    %c0_268 = arith.constant 0 : index
    %241 = vector.load %arg2[%c2_266, %c0_267, %c0_268] : memref<4x1152x128xbf16, #tpu.memory_space<vmem>>, vector<1x1152x128xbf16>
    %242 = vector.shape_cast %241 : vector<1x1152x128xbf16> to vector<1152x128xbf16>
    %cst_269 = arith.constant dense<0.000000e+00> : vector<24x128xf32>
    %243 = tpu.matmul %240, %242, %cst_269 {dimension_numbers = #tpu.dot_dimension_numbers<[1], [0], [0], [1], [0, 0, 1, 1], [], []>} : vector<24x1152xbf16>, vector<1152x128xbf16>, vector<24x128xf32> -> vector<24x128xf32>
    %c2_270 = arith.constant 2 : index
    %c0_271 = arith.constant 0 : index
    %c0_272 = arith.constant 0 : index
    %244 = vector.load %arg3[%c2_270, %c0_271, %c0_272] : memref<4x1x128xf32, #tpu.memory_space<vmem>>, vector<1x1x128xf32>
    %245 = vector.shape_cast %244 : vector<1x1x128xf32> to vector<1x128xf32>
    %246 = vector.broadcast %245 : vector<1x128xf32> to vector<24x128xf32>
    %247 = arith.addf %243, %246 : vector<24x128xf32>
    %cst_273 = arith.constant 0.000000e+00 : f32
    %248 = vector.broadcast %cst_273 : f32 to vector<24x128xf32>
    %249 = arith.maximumf %247, %248 : vector<24x128xf32>
    %c0_274 = arith.constant 0 : index
    %c0_275 = arith.constant 0 : index
    %250 = vector.load %arg12[%c0_274, %c0_275] : memref<288x128xf32, #tpu.memory_space<vmem>>, vector<24x128xf32>
    tpu.vector_store %arg12[%c0_274, %c0_275], %249 {strides = array<i32>} : memref<288x128xf32, #tpu.memory_space<vmem>>, vector<24x128xf32>,
    %c0_276 = arith.constant 0 : index
    %c0_277 = arith.constant 0 : index
    %251 = tpu.strided_load %arg12[%c0_276, %c0_277] {strides = array<i32: 2, 1>} : memref<288x128xf32, #tpu.memory_space<vmem>>, vector<2x128xf32>
    %c1_278 = arith.constant 1 : index
    %c0_279 = arith.constant 0 : index
    %252 = tpu.strided_load %arg12[%c1_278, %c0_279] {strides = array<i32: 2, 1>} : memref<288x128xf32, #tpu.memory_space<vmem>>, vector<2x128xf32>
    %c6_280 = arith.constant 6 : index
    %c0_281 = arith.constant 0 : index
    %253 = tpu.strided_load %arg12[%c6_280, %c0_281] {strides = array<i32: 2, 1>} : memref<288x128xf32, #tpu.memory_space<vmem>>, vector<2x128xf32>
    %c7_282 = arith.constant 7 : index
    %c0_283 = arith.constant 0 : index
    %254 = tpu.strided_load %arg12[%c7_282, %c0_283] {strides = array<i32: 2, 1>} : memref<288x128xf32, #tpu.memory_space<vmem>>, vector<2x128xf32>
    %255 = arith.maximumf %251, %252 : vector<2x128xf32>
    %256 = arith.maximumf %253, %254 : vector<2x128xf32>
    %257 = arith.maximumf %255, %256 : vector<2x128xf32>
    %258 = arith.truncf %257 : vector<2x128xf32> to vector<2x128xbf16>
    %c5 = arith.constant 5 : index
    %c0_284 = arith.constant 0 : index
    %259 = vector.load %arg10[%c5, %c0_284] : memref<20x128xbf16, #tpu.memory_space<vmem>>, vector<2x128xbf16>
    tpu.vector_store %arg10[%c5, %c0_284], %258 {strides = array<i32>} : memref<20x128xbf16, #tpu.memory_space<vmem>>, vector<2x128xbf16>,
    %c12_285 = arith.constant 12 : index
    %c0_286 = arith.constant 0 : index
    %260 = tpu.strided_load %arg12[%c12_285, %c0_286] {strides = array<i32: 2, 1>} : memref<288x128xf32, #tpu.memory_space<vmem>>, vector<2x128xf32>
    %c13_287 = arith.constant 13 : index
    %c0_288 = arith.constant 0 : index
    %261 = tpu.strided_load %arg12[%c13_287, %c0_288] {strides = array<i32: 2, 1>} : memref<288x128xf32, #tpu.memory_space<vmem>>, vector<2x128xf32>
    %c18_289 = arith.constant 18 : index
    %c0_290 = arith.constant 0 : index
    %262 = tpu.strided_load %arg12[%c18_289, %c0_290] {strides = array<i32: 2, 1>} : memref<288x128xf32, #tpu.memory_space<vmem>>, vector<2x128xf32>
    %c19_291 = arith.constant 19 : index
    %c0_292 = arith.constant 0 : index
    %263 = tpu.strided_load %arg12[%c19_291, %c0_292] {strides = array<i32: 2, 1>} : memref<288x128xf32, #tpu.memory_space<vmem>>, vector<2x128xf32>
    %264 = arith.maximumf %260, %261 : vector<2x128xf32>
    %265 = arith.maximumf %262, %263 : vector<2x128xf32>
    %266 = arith.maximumf %264, %265 : vector<2x128xf32>
    %267 = arith.truncf %266 : vector<2x128xf32> to vector<2x128xbf16>
    %c9 = arith.constant 9 : index
    %c0_293 = arith.constant 0 : index
    %268 = vector.load %arg10[%c9, %c0_293] : memref<20x128xbf16, #tpu.memory_space<vmem>>, vector<2x128xbf16>
    tpu.vector_store %arg10[%c9, %c0_293], %267 {strides = array<i32>} : memref<20x128xbf16, #tpu.memory_space<vmem>>, vector<2x128xbf16>,
    %c0_294 = arith.constant 0 : index
    %c0_295 = arith.constant 0 : index
    %269 = vector.load %arg10[%c0_294, %c0_295] : memref<20x128xbf16, #tpu.memory_space<vmem>>, vector<8x128xbf16>
    %c0_296 = arith.constant 0 : index
    %c0_297 = arith.constant 0 : index
    %270 = vector.load %arg11[%c0_296, %c0_297] : memref<288x1152xbf16, #tpu.memory_space<vmem>>, vector<8x128xbf16>
    tpu.vector_store %arg11[%c0_296, %c0_297], %269 {strides = array<i32>} : memref<288x1152xbf16, #tpu.memory_space<vmem>>, vector<8x128xbf16>,
    %c1_298 = arith.constant 1 : index
    %c0_299 = arith.constant 0 : index
    %271 = vector.load %arg10[%c1_298, %c0_299] : memref<20x128xbf16, #tpu.memory_space<vmem>>, vector<8x128xbf16>
    %c0_300 = arith.constant 0 : index
    %c128_301 = arith.constant 128 : index
    %272 = vector.load %arg11[%c0_300, %c128_301] : memref<288x1152xbf16, #tpu.memory_space<vmem>>, vector<8x128xbf16>
    tpu.vector_store %arg11[%c0_300, %c128_301], %271 {strides = array<i32>} : memref<288x1152xbf16, #tpu.memory_space<vmem>>, vector<8x128xbf16>,
    %c2_302 = arith.constant 2 : index
    %c0_303 = arith.constant 0 : index
    %273 = vector.load %arg10[%c2_302, %c0_303] : memref<20x128xbf16, #tpu.memory_space<vmem>>, vector<8x128xbf16>
    %c0_304 = arith.constant 0 : index
    %c256_305 = arith.constant 256 : index
    %274 = vector.load %arg11[%c0_304, %c256_305] : memref<288x1152xbf16, #tpu.memory_space<vmem>>, vector<8x128xbf16>
    tpu.vector_store %arg11[%c0_304, %c256_305], %273 {strides = array<i32>} : memref<288x1152xbf16, #tpu.memory_space<vmem>>, vector<8x128xbf16>,
    %c4 = arith.constant 4 : index
    %c0_306 = arith.constant 0 : index
    %275 = vector.load %arg10[%c4, %c0_306] : memref<20x128xbf16, #tpu.memory_space<vmem>>, vector<8x128xbf16>
    %c0_307 = arith.constant 0 : index
    %c384_308 = arith.constant 384 : index
    %276 = vector.load %arg11[%c0_307, %c384_308] : memref<288x1152xbf16, #tpu.memory_space<vmem>>, vector<8x128xbf16>
    tpu.vector_store %arg11[%c0_307, %c384_308], %275 {strides = array<i32>} : memref<288x1152xbf16, #tpu.memory_space<vmem>>, vector<8x128xbf16>,
    %c5_309 = arith.constant 5 : index
    %c0_310 = arith.constant 0 : index
    %277 = vector.load %arg10[%c5_309, %c0_310] : memref<20x128xbf16, #tpu.memory_space<vmem>>, vector<8x128xbf16>
    %c0_311 = arith.constant 0 : index
    %c512_312 = arith.constant 512 : index
    %278 = vector.load %arg11[%c0_311, %c512_312] : memref<288x1152xbf16, #tpu.memory_space<vmem>>, vector<8x128xbf16>
    tpu.vector_store %arg11[%c0_311, %c512_312], %277 {strides = array<i32>} : memref<288x1152xbf16, #tpu.memory_space<vmem>>, vector<8x128xbf16>,
    %c6_313 = arith.constant 6 : index
    %c0_314 = arith.constant 0 : index
    %279 = vector.load %arg10[%c6_313, %c0_314] : memref<20x128xbf16, #tpu.memory_space<vmem>>, vector<8x128xbf16>
    %c0_315 = arith.constant 0 : index
    %c640_316 = arith.constant 640 : index
    %280 = vector.load %arg11[%c0_315, %c640_316] : memref<288x1152xbf16, #tpu.memory_space<vmem>>, vector<8x128xbf16>
    tpu.vector_store %arg11[%c0_315, %c640_316], %279 {strides = array<i32>} : memref<288x1152xbf16, #tpu.memory_space<vmem>>, vector<8x128xbf16>,
    %c8_317 = arith.constant 8 : index
    %c0_318 = arith.constant 0 : index
    %281 = vector.load %arg10[%c8_317, %c0_318] : memref<20x128xbf16, #tpu.memory_space<vmem>>, vector<8x128xbf16>
    %c0_319 = arith.constant 0 : index
    %c768_320 = arith.constant 768 : index
    %282 = vector.load %arg11[%c0_319, %c768_320] : memref<288x1152xbf16, #tpu.memory_space<vmem>>, vector<8x128xbf16>
    tpu.vector_store %arg11[%c0_319, %c768_320], %281 {strides = array<i32>} : memref<288x1152xbf16, #tpu.memory_space<vmem>>, vector<8x128xbf16>,
    %c9_321 = arith.constant 9 : index
    %c0_322 = arith.constant 0 : index
    %283 = vector.load %arg10[%c9_321, %c0_322] : memref<20x128xbf16, #tpu.memory_space<vmem>>, vector<8x128xbf16>
    %c0_323 = arith.constant 0 : index
    %c896_324 = arith.constant 896 : index
    %284 = vector.load %arg11[%c0_323, %c896_324] : memref<288x1152xbf16, #tpu.memory_space<vmem>>, vector<8x128xbf16>
    tpu.vector_store %arg11[%c0_323, %c896_324], %283 {strides = array<i32>} : memref<288x1152xbf16, #tpu.memory_space<vmem>>, vector<8x128xbf16>,
    %c10_325 = arith.constant 10 : index
    %c0_326 = arith.constant 0 : index
    %285 = vector.load %arg10[%c10_325, %c0_326] : memref<20x128xbf16, #tpu.memory_space<vmem>>, vector<8x128xbf16>
    %c0_327 = arith.constant 0 : index
    %c1024_328 = arith.constant 1024 : index
    %286 = vector.load %arg11[%c0_327, %c1024_328] : memref<288x1152xbf16, #tpu.memory_space<vmem>>, vector<8x128xbf16>
    tpu.vector_store %arg11[%c0_327, %c1024_328], %285 {strides = array<i32>} : memref<288x1152xbf16, #tpu.memory_space<vmem>>, vector<8x128xbf16>,
    %c0_329 = arith.constant 0 : index
    %c0_330 = arith.constant 0 : index
    %287 = vector.load %arg11[%c0_329, %c0_330] : memref<288x1152xbf16, #tpu.memory_space<vmem>>, vector<8x1152xbf16>
    %c3 = arith.constant 3 : index
    %c0_331 = arith.constant 0 : index
    %c0_332 = arith.constant 0 : index
    %288 = vector.load %arg2[%c3, %c0_331, %c0_332] : memref<4x1152x128xbf16, #tpu.memory_space<vmem>>, vector<1x1152x128xbf16>
    %289 = vector.shape_cast %288 : vector<1x1152x128xbf16> to vector<1152x128xbf16>
    %cst_333 = arith.constant dense<0.000000e+00> : vector<8x128xf32>
    %290 = tpu.matmul %287, %289, %cst_333 {dimension_numbers = #tpu.dot_dimension_numbers<[1], [0], [0], [1], [0, 0, 1, 1], [], []>} : vector<8x1152xbf16>, vector<1152x128xbf16>, vector<8x128xf32> -> vector<8x128xf32>
    %c3_334 = arith.constant 3 : index
    %c0_335 = arith.constant 0 : index
    %c0_336 = arith.constant 0 : index
    %291 = vector.load %arg3[%c3_334, %c0_335, %c0_336] : memref<4x1x128xf32, #tpu.memory_space<vmem>>, vector<1x1x128xf32>
    %292 = vector.shape_cast %291 : vector<1x1x128xf32> to vector<1x128xf32>
    %293 = vector.broadcast %292 : vector<1x128xf32> to vector<8x128xf32>
    %294 = arith.addf %290, %293 : vector<8x128xf32>
    %cst_337 = arith.constant 0.000000e+00 : f32
    %295 = vector.broadcast %cst_337 : f32 to vector<8x128xf32>
    %296 = arith.maximumf %294, %295 : vector<8x128xf32>
    %c0_338 = arith.constant 0 : index
    %c0_339 = arith.constant 0 : index
    %297 = vector.load %arg12[%c0_338, %c0_339] : memref<288x128xf32, #tpu.memory_space<vmem>>, vector<8x128xf32>
    tpu.vector_store %arg12[%c0_338, %c0_339], %296 {strides = array<i32>} : memref<288x128xf32, #tpu.memory_space<vmem>>, vector<8x128xf32>,
    %c0_340 = arith.constant 0 : index
    %c0_341 = arith.constant 0 : index
    %298 = vector.load %arg12[%c0_340, %c0_341] : memref<288x128xf32, #tpu.memory_space<vmem>>, vector<1x128xf32>
    %c1_342 = arith.constant 1 : index
    %c0_343 = arith.constant 0 : index
    %299 = vector.load %arg12[%c1_342, %c0_343] : memref<288x128xf32, #tpu.memory_space<vmem>>, vector<1x128xf32>
    %300 = arith.addf %298, %299 : vector<1x128xf32>
    %c4_344 = arith.constant 4 : index
    %c0_345 = arith.constant 0 : index
    %301 = vector.load %arg12[%c4_344, %c0_345] : memref<288x128xf32, #tpu.memory_space<vmem>>, vector<1x128xf32>
    %302 = arith.addf %300, %301 : vector<1x128xf32>
    %c5_346 = arith.constant 5 : index
    %c0_347 = arith.constant 0 : index
    %303 = vector.load %arg12[%c5_346, %c0_347] : memref<288x128xf32, #tpu.memory_space<vmem>>, vector<1x128xf32>
    %304 = arith.addf %302, %303 : vector<1x128xf32>
    %cst_348 = arith.constant 2.500000e-01 : f32
    %305 = vector.broadcast %cst_348 : f32 to vector<1x128xf32>
    %306 = arith.mulf %304, %305 : vector<1x128xf32>
    %307 = arith.truncf %306 : vector<1x128xf32> to vector<1x128xbf16>
    %c0_349 = arith.constant 0 : index
    %c0_350 = arith.constant 0 : index
    %308 = vector.load %arg4[%c0_349, %c0_350] : memref<128x128xbf16, #tpu.memory_space<vmem>>, vector<128x128xbf16>
    %cst_351 = arith.constant dense<0.000000e+00> : vector<1x128xf32>
    %309 = tpu.matmul %307, %308, %cst_351 {dimension_numbers = #tpu.dot_dimension_numbers<[1], [0], [0], [1], [0, 0, 1, 1], [], []>} : vector<1x128xbf16>, vector<128x128xbf16>, vector<1x128xf32> -> vector<1x128xf32>
    %c0_352 = arith.constant 0 : index
    %c0_353 = arith.constant 0 : index
    %310 = vector.load %arg5[%c0_352, %c0_353] : memref<1x128xf32, #tpu.memory_space<vmem>>, vector<1x128xf32>
    %311 = arith.addf %309, %310 : vector<1x128xf32>
    %c0_354 = arith.constant 0 : index
    %c0_355 = arith.constant 0 : index
    %c0_356 = arith.constant 0 : index
    %312 = vector.load %arg6[%c0_354, %c0_355, %c0_356] : memref<1x1x128xf32, #tpu.memory_space<vmem>>, vector<1x1x128xf32>
    %313 = vector.shape_cast %312 : vector<1x1x128xf32> to vector<1x128xf32>
    %314 = vector.shape_cast %311 : vector<1x128xf32> to vector<1x1x128xf32>
    tpu.vector_store %arg6[%c0_354, %c0_355, %c0_356], %314 {strides = array<i32>} : memref<1x1x128xf32, #tpu.memory_space<vmem>>, vector<1x1x128xf32>,
    return
  }
  func.func @transform_0(%arg0: i32) -> (i32, i32, i32) {
    %c0_i32 = arith.constant 0 : i32
    %c0_i32_0 = arith.constant 0 : i32
    %c0_i32_1 = arith.constant 0 : i32
    return %arg0, %c0_i32, %c0_i32_0 : i32, i32, i32
  }
  func.func @transform_1(%arg0: i32) -> (i32, i32, i32) {
    %c0_i32 = arith.constant 0 : i32
    %c0_i32_0 = arith.constant 0 : i32
    %c0_i32_1 = arith.constant 0 : i32
    %c0_i32_2 = arith.constant 0 : i32
    return %c0_i32, %c0_i32_0, %c0_i32_1 : i32, i32, i32
  }
  func.func @transform_2(%arg0: i32) -> (i32, i32, i32) {
    %c0_i32 = arith.constant 0 : i32
    %c0_i32_0 = arith.constant 0 : i32
    %c0_i32_1 = arith.constant 0 : i32
    %c0_i32_2 = arith.constant 0 : i32
    return %c0_i32, %c0_i32_0, %c0_i32_1 : i32, i32, i32
  }
  func.func @transform_3(%arg0: i32) -> (i32, i32) {
    %c0_i32 = arith.constant 0 : i32
    %c0_i32_0 = arith.constant 0 : i32
    %c0_i32_1 = arith.constant 0 : i32
    return %c0_i32, %c0_i32_0 : i32, i32
  }
  func.func @transform_4(%arg0: i32) -> (i32, i32) {
    %c0_i32 = arith.constant 0 : i32
    %c0_i32_0 = arith.constant 0 : i32
    %c0_i32_1 = arith.constant 0 : i32
    return %c0_i32, %c0_i32_0 : i32, i32
  }
  func.func @transform_5(%arg0: i32) -> (i32, i32, i32) {
    %c0_i32 = arith.constant 0 : i32
    %c0_i32_0 = arith.constant 0 : i32
    %c0_i32_1 = arith.constant 0 : i32
    return %arg0, %c0_i32, %c0_i32_0 : i32, i32, i32
  }
}

</mosaic_0001>

<llo_original>
// kernel: a_call__.1
$region0: #{a_call__.1}
  #allocation0 [shape = 'u32[]', space=smem, size = 0x4, offset = 0x4, fixed_abs, tag = 'smem constant byte address 0x4 - core index']
  #allocation1 [shape = 'u32[144,128]{1,0:T(1,128)}', space=vmem, size = 0x12000, scoped, tag = 'internal scratch']
  #allocation2 [shape = 'bf16[342,128]{1,0:T(8,128)(2,1)}', space=vmem, size = 0x15800, scoped, tag = 'scratch operand']
  #allocation3 [shape = 'bf16[110,128]{1,0:T(8,128)(2,1)}', space=vmem, size = 0x7000, scoped, tag = 'scratch operand']
  #allocation4 [shape = 'bf16[42,128]{1,0:T(8,128)(2,1)}', space=vmem, size = 0x3000, scoped, tag = 'scratch operand']
  #allocation5 [shape = 'bf16[20,128]{1,0:T(8,128)(2,1)}', space=vmem, size = 0x1800, scoped, tag = 'scratch operand']
  #allocation6 [shape = 'bf16[288,1152]{1,0:T(8,128)(2,1)}', space=vmem, size = 0xa2000, scoped, tag = 'scratch operand']
  #allocation7 [shape = 'f32[288,128]{1,0:T(8,128)}', space=vmem, size = 0x24000, scoped, tag = 'scratch operand']
  %s0 = inlined_call_operand.vmem [shape: bf16[2,256,128], index: 0, kind: input, shape index: {}]
  %s1 = inlined_call_operand.hbm [shape: bf16[4,1152,128], index: 1, kind: input, shape index: {}]
  %s2 = inlined_call_operand.vmem [shape: f32[4,1,128], index: 2, kind: input, shape index: {}]
  %s3 = inlined_call_operand.hbm [shape: bf16[128,128], index: 3, kind: input, shape index: {}]
  %s4 = inlined_call_operand.vmem [shape: f32[1,128], index: 4, kind: input, shape index: {}]
  %s5 = inlined_call_operand.hbm [shape: f32[2,1,128], index: 5, kind: output, shape index: {}]
  %s6 = sld [smem:[#allocation0]]
  $region61: #{a_call__.1} parent=0
    _
  %s8 = ssub.s32 1, %s6
  %s9 = scalar_select 0, %s8, %s6
  $region1: #{a_call__.1} parent=0
    #allocation8 [shape = 'u8[1179648]{0}', space=vmem, size = 0x120000, scoped, tag = 'input window, operand 1, single buffered']
    #allocation9 [shape = 's32[2]{0}', space=sflag, size = 0x8, scoped, tag = 'scoped memory for a_call__.1']
    #allocation10 [shape = 's32[2]{0}', space=sflag, size = 0x8, scoped, tag = 'scoped memory for a_call__.1']
    #allocation11 [shape = 'u8[32768]{0}', space=vmem, size = 0x8000, scoped, tag = 'input window, operand 3, single buffered']
    #allocation12 [shape = 's32[1]{0}', space=sflag, size = 0x4, scoped, tag = 'scoped memory for a_call__.1']
    #allocation13 [shape = 'u8[1024]{0}', space=vmem, size = 0x400, scoped, tag = 'output window, operand 0']
    %10 = vsyncpa [#allocation9], 0
    %11 = vsyncpa [#allocation12], 0
    %12 = vsyncpa [#allocation10], 0
    %s13 = scalar_lea.sflag [#allocation10], 1
    %14 = vsyncpa %s13, 0
    loop: start=0, step=1, limit=4
    $region2: #{a_call__.1} parent=1 // loop_pre_header
      _
    $region3: #{a_call__.1} parent=1 // loop_header
      %s16 = sphi 0, %s20
      %p17 = scmp.ge.s32.totalorder %s16, 4
      %s26 = sphi 0, %s28
      %s29 = sphi 0, %s26
      %s30 = sphi 0, %s29
      %s46 = sphi 0, %s30
      %s50 = sphi 0, %s50
      %s52 = sphi 0, %s50
      %s53 = sphi 0, %s52
      %s67 = sphi 0, %s53
      %s71 = sphi 0, %s71
      %s73 = sphi 0, %s71
      %s74 = sphi 0, %s73
      %s88 = sphi 0, %s74
      %s92 = sphi 0, %s92
      %s94 = sphi 0, %s92
      %s95 = sphi 0, %s94
      %s109 = sphi 0, %s95
      %s113 = sphi 0, %s113
      %s115 = sphi 0, %s113
      %s116 = sphi 0, %s115
      %s130 = sphi 0, %s116
      %s136 = sphi 0, %s138
      %s139 = sphi 0, %s136
      %s140 = sphi 0, %s139
      %s156 = sphi 0, %s140
    $region4: #{a_call__.1} parent=1 // loop_header_branch
      %19 = sbr.rel (%p17) target = $region8
    $region5: #{a_call__.1} parent=1 // loop_body
      %s21 = ssub.s32 %s16, 1
      %s22 = ssub.s32 %s16, 2
      %s23 = sadd.s32 %s16, 1
      %s24 = ssub.s32 %s16, %s23
      %p25 = scmp.eq.s32.totalorder %s24, 0
      %s27 = sadd.s32 %s26, 1
      %s28 = scalar_select %p25, %s26, %s27
      %p31 = pneg %p25
      %p32 = scmp.eq.s32.totalorder %s16, 1
      %p33 = por %p31, %p32
      %p34 = scmp.ne.s32.totalorder %s26, %s29
      %p35 = scmp.eq.s32.totalorder %s16, 0
      %p36 = por %p34, %p35
      %p37 = scmp.ne.s32.totalorder %s26, %s29
      %p38 = scmp.eq.s32.totalorder %s21, 1
      %p39 = por %p37, %p38
      %p40 = scmp.ne.s32.totalorder %s29, %s30
      %p41 = scmp.eq.s32.totalorder %s21, 0
      %p42 = por %p40, %p41
      %p43 = scmp.ne.s32.totalorder %s29, %s30
      %p44 = scmp.eq.s32.totalorder %s22, 1
      %p45 = por %p43, %p44
      %p47 = scmp.ne.s32.totalorder %s30, %s46
      %p48 = scmp.eq.s32.totalorder %s22, 0
      %p49 = por %p47, %p48
      %s51 = sadd.s32 %s50, 1
      %p54 = scmp.eq.s32.totalorder %s16, 1
      %p55 = scmp.ne.s32.totalorder %s50, %s52
      %p56 = scmp.eq.s32.totalorder %s16, 0
      %p57 = por %p55, %p56
      %p58 = scmp.ne.s32.totalorder %s50, %s52
      %p59 = scmp.eq.s32.totalorder %s21, 1
      %p60 = por %p58, %p59
      %p61 = scmp.ne.s32.totalorder %s52, %s53
      %p62 = scmp.eq.s32.totalorder %s21, 0
      %p63 = por %p61, %p62
      %p64 = scmp.ne.s32.totalorder %s52, %s53
      %p65 = scmp.eq.s32.totalorder %s22, 1
      %p66 = por %p64, %p65
      %p68 = scmp.ne.s32.totalorder %s53, %s67
      %p69 = scmp.eq.s32.totalorder %s22, 0
      %p70 = por %p68, %p69
      %s72 = sadd.s32 %s71, 1
      %p75 = scmp.eq.s32.totalorder %s16, 1
      %p76 = scmp.ne.s32.totalorder %s71, %s73
      %p77 = scmp.eq.s32.totalorder %s16, 0
      %p78 = por %p76, %p77
      %p79 = scmp.ne.s32.totalorder %s71, %s73
      %p80 = scmp.eq.s32.totalorder %s21, 1
      %p81 = por %p79, %p80
      %p82 = scmp.ne.s32.totalorder %s73, %s74
      %p83 = scmp.eq.s32.totalorder %s21, 0
      %p84 = por %p82, %p83
      %p85 = scmp.ne.s32.totalorder %s73, %s74
      %p86 = scmp.eq.s32.totalorder %s22, 1
      %p87 = por %p85, %p86
      %p89 = scmp.ne.s32.totalorder %s74, %s88
      %p90 = scmp.eq.s32.totalorder %s22, 0
      %p91 = por %p89, %p90
      %s93 = sadd.s32 %s92, 1
      %p96 = scmp.eq.s32.totalorder %s16, 1
      %p97 = scmp.ne.s32.totalorder %s92, %s94
      %p98 = scmp.eq.s32.totalorder %s16, 0
      %p99 = por %p97, %p98
      %p100 = scmp.ne.s32.totalorder %s92, %s94
      %p101 = scmp.eq.s32.totalorder %s21, 1
      %p102 = por %p100, %p101
      %p103 = scmp.ne.s32.totalorder %s94, %s95
      %p104 = scmp.eq.s32.totalorder %s21, 0
      %p105 = por %p103, %p104
      %p106 = scmp.ne.s32.totalorder %s94, %s95
      %p107 = scmp.eq.s32.totalorder %s22, 1
      %p108 = por %p106, %p107
      %p110 = scmp.ne.s32.totalorder %s95, %s109
      %p111 = scmp.eq.s32.totalorder %s22, 0
      %p112 = por %p110, %p111
      %s114 = sadd.s32 %s113, 1
      %p117 = scmp.eq.s32.totalorder %s16, 1
      %p118 = scmp.ne.s32.totalorder %s113, %s115
      %p119 = scmp.eq.s32.totalorder %s16, 0
      %p120 = por %p118, %p119
      %p121 = scmp.ne.s32.totalorder %s113, %s115
      %p122 = scmp.eq.s32.totalorder %s21, 1
      %p123 = por %p121, %p122
      %p124 = scmp.ne.s32.totalorder %s115, %s116
      %p125 = scmp.eq.s32.totalorder %s21, 0
      %p126 = por %p124, %p125
      %p127 = scmp.ne.s32.totalorder %s115, %s116
      %p128 = scmp.eq.s32.totalorder %s22, 1
      %p129 = por %p127, %p128
      %p131 = scmp.ne.s32.totalorder %s116, %s130
      %p132 = scmp.eq.s32.totalorder %s22, 0
      %p133 = por %p131, %p132
      %s134 = ssub.s32 %s16, %s23
      %p135 = scmp.eq.s32.totalorder %s134, 0
      %s137 = sadd.s32 %s136, 1
      %s138 = scalar_select %p135, %s136, %s137
      %p141 = pneg %p135
      %p142 = scmp.eq.s32.totalorder %s16, 1
      %p143 = por %p141, %p142
      %p144 = scmp.ne.s32.totalorder %s136, %s139
      %p145 = scmp.eq.s32.totalorder %s16, 0
      %p146 = por %p144, %p145
      %p147 = scmp.ne.s32.totalorder %s136, %s139
      %p148 = scmp.eq.s32.totalorder %s21, 1
      %p149 = por %p147, %p148
      %p150 = scmp.ne.s32.totalorder %s139, %s140
      %p151 = scmp.eq.s32.totalorder %s21, 0
      %p152 = por %p150, %p151
      %p153 = scmp.ne.s32.totalorder %s139, %s140
      %p154 = scmp.eq.s32.totalorder %s22, 1
      %p155 = por %p153, %p154
      %p157 = scmp.ne.s32.totalorder %s140, %s156
      %p158 = scmp.eq.s32.totalorder %s22, 0
      %p159 = por %p157, %p158
      %p160 = scmp.le.s32.totalorder 1, %s16
      %p161 = scmp.lt.s32.totalorder %s16, 3
      %p162 = pnand %p160, %p161
      %p163 = pneg %p162
      // Predicated region
      $region9: #{a_call__.1} parent=5 // pred_check
        _
      $region10: #{a_call__.1} parent=5 // pred_check_branch
        %165 = sbr.rel (%p162) target = $region12
      $region11: #{a_call__.1} parent=5 // pred_region
        %s166 = ssub.s32 %s16, 1
        // Predicated region
        $region13: #{a_call__.1} parent=11 // pred_check
          %p167 = pneg %p63
        $region14: #{a_call__.1} parent=11 // pred_check_branch
          %169 = sbr.rel (%p167) target = $region16
        $region15: #{a_call__.1} parent=11 // pred_region
          %s171 = ssub.s32 36864, 36864
          %172 = vsyncadd [#allocation9], %s171
          %s173 = sshll.u32 [#allocation8], 4
          %s174 = int_to_ptr.vmem [resolvable:$true] %s173
          %179 = dma.hbm_to_vmem [thread:$0]  %s1, 36864, %s174, [#allocation9], 64, 64, 4
        $region16: #{a_call__.1} parent=11 // pred_fallthru
          _
        // Predicated region
        $region17: #{a_call__.1} parent=11 // pred_check
          %p180 = pneg %p84
        $region18: #{a_call__.1} parent=11 // pred_check_branch
          %182 = sbr.rel (%p180) target = $region20
        $region19: #{a_call__.1} parent=11 // pred_region
          _
        $region20: #{a_call__.1} parent=11 // pred_fallthru
          _
        // Predicated region
        $region21: #{a_call__.1} parent=11 // pred_check
          %p183 = pneg %p105
        $region22: #{a_call__.1} parent=11 // pred_check_branch
          %185 = sbr.rel (%p183) target = $region24
        $region23: #{a_call__.1} parent=11 // pred_region
          %s187 = ssub.s32 1024, 1024
          %188 = vsyncadd [#allocation12], %s187
          %s189 = sshll.u32 [#allocation11], 4
          %s190 = int_to_ptr.vmem [resolvable:$true] %s189
          %195 = dma.hbm_to_vmem [thread:$0]  %s3, 1024, %s190, [#allocation12], 64, 64, 4
        $region24: #{a_call__.1} parent=11 // pred_fallthru
          _
        // Predicated region
        $region25: #{a_call__.1} parent=11 // pred_check
          %p196 = pneg %p126
        $region26: #{a_call__.1} parent=11 // pred_check_branch
          %198 = sbr.rel (%p196) target = $region28
        $region27: #{a_call__.1} parent=11 // pred_region
          _
        $region28: #{a_call__.1} parent=11 // pred_fallthru
          _
      $region12: #{a_call__.1} parent=5 // pred_fallthru
        _
      %p199 = scmp.lt.s32.totalorder %s16, 2
      // Predicated region
      $region29: #{a_call__.1} parent=5 // pred_check
        %p200 = pneg %p199
      $region30: #{a_call__.1} parent=5 // pred_check_branch
        %202 = sbr.rel (%p200) target = $region32
      $region31: #{a_call__.1} parent=5 // pred_region
        // Predicated region
        $region33: #{a_call__.1} parent=31 // pred_check
          %p203 = pneg %p36
        $region34: #{a_call__.1} parent=31 // pred_check_branch
          %205 = sbr.rel (%p203) target = $region36
        $region35: #{a_call__.1} parent=31 // pred_region
          %p206 = scmp.lt.s32.totalorder %s16, 1
          %s207 = scalar_select %p206, %s16, 1
          %s208 = smul.addr %s207, 32
          %s209 = smul.addr %s208, 4
          %s210 = scalar_lea.vmem %s0, %s209
        $region36: #{a_call__.1} parent=31 // pred_fallthru
          _
      $region32: #{a_call__.1} parent=5 // pred_fallthru
        _
      %p211 = scmp.le.s32.totalorder 1, %s16
      %p212 = scmp.lt.s32.totalorder %s16, 3
      %p213 = pnand %p211, %p212
      %p214 = pneg %p213
      // Predicated region
      $region37: #{a_call__.1} parent=5 // pred_check
        _
      $region38: #{a_call__.1} parent=5 // pred_check_branch
        %216 = sbr.rel (%p213) target = $region40
      $region39: #{a_call__.1} parent=5 // pred_region
        %s217 = ssub.s32 %s16, 1
        // Predicated region
        $region41: #{a_call__.1} parent=39 // pred_check
          %p218 = pneg %p63
        $region42: #{a_call__.1} parent=39 // pred_check_branch
          %220 = sbr.rel (%p218) target = $region44
        $region43: #{a_call__.1} parent=39 // pred_region
          %221 = dma.done [#allocation9], 36864
        $region44: #{a_call__.1} parent=39 // pred_fallthru
          _
        // Predicated region
        $region45: #{a_call__.1} parent=39 // pred_check
          %p222 = pneg %p105
        $region46: #{a_call__.1} parent=39 // pred_check_branch
          %224 = sbr.rel (%p222) target = $region48
        $region47: #{a_call__.1} parent=39 // pred_region
          %225 = dma.done [#allocation12], 1024
        $region48: #{a_call__.1} parent=39 // pred_fallthru
          _
        %p226 = scmp.lt.s32.totalorder %s21, 1
        %s227 = scalar_select %p226, %s21, 1
        %s228 = smul.addr %s227, 32
        %s229 = smul.addr %s228, 4
        %s230 = scalar_lea.vmem %s0, %s229
        %p231 = pneg %p42
        %p232 = pneg %p39
        %p233 = pneg %p63
        %p234 = pneg %p60
        %p235 = pneg %p84
        %p236 = pneg %p81
        %p237 = pneg %p105
        %p238 = pneg %p102
        %p239 = pneg %p126
        %p240 = pneg %p123
        %p241 = pneg %p152
        %p242 = pneg %p149
        %s243 = sand.u32 %s139, 1
        %s244 = scalar_lea.sflag [#allocation10], %s243
        %s245 = sand.u32 %s139, 1
        %s246 = scalar_lea.vmem [#allocation13], %s245
        %p247 = scmp.lt.s32.totalorder %s21, 1
        %s248 = scalar_select %p247, %s21, 1
        %s249 = smul.addr %s248, 32
        %s250 = smul.addr %s249, 4
        %s251 = scalar_lea.vmem %s0, %s250
        %253 = vst [vmem:[#allocation2] sm:$0xf] 0
        %254 = vst [vmem:[#allocation2 + $0x4] sm:$0xf] 0
        %255 = vst [vmem:[#allocation2 + $0x8] sm:$0xf] 0
        %256 = vst [vmem:[#allocation2 + $0xc] sm:$0xf] 0
        %257 = vst [vmem:[#allocation2 + $0x10] sm:$0xf] 0
        %258 = vst [vmem:[#allocation2 + $0x14] sm:$0xf] 0
        %259 = vst [vmem:[#allocation2 + $0x18] sm:$0xf] 0
        %260 = vst [vmem:[#allocation2 + $0x1c] sm:$0xf] 0
        %261 = vst [vmem:[#allocation2 + $0x20] sm:$0xf] 0
        %262 = vst [vmem:[#allocation2 + $0x24] sm:$0xf] 0
        %263 = vst [vmem:[#allocation2 + $0x28] sm:$0xf] 0
        %264 = vst [vmem:[#allocation2 + $0x2c] sm:$0xf] 0
        %265 = vst [vmem:[#allocation2 + $0x30] sm:$0xf] 0
        %266 = vst [vmem:[#allocation2 + $0x34] sm:$0xf] 0
        %267 = vst [vmem:[#allocation2 + $0x38] sm:$0xf] 0
        %268 = vst [vmem:[#allocation2 + $0x3c] sm:$0xf] 0
        %269 = vst [vmem:[#allocation2 + $0x40] sm:$0xf] 0
        %270 = vst [vmem:[#allocation2 + $0x44] sm:$0xf] 0
        %271 = vst [vmem:[#allocation2 + $0x48] sm:$0xf] 0
        %272 = vst [vmem:[#allocation2 + $0x4c] sm:$0xf] 0
        %273 = vst [vmem:[#allocation2 + $0x50] sm:$0xf] 0
        %274 = vst [vmem:[#allocation2 + $0x54] sm:$0xf] 0
        %275 = vst [vmem:[#allocation2 + $0x58] sm:$0xf] 0
        %276 = vst [vmem:[#allocation2 + $0x5c] sm:$0xf] 0
        %277 = vst [vmem:[#allocation2 + $0x60] sm:$0xf] 0
        %278 = vst [vmem:[#allocation2 + $0x64] sm:$0xf] 0
        %279 = vst [vmem:[#allocation2 + $0x68] sm:$0xf] 0
        %280 = vst [vmem:[#allocation2 + $0x6c] sm:$0xf] 0
        %281 = vst [vmem:[#allocation2 + $0x70] sm:$0xf] 0
        %282 = vst [vmem:[#allocation2 + $0x74] sm:$0xf] 0
        %283 = vst [vmem:[#allocation2 + $0x78] sm:$0xf] 0
        %284 = vst [vmem:[#allocation2 + $0x7c] sm:$0xf] 0
        %285 = vst [vmem:[#allocation2 + $0x80] sm:$0xf] 0
        %286 = vst [vmem:[#allocation2 + $0x84] sm:$0xf] 0
        %287 = vst [vmem:[#allocation2 + $0x88] sm:$0xf] 0
        %288 = vst [vmem:[#allocation2 + $0x8c] sm:$0xf] 0
        %289 = vst [vmem:[#allocation2 + $0x90] sm:$0xf] 0
        %290 = vst [vmem:[#allocation2 + $0x94] sm:$0xf] 0
        %291 = vst [vmem:[#allocation2 + $0x98] sm:$0xf] 0
        %292 = vst [vmem:[#allocation2 + $0x9c] sm:$0xf] 0
        %293 = vst [vmem:[#allocation2 + $0xa0] sm:$0xf] 0
        %294 = vst [vmem:[#allocation2 + $0xa4] sm:$0xf] 0
        %295 = vst [vmem:[#allocation2 + $0xa8] sm:$0x7] 0
        %296 = vst [vmem:[#allocation3] sm:$0xf] 0
        %297 = vst [vmem:[#allocation3 + $0x4] sm:$0xf] 0
        %298 = vst [vmem:[#allocation3 + $0x8] sm:$0xf] 0
        %299 = vst [vmem:[#allocation3 + $0xc] sm:$0xf] 0
        %300 = vst [vmem:[#allocation3 + $0x10] sm:$0xf] 0
        %301 = vst [vmem:[#allocation3 + $0x14] sm:$0xf] 0
        %302 = vst [vmem:[#allocation3 + $0x18] sm:$0xf] 0
        %303 = vst [vmem:[#allocation3 + $0x1c] sm:$0xf] 0
        %304 = vst [vmem:[#allocation3 + $0x20] sm:$0xf] 0
        %305 = vst [vmem:[#allocation3 + $0x24] sm:$0xf] 0
        %306 = vst [vmem:[#allocation3 + $0x28] sm:$0xf] 0
        %307 = vst [vmem:[#allocation3 + $0x2c] sm:$0xf] 0
        %308 = vst [vmem:[#allocation3 + $0x30] sm:$0xf] 0
        %309 = vst [vmem:[#allocation3 + $0x34] sm:$0x7] 0
        %310 = vst [vmem:[#allocation4] sm:$0xf] 0
        %311 = vst [vmem:[#allocation4 + $0x4] sm:$0xf] 0
        %312 = vst [vmem:[#allocation4 + $0x8] sm:$0xf] 0
        %313 = vst [vmem:[#allocation4 + $0xc] sm:$0xf] 0
        %314 = vst [vmem:[#allocation4 + $0x10] sm:$0xf] 0
        %315 = vst [vmem:[#allocation4 + $0x14] sm:$0x1] 0
        %316 = vst [vmem:[#allocation5] sm:$0xf] 0
        %317 = vst [vmem:[#allocation5 + $0x4] sm:$0xf] 0
        %318 = vst [vmem:[#allocation5 + $0x8] sm:$0x3] 0
        %v319 = vld [vmem:[%s251] sm:$0xf]
        %v320 = vld [vmem:[%s251 + $0x4] sm:$0xf]
        %vm321 = vsmask.f32 1280
        %vm322 = vsmask.f32 5392
        %vm323 = vmor %vm321, %vm322
        %v325 = vshrl.u32 %v319, 16
        %v327 = vrot.slane %v325, 6
        %v328 = vshll.u32 %v319, 16
        %v330 = vrot.slane %v328, 7
        %v331 = vor.u32 %v327, %v330
        %v332 = vrot.slane %v331, 4
        %v334 = vshrl.u32 %v320, 16
        %v336 = vrot.slane %v334, 6
        %v337 = vshll.u32 %v320, 16
        %v339 = vrot.slane %v337, 7
        %v340 = vor.u32 %v336, %v339
        %v341 = vsel %vm323, %v332, %v340
        %v342 = vrot.slane %v340, 4
        %vm346 = vcmask 1043457
        %vm347 = vsmask.f32 7942
        %vm348 = vmand %vm346, %vm347
        %v349 = vld [vmem:[#allocation2 + $0x8] sm:$0xe]
        %v350 = vsel %vm348, %v331, %v349
        %351 = vst [vmem:[#allocation2 + $0x8] sm:$0xe] %v350
        %352 = vst [vmem:[#allocation2 + $0xc] sm:$0xf] %v341
        %vm353 = vcmask 1041408
        %vm354 = vmand %vm353, %vm321
        %v355 = vld [vmem:[#allocation2 + $0x10] sm:$0x3]
        %v356 = vsel %vm354, %v342, %v355
        %357 = vst [vmem:[#allocation2 + $0x10] sm:$0x3] %v356
        %v358 = vld [vmem:[%s251 + $0x8] sm:$0xf]
        %v359 = vld [vmem:[%s251 + $0xc] sm:$0xf]
        %vm360 = vsmask.f32 2304
        %vm361 = vsmask.f32 6416
        %vm362 = vmor %vm360, %vm361
        %v364 = vshrl.u32 %v358, 16
        %v366 = vrot.slane %v364, 5
        %v367 = vshll.u32 %v358, 16
        %v369 = vrot.slane %v367, 6
        %v370 = vor.u32 %v366, %v369
        %v371 = vrot.slane %v370, 4
        %v373 = vshrl.u32 %v359, 16
        %v375 = vrot.slane %v373, 5
        %v376 = vshll.u32 %v359, 16
        %v378 = vrot.slane %v376, 6
        %v379 = vor.u32 %v375, %v378
        %v380 = vsel %vm362, %v371, %v379
        %v381 = vrot.slane %v379, 4
        %vm385 = vcmask 1043458
        %vm386 = vsmask.f32 7946
        %vm387 = vmand %vm385, %vm386
        %v388 = vld [vmem:[#allocation2 + $0x10] sm:$0xc]
        %v389 = vsel %vm387, %v370, %v388
        %390 = vst [vmem:[#allocation2 + $0x10] sm:$0xc] %v389
        %391 = vst [vmem:[#allocation2 + $0x14] sm:$0xf] %v380
        %vm392 = vcmask 1042432
        %vm393 = vmand %vm392, %vm360
        %v394 = vld [vmem:[#allocation2 + $0x18] sm:$0x7]
        %v395 = vsel %vm393, %v381, %v394
        %396 = vst [vmem:[#allocation2 + $0x18] sm:$0x7] %v395
        %v397 = vld [vmem:[%s251 + $0x10] sm:$0xf]
        %v398 = vld [vmem:[%s251 + $0x14] sm:$0xf]
        %vm399 = vsmask.f32 3328
        %vm400 = vsmask.f32 7440
        %vm401 = vmor %vm399, %vm400
        %v403 = vshll.u32 %v397, 16
        %v405 = vrot.slane %v403, 5
        %v406 = vshrl.u32 %v397, 16
        %v408 = vrot.slane %v406, 4
        %v409 = vor.u32 %v408, %v405
        %v410 = vrot.slane %v409, 4
        %v412 = vshll.u32 %v398, 16
        %v414 = vrot.slane %v412, 5
        %v415 = vsel %vm401, %v410, %v414
        %v416 = vshrl.u32 %v398, 16
        %v418 = vrot.slane %v416, 4
        %v419 = vor.u32 %v418, %v414
        %v420 = vrot.slane %v419, 4
        %vm424 = vcmask 1043459
        %vm425 = vsmask.f32 7950
        %vm426 = vmand %vm424, %vm425
        %v427 = vld [vmem:[#allocation2 + $0x18] sm:$0x8]
        %v428 = vsel %vm426, %v405, %v427
        %429 = vst [vmem:[#allocation2 + $0x18] sm:$0x8] %v428
        %430 = vst [vmem:[#allocation2 + $0x1c] sm:$0xf] %v415
        %vm431 = vcmask 1043456
        %vm432 = vmand %vm431, %vm399
        %v433 = vld [vmem:[#allocation2 + $0x20] sm:$0xf]
        %v434 = vsel %vm432, %v420, %v433
        %435 = vst [vmem:[#allocation2 + $0x20] sm:$0xf] %v434
        %v436 = vld [vmem:[%s251 + $0x18] sm:$0xf]
        %v437 = vld [vmem:[%s251 + $0x1c] sm:$0xf]
        %vm438 = vsmask.f32 256
        %vm439 = vsmask.f32 4368
        %vm440 = vmor %vm438, %vm439
        %v442 = vshrl.u32 %v436, 16
        %v444 = vrot.slane %v442, 7
        %v445 = vshll.u32 %v436, 16
        %v447 = vor.u32 %v444, %v445
        %v448 = vrot.slane %v444, 4
        %v450 = vshrl.u32 %v437, 16
        %v452 = vrot.slane %v450, 7
        %v453 = vshll.u32 %v437, 16
        %v455 = vor.u32 %v452, %v453
        %v456 = vsel %vm440, %v448, %v455
        %v457 = vrot.slane %v452, 4
        %vm461 = vsmask.f32 7938
        %vm462 = vmand %vm431, %vm461
        %v463 = vld [vmem:[#allocation2 + $0x24] sm:$0xf]
        %v464 = vsel %vm462, %v447, %v463
        %465 = vst [vmem:[#allocation2 + $0x24] sm:$0xf] %v464
        %466 = vst [vmem:[#allocation2 + $0x28] sm:$0xf] %v456
        %vm467 = vcmask 1040384
        %vm468 = vmand %vm467, %vm438
        %v469 = vld [vmem:[#allocation2 + $0x2c] sm:$0x1]
        %v470 = vsel %vm468, %v457, %v469
        %471 = vst [vmem:[#allocation2 + $0x2c] sm:$0x1] %v470
        %v472 = vld [vmem:[%s251 + $0x20] sm:$0xf]
        %v473 = vld [vmem:[%s251 + $0x24] sm:$0xf]
        %v475 = vshrl.u32 %v472, 16
        %v477 = vrot.slane %v475, 6
        %v478 = vshll.u32 %v472, 16
        %v480 = vrot.slane %v478, 7
        %v481 = vor.u32 %v477, %v480
        %v482 = vrot.slane %v481, 4
        %v484 = vshrl.u32 %v473, 16
        %v486 = vrot.slane %v484, 6
        %v487 = vshll.u32 %v473, 16
        %v489 = vrot.slane %v487, 7
        %v490 = vor.u32 %v486, %v489
        %v491 = vsel %vm323, %v482, %v490
        %v492 = vrot.slane %v490, 4
        %v496 = vld [vmem:[#allocation2 + $0x2c] sm:$0xe]
        %v497 = vsel %vm348, %v481, %v496
        %498 = vst [vmem:[#allocation2 + $0x2c] sm:$0xe] %v497
        %499 = vst [vmem:[#allocation2 + $0x30] sm:$0xf] %v491
        %v500 = vld [vmem:[#allocation2 + $0x34] sm:$0x3]
        %v501 = vsel %vm354, %v492, %v500
        %502 = vst [vmem:[#allocation2 + $0x34] sm:$0x3] %v501
        %v503 = vld [vmem:[%s251 + $0x28] sm:$0xf]
        %v504 = vld [vmem:[%s251 + $0x2c] sm:$0xf]
        %v506 = vshrl.u32 %v503, 16
        %v508 = vrot.slane %v506, 5
        %v509 = vshll.u32 %v503, 16
        %v511 = vrot.slane %v509, 6
        %v512 = vor.u32 %v508, %v511
        %v513 = vrot.slane %v512, 4
        %v515 = vshrl.u32 %v504, 16
        %v517 = vrot.slane %v515, 5
        %v518 = vshll.u32 %v504, 16
        %v520 = vrot.slane %v518, 6
        %v521 = vor.u32 %v517, %v520
        %v522 = vsel %vm362, %v513, %v521
        %v523 = vrot.slane %v521, 4
        %v527 = vld [vmem:[#allocation2 + $0x34] sm:$0xc]
        %v528 = vsel %vm387, %v512, %v527
        %529 = vst [vmem:[#allocation2 + $0x34] sm:$0xc] %v528
        %530 = vst [vmem:[#allocation2 + $0x38] sm:$0xf] %v522
        %v531 = vld [vmem:[#allocation2 + $0x3c] sm:$0x7]
        %v532 = vsel %vm393, %v523, %v531
        %533 = vst [vmem:[#allocation2 + $0x3c] sm:$0x7] %v532
        %v534 = vld [vmem:[%s251 + $0x30] sm:$0xf]
        %v535 = vld [vmem:[%s251 + $0x34] sm:$0xf]
        %v537 = vshll.u32 %v534, 16
        %v539 = vrot.slane %v537, 5
        %v540 = vshrl.u32 %v534, 16
        %v542 = vrot.slane %v540, 4
        %v543 = vor.u32 %v542, %v539
        %v544 = vrot.slane %v543, 4
        %v546 = vshll.u32 %v535, 16
        %v548 = vrot.slane %v546, 5
        %v549 = vsel %vm401, %v544, %v548
        %v550 = vshrl.u32 %v535, 16
        %v552 = vrot.slane %v550, 4
        %v553 = vor.u32 %v552, %v548
        %v554 = vrot.slane %v553, 4
        %v558 = vld [vmem:[#allocation2 + $0x3c] sm:$0x8]
        %v559 = vsel %vm426, %v539, %v558
        %560 = vst [vmem:[#allocation2 + $0x3c] sm:$0x8] %v559
        %561 = vst [vmem:[#allocation2 + $0x40] sm:$0xf] %v549
        %v562 = vld [vmem:[#allocation2 + $0x44] sm:$0xf]
        %v563 = vsel %vm432, %v554, %v562
        %564 = vst [vmem:[#allocation2 + $0x44] sm:$0xf] %v563
        %v565 = vld [vmem:[%s251 + $0x38] sm:$0xf]
        %v566 = vld [vmem:[%s251 + $0x3c] sm:$0xf]
        %v568 = vshrl.u32 %v565, 16
        %v570 = vrot.slane %v568, 7
        %v571 = vshll.u32 %v565, 16
        %v573 = vor.u32 %v570, %v571
        %v574 = vrot.slane %v570, 4
        %v576 = vshrl.u32 %v566, 16
        %v578 = vrot.slane %v576, 7
        %v579 = vshll.u32 %v566, 16
        %v581 = vor.u32 %v578, %v579
        %v582 = vsel %vm440, %v574, %v581
        %v583 = vrot.slane %v578, 4
        %v587 = vld [vmem:[#allocation2 + $0x48] sm:$0xf]
        %v588 = vsel %vm462, %v573, %v587
        %589 = vst [vmem:[#allocation2 + $0x48] sm:$0xf] %v588
        %590 = vst [vmem:[#allocation2 + $0x4c] sm:$0xf] %v582
        %v591 = vld [vmem:[#allocation2 + $0x50] sm:$0x1]
        %v592 = vsel %vm468, %v583, %v591
        %593 = vst [vmem:[#allocation2 + $0x50] sm:$0x1] %v592
        %v594 = vld [vmem:[%s251 + $0x40] sm:$0xf]
        %v595 = vld [vmem:[%s251 + $0x44] sm:$0xf]
        %v597 = vshrl.u32 %v594, 16
        %v599 = vrot.slane %v597, 6
        %v600 = vshll.u32 %v594, 16
        %v602 = vrot.slane %v600, 7
        %v603 = vor.u32 %v599, %v602
        %v604 = vrot.slane %v603, 4
        %v606 = vshrl.u32 %v595, 16
        %v608 = vrot.slane %v606, 6
        %v609 = vshll.u32 %v595, 16
        %v611 = vrot.slane %v609, 7
        %v612 = vor.u32 %v608, %v611
        %v613 = vsel %vm323, %v604, %v612
        %v614 = vrot.slane %v612, 4
        %v618 = vld [vmem:[#allocation2 + $0x50] sm:$0xe]
        %v619 = vsel %vm348, %v603, %v618
        %620 = vst [vmem:[#allocation2 + $0x50] sm:$0xe] %v619
        %621 = vst [vmem:[#allocation2 + $0x54] sm:$0xf] %v613
        %v622 = vld [vmem:[#allocation2 + $0x58] sm:$0x3]
        %v623 = vsel %vm354, %v614, %v622
        %624 = vst [vmem:[#allocation2 + $0x58] sm:$0x3] %v623
        %v625 = vld [vmem:[%s251 + $0x48] sm:$0xf]
        %v626 = vld [vmem:[%s251 + $0x4c] sm:$0xf]
        %v628 = vshrl.u32 %v625, 16
        %v630 = vrot.slane %v628, 5
        %v631 = vshll.u32 %v625, 16
        %v633 = vrot.slane %v631, 6
        %v634 = vor.u32 %v630, %v633
        %v635 = vrot.slane %v634, 4
        %v637 = vshrl.u32 %v626, 16
        %v639 = vrot.slane %v637, 5
        %v640 = vshll.u32 %v626, 16
        %v642 = vrot.slane %v640, 6
        %v643 = vor.u32 %v639, %v642
        %v644 = vsel %vm362, %v635, %v643
        %v645 = vrot.slane %v643, 4
        %v649 = vld [vmem:[#allocation2 + $0x58] sm:$0xc]
        %v650 = vsel %vm387, %v634, %v649
        %651 = vst [vmem:[#allocation2 + $0x58] sm:$0xc] %v650
        %652 = vst [vmem:[#allocation2 + $0x5c] sm:$0xf] %v644
        %v653 = vld [vmem:[#allocation2 + $0x60] sm:$0x7]
        %v654 = vsel %vm393, %v645, %v653
        %655 = vst [vmem:[#allocation2 + $0x60] sm:$0x7] %v654
        %v656 = vld [vmem:[%s251 + $0x50] sm:$0xf]
        %v657 = vld [vmem:[%s251 + $0x54] sm:$0xf]
        %v659 = vshll.u32 %v656, 16
        %v661 = vrot.slane %v659, 5
        %v662 = vshrl.u32 %v656, 16
        %v664 = vrot.slane %v662, 4
        %v665 = vor.u32 %v664, %v661
        %v666 = vrot.slane %v665, 4
        %v668 = vshll.u32 %v657, 16
        %v670 = vrot.slane %v668, 5
        %v671 = vsel %vm401, %v666, %v670
        %v672 = vshrl.u32 %v657, 16
        %v674 = vrot.slane %v672, 4
        %v675 = vor.u32 %v674, %v670
        %v676 = vrot.slane %v675, 4
        %v680 = vld [vmem:[#allocation2 + $0x60] sm:$0x8]
        %v681 = vsel %vm426, %v661, %v680
        %682 = vst [vmem:[#allocation2 + $0x60] sm:$0x8] %v681
        %683 = vst [vmem:[#allocation2 + $0x64] sm:$0xf] %v671
        %v684 = vld [vmem:[#allocation2 + $0x68] sm:$0xf]
        %v685 = vsel %vm432, %v676, %v684
        %686 = vst [vmem:[#allocation2 + $0x68] sm:$0xf] %v685
        %v687 = vld [vmem:[%s251 + $0x58] sm:$0xf]
        %v688 = vld [vmem:[%s251 + $0x5c] sm:$0xf]
        %v690 = vshrl.u32 %v687, 16
        %v692 = vrot.slane %v690, 7
        %v693 = vshll.u32 %v687, 16
        %v695 = vor.u32 %v692, %v693
        %v696 = vrot.slane %v692, 4
        %v698 = vshrl.u32 %v688, 16
        %v700 = vrot.slane %v698, 7
        %v701 = vshll.u32 %v688, 16
        %v703 = vor.u32 %v700, %v701
        %v704 = vsel %vm440, %v696, %v703
        %v705 = vrot.slane %v700, 4
        %v709 = vld [vmem:[#allocation2 + $0x6c] sm:$0xf]
        %v710 = vsel %vm462, %v695, %v709
        %711 = vst [vmem:[#allocation2 + $0x6c] sm:$0xf] %v710
        %712 = vst [vmem:[#allocation2 + $0x70] sm:$0xf] %v704
        %v713 = vld [vmem:[#allocation2 + $0x74] sm:$0x1]
        %v714 = vsel %vm468, %v705, %v713
        %715 = vst [vmem:[#allocation2 + $0x74] sm:$0x1] %v714
        %v716 = vld [vmem:[%s251 + $0x60] sm:$0xf]
        %v717 = vld [vmem:[%s251 + $0x64] sm:$0xf]
        %v719 = vshrl.u32 %v716, 16
        %v721 = vrot.slane %v719, 6
        %v722 = vshll.u32 %v716, 16
        %v724 = vrot.slane %v722, 7
        %v725 = vor.u32 %v721, %v724
        %v726 = vrot.slane %v725, 4
        %v728 = vshrl.u32 %v717, 16
        %v730 = vrot.slane %v728, 6
        %v731 = vshll.u32 %v717, 16
        %v733 = vrot.slane %v731, 7
        %v734 = vor.u32 %v730, %v733
        %v735 = vsel %vm323, %v726, %v734
        %v736 = vrot.slane %v734, 4
        %v740 = vld [vmem:[#allocation2 + $0x74] sm:$0xe]
        %v741 = vsel %vm348, %v725, %v740
        %742 = vst [vmem:[#allocation2 + $0x74] sm:$0xe] %v741
        %743 = vst [vmem:[#allocation2 + $0x78] sm:$0xf] %v735
        %v744 = vld [vmem:[#allocation2 + $0x7c] sm:$0x3]
        %v745 = vsel %vm354, %v736, %v744
        %746 = vst [vmem:[#allocation2 + $0x7c] sm:$0x3] %v745
        %v747 = vld [vmem:[%s251 + $0x68] sm:$0xf]
        %v748 = vld [vmem:[%s251 + $0x6c] sm:$0xf]
        %v750 = vshrl.u32 %v747, 16
        %v752 = vrot.slane %v750, 5
        %v753 = vshll.u32 %v747, 16
        %v755 = vrot.slane %v753, 6
        %v756 = vor.u32 %v752, %v755
        %v757 = vrot.slane %v756, 4
        %v759 = vshrl.u32 %v748, 16
        %v761 = vrot.slane %v759, 5
        %v762 = vshll.u32 %v748, 16
        %v764 = vrot.slane %v762, 6
        %v765 = vor.u32 %v761, %v764
        %v766 = vsel %vm362, %v757, %v765
        %v767 = vrot.slane %v765, 4
        %v771 = vld [vmem:[#allocation2 + $0x7c] sm:$0xc]
        %v772 = vsel %vm387, %v756, %v771
        %773 = vst [vmem:[#allocation2 + $0x7c] sm:$0xc] %v772
        %774 = vst [vmem:[#allocation2 + $0x80] sm:$0xf] %v766
        %v775 = vld [vmem:[#allocation2 + $0x84] sm:$0x7]
        %v776 = vsel %vm393, %v767, %v775
        %777 = vst [vmem:[#allocation2 + $0x84] sm:$0x7] %v776
        %v778 = vld [vmem:[%s251 + $0x70] sm:$0xf]
        %v779 = vld [vmem:[%s251 + $0x74] sm:$0xf]
        %v781 = vshll.u32 %v778, 16
        %v783 = vrot.slane %v781, 5
        %v784 = vshrl.u32 %v778, 16
        %v786 = vrot.slane %v784, 4
        %v787 = vor.u32 %v786, %v783
        %v788 = vrot.slane %v787, 4
        %v790 = vshll.u32 %v779, 16
        %v792 = vrot.slane %v790, 5
        %v793 = vsel %vm401, %v788, %v792
        %v794 = vshrl.u32 %v779, 16
        %v796 = vrot.slane %v794, 4
        %v797 = vor.u32 %v796, %v792
        %v798 = vrot.slane %v797, 4
        %v802 = vld [vmem:[#allocation2 + $0x84] sm:$0x8]
        %v803 = vsel %vm426, %v783, %v802
        %804 = vst [vmem:[#allocation2 + $0x84] sm:$0x8] %v803
        %805 = vst [vmem:[#allocation2 + $0x88] sm:$0xf] %v793
        %v806 = vld [vmem:[#allocation2 + $0x8c] sm:$0xf]
        %v807 = vsel %vm432, %v798, %v806
        %808 = vst [vmem:[#allocation2 + $0x8c] sm:$0xf] %v807
        %v809 = vld [vmem:[%s251 + $0x78] sm:$0xf]
        %v810 = vld [vmem:[%s251 + $0x7c] sm:$0xf]
        %v812 = vshrl.u32 %v809, 16
        %v814 = vrot.slane %v812, 7
        %v815 = vshll.u32 %v809, 16
        %v817 = vor.u32 %v814, %v815
        %v818 = vrot.slane %v814, 4
        %v820 = vshrl.u32 %v810, 16
        %v822 = vrot.slane %v820, 7
        %v823 = vshll.u32 %v810, 16
        %v825 = vor.u32 %v822, %v823
        %v826 = vsel %vm440, %v818, %v825
        %v827 = vrot.slane %v822, 4
        %v831 = vld [vmem:[#allocation2 + $0x90] sm:$0xf]
        %v832 = vsel %vm462, %v817, %v831
        %833 = vst [vmem:[#allocation2 + $0x90] sm:$0xf] %v832
        %834 = vst [vmem:[#allocation2 + $0x94] sm:$0xf] %v826
        %v835 = vld [vmem:[#allocation2 + $0x98] sm:$0x1]
        %v836 = vsel %vm468, %v827, %v835
        %837 = vst [vmem:[#allocation2 + $0x98] sm:$0x1] %v836
        %v838 = vld [vmem:[#allocation2] sm:$0xf]
        %v839 = vld [vmem:[#allocation2 + $0x4] sm:$0xf]
        %v840 = vld [vmem:[#allocation2 + $0x8] sm:$0xf]
        %v841 = vld [vmem:[#allocation2 + $0xc] sm:$0xf]
        %v842 = vld [vmem:[#allocation2 + $0x10] sm:$0xf]
        %v843 = vld [vmem:[#allocation2 + $0x14] sm:$0xf]
        %v844 = vld [vmem:[#allocation2 + $0x18] sm:$0xf]
        %v845 = vld [vmem:[#allocation2 + $0x1c] sm:$0xf]
        %v846 = vld [vmem:[#allocation2 + $0x20] sm:$0xf]
        %v847 = vld [vmem:[#allocation2 + $0x24] sm:$0xf]
        %v848 = vld [vmem:[#allocation2 + $0x28] sm:$0xf]
        %v849 = vld [vmem:[#allocation2 + $0x2c] sm:$0xf]
        %v850 = vld [vmem:[#allocation2 + $0x30] sm:$0xf]
        %v851 = vld [vmem:[#allocation2 + $0x34] sm:$0xf]
        %v852 = vld [vmem:[#allocation2 + $0x38] sm:$0xf]
        %v853 = vld [vmem:[#allocation2 + $0x3c] sm:$0xf]
        %v854 = vld [vmem:[#allocation2 + $0x40] sm:$0xf]
        %v855 = vld [vmem:[#allocation2 + $0x44] sm:$0xf]
        %v856 = vld [vmem:[#allocation2 + $0x48] sm:$0xf]
        %v857 = vld [vmem:[#allocation2 + $0x4c] sm:$0xf]
        %v858 = vld [vmem:[#allocation2 + $0x50] sm:$0xf]
        %v859 = vld [vmem:[#allocation2 + $0x54] sm:$0xf]
        %v860 = vld [vmem:[#allocation2 + $0x58] sm:$0xf]
        %v861 = vld [vmem:[#allocation2 + $0x5c] sm:$0xf]
        %v862 = vld [vmem:[#allocation2 + $0x60] sm:$0xf]
        %v863 = vld [vmem:[#allocation2 + $0x64] sm:$0xf]
        %v864 = vld [vmem:[#allocation2 + $0x68] sm:$0xf]
        %v865 = vld [vmem:[#allocation2 + $0x6c] sm:$0xf]
        %v866 = vld [vmem:[#allocation2 + $0x70] sm:$0xf]
        %v867 = vld [vmem:[#allocation2 + $0x74] sm:$0xf]
        %v868 = vld [vmem:[#allocation2 + $0x78] sm:$0xf]
        %v869 = vld [vmem:[#allocation2 + $0x7c] sm:$0xf]
        %v870 = vld [vmem:[#allocation2 + $0x80] sm:$0xf]
        %v871 = vld [vmem:[#allocation2 + $0x84] sm:$0xf]
        %v872 = vld [vmem:[#allocation2 + $0x88] sm:$0xf]
        %v873 = vld [vmem:[#allocation2 + $0x8c] sm:$0xf]
        %874 = vst [vmem:[#allocation6] sm:$0xf] %v838
        %875 = vst [vmem:[#allocation6 + $0x24] sm:$0xf] %v839
        %876 = vst [vmem:[#allocation6 + $0x48] sm:$0xf] %v840
        %877 = vst [vmem:[#allocation6 + $0x6c] sm:$0xf] %v841
        %878 = vst [vmem:[#allocation6 + $0x90] sm:$0xf] %v842
        %879 = vst [vmem:[#allocation6 + $0xb4] sm:$0xf] %v843
        %880 = vst [vmem:[#allocation6 + $0xd8] sm:$0xf] %v844
        %881 = vst [vmem:[#allocation6 + $0xfc] sm:$0xf] %v845
        %882 = vst [vmem:[#allocation6 + $0x120] sm:$0xf] %v846
        %883 = vst [vmem:[#allocation6 + $0x144] sm:$0xf] %v847
        %884 = vst [vmem:[#allocation6 + $0x168] sm:$0xf] %v848
        %885 = vst [vmem:[#allocation6 + $0x18c] sm:$0xf] %v849
        %886 = vst [vmem:[#allocation6 + $0x1b0] sm:$0xf] %v850
        %887 = vst [vmem:[#allocation6 + $0x1d4] sm:$0xf] %v851
        %888 = vst [vmem:[#allocation6 + $0x1f8] sm:$0xf] %v852
        %889 = vst [vmem:[#allocation6 + $0x21c] sm:$0xf] %v853
        %890 = vst [vmem:[#allocation6 + $0x240] sm:$0xf] %v854
        %891 = vst [vmem:[#allocation6 + $0x264] sm:$0xf] %v855
        %892 = vst [vmem:[#allocation6 + $0x288] sm:$0xf] %v856
        %893 = vst [vmem:[#allocation6 + $0x2ac] sm:$0xf] %v857
        %894 = vst [vmem:[#allocation6 + $0x2d0] sm:$0xf] %v858
        %895 = vst [vmem:[#allocation6 + $0x2f4] sm:$0xf] %v859
        %896 = vst [vmem:[#allocation6 + $0x318] sm:$0xf] %v860
        %897 = vst [vmem:[#allocation6 + $0x33c] sm:$0xf] %v861
        %898 = vst [vmem:[#allocation6 + $0x360] sm:$0xf] %v862
        %899 = vst [vmem:[#allocation6 + $0x384] sm:$0xf] %v863
        %900 = vst [vmem:[#allocation6 + $0x3a8] sm:$0xf] %v864
        %901 = vst [vmem:[#allocation6 + $0x3cc] sm:$0xf] %v865
        %902 = vst [vmem:[#allocation6 + $0x3f0] sm:$0xf] %v866
        %903 = vst [vmem:[#allocation6 + $0x414] sm:$0xf] %v867
        %904 = vst [vmem:[#allocation6 + $0x438] sm:$0xf] %v868
        %905 = vst [vmem:[#allocation6 + $0x45c] sm:$0xf] %v869
        %906 = vst [vmem:[#allocation6 + $0x480] sm:$0xf] %v870
        %907 = vst [vmem:[#allocation6 + $0x4a4] sm:$0xf] %v871
        %908 = vst [vmem:[#allocation6 + $0x4c8] sm:$0xf] %v872
        %909 = vst [vmem:[#allocation6 + $0x4ec] sm:$0xf] %v873
        %v910 = vld [vmem:[#allocation2] sm:$0xf]
        %v911 = vld [vmem:[#allocation2 + $0x4] sm:$0xf]
        %v912 = vld [vmem:[#allocation2 + $0x8] sm:$0xf]
        %v913 = vld [vmem:[#allocation2 + $0xc] sm:$0xf]
        %v914 = vld [vmem:[#allocation2 + $0x10] sm:$0xf]
        %v915 = vld [vmem:[#allocation2 + $0x14] sm:$0xf]
        %v916 = vld [vmem:[#allocation2 + $0x18] sm:$0xf]
        %v917 = vld [vmem:[#allocation2 + $0x1c] sm:$0xf]
        %v918 = vld [vmem:[#allocation2 + $0x20] sm:$0xf]
        %v919 = vld [vmem:[#allocation2 + $0x24] sm:$0xf]
        %v920 = vld [vmem:[#allocation2 + $0x28] sm:$0xf]
        %v921 = vld [vmem:[#allocation2 + $0x2c] sm:$0xf]
        %v922 = vld [vmem:[#allocation2 + $0x30] sm:$0xf]
        %v923 = vld [vmem:[#allocation2 + $0x34] sm:$0xf]
        %v924 = vld [vmem:[#allocation2 + $0x38] sm:$0xf]
        %v925 = vld [vmem:[#allocation2 + $0x3c] sm:$0xf]
        %v926 = vld [vmem:[#allocation2 + $0x40] sm:$0xf]
        %v927 = vld [vmem:[#allocation2 + $0x44] sm:$0xf]
        %v928 = vld [vmem:[#allocation2 + $0x48] sm:$0xf]
        %v929 = vld [vmem:[#allocation2 + $0x4c] sm:$0xf]
        %v930 = vld [vmem:[#allocation2 + $0x50] sm:$0xf]
        %v931 = vld [vmem:[#allocation2 + $0x54] sm:$0xf]
        %v932 = vld [vmem:[#allocation2 + $0x58] sm:$0xf]
        %v933 = vld [vmem:[#allocation2 + $0x5c] sm:$0xf]
        %v934 = vld [vmem:[#allocation2 + $0x60] sm:$0xf]
        %v935 = vld [vmem:[#allocation2 + $0x64] sm:$0xf]
        %v936 = vld [vmem:[#allocation2 + $0x68] sm:$0xf]
        %v937 = vld [vmem:[#allocation2 + $0x6c] sm:$0xf]
        %v938 = vld [vmem:[#allocation2 + $0x70] sm:$0xf]
        %v939 = vld [vmem:[#allocation2 + $0x74] sm:$0xf]
        %v940 = vld [vmem:[#allocation2 + $0x78] sm:$0xf]
        %v941 = vld [vmem:[#allocation2 + $0x7c] sm:$0xf]
        %v942 = vld [vmem:[#allocation2 + $0x80] sm:$0xf]
        %v943 = vld [vmem:[#allocation2 + $0x84] sm:$0xf]
        %v944 = vld [vmem:[#allocation2 + $0x88] sm:$0xf]
        %v945 = vld [vmem:[#allocation2 + $0x8c] sm:$0xf]
        %v946 = vld [vmem:[#allocation2 + $0x90] sm:$0x1]
        %v948 = vshrl.u32 %v910, 16
        %v950 = vrot.slane %v948, 4
        %v951 = vshll.u32 %v910, 16
        %v953 = vrot.slane %v951, 5
        %v954 = vor.u32 %v950, %v953
        %v955 = vrot.slane %v954, 4
        %v957 = vshll.u32 %v911, 16
        %v959 = vrot.slane %v957, 5
        %v960 = vsel %vm401, %v955, %v959
        %v961 = vshrl.u32 %v911, 16
        %v963 = vrot.slane %v961, 4
        %v964 = vor.u32 %v963, %v959
        %v965 = vrot.slane %v964, 4
        %v967 = vshll.u32 %v912, 16
        %v969 = vrot.slane %v967, 5
        %v970 = vsel %vm401, %v965, %v969
        %v971 = vshrl.u32 %v912, 16
        %v973 = vrot.slane %v971, 4
        %v974 = vor.u32 %v973, %v969
        %v975 = vrot.slane %v974, 4
        %v977 = vshll.u32 %v913, 16
        %v979 = vrot.slane %v977, 5
        %v980 = vsel %vm401, %v975, %v979
        %v981 = vshrl.u32 %v913, 16
        %v983 = vrot.slane %v981, 4
        %v984 = vor.u32 %v983, %v979
        %v985 = vrot.slane %v984, 4
        %v987 = vshll.u32 %v914, 16
        %v989 = vrot.slane %v987, 5
        %v990 = vsel %vm401, %v985, %v989
        %v991 = vshrl.u32 %v914, 16
        %v993 = vrot.slane %v991, 4
        %v994 = vor.u32 %v993, %v989
        %v995 = vrot.slane %v994, 4
        %v997 = vshll.u32 %v915, 16
        %v999 = vrot.slane %v997, 5
        %v1000 = vsel %vm401, %v995, %v999
        %v1001 = vshrl.u32 %v915, 16
        %v1003 = vrot.slane %v1001, 4
        %v1004 = vor.u32 %v1003, %v999
        %v1005 = vrot.slane %v1004, 4
        %v1007 = vshll.u32 %v916, 16
        %v1009 = vrot.slane %v1007, 5
        %v1010 = vsel %vm401, %v1005, %v1009
        %v1011 = vshrl.u32 %v916, 16
        %v1013 = vrot.slane %v1011, 4
        %v1014 = vor.u32 %v1013, %v1009
        %v1015 = vrot.slane %v1014, 4
        %v1017 = vshll.u32 %v917, 16
        %v1019 = vrot.slane %v1017, 5
        %v1020 = vsel %vm401, %v1015, %v1019
        %v1021 = vshrl.u32 %v917, 16
        %v1023 = vrot.slane %v1021, 4
        %v1024 = vor.u32 %v1023, %v1019
        %v1025 = vrot.slane %v1024, 4
        %v1027 = vshll.u32 %v918, 16
        %v1029 = vrot.slane %v1027, 5
        %v1030 = vsel %vm401, %v1025, %v1029
        %v1031 = vshrl.u32 %v918, 16
        %v1033 = vrot.slane %v1031, 4
        %v1034 = vor.u32 %v1033, %v1029
        %v1035 = vrot.slane %v1034, 4
        %v1037 = vshll.u32 %v919, 16
        %v1039 = vrot.slane %v1037, 5
        %v1040 = vsel %vm401, %v1035, %v1039
        %v1041 = vshrl.u32 %v919, 16
        %v1043 = vrot.slane %v1041, 4
        %v1044 = vor.u32 %v1043, %v1039
        %v1045 = vrot.slane %v1044, 4
        %v1047 = vshll.u32 %v920, 16
        %v1049 = vrot.slane %v1047, 5
        %v1050 = vsel %vm401, %v1045, %v1049
        %v1051 = vshrl.u32 %v920, 16
        %v1053 = vrot.slane %v1051, 4
        %v1054 = vor.u32 %v1053, %v1049
        %v1055 = vrot.slane %v1054, 4
        %v1057 = vshll.u32 %v921, 16
        %v1059 = vrot.slane %v1057, 5
        %v1060 = vsel %vm401, %v1055, %v1059
        %v1061 = vshrl.u32 %v921, 16
        %v1063 = vrot.slane %v1061, 4
        %v1064 = vor.u32 %v1063, %v1059
        %v1065 = vrot.slane %v1064, 4
        %v1067 = vshll.u32 %v922, 16
        %v1069 = vrot.slane %v1067, 5
        %v1070 = vsel %vm401, %v1065, %v1069
        %v1071 = vshrl.u32 %v922, 16
        %v1073 = vrot.slane %v1071, 4
        %v1074 = vor.u32 %v1073, %v1069
        %v1075 = vrot.slane %v1074, 4
        %v1077 = vshll.u32 %v923, 16
        %v1079 = vrot.slane %v1077, 5
        %v1080 = vsel %vm401, %v1075, %v1079
        %v1081 = vshrl.u32 %v923, 16
        %v1083 = vrot.slane %v1081, 4
        %v1084 = vor.u32 %v1083, %v1079
        %v1085 = vrot.slane %v1084, 4
        %v1087 = vshll.u32 %v924, 16
        %v1089 = vrot.slane %v1087, 5
        %v1090 = vsel %vm401, %v1085, %v1089
        %v1091 = vshrl.u32 %v924, 16
        %v1093 = vrot.slane %v1091, 4
        %v1094 = vor.u32 %v1093, %v1089
        %v1095 = vrot.slane %v1094, 4
        %v1097 = vshll.u32 %v925, 16
        %v1099 = vrot.slane %v1097, 5
        %v1100 = vsel %vm401, %v1095, %v1099
        %v1101 = vshrl.u32 %v925, 16
        %v1103 = vrot.slane %v1101, 4
        %v1104 = vor.u32 %v1103, %v1099
        %v1105 = vrot.slane %v1104, 4
        %v1107 = vshll.u32 %v926, 16
        %v1109 = vrot.slane %v1107, 5
        %v1110 = vsel %vm401, %v1105, %v1109
        %v1111 = vshrl.u32 %v926, 16
        %v1113 = vrot.slane %v1111, 4
        %v1114 = vor.u32 %v1113, %v1109
        %v1115 = vrot.slane %v1114, 4
        %v1117 = vshll.u32 %v927, 16
        %v1119 = vrot.slane %v1117, 5
        %v1120 = vsel %vm401, %v1115, %v1119
        %v1121 = vshrl.u32 %v927, 16
        %v1123 = vrot.slane %v1121, 4
        %v1124 = vor.u32 %v1123, %v1119
        %v1125 = vrot.slane %v1124, 4
        %v1127 = vshll.u32 %v928, 16
        %v1129 = vrot.slane %v1127, 5
        %v1130 = vsel %vm401, %v1125, %v1129
        %v1131 = vshrl.u32 %v928, 16
        %v1133 = vrot.slane %v1131, 4
        %v1134 = vor.u32 %v1133, %v1129
        %v1135 = vrot.slane %v1134, 4
        %v1137 = vshll.u32 %v929, 16
        %v1139 = vrot.slane %v1137, 5
        %v1140 = vsel %vm401, %v1135, %v1139
        %v1141 = vshrl.u32 %v929, 16
        %v1143 = vrot.slane %v1141, 4
        %v1144 = vor.u32 %v1143, %v1139
        %v1145 = vrot.slane %v1144, 4
        %v1147 = vshll.u32 %v930, 16
        %v1149 = vrot.slane %v1147, 5
        %v1150 = vsel %vm401, %v1145, %v1149
        %v1151 = vshrl.u32 %v930, 16
        %v1153 = vrot.slane %v1151, 4
        %v1154 = vor.u32 %v1153, %v1149
        %v1155 = vrot.slane %v1154, 4
        %v1157 = vshll.u32 %v931, 16
        %v1159 = vrot.slane %v1157, 5
        %v1160 = vsel %vm401, %v1155, %v1159
        %v1161 = vshrl.u32 %v931, 16
        %v1163 = vrot.slane %v1161, 4
        %v1164 = vor.u32 %v1163, %v1159
        %v1165 = vrot.slane %v1164, 4
        %v1167 = vshll.u32 %v932, 16
        %v1169 = vrot.slane %v1167, 5
        %v1170 = vsel %vm401, %v1165, %v1169
        %v1171 = vshrl.u32 %v932, 16
        %v1173 = vrot.slane %v1171, 4
        %v1174 = vor.u32 %v1173, %v1169
        %v1175 = vrot.slane %v1174, 4
        %v1177 = vshll.u32 %v933, 16
        %v1179 = vrot.slane %v1177, 5
        %v1180 = vsel %vm401, %v1175, %v1179
        %v1181 = vshrl.u32 %v933, 16
        %v1183 = vrot.slane %v1181, 4
        %v1184 = vor.u32 %v1183, %v1179
        %v1185 = vrot.slane %v1184, 4
        %v1187 = vshll.u32 %v934, 16
        %v1189 = vrot.slane %v1187, 5
        %v1190 = vsel %vm401, %v1185, %v1189
        %v1191 = vshrl.u32 %v934, 16
        %v1193 = vrot.slane %v1191, 4
        %v1194 = vor.u32 %v1193, %v1189
        %v1195 = vrot.slane %v1194, 4
        %v1197 = vshll.u32 %v935, 16
        %v1199 = vrot.slane %v1197, 5
        %v1200 = vsel %vm401, %v1195, %v1199
        %v1201 = vshrl.u32 %v935, 16
        %v1203 = vrot.slane %v1201, 4
        %v1204 = vor.u32 %v1203, %v1199
        %v1205 = vrot.slane %v1204, 4
        %v1207 = vshll.u32 %v936, 16
        %v1209 = vrot.slane %v1207, 5
        %v1210 = vsel %vm401, %v1205, %v1209
        %v1211 = vshrl.u32 %v936, 16
        %v1213 = vrot.slane %v1211, 4
        %v1214 = vor.u32 %v1213, %v1209
        %v1215 = vrot.slane %v1214, 4
        %v1217 = vshll.u32 %v937, 16
        %v1219 = vrot.slane %v1217, 5
        %v1220 = vsel %vm401, %v1215, %v1219
        %v1221 = vshrl.u32 %v937, 16
        %v1223 = vrot.slane %v1221, 4
        %v1224 = vor.u32 %v1223, %v1219
        %v1225 = vrot.slane %v1224, 4
        %v1227 = vshll.u32 %v938, 16
        %v1229 = vrot.slane %v1227, 5
        %v1230 = vsel %vm401, %v1225, %v1229
        %v1231 = vshrl.u32 %v938, 16
        %v1233 = vrot.slane %v1231, 4
        %v1234 = vor.u32 %v1233, %v1229
        %v1235 = vrot.slane %v1234, 4
        %v1237 = vshll.u32 %v939, 16
        %v1239 = vrot.slane %v1237, 5
        %v1240 = vsel %vm401, %v1235, %v1239
        %v1241 = vshrl.u32 %v939, 16
        %v1243 = vrot.slane %v1241, 4
        %v1244 = vor.u32 %v1243, %v1239
        %v1245 = vrot.slane %v1244, 4
        %v1247 = vshll.u32 %v940, 16
        %v1249 = vrot.slane %v1247, 5
        %v1250 = vsel %vm401, %v1245, %v1249
        %v1251 = vshrl.u32 %v940, 16
        %v1253 = vrot.slane %v1251, 4
        %v1254 = vor.u32 %v1253, %v1249
        %v1255 = vrot.slane %v1254, 4
        %v1257 = vshll.u32 %v941, 16
        %v1259 = vrot.slane %v1257, 5
        %v1260 = vsel %vm401, %v1255, %v1259
        %v1261 = vshrl.u32 %v941, 16
        %v1263 = vrot.slane %v1261, 4
        %v1264 = vor.u32 %v1263, %v1259
        %v1265 = vrot.slane %v1264, 4
        %v1267 = vshll.u32 %v942, 16
        %v1269 = vrot.slane %v1267, 5
        %v1270 = vsel %vm401, %v1265, %v1269
        %v1271 = vshrl.u32 %v942, 16
        %v1273 = vrot.slane %v1271, 4
        %v1274 = vor.u32 %v1273, %v1269
        %v1275 = vrot.slane %v1274, 4
        %v1277 = vshll.u32 %v943, 16
        %v1279 = vrot.slane %v1277, 5
        %v1280 = vsel %vm401, %v1275, %v1279
        %v1281 = vshrl.u32 %v943, 16
        %v1283 = vrot.slane %v1281, 4
        %v1284 = vor.u32 %v1283, %v1279
        %v1285 = vrot.slane %v1284, 4
        %v1287 = vshll.u32 %v944, 16
        %v1289 = vrot.slane %v1287, 5
        %v1290 = vsel %vm401, %v1285, %v1289
        %v1291 = vshrl.u32 %v944, 16
        %v1293 = vrot.slane %v1291, 4
        %v1294 = vor.u32 %v1293, %v1289
        %v1295 = vrot.slane %v1294, 4
        %v1297 = vshll.u32 %v945, 16
        %v1299 = vrot.slane %v1297, 5
        %v1300 = vsel %vm401, %v1295, %v1299
        %v1301 = vshrl.u32 %v945, 16
        %v1303 = vrot.slane %v1301, 4
        %v1304 = vor.u32 %v1303, %v1299
        %v1305 = vrot.slane %v1304, 4
        %v1307 = vshll.u32 %v946, 16
        %v1309 = vrot.slane %v1307, 5
        %v1310 = vsel %vm401, %v1305, %v1309
        %1347 = vst [vmem:[#allocation6 + $0x4] sm:$0xf] %v960
        %1348 = vst [vmem:[#allocation6 + $0x28] sm:$0xf] %v970
        %1349 = vst [vmem:[#allocation6 + $0x4c] sm:$0xf] %v980
        %1350 = vst [vmem:[#allocation6 + $0x70] sm:$0xf] %v990
        %1351 = vst [vmem:[#allocation6 + $0x94] sm:$0xf] %v1000
        %1352 = vst [vmem:[#allocation6 + $0xb8] sm:$0xf] %v1010
        %1353 = vst [vmem:[#allocation6 + $0xdc] sm:$0xf] %v1020
        %1354 = vst [vmem:[#allocation6 + $0x100] sm:$0xf] %v1030
        %1355 = vst [vmem:[#allocation6 + $0x124] sm:$0xf] %v1040
        %1356 = vst [vmem:[#allocation6 + $0x148] sm:$0xf] %v1050
        %1357 = vst [vmem:[#allocation6 + $0x16c] sm:$0xf] %v1060
        %1358 = vst [vmem:[#allocation6 + $0x190] sm:$0xf] %v1070
        %1359 = vst [vmem:[#allocation6 + $0x1b4] sm:$0xf] %v1080
        %1360 = vst [vmem:[#allocation6 + $0x1d8] sm:$0xf] %v1090
        %1361 = vst [vmem:[#allocation6 + $0x1fc] sm:$0xf] %v1100
        %1362 = vst [vmem:[#allocation6 + $0x220] sm:$0xf] %v1110
        %1363 = vst [vmem:[#allocation6 + $0x244] sm:$0xf] %v1120
        %1364 = vst [vmem:[#allocation6 + $0x268] sm:$0xf] %v1130
        %1365 = vst [vmem:[#allocation6 + $0x28c] sm:$0xf] %v1140
        %1366 = vst [vmem:[#allocation6 + $0x2b0] sm:$0xf] %v1150
        %1367 = vst [vmem:[#allocation6 + $0x2d4] sm:$0xf] %v1160
        %1368 = vst [vmem:[#allocation6 + $0x2f8] sm:$0xf] %v1170
        %1369 = vst [vmem:[#allocation6 + $0x31c] sm:$0xf] %v1180
        %1370 = vst [vmem:[#allocation6 + $0x340] sm:$0xf] %v1190
        %1371 = vst [vmem:[#allocation6 + $0x364] sm:$0xf] %v1200
        %1372 = vst [vmem:[#allocation6 + $0x388] sm:$0xf] %v1210
        %1373 = vst [vmem:[#allocation6 + $0x3ac] sm:$0xf] %v1220
        %1374 = vst [vmem:[#allocation6 + $0x3d0] sm:$0xf] %v1230
        %1375 = vst [vmem:[#allocation6 + $0x3f4] sm:$0xf] %v1240
        %1376 = vst [vmem:[#allocation6 + $0x418] sm:$0xf] %v1250
        %1377 = vst [vmem:[#allocation6 + $0x43c] sm:$0xf] %v1260
        %1378 = vst [vmem:[#allocation6 + $0x460] sm:$0xf] %v1270
        %1379 = vst [vmem:[#allocation6 + $0x484] sm:$0xf] %v1280
        %1380 = vst [vmem:[#allocation6 + $0x4a8] sm:$0xf] %v1290
        %1381 = vst [vmem:[#allocation6 + $0x4cc] sm:$0xf] %v1300
        %1382 = vst [vmem:[#allocation6 + $0x4f0] sm:$0xf] %v1310
        %v1383 = vld [vmem:[#allocation2] sm:$0xe]
        %v1384 = vld [vmem:[#allocation2 + $0x4] sm:$0xf]
        %v1385 = vld [vmem:[#allocation2 + $0x8] sm:$0xf]
        %v1386 = vld [vmem:[#allocation2 + $0xc] sm:$0xf]
        %v1387 = vld [vmem:[#allocation2 + $0x10] sm:$0xf]
        %v1388 = vld [vmem:[#allocation2 + $0x14] sm:$0xf]
        %v1389 = vld [vmem:[#allocation2 + $0x18] sm:$0xf]
        %v1390 = vld [vmem:[#allocation2 + $0x1c] sm:$0xf]
        %v1391 = vld [vmem:[#allocation2 + $0x20] sm:$0xf]
        %v1392 = vld [vmem:[#allocation2 + $0x24] sm:$0xf]
        %v1393 = vld [vmem:[#allocation2 + $0x28] sm:$0xf]
        %v1394 = vld [vmem:[#allocation2 + $0x2c] sm:$0xf]
        %v1395 = vld [vmem:[#allocation2 + $0x30] sm:$0xf]
        %v1396 = vld [vmem:[#allocation2 + $0x34] sm:$0xf]
        %v1397 = vld [vmem:[#allocation2 + $0x38] sm:$0xf]
        %v1398 = vld [vmem:[#allocation2 + $0x3c] sm:$0xf]
        %v1399 = vld [vmem:[#allocation2 + $0x40] sm:$0xf]
        %v1400 = vld [vmem:[#allocation2 + $0x44] sm:$0xf]
        %v1401 = vld [vmem:[#allocation2 + $0x48] sm:$0xf]
        %v1402 = vld [vmem:[#allocation2 + $0x4c] sm:$0xf]
        %v1403 = vld [vmem:[#allocation2 + $0x50] sm:$0xf]
        %v1404 = vld [vmem:[#allocation2 + $0x54] sm:$0xf]
        %v1405 = vld [vmem:[#allocation2 + $0x58] sm:$0xf]
        %v1406 = vld [vmem:[#allocation2 + $0x5c] sm:$0xf]
        %v1407 = vld [vmem:[#allocation2 + $0x60] sm:$0xf]
        %v1408 = vld [vmem:[#allocation2 + $0x64] sm:$0xf]
        %v1409 = vld [vmem:[#allocation2 + $0x68] sm:$0xf]
        %v1410 = vld [vmem:[#allocation2 + $0x6c] sm:$0xf]
        %v1411 = vld [vmem:[#allocation2 + $0x70] sm:$0xf]
        %v1412 = vld [vmem:[#allocation2 + $0x74] sm:$0xf]
        %v1413 = vld [vmem:[#allocation2 + $0x78] sm:$0xf]
        %v1414 = vld [vmem:[#allocation2 + $0x7c] sm:$0xf]
        %v1415 = vld [vmem:[#allocation2 + $0x80] sm:$0xf]
        %v1416 = vld [vmem:[#allocation2 + $0x84] sm:$0xf]
        %v1417 = vld [vmem:[#allocation2 + $0x88] sm:$0xf]
        %v1418 = vld [vmem:[#allocation2 + $0x8c] sm:$0xf]
        %v1419 = vld [vmem:[#allocation2 + $0x90] sm:$0x1]
        %vm1457 = vcmask 1046532
        %vm1458 = vmor %vm392, %vm1457
        %v1459 = vrot.slane %v1383, 5
        %v1460 = vrot.slane %v1459, 4
        %v1461 = vrot.slane %v1384, 5
        %v1462 = vsel %vm1458, %v1460, %v1461
        %v1463 = vrot.slane %v1461, 4
        %v1464 = vrot.slane %v1385, 5
        %v1465 = vsel %vm1458, %v1463, %v1464
        %v1466 = vrot.slane %v1464, 4
        %v1467 = vrot.slane %v1386, 5
        %v1468 = vsel %vm1458, %v1466, %v1467
        %v1469 = vrot.slane %v1467, 4
        %v1470 = vrot.slane %v1387, 5
        %v1471 = vsel %vm1458, %v1469, %v1470
        %v1472 = vrot.slane %v1470, 4
        %v1473 = vrot.slane %v1388, 5
        %v1474 = vsel %vm1458, %v1472, %v1473
        %v1475 = vrot.slane %v1473, 4
        %v1476 = vrot.slane %v1389, 5
        %v1477 = vsel %vm1458, %v1475, %v1476
        %v1478 = vrot.slane %v1476, 4
        %v1479 = vrot.slane %v1390, 5
        %v1480 = vsel %vm1458, %v1478, %v1479
        %v1481 = vrot.slane %v1479, 4
        %v1482 = vrot.slane %v1391, 5
        %v1483 = vsel %vm1458, %v1481, %v1482
        %v1484 = vrot.slane %v1482, 4
        %v1485 = vrot.slane %v1392, 5
        %v1486 = vsel %vm1458, %v1484, %v1485
        %v1487 = vrot.slane %v1485, 4
        %v1488 = vrot.slane %v1393, 5
        %v1489 = vsel %vm1458, %v1487, %v1488
        %v1490 = vrot.slane %v1488, 4
        %v1491 = vrot.slane %v1394, 5
        %v1492 = vsel %vm1458, %v1490, %v1491
        %v1493 = vrot.slane %v1491, 4
        %v1494 = vrot.slane %v1395, 5
        %v1495 = vsel %vm1458, %v1493, %v1494
        %v1496 = vrot.slane %v1494, 4
        %v1497 = vrot.slane %v1396, 5
        %v1498 = vsel %vm1458, %v1496, %v1497
        %v1499 = vrot.slane %v1497, 4
        %v1500 = vrot.slane %v1397, 5
        %v1501 = vsel %vm1458, %v1499, %v1500
        %v1502 = vrot.slane %v1500, 4
        %v1503 = vrot.slane %v1398, 5
        %v1504 = vsel %vm1458, %v1502, %v1503
        %v1505 = vrot.slane %v1503, 4
        %v1506 = vrot.slane %v1399, 5
        %v1507 = vsel %vm1458, %v1505, %v1506
        %v1508 = vrot.slane %v1506, 4
        %v1509 = vrot.slane %v1400, 5
        %v1510 = vsel %vm1458, %v1508, %v1509
        %v1511 = vrot.slane %v1509, 4
        %v1512 = vrot.slane %v1401, 5
        %v1513 = vsel %vm1458, %v1511, %v1512
        %v1514 = vrot.slane %v1512, 4
        %v1515 = vrot.slane %v1402, 5
        %v1516 = vsel %vm1458, %v1514, %v1515
        %v1517 = vrot.slane %v1515, 4
        %v1518 = vrot.slane %v1403, 5
        %v1519 = vsel %vm1458, %v1517, %v1518
        %v1520 = vrot.slane %v1518, 4
        %v1521 = vrot.slane %v1404, 5
        %v1522 = vsel %vm1458, %v1520, %v1521
        %v1523 = vrot.slane %v1521, 4
        %v1524 = vrot.slane %v1405, 5
        %v1525 = vsel %vm1458, %v1523, %v1524
        %v1526 = vrot.slane %v1524, 4
        %v1527 = vrot.slane %v1406, 5
        %v1528 = vsel %vm1458, %v1526, %v1527
        %v1529 = vrot.slane %v1527, 4
        %v1530 = vrot.slane %v1407, 5
        %v1531 = vsel %vm1458, %v1529, %v1530
        %v1532 = vrot.slane %v1530, 4
        %v1533 = vrot.slane %v1408, 5
        %v1534 = vsel %vm1458, %v1532, %v1533
        %v1535 = vrot.slane %v1533, 4
        %v1536 = vrot.slane %v1409, 5
        %v1537 = vsel %vm1458, %v1535, %v1536
        %v1538 = vrot.slane %v1536, 4
        %v1539 = vrot.slane %v1410, 5
        %v1540 = vsel %vm1458, %v1538, %v1539
        %v1541 = vrot.slane %v1539, 4
        %v1542 = vrot.slane %v1411, 5
        %v1543 = vsel %vm1458, %v1541, %v1542
        %v1544 = vrot.slane %v1542, 4
        %v1545 = vrot.slane %v1412, 5
        %v1546 = vsel %vm1458, %v1544, %v1545
        %v1547 = vrot.slane %v1545, 4
        %v1548 = vrot.slane %v1413, 5
        %v1549 = vsel %vm1458, %v1547, %v1548
        %v1550 = vrot.slane %v1548, 4
        %v1551 = vrot.slane %v1414, 5
        %v1552 = vsel %vm1458, %v1550, %v1551
        %v1553 = vrot.slane %v1551, 4
        %v1554 = vrot.slane %v1415, 5
        %v1555 = vsel %vm1458, %v1553, %v1554
        %v1556 = vrot.slane %v1554, 4
        %v1557 = vrot.slane %v1416, 5
        %v1558 = vsel %vm1458, %v1556, %v1557
        %v1559 = vrot.slane %v1557, 4
        %v1560 = vrot.slane %v1417, 5
        %v1561 = vsel %vm1458, %v1559, %v1560
        %v1562 = vrot.slane %v1560, 4
        %v1563 = vrot.slane %v1418, 5
        %v1564 = vsel %vm1458, %v1562, %v1563
        %v1565 = vrot.slane %v1563, 4
        %v1566 = vrot.slane %v1419, 5
        %v1567 = vsel %vm1458, %v1565, %v1566
        %1604 = vst [vmem:[#allocation6 + $0x8] sm:$0xf] %v1462
        %1605 = vst [vmem:[#allocation6 + $0x2c] sm:$0xf] %v1465
        %1606 = vst [vmem:[#allocation6 + $0x50] sm:$0xf] %v1468
        %1607 = vst [vmem:[#allocation6 + $0x74] sm:$0xf] %v1471
        %1608 = vst [vmem:[#allocation6 + $0x98] sm:$0xf] %v1474
        %1609 = vst [vmem:[#allocation6 + $0xbc] sm:$0xf] %v1477
        %1610 = vst [vmem:[#allocation6 + $0xe0] sm:$0xf] %v1480
        %1611 = vst [vmem:[#allocation6 + $0x104] sm:$0xf] %v1483
        %1612 = vst [vmem:[#allocation6 + $0x128] sm:$0xf] %v1486
        %1613 = vst [vmem:[#allocation6 + $0x14c] sm:$0xf] %v1489
        %1614 = vst [vmem:[#allocation6 + $0x170] sm:$0xf] %v1492
        %1615 = vst [vmem:[#allocation6 + $0x194] sm:$0xf] %v1495
        %1616 = vst [vmem:[#allocation6 + $0x1b8] sm:$0xf] %v1498
        %1617 = vst [vmem:[#allocation6 + $0x1dc] sm:$0xf] %v1501
        %1618 = vst [vmem:[#allocation6 + $0x200] sm:$0xf] %v1504
        %1619 = vst [vmem:[#allocation6 + $0x224] sm:$0xf] %v1507
        %1620 = vst [vmem:[#allocation6 + $0x248] sm:$0xf] %v1510
        %1621 = vst [vmem:[#allocation6 + $0x26c] sm:$0xf] %v1513
        %1622 = vst [vmem:[#allocation6 + $0x290] sm:$0xf] %v1516
        %1623 = vst [vmem:[#allocation6 + $0x2b4] sm:$0xf] %v1519
        %1624 = vst [vmem:[#allocation6 + $0x2d8] sm:$0xf] %v1522
        %1625 = vst [vmem:[#allocation6 + $0x2fc] sm:$0xf] %v1525
        %1626 = vst [vmem:[#allocation6 + $0x320] sm:$0xf] %v1528
        %1627 = vst [vmem:[#allocation6 + $0x344] sm:$0xf] %v1531
        %1628 = vst [vmem:[#allocation6 + $0x368] sm:$0xf] %v1534
        %1629 = vst [vmem:[#allocation6 + $0x38c] sm:$0xf] %v1537
        %1630 = vst [vmem:[#allocation6 + $0x3b0] sm:$0xf] %v1540
        %1631 = vst [vmem:[#allocation6 + $0x3d4] sm:$0xf] %v1543
        %1632 = vst [vmem:[#allocation6 + $0x3f8] sm:$0xf] %v1546
        %1633 = vst [vmem:[#allocation6 + $0x41c] sm:$0xf] %v1549
        %1634 = vst [vmem:[#allocation6 + $0x440] sm:$0xf] %v1552
        %1635 = vst [vmem:[#allocation6 + $0x464] sm:$0xf] %v1555
        %1636 = vst [vmem:[#allocation6 + $0x488] sm:$0xf] %v1558
        %1637 = vst [vmem:[#allocation6 + $0x4ac] sm:$0xf] %v1561
        %1638 = vst [vmem:[#allocation6 + $0x4d0] sm:$0xf] %v1564
        %1639 = vst [vmem:[#allocation6 + $0x4f4] sm:$0xf] %v1567
        %v1640 = vld [vmem:[#allocation2 + $0x8] sm:$0xe]
        %v1641 = vld [vmem:[#allocation2 + $0xc] sm:$0xf]
        %v1642 = vld [vmem:[#allocation2 + $0x10] sm:$0xf]
        %v1643 = vld [vmem:[#allocation2 + $0x14] sm:$0xf]
        %v1644 = vld [vmem:[#allocation2 + $0x18] sm:$0xf]
        %v1645 = vld [vmem:[#allocation2 + $0x1c] sm:$0xf]
        %v1646 = vld [vmem:[#allocation2 + $0x20] sm:$0xf]
        %v1647 = vld [vmem:[#allocation2 + $0x24] sm:$0xf]
        %v1648 = vld [vmem:[#allocation2 + $0x28] sm:$0xf]
        %v1649 = vld [vmem:[#allocation2 + $0x2c] sm:$0xf]
        %v1650 = vld [vmem:[#allocation2 + $0x30] sm:$0xf]
        %v1651 = vld [vmem:[#allocation2 + $0x34] sm:$0xf]
        %v1652 = vld [vmem:[#allocation2 + $0x38] sm:$0xf]
        %v1653 = vld [vmem:[#allocation2 + $0x3c] sm:$0xf]
        %v1654 = vld [vmem:[#allocation2 + $0x40] sm:$0xf]
        %v1655 = vld [vmem:[#allocation2 + $0x44] sm:$0xf]
        %v1656 = vld [vmem:[#allocation2 + $0x48] sm:$0xf]
        %v1657 = vld [vmem:[#allocation2 + $0x4c] sm:$0xf]
        %v1658 = vld [vmem:[#allocation2 + $0x50] sm:$0xf]
        %v1659 = vld [vmem:[#allocation2 + $0x54] sm:$0xf]
        %v1660 = vld [vmem:[#allocation2 + $0x58] sm:$0xf]
        %v1661 = vld [vmem:[#allocation2 + $0x5c] sm:$0xf]
        %v1662 = vld [vmem:[#allocation2 + $0x60] sm:$0xf]
        %v1663 = vld [vmem:[#allocation2 + $0x64] sm:$0xf]
        %v1664 = vld [vmem:[#allocation2 + $0x68] sm:$0xf]
        %v1665 = vld [vmem:[#allocation2 + $0x6c] sm:$0xf]
        %v1666 = vld [vmem:[#allocation2 + $0x70] sm:$0xf]
        %v1667 = vld [vmem:[#allocation2 + $0x74] sm:$0xf]
        %v1668 = vld [vmem:[#allocation2 + $0x78] sm:$0xf]
        %v1669 = vld [vmem:[#allocation2 + $0x7c] sm:$0xf]
        %v1670 = vld [vmem:[#allocation2 + $0x80] sm:$0xf]
        %v1671 = vld [vmem:[#allocation2 + $0x84] sm:$0xf]
        %v1672 = vld [vmem:[#allocation2 + $0x88] sm:$0xf]
        %v1673 = vld [vmem:[#allocation2 + $0x8c] sm:$0xf]
        %v1674 = vld [vmem:[#allocation2 + $0x90] sm:$0xf]
        %v1675 = vld [vmem:[#allocation2 + $0x94] sm:$0xf]
        %v1676 = vld [vmem:[#allocation2 + $0x98] sm:$0x1]
        %v1714 = vrot.slane %v1640, 5
        %v1715 = vrot.slane %v1714, 4
        %v1716 = vrot.slane %v1641, 5
        %v1717 = vsel %vm1458, %v1715, %v1716
        %v1718 = vrot.slane %v1716, 4
        %v1719 = vrot.slane %v1642, 5
        %v1720 = vsel %vm1458, %v1718, %v1719
        %v1721 = vrot.slane %v1719, 4
        %v1722 = vrot.slane %v1643, 5
        %v1723 = vsel %vm1458, %v1721, %v1722
        %v1724 = vrot.slane %v1722, 4
        %v1725 = vrot.slane %v1644, 5
        %v1726 = vsel %vm1458, %v1724, %v1725
        %v1727 = vrot.slane %v1725, 4
        %v1728 = vrot.slane %v1645, 5
        %v1729 = vsel %vm1458, %v1727, %v1728
        %v1730 = vrot.slane %v1728, 4
        %v1731 = vrot.slane %v1646, 5
        %v1732 = vsel %vm1458, %v1730, %v1731
        %v1733 = vrot.slane %v1731, 4
        %v1734 = vrot.slane %v1647, 5
        %v1735 = vsel %vm1458, %v1733, %v1734
        %v1736 = vrot.slane %v1734, 4
        %v1737 = vrot.slane %v1648, 5
        %v1738 = vsel %vm1458, %v1736, %v1737
        %v1739 = vrot.slane %v1737, 4
        %v1740 = vrot.slane %v1649, 5
        %v1741 = vsel %vm1458, %v1739, %v1740
        %v1742 = vrot.slane %v1740, 4
        %v1743 = vrot.slane %v1650, 5
        %v1744 = vsel %vm1458, %v1742, %v1743
        %v1745 = vrot.slane %v1743, 4
        %v1746 = vrot.slane %v1651, 5
        %v1747 = vsel %vm1458, %v1745, %v1746
        %v1748 = vrot.slane %v1746, 4
        %v1749 = vrot.slane %v1652, 5
        %v1750 = vsel %vm1458, %v1748, %v1749
        %v1751 = vrot.slane %v1749, 4
        %v1752 = vrot.slane %v1653, 5
        %v1753 = vsel %vm1458, %v1751, %v1752
        %v1754 = vrot.slane %v1752, 4
        %v1755 = vrot.slane %v1654, 5
        %v1756 = vsel %vm1458, %v1754, %v1755
        %v1757 = vrot.slane %v1755, 4
        %v1758 = vrot.slane %v1655, 5
        %v1759 = vsel %vm1458, %v1757, %v1758
        %v1760 = vrot.slane %v1758, 4
        %v1761 = vrot.slane %v1656, 5
        %v1762 = vsel %vm1458, %v1760, %v1761
        %v1763 = vrot.slane %v1761, 4
        %v1764 = vrot.slane %v1657, 5
        %v1765 = vsel %vm1458, %v1763, %v1764
        %v1766 = vrot.slane %v1764, 4
        %v1767 = vrot.slane %v1658, 5
        %v1768 = vsel %vm1458, %v1766, %v1767
        %v1769 = vrot.slane %v1767, 4
        %v1770 = vrot.slane %v1659, 5
        %v1771 = vsel %vm1458, %v1769, %v1770
        %v1772 = vrot.slane %v1770, 4
        %v1773 = vrot.slane %v1660, 5
        %v1774 = vsel %vm1458, %v1772, %v1773
        %v1775 = vrot.slane %v1773, 4
        %v1776 = vrot.slane %v1661, 5
        %v1777 = vsel %vm1458, %v1775, %v1776
        %v1778 = vrot.slane %v1776, 4
        %v1779 = vrot.slane %v1662, 5
        %v1780 = vsel %vm1458, %v1778, %v1779
        %v1781 = vrot.slane %v1779, 4
        %v1782 = vrot.slane %v1663, 5
        %v1783 = vsel %vm1458, %v1781, %v1782
        %v1784 = vrot.slane %v1782, 4
        %v1785 = vrot.slane %v1664, 5
        %v1786 = vsel %vm1458, %v1784, %v1785
        %v1787 = vrot.slane %v1785, 4
        %v1788 = vrot.slane %v1665, 5
        %v1789 = vsel %vm1458, %v1787, %v1788
        %v1790 = vrot.slane %v1788, 4
        %v1791 = vrot.slane %v1666, 5
        %v1792 = vsel %vm1458, %v1790, %v1791
        %v1793 = vrot.slane %v1791, 4
        %v1794 = vrot.slane %v1667, 5
        %v1795 = vsel %vm1458, %v1793, %v1794
        %v1796 = vrot.slane %v1794, 4
        %v1797 = vrot.slane %v1668, 5
        %v1798 = vsel %vm1458, %v1796, %v1797
        %v1799 = vrot.slane %v1797, 4
        %v1800 = vrot.slane %v1669, 5
        %v1801 = vsel %vm1458, %v1799, %v1800
        %v1802 = vrot.slane %v1800, 4
        %v1803 = vrot.slane %v1670, 5
        %v1804 = vsel %vm1458, %v1802, %v1803
        %v1805 = vrot.slane %v1803, 4
        %v1806 = vrot.slane %v1671, 5
        %v1807 = vsel %vm1458, %v1805, %v1806
        %v1808 = vrot.slane %v1806, 4
        %v1809 = vrot.slane %v1672, 5
        %v1810 = vsel %vm1458, %v1808, %v1809
        %v1811 = vrot.slane %v1809, 4
        %v1812 = vrot.slane %v1673, 5
        %v1813 = vsel %vm1458, %v1811, %v1812
        %v1814 = vrot.slane %v1812, 4
        %v1815 = vrot.slane %v1674, 5
        %v1816 = vsel %vm1458, %v1814, %v1815
        %v1817 = vrot.slane %v1815, 4
        %v1818 = vrot.slane %v1675, 5
        %v1819 = vsel %vm1458, %v1817, %v1818
        %v1820 = vrot.slane %v1818, 4
        %v1821 = vrot.slane %v1676, 5
        %v1822 = vsel %vm1458, %v1820, %v1821
        %1859 = vst [vmem:[#allocation6 + $0xc] sm:$0xf] %v1717
        %1860 = vst [vmem:[#allocation6 + $0x30] sm:$0xf] %v1720
        %1861 = vst [vmem:[#allocation6 + $0x54] sm:$0xf] %v1723
        %1862 = vst [vmem:[#allocation6 + $0x78] sm:$0xf] %v1726
        %1863 = vst [vmem:[#allocation6 + $0x9c] sm:$0xf] %v1729
        %1864 = vst [vmem:[#allocation6 + $0xc0] sm:$0xf] %v1732
        %1865 = vst [vmem:[#allocation6 + $0xe4] sm:$0xf] %v1735
        %1866 = vst [vmem:[#allocation6 + $0x108] sm:$0xf] %v1738
        %1867 = vst [vmem:[#allocation6 + $0x12c] sm:$0xf] %v1741
        %1868 = vst [vmem:[#allocation6 + $0x150] sm:$0xf] %v1744
        %1869 = vst [vmem:[#allocation6 + $0x174] sm:$0xf] %v1747
        %1870 = vst [vmem:[#allocation6 + $0x198] sm:$0xf] %v1750
        %1871 = vst [vmem:[#allocation6 + $0x1bc] sm:$0xf] %v1753
        %1872 = vst [vmem:[#allocation6 + $0x1e0] sm:$0xf] %v1756
        %1873 = vst [vmem:[#allocation6 + $0x204] sm:$0xf] %v1759
        %1874 = vst [vmem:[#allocation6 + $0x228] sm:$0xf] %v1762
        %1875 = vst [vmem:[#allocation6 + $0x24c] sm:$0xf] %v1765
        %1876 = vst [vmem:[#allocation6 + $0x270] sm:$0xf] %v1768
        %1877 = vst [vmem:[#allocation6 + $0x294] sm:$0xf] %v1771
        %1878 = vst [vmem:[#allocation6 + $0x2b8] sm:$0xf] %v1774
        %1879 = vst [vmem:[#allocation6 + $0x2dc] sm:$0xf] %v1777
        %1880 = vst [vmem:[#allocation6 + $0x300] sm:$0xf] %v1780
        %1881 = vst [vmem:[#allocation6 + $0x324] sm:$0xf] %v1783
        %1882 = vst [vmem:[#allocation6 + $0x348] sm:$0xf] %v1786
        %1883 = vst [vmem:[#allocation6 + $0x36c] sm:$0xf] %v1789
        %1884 = vst [vmem:[#allocation6 + $0x390] sm:$0xf] %v1792
        %1885 = vst [vmem:[#allocation6 + $0x3b4] sm:$0xf] %v1795
        %1886 = vst [vmem:[#allocation6 + $0x3d8] sm:$0xf] %v1798
        %1887 = vst [vmem:[#allocation6 + $0x3fc] sm:$0xf] %v1801
        %1888 = vst [vmem:[#allocation6 + $0x420] sm:$0xf] %v1804
        %1889 = vst [vmem:[#allocation6 + $0x444] sm:$0xf] %v1807
        %1890 = vst [vmem:[#allocation6 + $0x468] sm:$0xf] %v1810
        %1891 = vst [vmem:[#allocation6 + $0x48c] sm:$0xf] %v1813
        %1892 = vst [vmem:[#allocation6 + $0x4b0] sm:$0xf] %v1816
        %1893 = vst [vmem:[#allocation6 + $0x4d4] sm:$0xf] %v1819
        %1894 = vst [vmem:[#allocation6 + $0x4f8] sm:$0xf] %v1822
        %v1895 = vld [vmem:[#allocation2 + $0x8] sm:$0xe]
        %v1896 = vld [vmem:[#allocation2 + $0xc] sm:$0xf]
        %v1897 = vld [vmem:[#allocation2 + $0x10] sm:$0xf]
        %v1898 = vld [vmem:[#allocation2 + $0x14] sm:$0xf]
        %v1899 = vld [vmem:[#allocation2 + $0x18] sm:$0xf]
        %v1900 = vld [vmem:[#allocation2 + $0x1c] sm:$0xf]
        %v1901 = vld [vmem:[#allocation2 + $0x20] sm:$0xf]
        %v1902 = vld [vmem:[#allocation2 + $0x24] sm:$0xf]
        %v1903 = vld [vmem:[#allocation2 + $0x28] sm:$0xf]
        %v1904 = vld [vmem:[#allocation2 + $0x2c] sm:$0xf]
        %v1905 = vld [vmem:[#allocation2 + $0x30] sm:$0xf]
        %v1906 = vld [vmem:[#allocation2 + $0x34] sm:$0xf]
        %v1907 = vld [vmem:[#allocation2 + $0x38] sm:$0xf]
        %v1908 = vld [vmem:[#allocation2 + $0x3c] sm:$0xf]
        %v1909 = vld [vmem:[#allocation2 + $0x40] sm:$0xf]
        %v1910 = vld [vmem:[#allocation2 + $0x44] sm:$0xf]
        %v1911 = vld [vmem:[#allocation2 + $0x48] sm:$0xf]
        %v1912 = vld [vmem:[#allocation2 + $0x4c] sm:$0xf]
        %v1913 = vld [vmem:[#allocation2 + $0x50] sm:$0xf]
        %v1914 = vld [vmem:[#allocation2 + $0x54] sm:$0xf]
        %v1915 = vld [vmem:[#allocation2 + $0x58] sm:$0xf]
        %v1916 = vld [vmem:[#allocation2 + $0x5c] sm:$0xf]
        %v1917 = vld [vmem:[#allocation2 + $0x60] sm:$0xf]
        %v1918 = vld [vmem:[#allocation2 + $0x64] sm:$0xf]
        %v1919 = vld [vmem:[#allocation2 + $0x68] sm:$0xf]
        %v1920 = vld [vmem:[#allocation2 + $0x6c] sm:$0xf]
        %v1921 = vld [vmem:[#allocation2 + $0x70] sm:$0xf]
        %v1922 = vld [vmem:[#allocation2 + $0x74] sm:$0xf]
        %v1923 = vld [vmem:[#allocation2 + $0x78] sm:$0xf]
        %v1924 = vld [vmem:[#allocation2 + $0x7c] sm:$0xf]
        %v1925 = vld [vmem:[#allocation2 + $0x80] sm:$0xf]
        %v1926 = vld [vmem:[#allocation2 + $0x84] sm:$0xf]
        %v1927 = vld [vmem:[#allocation2 + $0x88] sm:$0xf]
        %v1928 = vld [vmem:[#allocation2 + $0x8c] sm:$0xf]
        %v1929 = vld [vmem:[#allocation2 + $0x90] sm:$0xf]
        %v1930 = vld [vmem:[#allocation2 + $0x94] sm:$0xf]
        %v1931 = vld [vmem:[#allocation2 + $0x98] sm:$0x3]
        %v1933 = vshrl.u32 %v1895, 16
        %v1935 = vrot.slane %v1933, 5
        %v1936 = vshll.u32 %v1895, 16
        %v1938 = vrot.slane %v1936, 6
        %v1939 = vor.u32 %v1935, %v1938
        %v1940 = vrot.slane %v1939, 4
        %v1942 = vshrl.u32 %v1896, 16
        %v1944 = vrot.slane %v1942, 5
        %v1945 = vshll.u32 %v1896, 16
        %v1947 = vrot.slane %v1945, 6
        %v1948 = vor.u32 %v1944, %v1947
        %v1949 = vsel %vm362, %v1940, %v1948
        %v1950 = vrot.slane %v1948, 4
        %v1952 = vshrl.u32 %v1897, 16
        %v1954 = vrot.slane %v1952, 5
        %v1955 = vshll.u32 %v1897, 16
        %v1957 = vrot.slane %v1955, 6
        %v1958 = vor.u32 %v1954, %v1957
        %v1959 = vsel %vm362, %v1950, %v1958
        %v1960 = vrot.slane %v1958, 4
        %v1962 = vshrl.u32 %v1898, 16
        %v1964 = vrot.slane %v1962, 5
        %v1965 = vshll.u32 %v1898, 16
        %v1967 = vrot.slane %v1965, 6
        %v1968 = vor.u32 %v1964, %v1967
        %v1969 = vsel %vm362, %v1960, %v1968
        %v1970 = vrot.slane %v1968, 4
        %v1972 = vshrl.u32 %v1899, 16
        %v1974 = vrot.slane %v1972, 5
        %v1975 = vshll.u32 %v1899, 16
        %v1977 = vrot.slane %v1975, 6
        %v1978 = vor.u32 %v1974, %v1977
        %v1979 = vsel %vm362, %v1970, %v1978
        %v1980 = vrot.slane %v1978, 4
        %v1982 = vshrl.u32 %v1900, 16
        %v1984 = vrot.slane %v1982, 5
        %v1985 = vshll.u32 %v1900, 16
        %v1987 = vrot.slane %v1985, 6
        %v1988 = vor.u32 %v1984, %v1987
        %v1989 = vsel %vm362, %v1980, %v1988
        %v1990 = vrot.slane %v1988, 4
        %v1992 = vshrl.u32 %v1901, 16
        %v1994 = vrot.slane %v1992, 5
        %v1995 = vshll.u32 %v1901, 16
        %v1997 = vrot.slane %v1995, 6
        %v1998 = vor.u32 %v1994, %v1997
        %v1999 = vsel %vm362, %v1990, %v1998
        %v2000 = vrot.slane %v1998, 4
        %v2002 = vshrl.u32 %v1902, 16
        %v2004 = vrot.slane %v2002, 5
        %v2005 = vshll.u32 %v1902, 16
        %v2007 = vrot.slane %v2005, 6
        %v2008 = vor.u32 %v2004, %v2007
        %v2009 = vsel %vm362, %v2000, %v2008
        %v2010 = vrot.slane %v2008, 4
        %v2012 = vshrl.u32 %v1903, 16
        %v2014 = vrot.slane %v2012, 5
        %v2015 = vshll.u32 %v1903, 16
        %v2017 = vrot.slane %v2015, 6
        %v2018 = vor.u32 %v2014, %v2017
        %v2019 = vsel %vm362, %v2010, %v2018
        %v2020 = vrot.slane %v2018, 4
        %v2022 = vshrl.u32 %v1904, 16
        %v2024 = vrot.slane %v2022, 5
        %v2025 = vshll.u32 %v1904, 16
        %v2027 = vrot.slane %v2025, 6
        %v2028 = vor.u32 %v2024, %v2027
        %v2029 = vsel %vm362, %v2020, %v2028
        %v2030 = vrot.slane %v2028, 4
        %v2032 = vshrl.u32 %v1905, 16
        %v2034 = vrot.slane %v2032, 5
        %v2035 = vshll.u32 %v1905, 16
        %v2037 = vrot.slane %v2035, 6
        %v2038 = vor.u32 %v2034, %v2037
        %v2039 = vsel %vm362, %v2030, %v2038
        %v2040 = vrot.slane %v2038, 4
        %v2042 = vshrl.u32 %v1906, 16
        %v2044 = vrot.slane %v2042, 5
        %v2045 = vshll.u32 %v1906, 16
        %v2047 = vrot.slane %v2045, 6
        %v2048 = vor.u32 %v2044, %v2047
        %v2049 = vsel %vm362, %v2040, %v2048
        %v2050 = vrot.slane %v2048, 4
        %v2052 = vshrl.u32 %v1907, 16
        %v2054 = vrot.slane %v2052, 5
        %v2055 = vshll.u32 %v1907, 16
        %v2057 = vrot.slane %v2055, 6
        %v2058 = vor.u32 %v2054, %v2057
        %v2059 = vsel %vm362, %v2050, %v2058
        %v2060 = vrot.slane %v2058, 4
        %v2062 = vshrl.u32 %v1908, 16
        %v2064 = vrot.slane %v2062, 5
        %v2065 = vshll.u32 %v1908, 16
        %v2067 = vrot.slane %v2065, 6
        %v2068 = vor.u32 %v2064, %v2067
        %v2069 = vsel %vm362, %v2060, %v2068
        %v2070 = vrot.slane %v2068, 4
        %v2072 = vshrl.u32 %v1909, 16
        %v2074 = vrot.slane %v2072, 5
        %v2075 = vshll.u32 %v1909, 16
        %v2077 = vrot.slane %v2075, 6
        %v2078 = vor.u32 %v2074, %v2077
        %v2079 = vsel %vm362, %v2070, %v2078
        %v2080 = vrot.slane %v2078, 4
        %v2082 = vshrl.u32 %v1910, 16
        %v2084 = vrot.slane %v2082, 5
        %v2085 = vshll.u32 %v1910, 16
        %v2087 = vrot.slane %v2085, 6
        %v2088 = vor.u32 %v2084, %v2087
        %v2089 = vsel %vm362, %v2080, %v2088
        %v2090 = vrot.slane %v2088, 4
        %v2092 = vshrl.u32 %v1911, 16
        %v2094 = vrot.slane %v2092, 5
        %v2095 = vshll.u32 %v1911, 16
        %v2097 = vrot.slane %v2095, 6
        %v2098 = vor.u32 %v2094, %v2097
        %v2099 = vsel %vm362, %v2090, %v2098
        %v2100 = vrot.slane %v2098, 4
        %v2102 = vshrl.u32 %v1912, 16
        %v2104 = vrot.slane %v2102, 5
        %v2105 = vshll.u32 %v1912, 16
        %v2107 = vrot.slane %v2105, 6
        %v2108 = vor.u32 %v2104, %v2107
        %v2109 = vsel %vm362, %v2100, %v2108
        %v2110 = vrot.slane %v2108, 4
        %v2112 = vshrl.u32 %v1913, 16
        %v2114 = vrot.slane %v2112, 5
        %v2115 = vshll.u32 %v1913, 16
        %v2117 = vrot.slane %v2115, 6
        %v2118 = vor.u32 %v2114, %v2117
        %v2119 = vsel %vm362, %v2110, %v2118
        %v2120 = vrot.slane %v2118, 4
        %v2122 = vshrl.u32 %v1914, 16
        %v2124 = vrot.slane %v2122, 5
        %v2125 = vshll.u32 %v1914, 16
        %v2127 = vrot.slane %v2125, 6
        %v2128 = vor.u32 %v2124, %v2127
        %v2129 = vsel %vm362, %v2120, %v2128
        %v2130 = vrot.slane %v2128, 4
        %v2132 = vshrl.u32 %v1915, 16
        %v2134 = vrot.slane %v2132, 5
        %v2135 = vshll.u32 %v1915, 16
        %v2137 = vrot.slane %v2135, 6
        %v2138 = vor.u32 %v2134, %v2137
        %v2139 = vsel %vm362, %v2130, %v2138
        %v2140 = vrot.slane %v2138, 4
        %v2142 = vshrl.u32 %v1916, 16
        %v2144 = vrot.slane %v2142, 5
        %v2145 = vshll.u32 %v1916, 16
        %v2147 = vrot.slane %v2145, 6
        %v2148 = vor.u32 %v2144, %v2147
        %v2149 = vsel %vm362, %v2140, %v2148
        %v2150 = vrot.slane %v2148, 4
        %v2152 = vshrl.u32 %v1917, 16
        %v2154 = vrot.slane %v2152, 5
        %v2155 = vshll.u32 %v1917, 16
        %v2157 = vrot.slane %v2155, 6
        %v2158 = vor.u32 %v2154, %v2157
        %v2159 = vsel %vm362, %v2150, %v2158
        %v2160 = vrot.slane %v2158, 4
        %v2162 = vshrl.u32 %v1918, 16
        %v2164 = vrot.slane %v2162, 5
        %v2165 = vshll.u32 %v1918, 16
        %v2167 = vrot.slane %v2165, 6
        %v2168 = vor.u32 %v2164, %v2167
        %v2169 = vsel %vm362, %v2160, %v2168
        %v2170 = vrot.slane %v2168, 4
        %v2172 = vshrl.u32 %v1919, 16
        %v2174 = vrot.slane %v2172, 5
        %v2175 = vshll.u32 %v1919, 16
        %v2177 = vrot.slane %v2175, 6
        %v2178 = vor.u32 %v2174, %v2177
        %v2179 = vsel %vm362, %v2170, %v2178
        %v2180 = vrot.slane %v2178, 4
        %v2182 = vshrl.u32 %v1920, 16
        %v2184 = vrot.slane %v2182, 5
        %v2185 = vshll.u32 %v1920, 16
        %v2187 = vrot.slane %v2185, 6
        %v2188 = vor.u32 %v2184, %v2187
        %v2189 = vsel %vm362, %v2180, %v2188
        %v2190 = vrot.slane %v2188, 4
        %v2192 = vshrl.u32 %v1921, 16
        %v2194 = vrot.slane %v2192, 5
        %v2195 = vshll.u32 %v1921, 16
        %v2197 = vrot.slane %v2195, 6
        %v2198 = vor.u32 %v2194, %v2197
        %v2199 = vsel %vm362, %v2190, %v2198
        %v2200 = vrot.slane %v2198, 4
        %v2202 = vshrl.u32 %v1922, 16
        %v2204 = vrot.slane %v2202, 5
        %v2205 = vshll.u32 %v1922, 16
        %v2207 = vrot.slane %v2205, 6
        %v2208 = vor.u32 %v2204, %v2207
        %v2209 = vsel %vm362, %v2200, %v2208
        %v2210 = vrot.slane %v2208, 4
        %v2212 = vshrl.u32 %v1923, 16
        %v2214 = vrot.slane %v2212, 5
        %v2215 = vshll.u32 %v1923, 16
        %v2217 = vrot.slane %v2215, 6
        %v2218 = vor.u32 %v2214, %v2217
        %v2219 = vsel %vm362, %v2210, %v2218
        %v2220 = vrot.slane %v2218, 4
        %v2222 = vshrl.u32 %v1924, 16
        %v2224 = vrot.slane %v2222, 5
        %v2225 = vshll.u32 %v1924, 16
        %v2227 = vrot.slane %v2225, 6
        %v2228 = vor.u32 %v2224, %v2227
        %v2229 = vsel %vm362, %v2220, %v2228
        %v2230 = vrot.slane %v2228, 4
        %v2232 = vshrl.u32 %v1925, 16
        %v2234 = vrot.slane %v2232, 5
        %v2235 = vshll.u32 %v1925, 16
        %v2237 = vrot.slane %v2235, 6
        %v2238 = vor.u32 %v2234, %v2237
        %v2239 = vsel %vm362, %v2230, %v2238
        %v2240 = vrot.slane %v2238, 4
        %v2242 = vshrl.u32 %v1926, 16
        %v2244 = vrot.slane %v2242, 5
        %v2245 = vshll.u32 %v1926, 16
        %v2247 = vrot.slane %v2245, 6
        %v2248 = vor.u32 %v2244, %v2247
        %v2249 = vsel %vm362, %v2240, %v2248
        %v2250 = vrot.slane %v2248, 4
        %v2252 = vshrl.u32 %v1927, 16
        %v2254 = vrot.slane %v2252, 5
        %v2255 = vshll.u32 %v1927, 16
        %v2257 = vrot.slane %v2255, 6
        %v2258 = vor.u32 %v2254, %v2257
        %v2259 = vsel %vm362, %v2250, %v2258
        %v2260 = vrot.slane %v2258, 4
        %v2262 = vshrl.u32 %v1928, 16
        %v2264 = vrot.slane %v2262, 5
        %v2265 = vshll.u32 %v1928, 16
        %v2267 = vrot.slane %v2265, 6
        %v2268 = vor.u32 %v2264, %v2267
        %v2269 = vsel %vm362, %v2260, %v2268
        %v2270 = vrot.slane %v2268, 4
        %v2272 = vshrl.u32 %v1929, 16
        %v2274 = vrot.slane %v2272, 5
        %v2275 = vshll.u32 %v1929, 16
        %v2277 = vrot.slane %v2275, 6
        %v2278 = vor.u32 %v2274, %v2277
        %v2279 = vsel %vm362, %v2270, %v2278
        %v2280 = vrot.slane %v2278, 4
        %v2282 = vshrl.u32 %v1930, 16
        %v2284 = vrot.slane %v2282, 5
        %v2285 = vshll.u32 %v1930, 16
        %v2287 = vrot.slane %v2285, 6
        %v2288 = vor.u32 %v2284, %v2287
        %v2289 = vsel %vm362, %v2280, %v2288
        %v2290 = vrot.slane %v2288, 4
        %v2292 = vshrl.u32 %v1931, 16
        %v2294 = vrot.slane %v2292, 5
        %v2295 = vshll.u32 %v1931, 16
        %v2297 = vrot.slane %v2295, 6
        %v2298 = vor.u32 %v2294, %v2297
        %v2299 = vsel %vm362, %v2290, %v2298
        %2336 = vst [vmem:[#allocation6 + $0x10] sm:$0xf] %v1949
        %2337 = vst [vmem:[#allocation6 + $0x34] sm:$0xf] %v1959
        %2338 = vst [vmem:[#allocation6 + $0x58] sm:$0xf] %v1969
        %2339 = vst [vmem:[#allocation6 + $0x7c] sm:$0xf] %v1979
        %2340 = vst [vmem:[#allocation6 + $0xa0] sm:$0xf] %v1989
        %2341 = vst [vmem:[#allocation6 + $0xc4] sm:$0xf] %v1999
        %2342 = vst [vmem:[#allocation6 + $0xe8] sm:$0xf] %v2009
        %2343 = vst [vmem:[#allocation6 + $0x10c] sm:$0xf] %v2019
        %2344 = vst [vmem:[#allocation6 + $0x130] sm:$0xf] %v2029
        %2345 = vst [vmem:[#allocation6 + $0x154] sm:$0xf] %v2039
        %2346 = vst [vmem:[#allocation6 + $0x178] sm:$0xf] %v2049
        %2347 = vst [vmem:[#allocation6 + $0x19c] sm:$0xf] %v2059
        %2348 = vst [vmem:[#allocation6 + $0x1c0] sm:$0xf] %v2069
        %2349 = vst [vmem:[#allocation6 + $0x1e4] sm:$0xf] %v2079
        %2350 = vst [vmem:[#allocation6 + $0x208] sm:$0xf] %v2089
        %2351 = vst [vmem:[#allocation6 + $0x22c] sm:$0xf] %v2099
        %2352 = vst [vmem:[#allocation6 + $0x250] sm:$0xf] %v2109
        %2353 = vst [vmem:[#allocation6 + $0x274] sm:$0xf] %v2119
        %2354 = vst [vmem:[#allocation6 + $0x298] sm:$0xf] %v2129
        %2355 = vst [vmem:[#allocation6 + $0x2bc] sm:$0xf] %v2139
        %2356 = vst [vmem:[#allocation6 + $0x2e0] sm:$0xf] %v2149
        %2357 = vst [vmem:[#allocation6 + $0x304] sm:$0xf] %v2159
        %2358 = vst [vmem:[#allocation6 + $0x328] sm:$0xf] %v2169
        %2359 = vst [vmem:[#allocation6 + $0x34c] sm:$0xf] %v2179
        %2360 = vst [vmem:[#allocation6 + $0x370] sm:$0xf] %v2189
        %2361 = vst [vmem:[#allocation6 + $0x394] sm:$0xf] %v2199
        %2362 = vst [vmem:[#allocation6 + $0x3b8] sm:$0xf] %v2209
        %2363 = vst [vmem:[#allocation6 + $0x3dc] sm:$0xf] %v2219
        %2364 = vst [vmem:[#allocation6 + $0x400] sm:$0xf] %v2229
        %2365 = vst [vmem:[#allocation6 + $0x424] sm:$0xf] %v2239
        %2366 = vst [vmem:[#allocation6 + $0x448] sm:$0xf] %v2249
        %2367 = vst [vmem:[#allocation6 + $0x46c] sm:$0xf] %v2259
        %2368 = vst [vmem:[#allocation6 + $0x490] sm:$0xf] %v2269
        %2369 = vst [vmem:[#allocation6 + $0x4b4] sm:$0xf] %v2279
        %2370 = vst [vmem:[#allocation6 + $0x4d8] sm:$0xf] %v2289
        %2371 = vst [vmem:[#allocation6 + $0x4fc] sm:$0xf] %v2299
        %v2372 = vld [vmem:[#allocation2 + $0x8] sm:$0xc]
        %v2373 = vld [vmem:[#allocation2 + $0xc] sm:$0xf]
        %v2374 = vld [vmem:[#allocation2 + $0x10] sm:$0xf]
        %v2375 = vld [vmem:[#allocation2 + $0x14] sm:$0xf]
        %v2376 = vld [vmem:[#allocation2 + $0x18] sm:$0xf]
        %v2377 = vld [vmem:[#allocation2 + $0x1c] sm:$0xf]
        %v2378 = vld [vmem:[#allocation2 + $0x20] sm:$0xf]
        %v2379 = vld [vmem:[#allocation2 + $0x24] sm:$0xf]
        %v2380 = vld [vmem:[#allocation2 + $0x28] sm:$0xf]
        %v2381 = vld [vmem:[#allocation2 + $0x2c] sm:$0xf]
        %v2382 = vld [vmem:[#allocation2 + $0x30] sm:$0xf]
        %v2383 = vld [vmem:[#allocation2 + $0x34] sm:$0xf]
        %v2384 = vld [vmem:[#allocation2 + $0x38] sm:$0xf]
        %v2385 = vld [vmem:[#allocation2 + $0x3c] sm:$0xf]
        %v2386 = vld [vmem:[#allocation2 + $0x40] sm:$0xf]
        %v2387 = vld [vmem:[#allocation2 + $0x44] sm:$0xf]
        %v2388 = vld [vmem:[#allocation2 + $0x48] sm:$0xf]
        %v2389 = vld [vmem:[#allocation2 + $0x4c] sm:$0xf]
        %v2390 = vld [vmem:[#allocation2 + $0x50] sm:$0xf]
        %v2391 = vld [vmem:[#allocation2 + $0x54] sm:$0xf]
        %v2392 = vld [vmem:[#allocation2 + $0x58] sm:$0xf]
        %v2393 = vld [vmem:[#allocation2 + $0x5c] sm:$0xf]
        %v2394 = vld [vmem:[#allocation2 + $0x60] sm:$0xf]
        %v2395 = vld [vmem:[#allocation2 + $0x64] sm:$0xf]
        %v2396 = vld [vmem:[#allocation2 + $0x68] sm:$0xf]
        %v2397 = vld [vmem:[#allocation2 + $0x6c] sm:$0xf]
        %v2398 = vld [vmem:[#allocation2 + $0x70] sm:$0xf]
        %v2399 = vld [vmem:[#allocation2 + $0x74] sm:$0xf]
        %v2400 = vld [vmem:[#allocation2 + $0x78] sm:$0xf]
        %v2401 = vld [vmem:[#allocation2 + $0x7c] sm:$0xf]
        %v2402 = vld [vmem:[#allocation2 + $0x80] sm:$0xf]
        %v2403 = vld [vmem:[#allocation2 + $0x84] sm:$0xf]
        %v2404 = vld [vmem:[#allocation2 + $0x88] sm:$0xf]
        %v2405 = vld [vmem:[#allocation2 + $0x8c] sm:$0xf]
        %v2406 = vld [vmem:[#allocation2 + $0x90] sm:$0xf]
        %v2407 = vld [vmem:[#allocation2 + $0x94] sm:$0xf]
        %v2408 = vld [vmem:[#allocation2 + $0x98] sm:$0x3]
        %vm2446 = vcmask 1045508
        %vm2447 = vmor %vm353, %vm2446
        %v2448 = vrot.slane %v2372, 6
        %v2449 = vrot.slane %v2448, 4
        %v2450 = vrot.slane %v2373, 6
        %v2451 = vsel %vm2447, %v2449, %v2450
        %v2452 = vrot.slane %v2450, 4
        %v2453 = vrot.slane %v2374, 6
        %v2454 = vsel %vm2447, %v2452, %v2453
        %v2455 = vrot.slane %v2453, 4
        %v2456 = vrot.slane %v2375, 6
        %v2457 = vsel %vm2447, %v2455, %v2456
        %v2458 = vrot.slane %v2456, 4
        %v2459 = vrot.slane %v2376, 6
        %v2460 = vsel %vm2447, %v2458, %v2459
        %v2461 = vrot.slane %v2459, 4
        %v2462 = vrot.slane %v2377, 6
        %v2463 = vsel %vm2447, %v2461, %v2462
        %v2464 = vrot.slane %v2462, 4
        %v2465 = vrot.slane %v2378, 6
        %v2466 = vsel %vm2447, %v2464, %v2465
        %v2467 = vrot.slane %v2465, 4
        %v2468 = vrot.slane %v2379, 6
        %v2469 = vsel %vm2447, %v2467, %v2468
        %v2470 = vrot.slane %v2468, 4
        %v2471 = vrot.slane %v2380, 6
        %v2472 = vsel %vm2447, %v2470, %v2471
        %v2473 = vrot.slane %v2471, 4
        %v2474 = vrot.slane %v2381, 6
        %v2475 = vsel %vm2447, %v2473, %v2474
        %v2476 = vrot.slane %v2474, 4
        %v2477 = vrot.slane %v2382, 6
        %v2478 = vsel %vm2447, %v2476, %v2477
        %v2479 = vrot.slane %v2477, 4
        %v2480 = vrot.slane %v2383, 6
        %v2481 = vsel %vm2447, %v2479, %v2480
        %v2482 = vrot.slane %v2480, 4
        %v2483 = vrot.slane %v2384, 6
        %v2484 = vsel %vm2447, %v2482, %v2483
        %v2485 = vrot.slane %v2483, 4
        %v2486 = vrot.slane %v2385, 6
        %v2487 = vsel %vm2447, %v2485, %v2486
        %v2488 = vrot.slane %v2486, 4
        %v2489 = vrot.slane %v2386, 6
        %v2490 = vsel %vm2447, %v2488, %v2489
        %v2491 = vrot.slane %v2489, 4
        %v2492 = vrot.slane %v2387, 6
        %v2493 = vsel %vm2447, %v2491, %v2492
        %v2494 = vrot.slane %v2492, 4
        %v2495 = vrot.slane %v2388, 6
        %v2496 = vsel %vm2447, %v2494, %v2495
        %v2497 = vrot.slane %v2495, 4
        %v2498 = vrot.slane %v2389, 6
        %v2499 = vsel %vm2447, %v2497, %v2498
        %v2500 = vrot.slane %v2498, 4
        %v2501 = vrot.slane %v2390, 6
        %v2502 = vsel %vm2447, %v2500, %v2501
        %v2503 = vrot.slane %v2501, 4
        %v2504 = vrot.slane %v2391, 6
        %v2505 = vsel %vm2447, %v2503, %v2504
        %v2506 = vrot.slane %v2504, 4
        %v2507 = vrot.slane %v2392, 6
        %v2508 = vsel %vm2447, %v2506, %v2507
        %v2509 = vrot.slane %v2507, 4
        %v2510 = vrot.slane %v2393, 6
        %v2511 = vsel %vm2447, %v2509, %v2510
        %v2512 = vrot.slane %v2510, 4
        %v2513 = vrot.slane %v2394, 6
        %v2514 = vsel %vm2447, %v2512, %v2513
        %v2515 = vrot.slane %v2513, 4
        %v2516 = vrot.slane %v2395, 6
        %v2517 = vsel %vm2447, %v2515, %v2516
        %v2518 = vrot.slane %v2516, 4
        %v2519 = vrot.slane %v2396, 6
        %v2520 = vsel %vm2447, %v2518, %v2519
        %v2521 = vrot.slane %v2519, 4
        %v2522 = vrot.slane %v2397, 6
        %v2523 = vsel %vm2447, %v2521, %v2522
        %v2524 = vrot.slane %v2522, 4
        %v2525 = vrot.slane %v2398, 6
        %v2526 = vsel %vm2447, %v2524, %v2525
        %v2527 = vrot.slane %v2525, 4
        %v2528 = vrot.slane %v2399, 6
        %v2529 = vsel %vm2447, %v2527, %v2528
        %v2530 = vrot.slane %v2528, 4
        %v2531 = vrot.slane %v2400, 6
        %v2532 = vsel %vm2447, %v2530, %v2531
        %v2533 = vrot.slane %v2531, 4
        %v2534 = vrot.slane %v2401, 6
        %v2535 = vsel %vm2447, %v2533, %v2534
        %v2536 = vrot.slane %v2534, 4
        %v2537 = vrot.slane %v2402, 6
        %v2538 = vsel %vm2447, %v2536, %v2537
        %v2539 = vrot.slane %v2537, 4
        %v2540 = vrot.slane %v2403, 6
        %v2541 = vsel %vm2447, %v2539, %v2540
        %v2542 = vrot.slane %v2540, 4
        %v2543 = vrot.slane %v2404, 6
        %v2544 = vsel %vm2447, %v2542, %v2543
        %v2545 = vrot.slane %v2543, 4
        %v2546 = vrot.slane %v2405, 6
        %v2547 = vsel %vm2447, %v2545, %v2546
        %v2548 = vrot.slane %v2546, 4
        %v2549 = vrot.slane %v2406, 6
        %v2550 = vsel %vm2447, %v2548, %v2549
        %v2551 = vrot.slane %v2549, 4
        %v2552 = vrot.slane %v2407, 6
        %v2553 = vsel %vm2447, %v2551, %v2552
        %v2554 = vrot.slane %v2552, 4
        %v2555 = vrot.slane %v2408, 6
        %v2556 = vsel %vm2447, %v2554, %v2555
        %2593 = vst [vmem:[#allocation6 + $0x14] sm:$0xf] %v2451
        %2594 = vst [vmem:[#allocation6 + $0x38] sm:$0xf] %v2454
        %2595 = vst [vmem:[#allocation6 + $0x5c] sm:$0xf] %v2457
        %2596 = vst [vmem:[#allocation6 + $0x80] sm:$0xf] %v2460
        %2597 = vst [vmem:[#allocation6 + $0xa4] sm:$0xf] %v2463
        %2598 = vst [vmem:[#allocation6 + $0xc8] sm:$0xf] %v2466
        %2599 = vst [vmem:[#allocation6 + $0xec] sm:$0xf] %v2469
        %2600 = vst [vmem:[#allocation6 + $0x110] sm:$0xf] %v2472
        %2601 = vst [vmem:[#allocation6 + $0x134] sm:$0xf] %v2475
        %2602 = vst [vmem:[#allocation6 + $0x158] sm:$0xf] %v2478
        %2603 = vst [vmem:[#allocation6 + $0x17c] sm:$0xf] %v2481
        %2604 = vst [vmem:[#allocation6 + $0x1a0] sm:$0xf] %v2484
        %2605 = vst [vmem:[#allocation6 + $0x1c4] sm:$0xf] %v2487
        %2606 = vst [vmem:[#allocation6 + $0x1e8] sm:$0xf] %v2490
        %2607 = vst [vmem:[#allocation6 + $0x20c] sm:$0xf] %v2493
        %2608 = vst [vmem:[#allocation6 + $0x230] sm:$0xf] %v2496
        %2609 = vst [vmem:[#allocation6 + $0x254] sm:$0xf] %v2499
        %2610 = vst [vmem:[#allocation6 + $0x278] sm:$0xf] %v2502
        %2611 = vst [vmem:[#allocation6 + $0x29c] sm:$0xf] %v2505
        %2612 = vst [vmem:[#allocation6 + $0x2c0] sm:$0xf] %v2508
        %2613 = vst [vmem:[#allocation6 + $0x2e4] sm:$0xf] %v2511
        %2614 = vst [vmem:[#allocation6 + $0x308] sm:$0xf] %v2514
        %2615 = vst [vmem:[#allocation6 + $0x32c] sm:$0xf] %v2517
        %2616 = vst [vmem:[#allocation6 + $0x350] sm:$0xf] %v2520
        %2617 = vst [vmem:[#allocation6 + $0x374] sm:$0xf] %v2523
        %2618 = vst [vmem:[#allocation6 + $0x398] sm:$0xf] %v2526
        %2619 = vst [vmem:[#allocation6 + $0x3bc] sm:$0xf] %v2529
        %2620 = vst [vmem:[#allocation6 + $0x3e0] sm:$0xf] %v2532
        %2621 = vst [vmem:[#allocation6 + $0x404] sm:$0xf] %v2535
        %2622 = vst [vmem:[#allocation6 + $0x428] sm:$0xf] %v2538
        %2623 = vst [vmem:[#allocation6 + $0x44c] sm:$0xf] %v2541
        %2624 = vst [vmem:[#allocation6 + $0x470] sm:$0xf] %v2544
        %2625 = vst [vmem:[#allocation6 + $0x494] sm:$0xf] %v2547
        %2626 = vst [vmem:[#allocation6 + $0x4b8] sm:$0xf] %v2550
        %2627 = vst [vmem:[#allocation6 + $0x4dc] sm:$0xf] %v2553
        %2628 = vst [vmem:[#allocation6 + $0x500] sm:$0xf] %v2556
        %v2629 = vld [vmem:[#allocation2 + $0x10] sm:$0xc]
        %v2630 = vld [vmem:[#allocation2 + $0x14] sm:$0xf]
        %v2631 = vld [vmem:[#allocation2 + $0x18] sm:$0xf]
        %v2632 = vld [vmem:[#allocation2 + $0x1c] sm:$0xf]
        %v2633 = vld [vmem:[#allocation2 + $0x20] sm:$0xf]
        %v2634 = vld [vmem:[#allocation2 + $0x24] sm:$0xf]
        %v2635 = vld [vmem:[#allocation2 + $0x28] sm:$0xf]
        %v2636 = vld [vmem:[#allocation2 + $0x2c] sm:$0xf]
        %v2637 = vld [vmem:[#allocation2 + $0x30] sm:$0xf]
        %v2638 = vld [vmem:[#allocation2 + $0x34] sm:$0xf]
        %v2639 = vld [vmem:[#allocation2 + $0x38] sm:$0xf]
        %v2640 = vld [vmem:[#allocation2 + $0x3c] sm:$0xf]
        %v2641 = vld [vmem:[#allocation2 + $0x40] sm:$0xf]
        %v2642 = vld [vmem:[#allocation2 + $0x44] sm:$0xf]
        %v2643 = vld [vmem:[#allocation2 + $0x48] sm:$0xf]
        %v2644 = vld [vmem:[#allocation2 + $0x4c] sm:$0xf]
        %v2645 = vld [vmem:[#allocation2 + $0x50] sm:$0xf]
        %v2646 = vld [vmem:[#allocation2 + $0x54] sm:$0xf]
        %v2647 = vld [vmem:[#allocation2 + $0x58] sm:$0xf]
        %v2648 = vld [vmem:[#allocation2 + $0x5c] sm:$0xf]
        %v2649 = vld [vmem:[#allocation2 + $0x60] sm:$0xf]
        %v2650 = vld [vmem:[#allocation2 + $0x64] sm:$0xf]
        %v2651 = vld [vmem:[#allocation2 + $0x68] sm:$0xf]
        %v2652 = vld [vmem:[#allocation2 + $0x6c] sm:$0xf]
        %v2653 = vld [vmem:[#allocation2 + $0x70] sm:$0xf]
        %v2654 = vld [vmem:[#allocation2 + $0x74] sm:$0xf]
        %v2655 = vld [vmem:[#allocation2 + $0x78] sm:$0xf]
        %v2656 = vld [vmem:[#allocation2 + $0x7c] sm:$0xf]
        %v2657 = vld [vmem:[#allocation2 + $0x80] sm:$0xf]
        %v2658 = vld [vmem:[#allocation2 + $0x84] sm:$0xf]
        %v2659 = vld [vmem:[#allocation2 + $0x88] sm:$0xf]
        %v2660 = vld [vmem:[#allocation2 + $0x8c] sm:$0xf]
        %v2661 = vld [vmem:[#allocation2 + $0x90] sm:$0xf]
        %v2662 = vld [vmem:[#allocation2 + $0x94] sm:$0xf]
        %v2663 = vld [vmem:[#allocation2 + $0x98] sm:$0xf]
        %v2664 = vld [vmem:[#allocation2 + $0x9c] sm:$0xf]
        %v2665 = vld [vmem:[#allocation2 + $0xa0] sm:$0x3]
        %v2703 = vrot.slane %v2629, 6
        %v2704 = vrot.slane %v2703, 4
        %v2705 = vrot.slane %v2630, 6
        %v2706 = vsel %vm2447, %v2704, %v2705
        %v2707 = vrot.slane %v2705, 4
        %v2708 = vrot.slane %v2631, 6
        %v2709 = vsel %vm2447, %v2707, %v2708
        %v2710 = vrot.slane %v2708, 4
        %v2711 = vrot.slane %v2632, 6
        %v2712 = vsel %vm2447, %v2710, %v2711
        %v2713 = vrot.slane %v2711, 4
        %v2714 = vrot.slane %v2633, 6
        %v2715 = vsel %vm2447, %v2713, %v2714
        %v2716 = vrot.slane %v2714, 4
        %v2717 = vrot.slane %v2634, 6
        %v2718 = vsel %vm2447, %v2716, %v2717
        %v2719 = vrot.slane %v2717, 4
        %v2720 = vrot.slane %v2635, 6
        %v2721 = vsel %vm2447, %v2719, %v2720
        %v2722 = vrot.slane %v2720, 4
        %v2723 = vrot.slane %v2636, 6
        %v2724 = vsel %vm2447, %v2722, %v2723
        %v2725 = vrot.slane %v2723, 4
        %v2726 = vrot.slane %v2637, 6
        %v2727 = vsel %vm2447, %v2725, %v2726
        %v2728 = vrot.slane %v2726, 4
        %v2729 = vrot.slane %v2638, 6
        %v2730 = vsel %vm2447, %v2728, %v2729
        %v2731 = vrot.slane %v2729, 4
        %v2732 = vrot.slane %v2639, 6
        %v2733 = vsel %vm2447, %v2731, %v2732
        %v2734 = vrot.slane %v2732, 4
        %v2735 = vrot.slane %v2640, 6
        %v2736 = vsel %vm2447, %v2734, %v2735
        %v2737 = vrot.slane %v2735, 4
        %v2738 = vrot.slane %v2641, 6
        %v2739 = vsel %vm2447, %v2737, %v2738
        %v2740 = vrot.slane %v2738, 4
        %v2741 = vrot.slane %v2642, 6
        %v2742 = vsel %vm2447, %v2740, %v2741
        %v2743 = vrot.slane %v2741, 4
        %v2744 = vrot.slane %v2643, 6
        %v2745 = vsel %vm2447, %v2743, %v2744
        %v2746 = vrot.slane %v2744, 4
        %v2747 = vrot.slane %v2644, 6
        %v2748 = vsel %vm2447, %v2746, %v2747
        %v2749 = vrot.slane %v2747, 4
        %v2750 = vrot.slane %v2645, 6
        %v2751 = vsel %vm2447, %v2749, %v2750
        %v2752 = vrot.slane %v2750, 4
        %v2753 = vrot.slane %v2646, 6
        %v2754 = vsel %vm2447, %v2752, %v2753
        %v2755 = vrot.slane %v2753, 4
        %v2756 = vrot.slane %v2647, 6
        %v2757 = vsel %vm2447, %v2755, %v2756
        %v2758 = vrot.slane %v2756, 4
        %v2759 = vrot.slane %v2648, 6
        %v2760 = vsel %vm2447, %v2758, %v2759
        %v2761 = vrot.slane %v2759, 4
        %v2762 = vrot.slane %v2649, 6
        %v2763 = vsel %vm2447, %v2761, %v2762
        %v2764 = vrot.slane %v2762, 4
        %v2765 = vrot.slane %v2650, 6
        %v2766 = vsel %vm2447, %v2764, %v2765
        %v2767 = vrot.slane %v2765, 4
        %v2768 = vrot.slane %v2651, 6
        %v2769 = vsel %vm2447, %v2767, %v2768
        %v2770 = vrot.slane %v2768, 4
        %v2771 = vrot.slane %v2652, 6
        %v2772 = vsel %vm2447, %v2770, %v2771
        %v2773 = vrot.slane %v2771, 4
        %v2774 = vrot.slane %v2653, 6
        %v2775 = vsel %vm2447, %v2773, %v2774
        %v2776 = vrot.slane %v2774, 4
        %v2777 = vrot.slane %v2654, 6
        %v2778 = vsel %vm2447, %v2776, %v2777
        %v2779 = vrot.slane %v2777, 4
        %v2780 = vrot.slane %v2655, 6
        %v2781 = vsel %vm2447, %v2779, %v2780
        %v2782 = vrot.slane %v2780, 4
        %v2783 = vrot.slane %v2656, 6
        %v2784 = vsel %vm2447, %v2782, %v2783
        %v2785 = vrot.slane %v2783, 4
        %v2786 = vrot.slane %v2657, 6
        %v2787 = vsel %vm2447, %v2785, %v2786
        %v2788 = vrot.slane %v2786, 4
        %v2789 = vrot.slane %v2658, 6
        %v2790 = vsel %vm2447, %v2788, %v2789
        %v2791 = vrot.slane %v2789, 4
        %v2792 = vrot.slane %v2659, 6
        %v2793 = vsel %vm2447, %v2791, %v2792
        %v2794 = vrot.slane %v2792, 4
        %v2795 = vrot.slane %v2660, 6
        %v2796 = vsel %vm2447, %v2794, %v2795
        %v2797 = vrot.slane %v2795, 4
        %v2798 = vrot.slane %v2661, 6
        %v2799 = vsel %vm2447, %v2797, %v2798
        %v2800 = vrot.slane %v2798, 4
        %v2801 = vrot.slane %v2662, 6
        %v2802 = vsel %vm2447, %v2800, %v2801
        %v2803 = vrot.slane %v2801, 4
        %v2804 = vrot.slane %v2663, 6
        %v2805 = vsel %vm2447, %v2803, %v2804
        %v2806 = vrot.slane %v2804, 4
        %v2807 = vrot.slane %v2664, 6
        %v2808 = vsel %vm2447, %v2806, %v2807
        %v2809 = vrot.slane %v2807, 4
        %v2810 = vrot.slane %v2665, 6
        %v2811 = vsel %vm2447, %v2809, %v2810
        %2848 = vst [vmem:[#allocation6 + $0x18] sm:$0xf] %v2706
        %2849 = vst [vmem:[#allocation6 + $0x3c] sm:$0xf] %v2709
        %2850 = vst [vmem:[#allocation6 + $0x60] sm:$0xf] %v2712
        %2851 = vst [vmem:[#allocation6 + $0x84] sm:$0xf] %v2715
        %2852 = vst [vmem:[#allocation6 + $0xa8] sm:$0xf] %v2718
        %2853 = vst [vmem:[#allocation6 + $0xcc] sm:$0xf] %v2721
        %2854 = vst [vmem:[#allocation6 + $0xf0] sm:$0xf] %v2724
        %2855 = vst [vmem:[#allocation6 + $0x114] sm:$0xf] %v2727
        %2856 = vst [vmem:[#allocation6 + $0x138] sm:$0xf] %v2730
        %2857 = vst [vmem:[#allocation6 + $0x15c] sm:$0xf] %v2733
        %2858 = vst [vmem:[#allocation6 + $0x180] sm:$0xf] %v2736
        %2859 = vst [vmem:[#allocation6 + $0x1a4] sm:$0xf] %v2739
        %2860 = vst [vmem:[#allocation6 + $0x1c8] sm:$0xf] %v2742
        %2861 = vst [vmem:[#allocation6 + $0x1ec] sm:$0xf] %v2745
        %2862 = vst [vmem:[#allocation6 + $0x210] sm:$0xf] %v2748
        %2863 = vst [vmem:[#allocation6 + $0x234] sm:$0xf] %v2751
        %2864 = vst [vmem:[#allocation6 + $0x258] sm:$0xf] %v2754
        %2865 = vst [vmem:[#allocation6 + $0x27c] sm:$0xf] %v2757
        %2866 = vst [vmem:[#allocation6 + $0x2a0] sm:$0xf] %v2760
        %2867 = vst [vmem:[#allocation6 + $0x2c4] sm:$0xf] %v2763
        %2868 = vst [vmem:[#allocation6 + $0x2e8] sm:$0xf] %v2766
        %2869 = vst [vmem:[#allocation6 + $0x30c] sm:$0xf] %v2769
        %2870 = vst [vmem:[#allocation6 + $0x330] sm:$0xf] %v2772
        %2871 = vst [vmem:[#allocation6 + $0x354] sm:$0xf] %v2775
        %2872 = vst [vmem:[#allocation6 + $0x378] sm:$0xf] %v2778
        %2873 = vst [vmem:[#allocation6 + $0x39c] sm:$0xf] %v2781
        %2874 = vst [vmem:[#allocation6 + $0x3c0] sm:$0xf] %v2784
        %2875 = vst [vmem:[#allocation6 + $0x3e4] sm:$0xf] %v2787
        %2876 = vst [vmem:[#allocation6 + $0x408] sm:$0xf] %v2790
        %2877 = vst [vmem:[#allocation6 + $0x42c] sm:$0xf] %v2793
        %2878 = vst [vmem:[#allocation6 + $0x450] sm:$0xf] %v2796
        %2879 = vst [vmem:[#allocation6 + $0x474] sm:$0xf] %v2799
        %2880 = vst [vmem:[#allocation6 + $0x498] sm:$0xf] %v2802
        %2881 = vst [vmem:[#allocation6 + $0x4bc] sm:$0xf] %v2805
        %2882 = vst [vmem:[#allocation6 + $0x4e0] sm:$0xf] %v2808
        %2883 = vst [vmem:[#allocation6 + $0x504] sm:$0xf] %v2811
        %v2884 = vld [vmem:[#allocation2 + $0x10] sm:$0xc]
        %v2885 = vld [vmem:[#allocation2 + $0x14] sm:$0xf]
        %v2886 = vld [vmem:[#allocation2 + $0x18] sm:$0xf]
        %v2887 = vld [vmem:[#allocation2 + $0x1c] sm:$0xf]
        %v2888 = vld [vmem:[#allocation2 + $0x20] sm:$0xf]
        %v2889 = vld [vmem:[#allocation2 + $0x24] sm:$0xf]
        %v2890 = vld [vmem:[#allocation2 + $0x28] sm:$0xf]
        %v2891 = vld [vmem:[#allocation2 + $0x2c] sm:$0xf]
        %v2892 = vld [vmem:[#allocation2 + $0x30] sm:$0xf]
        %v2893 = vld [vmem:[#allocation2 + $0x34] sm:$0xf]
        %v2894 = vld [vmem:[#allocation2 + $0x38] sm:$0xf]
        %v2895 = vld [vmem:[#allocation2 + $0x3c] sm:$0xf]
        %v2896 = vld [vmem:[#allocation2 + $0x40] sm:$0xf]
        %v2897 = vld [vmem:[#allocation2 + $0x44] sm:$0xf]
        %v2898 = vld [vmem:[#allocation2 + $0x48] sm:$0xf]
        %v2899 = vld [vmem:[#allocation2 + $0x4c] sm:$0xf]
        %v2900 = vld [vmem:[#allocation2 + $0x50] sm:$0xf]
        %v2901 = vld [vmem:[#allocation2 + $0x54] sm:$0xf]
        %v2902 = vld [vmem:[#allocation2 + $0x58] sm:$0xf]
        %v2903 = vld [vmem:[#allocation2 + $0x5c] sm:$0xf]
        %v2904 = vld [vmem:[#allocation2 + $0x60] sm:$0xf]
        %v2905 = vld [vmem:[#allocation2 + $0x64] sm:$0xf]
        %v2906 = vld [vmem:[#allocation2 + $0x68] sm:$0xf]
        %v2907 = vld [vmem:[#allocation2 + $0x6c] sm:$0xf]
        %v2908 = vld [vmem:[#allocation2 + $0x70] sm:$0xf]
        %v2909 = vld [vmem:[#allocation2 + $0x74] sm:$0xf]
        %v2910 = vld [vmem:[#allocation2 + $0x78] sm:$0xf]
        %v2911 = vld [vmem:[#allocation2 + $0x7c] sm:$0xf]
        %v2912 = vld [vmem:[#allocation2 + $0x80] sm:$0xf]
        %v2913 = vld [vmem:[#allocation2 + $0x84] sm:$0xf]
        %v2914 = vld [vmem:[#allocation2 + $0x88] sm:$0xf]
        %v2915 = vld [vmem:[#allocation2 + $0x8c] sm:$0xf]
        %v2916 = vld [vmem:[#allocation2 + $0x90] sm:$0xf]
        %v2917 = vld [vmem:[#allocation2 + $0x94] sm:$0xf]
        %v2918 = vld [vmem:[#allocation2 + $0x98] sm:$0xf]
        %v2919 = vld [vmem:[#allocation2 + $0x9c] sm:$0xf]
        %v2920 = vld [vmem:[#allocation2 + $0xa0] sm:$0x7]
        %v2922 = vshrl.u32 %v2884, 16
        %v2924 = vrot.slane %v2922, 6
        %v2925 = vshll.u32 %v2884, 16
        %v2927 = vrot.slane %v2925, 7
        %v2928 = vor.u32 %v2924, %v2927
        %v2929 = vrot.slane %v2928, 4
        %v2931 = vshrl.u32 %v2885, 16
        %v2933 = vrot.slane %v2931, 6
        %v2934 = vshll.u32 %v2885, 16
        %v2936 = vrot.slane %v2934, 7
        %v2937 = vor.u32 %v2933, %v2936
        %v2938 = vsel %vm323, %v2929, %v2937
        %v2939 = vrot.slane %v2937, 4
        %v2941 = vshrl.u32 %v2886, 16
        %v2943 = vrot.slane %v2941, 6
        %v2944 = vshll.u32 %v2886, 16
        %v2946 = vrot.slane %v2944, 7
        %v2947 = vor.u32 %v2943, %v2946
        %v2948 = vsel %vm323, %v2939, %v2947
        %v2949 = vrot.slane %v2947, 4
        %v2951 = vshrl.u32 %v2887, 16
        %v2953 = vrot.slane %v2951, 6
        %v2954 = vshll.u32 %v2887, 16
        %v2956 = vrot.slane %v2954, 7
        %v2957 = vor.u32 %v2953, %v2956
        %v2958 = vsel %vm323, %v2949, %v2957
        %v2959 = vrot.slane %v2957, 4
        %v2961 = vshrl.u32 %v2888, 16
        %v2963 = vrot.slane %v2961, 6
        %v2964 = vshll.u32 %v2888, 16
        %v2966 = vrot.slane %v2964, 7
        %v2967 = vor.u32 %v2963, %v2966
        %v2968 = vsel %vm323, %v2959, %v2967
        %v2969 = vrot.slane %v2967, 4
        %v2971 = vshrl.u32 %v2889, 16
        %v2973 = vrot.slane %v2971, 6
        %v2974 = vshll.u32 %v2889, 16
        %v2976 = vrot.slane %v2974, 7
        %v2977 = vor.u32 %v2973, %v2976
        %v2978 = vsel %vm323, %v2969, %v2977
        %v2979 = vrot.slane %v2977, 4
        %v2981 = vshrl.u32 %v2890, 16
        %v2983 = vrot.slane %v2981, 6
        %v2984 = vshll.u32 %v2890, 16
        %v2986 = vrot.slane %v2984, 7
        %v2987 = vor.u32 %v2983, %v2986
        %v2988 = vsel %vm323, %v2979, %v2987
        %v2989 = vrot.slane %v2987, 4
        %v2991 = vshrl.u32 %v2891, 16
        %v2993 = vrot.slane %v2991, 6
        %v2994 = vshll.u32 %v2891, 16
        %v2996 = vrot.slane %v2994, 7
        %v2997 = vor.u32 %v2993, %v2996
        %v2998 = vsel %vm323, %v2989, %v2997
        %v2999 = vrot.slane %v2997, 4
        %v3001 = vshrl.u32 %v2892, 16
        %v3003 = vrot.slane %v3001, 6
        %v3004 = vshll.u32 %v2892, 16
        %v3006 = vrot.slane %v3004, 7
        %v3007 = vor.u32 %v3003, %v3006
        %v3008 = vsel %vm323, %v2999, %v3007
        %v3009 = vrot.slane %v3007, 4
        %v3011 = vshrl.u32 %v2893, 16
        %v3013 = vrot.slane %v3011, 6
        %v3014 = vshll.u32 %v2893, 16
        %v3016 = vrot.slane %v3014, 7
        %v3017 = vor.u32 %v3013, %v3016
        %v3018 = vsel %vm323, %v3009, %v3017
        %v3019 = vrot.slane %v3017, 4
        %v3021 = vshrl.u32 %v2894, 16
        %v3023 = vrot.slane %v3021, 6
        %v3024 = vshll.u32 %v2894, 16
        %v3026 = vrot.slane %v3024, 7
        %v3027 = vor.u32 %v3023, %v3026
        %v3028 = vsel %vm323, %v3019, %v3027
        %v3029 = vrot.slane %v3027, 4
        %v3031 = vshrl.u32 %v2895, 16
        %v3033 = vrot.slane %v3031, 6
        %v3034 = vshll.u32 %v2895, 16
        %v3036 = vrot.slane %v3034, 7
        %v3037 = vor.u32 %v3033, %v3036
        %v3038 = vsel %vm323, %v3029, %v3037
        %v3039 = vrot.slane %v3037, 4
        %v3041 = vshrl.u32 %v2896, 16
        %v3043 = vrot.slane %v3041, 6
        %v3044 = vshll.u32 %v2896, 16
        %v3046 = vrot.slane %v3044, 7
        %v3047 = vor.u32 %v3043, %v3046
        %v3048 = vsel %vm323, %v3039, %v3047
        %v3049 = vrot.slane %v3047, 4
        %v3051 = vshrl.u32 %v2897, 16
        %v3053 = vrot.slane %v3051, 6
        %v3054 = vshll.u32 %v2897, 16
        %v3056 = vrot.slane %v3054, 7
        %v3057 = vor.u32 %v3053, %v3056
        %v3058 = vsel %vm323, %v3049, %v3057
        %v3059 = vrot.slane %v3057, 4
        %v3061 = vshrl.u32 %v2898, 16
        %v3063 = vrot.slane %v3061, 6
        %v3064 = vshll.u32 %v2898, 16
        %v3066 = vrot.slane %v3064, 7
        %v3067 = vor.u32 %v3063, %v3066
        %v3068 = vsel %vm323, %v3059, %v3067
        %v3069 = vrot.slane %v3067, 4
        %v3071 = vshrl.u32 %v2899, 16
        %v3073 = vrot.slane %v3071, 6
        %v3074 = vshll.u32 %v2899, 16
        %v3076 = vrot.slane %v3074, 7
        %v3077 = vor.u32 %v3073, %v3076
        %v3078 = vsel %vm323, %v3069, %v3077
        %v3079 = vrot.slane %v3077, 4
        %v3081 = vshrl.u32 %v2900, 16
        %v3083 = vrot.slane %v3081, 6
        %v3084 = vshll.u32 %v2900, 16
        %v3086 = vrot.slane %v3084, 7
        %v3087 = vor.u32 %v3083, %v3086
        %v3088 = vsel %vm323, %v3079, %v3087
        %v3089 = vrot.slane %v3087, 4
        %v3091 = vshrl.u32 %v2901, 16
        %v3093 = vrot.slane %v3091, 6
        %v3094 = vshll.u32 %v2901, 16
        %v3096 = vrot.slane %v3094, 7
        %v3097 = vor.u32 %v3093, %v3096
        %v3098 = vsel %vm323, %v3089, %v3097
        %v3099 = vrot.slane %v3097, 4
        %v3101 = vshrl.u32 %v2902, 16
        %v3103 = vrot.slane %v3101, 6
        %v3104 = vshll.u32 %v2902, 16
        %v3106 = vrot.slane %v3104, 7
        %v3107 = vor.u32 %v3103, %v3106
        %v3108 = vsel %vm323, %v3099, %v3107
        %v3109 = vrot.slane %v3107, 4
        %v3111 = vshrl.u32 %v2903, 16
        %v3113 = vrot.slane %v3111, 6
        %v3114 = vshll.u32 %v2903, 16
        %v3116 = vrot.slane %v3114, 7
        %v3117 = vor.u32 %v3113, %v3116
        %v3118 = vsel %vm323, %v3109, %v3117
        %v3119 = vrot.slane %v3117, 4
        %v3121 = vshrl.u32 %v2904, 16
        %v3123 = vrot.slane %v3121, 6
        %v3124 = vshll.u32 %v2904, 16
        %v3126 = vrot.slane %v3124, 7
        %v3127 = vor.u32 %v3123, %v3126
        %v3128 = vsel %vm323, %v3119, %v3127
        %v3129 = vrot.slane %v3127, 4
        %v3131 = vshrl.u32 %v2905, 16
        %v3133 = vrot.slane %v3131, 6
        %v3134 = vshll.u32 %v2905, 16
        %v3136 = vrot.slane %v3134, 7
        %v3137 = vor.u32 %v3133, %v3136
        %v3138 = vsel %vm323, %v3129, %v3137
        %v3139 = vrot.slane %v3137, 4
        %v3141 = vshrl.u32 %v2906, 16
        %v3143 = vrot.slane %v3141, 6
        %v3144 = vshll.u32 %v2906, 16
        %v3146 = vrot.slane %v3144, 7
        %v3147 = vor.u32 %v3143, %v3146
        %v3148 = vsel %vm323, %v3139, %v3147
        %v3149 = vrot.slane %v3147, 4
        %v3151 = vshrl.u32 %v2907, 16
        %v3153 = vrot.slane %v3151, 6
        %v3154 = vshll.u32 %v2907, 16
        %v3156 = vrot.slane %v3154, 7
        %v3157 = vor.u32 %v3153, %v3156
        %v3158 = vsel %vm323, %v3149, %v3157
        %v3159 = vrot.slane %v3157, 4
        %v3161 = vshrl.u32 %v2908, 16
        %v3163 = vrot.slane %v3161, 6
        %v3164 = vshll.u32 %v2908, 16
        %v3166 = vrot.slane %v3164, 7
        %v3167 = vor.u32 %v3163, %v3166
        %v3168 = vsel %vm323, %v3159, %v3167
        %v3169 = vrot.slane %v3167, 4
        %v3171 = vshrl.u32 %v2909, 16
        %v3173 = vrot.slane %v3171, 6
        %v3174 = vshll.u32 %v2909, 16
        %v3176 = vrot.slane %v3174, 7
        %v3177 = vor.u32 %v3173, %v3176
        %v3178 = vsel %vm323, %v3169, %v3177
        %v3179 = vrot.slane %v3177, 4
        %v3181 = vshrl.u32 %v2910, 16
        %v3183 = vrot.slane %v3181, 6
        %v3184 = vshll.u32 %v2910, 16
        %v3186 = vrot.slane %v3184, 7
        %v3187 = vor.u32 %v3183, %v3186
        %v3188 = vsel %vm323, %v3179, %v3187
        %v3189 = vrot.slane %v3187, 4
        %v3191 = vshrl.u32 %v2911, 16
        %v3193 = vrot.slane %v3191, 6
        %v3194 = vshll.u32 %v2911, 16
        %v3196 = vrot.slane %v3194, 7
        %v3197 = vor.u32 %v3193, %v3196
        %v3198 = vsel %vm323, %v3189, %v3197
        %v3199 = vrot.slane %v3197, 4
        %v3201 = vshrl.u32 %v2912, 16
        %v3203 = vrot.slane %v3201, 6
        %v3204 = vshll.u32 %v2912, 16
        %v3206 = vrot.slane %v3204, 7
        %v3207 = vor.u32 %v3203, %v3206
        %v3208 = vsel %vm323, %v3199, %v3207
        %v3209 = vrot.slane %v3207, 4
        %v3211 = vshrl.u32 %v2913, 16
        %v3213 = vrot.slane %v3211, 6
        %v3214 = vshll.u32 %v2913, 16
        %v3216 = vrot.slane %v3214, 7
        %v3217 = vor.u32 %v3213, %v3216
        %v3218 = vsel %vm323, %v3209, %v3217
        %v3219 = vrot.slane %v3217, 4
        %v3221 = vshrl.u32 %v2914, 16
        %v3223 = vrot.slane %v3221, 6
        %v3224 = vshll.u32 %v2914, 16
        %v3226 = vrot.slane %v3224, 7
        %v3227 = vor.u32 %v3223, %v3226
        %v3228 = vsel %vm323, %v3219, %v3227
        %v3229 = vrot.slane %v3227, 4
        %v3231 = vshrl.u32 %v2915, 16
        %v3233 = vrot.slane %v3231, 6
        %v3234 = vshll.u32 %v2915, 16
        %v3236 = vrot.slane %v3234, 7
        %v3237 = vor.u32 %v3233, %v3236
        %v3238 = vsel %vm323, %v3229, %v3237
        %v3239 = vrot.slane %v3237, 4
        %v3241 = vshrl.u32 %v2916, 16
        %v3243 = vrot.slane %v3241, 6
        %v3244 = vshll.u32 %v2916, 16
        %v3246 = vrot.slane %v3244, 7
        %v3247 = vor.u32 %v3243, %v3246
        %v3248 = vsel %vm323, %v3239, %v3247
        %v3249 = vrot.slane %v3247, 4
        %v3251 = vshrl.u32 %v2917, 16
        %v3253 = vrot.slane %v3251, 6
        %v3254 = vshll.u32 %v2917, 16
        %v3256 = vrot.slane %v3254, 7
        %v3257 = vor.u32 %v3253, %v3256
        %v3258 = vsel %vm323, %v3249, %v3257
        %v3259 = vrot.slane %v3257, 4
        %v3261 = vshrl.u32 %v2918, 16
        %v3263 = vrot.slane %v3261, 6
        %v3264 = vshll.u32 %v2918, 16
        %v3266 = vrot.slane %v3264, 7
        %v3267 = vor.u32 %v3263, %v3266
        %v3268 = vsel %vm323, %v3259, %v3267
        %v3269 = vrot.slane %v3267, 4
        %v3271 = vshrl.u32 %v2919, 16
        %v3273 = vrot.slane %v3271, 6
        %v3274 = vshll.u32 %v2919, 16
        %v3276 = vrot.slane %v3274, 7
        %v3277 = vor.u32 %v3273, %v3276
        %v3278 = vsel %vm323, %v3269, %v3277
        %v3279 = vrot.slane %v3277, 4
        %v3281 = vshrl.u32 %v2920, 16
        %v3283 = vrot.slane %v3281, 6
        %v3284 = vshll.u32 %v2920, 16
        %v3286 = vrot.slane %v3284, 7
        %v3287 = vor.u32 %v3283, %v3286
        %v3288 = vsel %vm323, %v3279, %v3287
        %3325 = vst [vmem:[#allocation6 + $0x1c] sm:$0xf] %v2938
        %3326 = vst [vmem:[#allocation6 + $0x40] sm:$0xf] %v2948
        %3327 = vst [vmem:[#allocation6 + $0x64] sm:$0xf] %v2958
        %3328 = vst [vmem:[#allocation6 + $0x88] sm:$0xf] %v2968
        %3329 = vst [vmem:[#allocation6 + $0xac] sm:$0xf] %v2978
        %3330 = vst [vmem:[#allocation6 + $0xd0] sm:$0xf] %v2988
        %3331 = vst [vmem:[#allocation6 + $0xf4] sm:$0xf] %v2998
        %3332 = vst [vmem:[#allocation6 + $0x118] sm:$0xf] %v3008
        %3333 = vst [vmem:[#allocation6 + $0x13c] sm:$0xf] %v3018
        %3334 = vst [vmem:[#allocation6 + $0x160] sm:$0xf] %v3028
        %3335 = vst [vmem:[#allocation6 + $0x184] sm:$0xf] %v3038
        %3336 = vst [vmem:[#allocation6 + $0x1a8] sm:$0xf] %v3048
        %3337 = vst [vmem:[#allocation6 + $0x1cc] sm:$0xf] %v3058
        %3338 = vst [vmem:[#allocation6 + $0x1f0] sm:$0xf] %v3068
        %3339 = vst [vmem:[#allocation6 + $0x214] sm:$0xf] %v3078
        %3340 = vst [vmem:[#allocation6 + $0x238] sm:$0xf] %v3088
        %3341 = vst [vmem:[#allocation6 + $0x25c] sm:$0xf] %v3098
        %3342 = vst [vmem:[#allocation6 + $0x280] sm:$0xf] %v3108
        %3343 = vst [vmem:[#allocation6 + $0x2a4] sm:$0xf] %v3118
        %3344 = vst [vmem:[#allocation6 + $0x2c8] sm:$0xf] %v3128
        %3345 = vst [vmem:[#allocation6 + $0x2ec] sm:$0xf] %v3138
        %3346 = vst [vmem:[#allocation6 + $0x310] sm:$0xf] %v3148
        %3347 = vst [vmem:[#allocation6 + $0x334] sm:$0xf] %v3158
        %3348 = vst [vmem:[#allocation6 + $0x358] sm:$0xf] %v3168
        %3349 = vst [vmem:[#allocation6 + $0x37c] sm:$0xf] %v3178
        %3350 = vst [vmem:[#allocation6 + $0x3a0] sm:$0xf] %v3188
        %3351 = vst [vmem:[#allocation6 + $0x3c4] sm:$0xf] %v3198
        %3352 = vst [vmem:[#allocation6 + $0x3e8] sm:$0xf] %v3208
        %3353 = vst [vmem:[#allocation6 + $0x40c] sm:$0xf] %v3218
        %3354 = vst [vmem:[#allocation6 + $0x430] sm:$0xf] %v3228
        %3355 = vst [vmem:[#allocation6 + $0x454] sm:$0xf] %v3238
        %3356 = vst [vmem:[#allocation6 + $0x478] sm:$0xf] %v3248
        %3357 = vst [vmem:[#allocation6 + $0x49c] sm:$0xf] %v3258
        %3358 = vst [vmem:[#allocation6 + $0x4c0] sm:$0xf] %v3268
        %3359 = vst [vmem:[#allocation6 + $0x4e4] sm:$0xf] %v3278
        %3360 = vst [vmem:[#allocation6 + $0x508] sm:$0xf] %v3288
        %v3361 = vld [vmem:[#allocation2 + $0x10] sm:$0x8]
        %v3362 = vld [vmem:[#allocation2 + $0x14] sm:$0xf]
        %v3363 = vld [vmem:[#allocation2 + $0x18] sm:$0xf]
        %v3364 = vld [vmem:[#allocation2 + $0x1c] sm:$0xf]
        %v3365 = vld [vmem:[#allocation2 + $0x20] sm:$0xf]
        %v3366 = vld [vmem:[#allocation2 + $0x24] sm:$0xf]
        %v3367 = vld [vmem:[#allocation2 + $0x28] sm:$0xf]
        %v3368 = vld [vmem:[#allocation2 + $0x2c] sm:$0xf]
        %v3369 = vld [vmem:[#allocation2 + $0x30] sm:$0xf]
        %v3370 = vld [vmem:[#allocation2 + $0x34] sm:$0xf]
        %v3371 = vld [vmem:[#allocation2 + $0x38] sm:$0xf]
        %v3372 = vld [vmem:[#allocation2 + $0x3c] sm:$0xf]
        %v3373 = vld [vmem:[#allocation2 + $0x40] sm:$0xf]
        %v3374 = vld [vmem:[#allocation2 + $0x44] sm:$0xf]
        %v3375 = vld [vmem:[#allocation2 + $0x48] sm:$0xf]
        %v3376 = vld [vmem:[#allocation2 + $0x4c] sm:$0xf]
        %v3377 = vld [vmem:[#allocation2 + $0x50] sm:$0xf]
        %v3378 = vld [vmem:[#allocation2 + $0x54] sm:$0xf]
        %v3379 = vld [vmem:[#allocation2 + $0x58] sm:$0xf]
        %v3380 = vld [vmem:[#allocation2 + $0x5c] sm:$0xf]
        %v3381 = vld [vmem:[#allocation2 + $0x60] sm:$0xf]
        %v3382 = vld [vmem:[#allocation2 + $0x64] sm:$0xf]
        %v3383 = vld [vmem:[#allocation2 + $0x68] sm:$0xf]
        %v3384 = vld [vmem:[#allocation2 + $0x6c] sm:$0xf]
        %v3385 = vld [vmem:[#allocation2 + $0x70] sm:$0xf]
        %v3386 = vld [vmem:[#allocation2 + $0x74] sm:$0xf]
        %v3387 = vld [vmem:[#allocation2 + $0x78] sm:$0xf]
        %v3388 = vld [vmem:[#allocation2 + $0x7c] sm:$0xf]
        %v3389 = vld [vmem:[#allocation2 + $0x80] sm:$0xf]
        %v3390 = vld [vmem:[#allocation2 + $0x84] sm:$0xf]
        %v3391 = vld [vmem:[#allocation2 + $0x88] sm:$0xf]
        %v3392 = vld [vmem:[#allocation2 + $0x8c] sm:$0xf]
        %v3393 = vld [vmem:[#allocation2 + $0x90] sm:$0xf]
        %v3394 = vld [vmem:[#allocation2 + $0x94] sm:$0xf]
        %v3395 = vld [vmem:[#allocation2 + $0x98] sm:$0xf]
        %v3396 = vld [vmem:[#allocation2 + $0x9c] sm:$0xf]
        %v3397 = vld [vmem:[#allocation2 + $0xa0] sm:$0x7]
        %vm3435 = vcmask 1044484
        %vm3436 = vmor %vm467, %vm3435
        %v3437 = vrot.slane %v3361, 7
        %v3438 = vrot.slane %v3437, 4
        %v3439 = vrot.slane %v3362, 7
        %v3440 = vsel %vm3436, %v3438, %v3439
        %v3441 = vrot.slane %v3439, 4
        %v3442 = vrot.slane %v3363, 7
        %v3443 = vsel %vm3436, %v3441, %v3442
        %v3444 = vrot.slane %v3442, 4
        %v3445 = vrot.slane %v3364, 7
        %v3446 = vsel %vm3436, %v3444, %v3445
        %v3447 = vrot.slane %v3445, 4
        %v3448 = vrot.slane %v3365, 7
        %v3449 = vsel %vm3436, %v3447, %v3448
        %v3450 = vrot.slane %v3448, 4
        %v3451 = vrot.slane %v3366, 7
        %v3452 = vsel %vm3436, %v3450, %v3451
        %v3453 = vrot.slane %v3451, 4
        %v3454 = vrot.slane %v3367, 7
        %v3455 = vsel %vm3436, %v3453, %v3454
        %v3456 = vrot.slane %v3454, 4
        %v3457 = vrot.slane %v3368, 7
        %v3458 = vsel %vm3436, %v3456, %v3457
        %v3459 = vrot.slane %v3457, 4
        %v3460 = vrot.slane %v3369, 7
        %v3461 = vsel %vm3436, %v3459, %v3460
        %v3462 = vrot.slane %v3460, 4
        %v3463 = vrot.slane %v3370, 7
        %v3464 = vsel %vm3436, %v3462, %v3463
        %v3465 = vrot.slane %v3463, 4
        %v3466 = vrot.slane %v3371, 7
        %v3467 = vsel %vm3436, %v3465, %v3466
        %v3468 = vrot.slane %v3466, 4
        %v3469 = vrot.slane %v3372, 7
        %v3470 = vsel %vm3436, %v3468, %v3469
        %v3471 = vrot.slane %v3469, 4
        %v3472 = vrot.slane %v3373, 7
        %v3473 = vsel %vm3436, %v3471, %v3472
        %v3474 = vrot.slane %v3472, 4
        %v3475 = vrot.slane %v3374, 7
        %v3476 = vsel %vm3436, %v3474, %v3475
        %v3477 = vrot.slane %v3475, 4
        %v3478 = vrot.slane %v3375, 7
        %v3479 = vsel %vm3436, %v3477, %v3478
        %v3480 = vrot.slane %v3478, 4
        %v3481 = vrot.slane %v3376, 7
        %v3482 = vsel %vm3436, %v3480, %v3481
        %v3483 = vrot.slane %v3481, 4
        %v3484 = vrot.slane %v3377, 7
        %v3485 = vsel %vm3436, %v3483, %v3484
        %v3486 = vrot.slane %v3484, 4
        %v3487 = vrot.slane %v3378, 7
        %v3488 = vsel %vm3436, %v3486, %v3487
        %v3489 = vrot.slane %v3487, 4
        %v3490 = vrot.slane %v3379, 7
        %v3491 = vsel %vm3436, %v3489, %v3490
        %v3492 = vrot.slane %v3490, 4
        %v3493 = vrot.slane %v3380, 7
        %v3494 = vsel %vm3436, %v3492, %v3493
        %v3495 = vrot.slane %v3493, 4
        %v3496 = vrot.slane %v3381, 7
        %v3497 = vsel %vm3436, %v3495, %v3496
        %v3498 = vrot.slane %v3496, 4
        %v3499 = vrot.slane %v3382, 7
        %v3500 = vsel %vm3436, %v3498, %v3499
        %v3501 = vrot.slane %v3499, 4
        %v3502 = vrot.slane %v3383, 7
        %v3503 = vsel %vm3436, %v3501, %v3502
        %v3504 = vrot.slane %v3502, 4
        %v3505 = vrot.slane %v3384, 7
        %v3506 = vsel %vm3436, %v3504, %v3505
        %v3507 = vrot.slane %v3505, 4
        %v3508 = vrot.slane %v3385, 7
        %v3509 = vsel %vm3436, %v3507, %v3508
        %v3510 = vrot.slane %v3508, 4
        %v3511 = vrot.slane %v3386, 7
        %v3512 = vsel %vm3436, %v3510, %v3511
        %v3513 = vrot.slane %v3511, 4
        %v3514 = vrot.slane %v3387, 7
        %v3515 = vsel %vm3436, %v3513, %v3514
        %v3516 = vrot.slane %v3514, 4
        %v3517 = vrot.slane %v3388, 7
        %v3518 = vsel %vm3436, %v3516, %v3517
        %v3519 = vrot.slane %v3517, 4
        %v3520 = vrot.slane %v3389, 7
        %v3521 = vsel %vm3436, %v3519, %v3520
        %v3522 = vrot.slane %v3520, 4
        %v3523 = vrot.slane %v3390, 7
        %v3524 = vsel %vm3436, %v3522, %v3523
        %v3525 = vrot.slane %v3523, 4
        %v3526 = vrot.slane %v3391, 7
        %v3527 = vsel %vm3436, %v3525, %v3526
        %v3528 = vrot.slane %v3526, 4
        %v3529 = vrot.slane %v3392, 7
        %v3530 = vsel %vm3436, %v3528, %v3529
        %v3531 = vrot.slane %v3529, 4
        %v3532 = vrot.slane %v3393, 7
        %v3533 = vsel %vm3436, %v3531, %v3532
        %v3534 = vrot.slane %v3532, 4
        %v3535 = vrot.slane %v3394, 7
        %v3536 = vsel %vm3436, %v3534, %v3535
        %v3537 = vrot.slane %v3535, 4
        %v3538 = vrot.slane %v3395, 7
        %v3539 = vsel %vm3436, %v3537, %v3538
        %v3540 = vrot.slane %v3538, 4
        %v3541 = vrot.slane %v3396, 7
        %v3542 = vsel %vm3436, %v3540, %v3541
        %v3543 = vrot.slane %v3541, 4
        %v3544 = vrot.slane %v3397, 7
        %v3545 = vsel %vm3436, %v3543, %v3544
        %3582 = vst [vmem:[#allocation6 + $0x20] sm:$0xf] %v3440
        %3583 = vst [vmem:[#allocation6 + $0x44] sm:$0xf] %v3443
        %3584 = vst [vmem:[#allocation6 + $0x68] sm:$0xf] %v3446
        %3585 = vst [vmem:[#allocation6 + $0x8c] sm:$0xf] %v3449
        %3586 = vst [vmem:[#allocation6 + $0xb0] sm:$0xf] %v3452
        %3587 = vst [vmem:[#allocation6 + $0xd4] sm:$0xf] %v3455
        %3588 = vst [vmem:[#allocation6 + $0xf8] sm:$0xf] %v3458
        %3589 = vst [vmem:[#allocation6 + $0x11c] sm:$0xf] %v3461
        %3590 = vst [vmem:[#allocation6 + $0x140] sm:$0xf] %v3464
        %3591 = vst [vmem:[#allocation6 + $0x164] sm:$0xf] %v3467
        %3592 = vst [vmem:[#allocation6 + $0x188] sm:$0xf] %v3470
        %3593 = vst [vmem:[#allocation6 + $0x1ac] sm:$0xf] %v3473
        %3594 = vst [vmem:[#allocation6 + $0x1d0] sm:$0xf] %v3476
        %3595 = vst [vmem:[#allocation6 + $0x1f4] sm:$0xf] %v3479
        %3596 = vst [vmem:[#allocation6 + $0x218] sm:$0xf] %v3482
        %3597 = vst [vmem:[#allocation6 + $0x23c] sm:$0xf] %v3485
        %3598 = vst [vmem:[#allocation6 + $0x260] sm:$0xf] %v3488
        %3599 = vst [vmem:[#allocation6 + $0x284] sm:$0xf] %v3491
        %3600 = vst [vmem:[#allocation6 + $0x2a8] sm:$0xf] %v3494
        %3601 = vst [vmem:[#allocation6 + $0x2cc] sm:$0xf] %v3497
        %3602 = vst [vmem:[#allocation6 + $0x2f0] sm:$0xf] %v3500
        %3603 = vst [vmem:[#allocation6 + $0x314] sm:$0xf] %v3503
        %3604 = vst [vmem:[#allocation6 + $0x338] sm:$0xf] %v3506
        %3605 = vst [vmem:[#allocation6 + $0x35c] sm:$0xf] %v3509
        %3606 = vst [vmem:[#allocation6 + $0x380] sm:$0xf] %v3512
        %3607 = vst [vmem:[#allocation6 + $0x3a4] sm:$0xf] %v3515
        %3608 = vst [vmem:[#allocation6 + $0x3c8] sm:$0xf] %v3518
        %3609 = vst [vmem:[#allocation6 + $0x3ec] sm:$0xf] %v3521
        %3610 = vst [vmem:[#allocation6 + $0x410] sm:$0xf] %v3524
        %3611 = vst [vmem:[#allocation6 + $0x434] sm:$0xf] %v3527
        %3612 = vst [vmem:[#allocation6 + $0x458] sm:$0xf] %v3530
        %3613 = vst [vmem:[#allocation6 + $0x47c] sm:$0xf] %v3533
        %3614 = vst [vmem:[#allocation6 + $0x4a0] sm:$0xf] %v3536
        %3615 = vst [vmem:[#allocation6 + $0x4c4] sm:$0xf] %v3539
        %3616 = vst [vmem:[#allocation6 + $0x4e8] sm:$0xf] %v3542
        %3617 = vst [vmem:[#allocation6 + $0x50c] sm:$0xf] %v3545
        %v3618 = vld [vmem:[#allocation6] sm:$0xff]
        %v3619 = vld [vmem:[#allocation6 + $0x8] sm:$0xff]
        %v3620 = vld [vmem:[#allocation6 + $0x10] sm:$0xff]
        %v3621 = vld [vmem:[#allocation6 + $0x18] sm:$0xff]
        %v3622 = vld [vmem:[#allocation6 + $0x20] sm:$0xf]
        %v3623 = vld [vmem:[#allocation6 + $0x24] sm:$0xff]
        %v3624 = vld [vmem:[#allocation6 + $0x2c] sm:$0xff]
        %v3625 = vld [vmem:[#allocation6 + $0x34] sm:$0xff]
        %v3626 = vld [vmem:[#allocation6 + $0x3c] sm:$0xff]
        %v3627 = vld [vmem:[#allocation6 + $0x44] sm:$0xf]
        %v3628 = vld [vmem:[#allocation6 + $0x48] sm:$0xff]
        %v3629 = vld [vmem:[#allocation6 + $0x50] sm:$0xff]
        %v3630 = vld [vmem:[#allocation6 + $0x58] sm:$0xff]
        %v3631 = vld [vmem:[#allocation6 + $0x60] sm:$0xff]
        %v3632 = vld [vmem:[#allocation6 + $0x68] sm:$0xf]
        %v3633 = vld [vmem:[#allocation6 + $0x6c] sm:$0xff]
        %v3634 = vld [vmem:[#allocation6 + $0x74] sm:$0xff]
        %v3635 = vld [vmem:[#allocation6 + $0x7c] sm:$0xff]
        %v3636 = vld [vmem:[#allocation6 + $0x84] sm:$0xff]
        %v3637 = vld [vmem:[#allocation6 + $0x8c] sm:$0xf]
        %v3638 = vld [vmem:[#allocation6 + $0x90] sm:$0xff]
        %v3639 = vld [vmem:[#allocation6 + $0x98] sm:$0xff]
        %v3640 = vld [vmem:[#allocation6 + $0xa0] sm:$0xff]
        %v3641 = vld [vmem:[#allocation6 + $0xa8] sm:$0xff]
        %v3642 = vld [vmem:[#allocation6 + $0xb0] sm:$0xf]
        %v3643 = vld [vmem:[#allocation6 + $0xb4] sm:$0xff]
        %v3644 = vld [vmem:[#allocation6 + $0xbc] sm:$0xff]
        %v3645 = vld [vmem:[#allocation6 + $0xc4] sm:$0xff]
        %v3646 = vld [vmem:[#allocation6 + $0xcc] sm:$0xff]
        %v3647 = vld [vmem:[#allocation6 + $0xd4] sm:$0xf]
        %v3648 = vld [vmem:[#allocation6 + $0xd8] sm:$0xff]
        %v3649 = vld [vmem:[#allocation6 + $0xe0] sm:$0xff]
        %v3650 = vld [vmem:[#allocation6 + $0xe8] sm:$0xff]
        %v3651 = vld [vmem:[#allocation6 + $0xf0] sm:$0xff]
        %v3652 = vld [vmem:[#allocation6 + $0xf8] sm:$0xf]
        %v3653 = vld [vmem:[#allocation6 + $0xfc] sm:$0xff]
        %v3654 = vld [vmem:[#allocation6 + $0x104] sm:$0xff]
        %v3655 = vld [vmem:[#allocation6 + $0x10c] sm:$0xff]
        %v3656 = vld [vmem:[#allocation6 + $0x114] sm:$0xff]
        %v3657 = vld [vmem:[#allocation6 + $0x11c] sm:$0xf]
        %v3658 = vld [vmem:[#allocation6 + $0x120] sm:$0xff]
        %v3659 = vld [vmem:[#allocation6 + $0x128] sm:$0xff]
        %v3660 = vld [vmem:[#allocation6 + $0x130] sm:$0xff]
        %v3661 = vld [vmem:[#allocation6 + $0x138] sm:$0xff]
        %v3662 = vld [vmem:[#allocation6 + $0x140] sm:$0xf]
        %v3663 = vld [vmem:[#allocation6 + $0x144] sm:$0xff]
        %v3664 = vld [vmem:[#allocation6 + $0x14c] sm:$0xff]
        %v3665 = vld [vmem:[#allocation6 + $0x154] sm:$0xff]
        %v3666 = vld [vmem:[#allocation6 + $0x15c] sm:$0xff]
        %v3667 = vld [vmem:[#allocation6 + $0x164] sm:$0xf]
        %v3668 = vld [vmem:[#allocation6 + $0x168] sm:$0xff]
        %v3669 = vld [vmem:[#allocation6 + $0x170] sm:$0xff]
        %v3670 = vld [vmem:[#allocation6 + $0x178] sm:$0xff]
        %v3671 = vld [vmem:[#allocation6 + $0x180] sm:$0xff]
        %v3672 = vld [vmem:[#allocation6 + $0x188] sm:$0xf]
        %v3673 = vld [vmem:[#allocation6 + $0x18c] sm:$0xff]
        %v3674 = vld [vmem:[#allocation6 + $0x194] sm:$0xff]
        %v3675 = vld [vmem:[#allocation6 + $0x19c] sm:$0xff]
        %v3676 = vld [vmem:[#allocation6 + $0x1a4] sm:$0xff]
        %v3677 = vld [vmem:[#allocation6 + $0x1ac] sm:$0xf]
        %v3678 = vld [vmem:[#allocation6 + $0x1b0] sm:$0xff]
        %v3679 = vld [vmem:[#allocation6 + $0x1b8] sm:$0xff]
        %v3680 = vld [vmem:[#allocation6 + $0x1c0] sm:$0xff]
        %v3681 = vld [vmem:[#allocation6 + $0x1c8] sm:$0xff]
        %v3682 = vld [vmem:[#allocation6 + $0x1d0] sm:$0xf]
        %v3683 = vld [vmem:[#allocation6 + $0x1d4] sm:$0xff]
        %v3684 = vld [vmem:[#allocation6 + $0x1dc] sm:$0xff]
        %v3685 = vld [vmem:[#allocation6 + $0x1e4] sm:$0xff]
        %v3686 = vld [vmem:[#allocation6 + $0x1ec] sm:$0xff]
        %v3687 = vld [vmem:[#allocation6 + $0x1f4] sm:$0xf]
        %v3688 = vld [vmem:[#allocation6 + $0x1f8] sm:$0xff]
        %v3689 = vld [vmem:[#allocation6 + $0x200] sm:$0xff]
        %v3690 = vld [vmem:[#allocation6 + $0x208] sm:$0xff]
        %v3691 = vld [vmem:[#allocation6 + $0x210] sm:$0xff]
        %v3692 = vld [vmem:[#allocation6 + $0x218] sm:$0xf]
        %v3693 = vld [vmem:[#allocation6 + $0x21c] sm:$0xff]
        %v3694 = vld [vmem:[#allocation6 + $0x224] sm:$0xff]
        %v3695 = vld [vmem:[#allocation6 + $0x22c] sm:$0xff]
        %v3696 = vld [vmem:[#allocation6 + $0x234] sm:$0xff]
        %v3697 = vld [vmem:[#allocation6 + $0x23c] sm:$0xf]
        %v3698 = vld [vmem:[#allocation6 + $0x240] sm:$0xff]
        %v3699 = vld [vmem:[#allocation6 + $0x248] sm:$0xff]
        %v3700 = vld [vmem:[#allocation6 + $0x250] sm:$0xff]
        %v3701 = vld [vmem:[#allocation6 + $0x258] sm:$0xff]
        %v3702 = vld [vmem:[#allocation6 + $0x260] sm:$0xf]
        %v3703 = vld [vmem:[#allocation6 + $0x264] sm:$0xff]
        %v3704 = vld [vmem:[#allocation6 + $0x26c] sm:$0xff]
        %v3705 = vld [vmem:[#allocation6 + $0x274] sm:$0xff]
        %v3706 = vld [vmem:[#allocation6 + $0x27c] sm:$0xff]
        %v3707 = vld [vmem:[#allocation6 + $0x284] sm:$0xf]
        %v3708 = vld [vmem:[#allocation6 + $0x288] sm:$0xff]
        %v3709 = vld [vmem:[#allocation6 + $0x290] sm:$0xff]
        %v3710 = vld [vmem:[#allocation6 + $0x298] sm:$0xff]
        %v3711 = vld [vmem:[#allocation6 + $0x2a0] sm:$0xff]
        %v3712 = vld [vmem:[#allocation6 + $0x2a8] sm:$0xf]
        %v3713 = vld [vmem:[#allocation6 + $0x2ac] sm:$0xff]
        %v3714 = vld [vmem:[#allocation6 + $0x2b4] sm:$0xff]
        %v3715 = vld [vmem:[#allocation6 + $0x2bc] sm:$0xff]
        %v3716 = vld [vmem:[#allocation6 + $0x2c4] sm:$0xff]
        %v3717 = vld [vmem:[#allocation6 + $0x2cc] sm:$0xf]
        %v3718 = vld [vmem:[#allocation6 + $0x2d0] sm:$0xff]
        %v3719 = vld [vmem:[#allocation6 + $0x2d8] sm:$0xff]
        %v3720 = vld [vmem:[#allocation6 + $0x2e0] sm:$0xff]
        %v3721 = vld [vmem:[#allocation6 + $0x2e8] sm:$0xff]
        %v3722 = vld [vmem:[#allocation6 + $0x2f0] sm:$0xf]
        %v3723 = vld [vmem:[#allocation6 + $0x2f4] sm:$0xff]
        %v3724 = vld [vmem:[#allocation6 + $0x2fc] sm:$0xff]
        %v3725 = vld [vmem:[#allocation6 + $0x304] sm:$0xff]
        %v3726 = vld [vmem:[#allocation6 + $0x30c] sm:$0xff]
        %v3727 = vld [vmem:[#allocation6 + $0x314] sm:$0xf]
        %v3728 = vld [vmem:[#allocation6 + $0x318] sm:$0xff]
        %v3729 = vld [vmem:[#allocation6 + $0x320] sm:$0xff]
        %v3730 = vld [vmem:[#allocation6 + $0x328] sm:$0xff]
        %v3731 = vld [vmem:[#allocation6 + $0x330] sm:$0xff]
        %v3732 = vld [vmem:[#allocation6 + $0x338] sm:$0xf]
        %v3733 = vld [vmem:[#allocation6 + $0x33c] sm:$0xff]
        %v3734 = vld [vmem:[#allocation6 + $0x344] sm:$0xff]
        %v3735 = vld [vmem:[#allocation6 + $0x34c] sm:$0xff]
        %v3736 = vld [vmem:[#allocation6 + $0x354] sm:$0xff]
        %v3737 = vld [vmem:[#allocation6 + $0x35c] sm:$0xf]
        %v3738 = vld [vmem:[#allocation6 + $0x360] sm:$0xff]
        %v3739 = vld [vmem:[#allocation6 + $0x368] sm:$0xff]
        %v3740 = vld [vmem:[#allocation6 + $0x370] sm:$0xff]
        %v3741 = vld [vmem:[#allocation6 + $0x378] sm:$0xff]
        %v3742 = vld [vmem:[#allocation6 + $0x380] sm:$0xf]
        %v3743 = vld [vmem:[#allocation6 + $0x384] sm:$0xff]
        %v3744 = vld [vmem:[#allocation6 + $0x38c] sm:$0xff]
        %v3745 = vld [vmem:[#allocation6 + $0x394] sm:$0xff]
        %v3746 = vld [vmem:[#allocation6 + $0x39c] sm:$0xff]
        %v3747 = vld [vmem:[#allocation6 + $0x3a4] sm:$0xf]
        %v3748 = vld [vmem:[#allocation6 + $0x3a8] sm:$0xff]
        %v3749 = vld [vmem:[#allocation6 + $0x3b0] sm:$0xff]
        %v3750 = vld [vmem:[#allocation6 + $0x3b8] sm:$0xff]
        %v3751 = vld [vmem:[#allocation6 + $0x3c0] sm:$0xff]
        %v3752 = vld [vmem:[#allocation6 + $0x3c8] sm:$0xf]
        %v3753 = vld [vmem:[#allocation6 + $0x3cc] sm:$0xff]
        %v3754 = vld [vmem:[#allocation6 + $0x3d4] sm:$0xff]
        %v3755 = vld [vmem:[#allocation6 + $0x3dc] sm:$0xff]
        %v3756 = vld [vmem:[#allocation6 + $0x3e4] sm:$0xff]
        %v3757 = vld [vmem:[#allocation6 + $0x3ec] sm:$0xf]
        %v3758 = vld [vmem:[#allocation6 + $0x3f0] sm:$0xff]
        %v3759 = vld [vmem:[#allocation6 + $0x3f8] sm:$0xff]
        %v3760 = vld [vmem:[#allocation6 + $0x400] sm:$0xff]
        %v3761 = vld [vmem:[#allocation6 + $0x408] sm:$0xff]
        %v3762 = vld [vmem:[#allocation6 + $0x410] sm:$0xf]
        %v3763 = vld [vmem:[#allocation6 + $0x414] sm:$0xff]
        %v3764 = vld [vmem:[#allocation6 + $0x41c] sm:$0xff]
        %v3765 = vld [vmem:[#allocation6 + $0x424] sm:$0xff]
        %v3766 = vld [vmem:[#allocation6 + $0x42c] sm:$0xff]
        %v3767 = vld [vmem:[#allocation6 + $0x434] sm:$0xf]
        %v3768 = vld [vmem:[#allocation6 + $0x438] sm:$0xff]
        %v3769 = vld [vmem:[#allocation6 + $0x440] sm:$0xff]
        %v3770 = vld [vmem:[#allocation6 + $0x448] sm:$0xff]
        %v3771 = vld [vmem:[#allocation6 + $0x450] sm:$0xff]
        %v3772 = vld [vmem:[#allocation6 + $0x458] sm:$0xf]
        %v3773 = vld [vmem:[#allocation6 + $0x45c] sm:$0xff]
        %v3774 = vld [vmem:[#allocation6 + $0x464] sm:$0xff]
        %v3775 = vld [vmem:[#allocation6 + $0x46c] sm:$0xff]
        %v3776 = vld [vmem:[#allocation6 + $0x474] sm:$0xff]
        %v3777 = vld [vmem:[#allocation6 + $0x47c] sm:$0xf]
        %v3778 = vld [vmem:[#allocation6 + $0x480] sm:$0xff]
        %v3779 = vld [vmem:[#allocation6 + $0x488] sm:$0xff]
        %v3780 = vld [vmem:[#allocation6 + $0x490] sm:$0xff]
        %v3781 = vld [vmem:[#allocation6 + $0x498] sm:$0xff]
        %v3782 = vld [vmem:[#allocation6 + $0x4a0] sm:$0xf]
        %v3783 = vld [vmem:[#allocation6 + $0x4a4] sm:$0xff]
        %v3784 = vld [vmem:[#allocation6 + $0x4ac] sm:$0xff]
        %v3785 = vld [vmem:[#allocation6 + $0x4b4] sm:$0xff]
        %v3786 = vld [vmem:[#allocation6 + $0x4bc] sm:$0xff]
        %v3787 = vld [vmem:[#allocation6 + $0x4c4] sm:$0xf]
        %v3788 = vld [vmem:[#allocation6 + $0x4c8] sm:$0xff]
        %v3789 = vld [vmem:[#allocation6 + $0x4d0] sm:$0xff]
        %v3790 = vld [vmem:[#allocation6 + $0x4d8] sm:$0xff]
        %v3791 = vld [vmem:[#allocation6 + $0x4e0] sm:$0xff]
        %v3792 = vld [vmem:[#allocation6 + $0x4e8] sm:$0xf]
        %v3793 = vld [vmem:[#allocation6 + $0x4ec] sm:$0xff]
        %v3794 = vld [vmem:[#allocation6 + $0x4f4] sm:$0xff]
        %v3795 = vld [vmem:[#allocation6 + $0x4fc] sm:$0xff]
        %v3796 = vld [vmem:[#allocation6 + $0x504] sm:$0xff]
        %v3797 = vld [vmem:[#allocation6 + $0x50c] sm:$0xf]
        %v3798 = vld [vmem:[#allocation8] sm:$0xf]
        %v3799 = vld [vmem:[#allocation8 + $0x4] sm:$0xf]
        %v3800 = vld [vmem:[#allocation8 + $0x8] sm:$0xf]
        %v3801 = vld [vmem:[#allocation8 + $0xc] sm:$0xf]
        %v3802 = vld [vmem:[#allocation8 + $0x10] sm:$0xf]
        %v3803 = vld [vmem:[#allocation8 + $0x14] sm:$0xf]
        %v3804 = vld [vmem:[#allocation8 + $0x18] sm:$0xf]
        %v3805 = vld [vmem:[#allocation8 + $0x1c] sm:$0xf]
        %v3806 = vld [vmem:[#allocation8 + $0x20] sm:$0xf]
        %v3807 = vld [vmem:[#allocation8 + $0x24] sm:$0xf]
        %v3808 = vld [vmem:[#allocation8 + $0x28] sm:$0xf]
        %v3809 = vld [vmem:[#allocation8 + $0x2c] sm:$0xf]
        %v3810 = vld [vmem:[#allocation8 + $0x30] sm:$0xf]
        %v3811 = vld [vmem:[#allocation8 + $0x34] sm:$0xf]
        %v3812 = vld [vmem:[#allocation8 + $0x38] sm:$0xf]
        %v3813 = vld [vmem:[#allocation8 + $0x3c] sm:$0xf]
        %v3814 = vld [vmem:[#allocation8 + $0x40] sm:$0xf]
        %v3815 = vld [vmem:[#allocation8 + $0x44] sm:$0xf]
        %v3816 = vld [vmem:[#allocation8 + $0x48] sm:$0xf]
        %v3817 = vld [vmem:[#allocation8 + $0x4c] sm:$0xf]
        %v3818 = vld [vmem:[#allocation8 + $0x50] sm:$0xf]
        %v3819 = vld [vmem:[#allocation8 + $0x54] sm:$0xf]
        %v3820 = vld [vmem:[#allocation8 + $0x58] sm:$0xf]
        %v3821 = vld [vmem:[#allocation8 + $0x5c] sm:$0xf]
        %v3822 = vld [vmem:[#allocation8 + $0x60] sm:$0xf]
        %v3823 = vld [vmem:[#allocation8 + $0x64] sm:$0xf]
        %v3824 = vld [vmem:[#allocation8 + $0x68] sm:$0xf]
        %v3825 = vld [vmem:[#allocation8 + $0x6c] sm:$0xf]
        %v3826 = vld [vmem:[#allocation8 + $0x70] sm:$0xf]
        %v3827 = vld [vmem:[#allocation8 + $0x74] sm:$0xf]
        %v3828 = vld [vmem:[#allocation8 + $0x78] sm:$0xf]
        %v3829 = vld [vmem:[#allocation8 + $0x7c] sm:$0xf]
        %v3830 = vld [vmem:[#allocation8 + $0x80] sm:$0xf]
        %v3831 = vld [vmem:[#allocation8 + $0x84] sm:$0xf]
        %v3832 = vld [vmem:[#allocation8 + $0x88] sm:$0xf]
        %v3833 = vld [vmem:[#allocation8 + $0x8c] sm:$0xf]
        %v3834 = vld [vmem:[#allocation8 + $0x90] sm:$0xf]
        %v3835 = vld [vmem:[#allocation8 + $0x94] sm:$0xf]
        %v3836 = vld [vmem:[#allocation8 + $0x98] sm:$0xf]
        %v3837 = vld [vmem:[#allocation8 + $0x9c] sm:$0xf]
        %v3838 = vld [vmem:[#allocation8 + $0xa0] sm:$0xf]
        %v3839 = vld [vmem:[#allocation8 + $0xa4] sm:$0xf]
        %v3840 = vld [vmem:[#allocation8 + $0xa8] sm:$0xf]
        %v3841 = vld [vmem:[#allocation8 + $0xac] sm:$0xf]
        %v3842 = vld [vmem:[#allocation8 + $0xb0] sm:$0xf]
        %v3843 = vld [vmem:[#allocation8 + $0xb4] sm:$0xf]
        %v3844 = vld [vmem:[#allocation8 + $0xb8] sm:$0xf]
        %v3845 = vld [vmem:[#allocation8 + $0xbc] sm:$0xf]
        %v3846 = vld [vmem:[#allocation8 + $0xc0] sm:$0xf]
        %v3847 = vld [vmem:[#allocation8 + $0xc4] sm:$0xf]
        %v3848 = vld [vmem:[#allocation8 + $0xc8] sm:$0xf]
        %v3849 = vld [vmem:[#allocation8 + $0xcc] sm:$0xf]
        %v3850 = vld [vmem:[#allocation8 + $0xd0] sm:$0xf]
        %v3851 = vld [vmem:[#allocation8 + $0xd4] sm:$0xf]
        %v3852 = vld [vmem:[#allocation8 + $0xd8] sm:$0xf]
        %v3853 = vld [vmem:[#allocation8 + $0xdc] sm:$0xf]
        %v3854 = vld [vmem:[#allocation8 + $0xe0] sm:$0xf]
        %v3855 = vld [vmem:[#allocation8 + $0xe4] sm:$0xf]
        %v3856 = vld [vmem:[#allocation8 + $0xe8] sm:$0xf]
        %v3857 = vld [vmem:[#allocation8 + $0xec] sm:$0xf]
        %v3858 = vld [vmem:[#allocation8 + $0xf0] sm:$0xf]
        %v3859 = vld [vmem:[#allocation8 + $0xf4] sm:$0xf]
        %v3860 = vld [vmem:[#allocation8 + $0xf8] sm:$0xf]
        %v3861 = vld [vmem:[#allocation8 + $0xfc] sm:$0xf]
        %v3862 = vld [vmem:[#allocation8 + $0x100] sm:$0xf]
        %v3863 = vld [vmem:[#allocation8 + $0x104] sm:$0xf]
        %v3864 = vld [vmem:[#allocation8 + $0x108] sm:$0xf]
        %v3865 = vld [vmem:[#allocation8 + $0x10c] sm:$0xf]
        %v3866 = vld [vmem:[#allocation8 + $0x110] sm:$0xf]
        %v3867 = vld [vmem:[#allocation8 + $0x114] sm:$0xf]
        %v3868 = vld [vmem:[#allocation8 + $0x118] sm:$0xf]
        %v3869 = vld [vmem:[#allocation8 + $0x11c] sm:$0xf]
        %v3870 = vld [vmem:[#allocation8 + $0x120] sm:$0xf]
        %v3871 = vld [vmem:[#allocation8 + $0x124] sm:$0xf]
        %v3872 = vld [vmem:[#allocation8 + $0x128] sm:$0xf]
        %v3873 = vld [vmem:[#allocation8 + $0x12c] sm:$0xf]
        %v3874 = vld [vmem:[#allocation8 + $0x130] sm:$0xf]
        %v3875 = vld [vmem:[#allocation8 + $0x134] sm:$0xf]
        %v3876 = vld [vmem:[#allocation8 + $0x138] sm:$0xf]
        %v3877 = vld [vmem:[#allocation8 + $0x13c] sm:$0xf]
        %v3878 = vld [vmem:[#allocation8 + $0x140] sm:$0xf]
        %v3879 = vld [vmem:[#allocation8 + $0x144] sm:$0xf]
        %v3880 = vld [vmem:[#allocation8 + $0x148] sm:$0xf]
        %v3881 = vld [vmem:[#allocation8 + $0x14c] sm:$0xf]
        %v3882 = vld [vmem:[#allocation8 + $0x150] sm:$0xf]
        %v3883 = vld [vmem:[#allocation8 + $0x154] sm:$0xf]
        %v3884 = vld [vmem:[#allocation8 + $0x158] sm:$0xf]
        %v3885 = vld [vmem:[#allocation8 + $0x15c] sm:$0xf]
        %v3886 = vld [vmem:[#allocation8 + $0x160] sm:$0xf]
        %v3887 = vld [vmem:[#allocation8 + $0x164] sm:$0xf]
        %v3888 = vld [vmem:[#allocation8 + $0x168] sm:$0xf]
        %v3889 = vld [vmem:[#allocation8 + $0x16c] sm:$0xf]
        %v3890 = vld [vmem:[#allocation8 + $0x170] sm:$0xf]
        %v3891 = vld [vmem:[#allocation8 + $0x174] sm:$0xf]
        %v3892 = vld [vmem:[#allocation8 + $0x178] sm:$0xf]
        %v3893 = vld [vmem:[#allocation8 + $0x17c] sm:$0xf]
        %v3894 = vld [vmem:[#allocation8 + $0x180] sm:$0xf]
        %v3895 = vld [vmem:[#allocation8 + $0x184] sm:$0xf]
        %v3896 = vld [vmem:[#allocation8 + $0x188] sm:$0xf]
        %v3897 = vld [vmem:[#allocation8 + $0x18c] sm:$0xf]
        %v3898 = vld [vmem:[#allocation8 + $0x190] sm:$0xf]
        %v3899 = vld [vmem:[#allocation8 + $0x194] sm:$0xf]
        %v3900 = vld [vmem:[#allocation8 + $0x198] sm:$0xf]
        %v3901 = vld [vmem:[#allocation8 + $0x19c] sm:$0xf]
        %v3902 = vld [vmem:[#allocation8 + $0x1a0] sm:$0xf]
        %v3903 = vld [vmem:[#allocation8 + $0x1a4] sm:$0xf]
        %v3904 = vld [vmem:[#allocation8 + $0x1a8] sm:$0xf]
        %v3905 = vld [vmem:[#allocation8 + $0x1ac] sm:$0xf]
        %v3906 = vld [vmem:[#allocation8 + $0x1b0] sm:$0xf]
        %v3907 = vld [vmem:[#allocation8 + $0x1b4] sm:$0xf]
        %v3908 = vld [vmem:[#allocation8 + $0x1b8] sm:$0xf]
        %v3909 = vld [vmem:[#allocation8 + $0x1bc] sm:$0xf]
        %v3910 = vld [vmem:[#allocation8 + $0x1c0] sm:$0xf]
        %v3911 = vld [vmem:[#allocation8 + $0x1c4] sm:$0xf]
        %v3912 = vld [vmem:[#allocation8 + $0x1c8] sm:$0xf]
        %v3913 = vld [vmem:[#allocation8 + $0x1cc] sm:$0xf]
        %v3914 = vld [vmem:[#allocation8 + $0x1d0] sm:$0xf]
        %v3915 = vld [vmem:[#allocation8 + $0x1d4] sm:$0xf]
        %v3916 = vld [vmem:[#allocation8 + $0x1d8] sm:$0xf]
        %v3917 = vld [vmem:[#allocation8 + $0x1dc] sm:$0xf]
        %v3918 = vld [vmem:[#allocation8 + $0x1e0] sm:$0xf]
        %v3919 = vld [vmem:[#allocation8 + $0x1e4] sm:$0xf]
        %v3920 = vld [vmem:[#allocation8 + $0x1e8] sm:$0xf]
        %v3921 = vld [vmem:[#allocation8 + $0x1ec] sm:$0xf]
        %v3922 = vld [vmem:[#allocation8 + $0x1f0] sm:$0xf]
        %v3923 = vld [vmem:[#allocation8 + $0x1f4] sm:$0xf]
        %v3924 = vld [vmem:[#allocation8 + $0x1f8] sm:$0xf]
        %v3925 = vld [vmem:[#allocation8 + $0x1fc] sm:$0xf]
        %v3926 = vld [vmem:[#allocation8 + $0x200] sm:$0xf]
        %v3927 = vld [vmem:[#allocation8 + $0x204] sm:$0xf]
        %v3928 = vld [vmem:[#allocation8 + $0x208] sm:$0xf]
        %v3929 = vld [vmem:[#allocation8 + $0x20c] sm:$0xf]
        %v3930 = vld [vmem:[#allocation8 + $0x210] sm:$0xf]
        %v3931 = vld [vmem:[#allocation8 + $0x214] sm:$0xf]
        %v3932 = vld [vmem:[#allocation8 + $0x218] sm:$0xf]
        %v3933 = vld [vmem:[#allocation8 + $0x21c] sm:$0xf]
        %v3934 = vld [vmem:[#allocation8 + $0x220] sm:$0xf]
        %v3935 = vld [vmem:[#allocation8 + $0x224] sm:$0xf]
        %v3936 = vld [vmem:[#allocation8 + $0x228] sm:$0xf]
        %v3937 = vld [vmem:[#allocation8 + $0x22c] sm:$0xf]
        %v3938 = vld [vmem:[#allocation8 + $0x230] sm:$0xf]
        %v3939 = vld [vmem:[#allocation8 + $0x234] sm:$0xf]
        %v3940 = vld [vmem:[#allocation8 + $0x238] sm:$0xf]
        %v3941 = vld [vmem:[#allocation8 + $0x23c] sm:$0xf]
        %v3942 = vld [vmem:[%s2] sm:$0x1]
        %v3944 = vlaneseq
        %v3945 = vshrl.u32 %v3944, 7
        %v3946 = vsub.s32 0, %v3945
        %v3947 = vrot.slane %v3942, %v3946
        %v4129 = vunpack.c.l.b16 %v3618
        %v4130 = vunpack.c.h.b16 %v3618
        %v4131 = vunpack.c.l.b16 %v3619
        %v4132 = vunpack.c.h.b16 %v3619
        %v4133 = vunpack.c.l.b16 %v3620
        %v4134 = vunpack.c.h.b16 %v3620
        %v4135 = vunpack.c.l.b16 %v3621
        %v4136 = vunpack.c.h.b16 %v3621
        %v4137 = vunpack.c.l.b16 %v3622
        %v4138 = vunpack.c.l.b16 %v3623
        %v4139 = vunpack.c.h.b16 %v3623
        %v4140 = vunpack.c.l.b16 %v3624
        %v4141 = vunpack.c.h.b16 %v3624
        %v4142 = vunpack.c.l.b16 %v3625
        %v4143 = vunpack.c.h.b16 %v3625
        %v4144 = vunpack.c.l.b16 %v3626
        %v4145 = vunpack.c.h.b16 %v3626
        %v4146 = vunpack.c.l.b16 %v3627
        %v4147 = vunpack.c.l.b16 %v3628
        %v4148 = vunpack.c.h.b16 %v3628
        %v4149 = vunpack.c.l.b16 %v3629
        %v4150 = vunpack.c.h.b16 %v3629
        %v4151 = vunpack.c.l.b16 %v3630
        %v4152 = vunpack.c.h.b16 %v3630
        %v4153 = vunpack.c.l.b16 %v3631
        %v4154 = vunpack.c.h.b16 %v3631
        %v4155 = vunpack.c.l.b16 %v3632
        %v4156 = vunpack.c.l.b16 %v3633
        %v4157 = vunpack.c.h.b16 %v3633
        %v4158 = vunpack.c.l.b16 %v3634
        %v4159 = vunpack.c.h.b16 %v3634
        %v4160 = vunpack.c.l.b16 %v3635
        %v4161 = vunpack.c.h.b16 %v3635
        %v4162 = vunpack.c.l.b16 %v3636
        %v4163 = vunpack.c.h.b16 %v3636
        %v4164 = vunpack.c.l.b16 %v3637
        %v4165 = vunpack.c.l.b16 %v3638
        %v4166 = vunpack.c.h.b16 %v3638
        %v4167 = vunpack.c.l.b16 %v3639
        %v4168 = vunpack.c.h.b16 %v3639
        %v4169 = vunpack.c.l.b16 %v3640
        %v4170 = vunpack.c.h.b16 %v3640
        %v4171 = vunpack.c.l.b16 %v3641
        %v4172 = vunpack.c.h.b16 %v3641
        %v4173 = vunpack.c.l.b16 %v3642
        %v4174 = vunpack.c.l.b16 %v3643
        %v4175 = vunpack.c.h.b16 %v3643
        %v4176 = vunpack.c.l.b16 %v3644
        %v4177 = vunpack.c.h.b16 %v3644
        %v4178 = vunpack.c.l.b16 %v3645
        %v4179 = vunpack.c.h.b16 %v3645
        %v4180 = vunpack.c.l.b16 %v3646
        %v4181 = vunpack.c.h.b16 %v3646
        %v4182 = vunpack.c.l.b16 %v3647
        %v4183 = vunpack.c.l.b16 %v3648
        %v4184 = vunpack.c.h.b16 %v3648
        %v4185 = vunpack.c.l.b16 %v3649
        %v4186 = vunpack.c.h.b16 %v3649
        %v4187 = vunpack.c.l.b16 %v3650
        %v4188 = vunpack.c.h.b16 %v3650
        %v4189 = vunpack.c.l.b16 %v3651
        %v4190 = vunpack.c.h.b16 %v3651
        %v4191 = vunpack.c.l.b16 %v3652
        %v4192 = vunpack.c.l.b16 %v3653
        %v4193 = vunpack.c.h.b16 %v3653
        %v4194 = vunpack.c.l.b16 %v3654
        %v4195 = vunpack.c.h.b16 %v3654
        %v4196 = vunpack.c.l.b16 %v3655
        %v4197 = vunpack.c.h.b16 %v3655
        %v4198 = vunpack.c.l.b16 %v3656
        %v4199 = vunpack.c.h.b16 %v3656
        %v4200 = vunpack.c.l.b16 %v3657
        %v4201 = vunpack.c.l.b16 %v3658
        %v4202 = vunpack.c.h.b16 %v3658
        %v4203 = vunpack.c.l.b16 %v3659
        %v4204 = vunpack.c.h.b16 %v3659
        %v4205 = vunpack.c.l.b16 %v3660
        %v4206 = vunpack.c.h.b16 %v3660
        %v4207 = vunpack.c.l.b16 %v3661
        %v4208 = vunpack.c.h.b16 %v3661
        %v4209 = vunpack.c.l.b16 %v3662
        %v4210 = vunpack.c.l.b16 %v3663
        %v4211 = vunpack.c.h.b16 %v3663
        %v4212 = vunpack.c.l.b16 %v3664
        %v4213 = vunpack.c.h.b16 %v3664
        %v4214 = vunpack.c.l.b16 %v3665
        %v4215 = vunpack.c.h.b16 %v3665
        %v4216 = vunpack.c.l.b16 %v3666
        %v4217 = vunpack.c.h.b16 %v3666
        %v4218 = vunpack.c.l.b16 %v3667
        %v4219 = vunpack.c.l.b16 %v3668
        %v4220 = vunpack.c.h.b16 %v3668
        %v4221 = vunpack.c.l.b16 %v3669
        %v4222 = vunpack.c.h.b16 %v3669
        %v4223 = vunpack.c.l.b16 %v3670
        %v4224 = vunpack.c.h.b16 %v3670
        %v4225 = vunpack.c.l.b16 %v3671
        %v4226 = vunpack.c.h.b16 %v3671
        %v4227 = vunpack.c.l.b16 %v3672
        %v4228 = vunpack.c.l.b16 %v3673
        %v4229 = vunpack.c.h.b16 %v3673
        %v4230 = vunpack.c.l.b16 %v3674
        %v4231 = vunpack.c.h.b16 %v3674
        %v4232 = vunpack.c.l.b16 %v3675
        %v4233 = vunpack.c.h.b16 %v3675
        %v4234 = vunpack.c.l.b16 %v3676
        %v4235 = vunpack.c.h.b16 %v3676
        %v4236 = vunpack.c.l.b16 %v3677
        %v4237 = vunpack.c.l.b16 %v3678
        %v4238 = vunpack.c.h.b16 %v3678
        %v4239 = vunpack.c.l.b16 %v3679
        %v4240 = vunpack.c.h.b16 %v3679
        %v4241 = vunpack.c.l.b16 %v3680
        %v4242 = vunpack.c.h.b16 %v3680
        %v4243 = vunpack.c.l.b16 %v3681
        %v4244 = vunpack.c.h.b16 %v3681
        %v4245 = vunpack.c.l.b16 %v3682
        %v4246 = vunpack.c.l.b16 %v3683
        %v4247 = vunpack.c.h.b16 %v3683
        %v4248 = vunpack.c.l.b16 %v3684
        %v4249 = vunpack.c.h.b16 %v3684
        %v4250 = vunpack.c.l.b16 %v3685
        %v4251 = vunpack.c.h.b16 %v3685
        %v4252 = vunpack.c.l.b16 %v3686
        %v4253 = vunpack.c.h.b16 %v3686
        %v4254 = vunpack.c.l.b16 %v3687
        %v4255 = vunpack.c.l.b16 %v3688
        %v4256 = vunpack.c.h.b16 %v3688
        %v4257 = vunpack.c.l.b16 %v3689
        %v4258 = vunpack.c.h.b16 %v3689
        %v4259 = vunpack.c.l.b16 %v3690
        %v4260 = vunpack.c.h.b16 %v3690
        %v4261 = vunpack.c.l.b16 %v3691
        %v4262 = vunpack.c.h.b16 %v3691
        %v4263 = vunpack.c.l.b16 %v3692
        %v4264 = vunpack.c.l.b16 %v3693
        %v4265 = vunpack.c.h.b16 %v3693
        %v4266 = vunpack.c.l.b16 %v3694
        %v4267 = vunpack.c.h.b16 %v3694
        %v4268 = vunpack.c.l.b16 %v3695
        %v4269 = vunpack.c.h.b16 %v3695
        %v4270 = vunpack.c.l.b16 %v3696
        %v4271 = vunpack.c.h.b16 %v3696
        %v4272 = vunpack.c.l.b16 %v3697
        %v4273 = vunpack.c.l.b16 %v3698
        %v4274 = vunpack.c.h.b16 %v3698
        %v4275 = vunpack.c.l.b16 %v3699
        %v4276 = vunpack.c.h.b16 %v3699
        %v4277 = vunpack.c.l.b16 %v3700
        %v4278 = vunpack.c.h.b16 %v3700
        %v4279 = vunpack.c.l.b16 %v3701
        %v4280 = vunpack.c.h.b16 %v3701
        %v4281 = vunpack.c.l.b16 %v3702
        %v4282 = vunpack.c.l.b16 %v3703
        %v4283 = vunpack.c.h.b16 %v3703
        %v4284 = vunpack.c.l.b16 %v3704
        %v4285 = vunpack.c.h.b16 %v3704
        %v4286 = vunpack.c.l.b16 %v3705
        %v4287 = vunpack.c.h.b16 %v3705
        %v4288 = vunpack.c.l.b16 %v3706
        %v4289 = vunpack.c.h.b16 %v3706
        %v4290 = vunpack.c.l.b16 %v3707
        %v4291 = vunpack.c.l.b16 %v3708
        %v4292 = vunpack.c.h.b16 %v3708
        %v4293 = vunpack.c.l.b16 %v3709
        %v4294 = vunpack.c.h.b16 %v3709
        %v4295 = vunpack.c.l.b16 %v3710
        %v4296 = vunpack.c.h.b16 %v3710
        %v4297 = vunpack.c.l.b16 %v3711
        %v4298 = vunpack.c.h.b16 %v3711
        %v4299 = vunpack.c.l.b16 %v3712
        %v4300 = vunpack.c.l.b16 %v3713
        %v4301 = vunpack.c.h.b16 %v3713
        %v4302 = vunpack.c.l.b16 %v3714
        %v4303 = vunpack.c.h.b16 %v3714
        %v4304 = vunpack.c.l.b16 %v3715
        %v4305 = vunpack.c.h.b16 %v3715
        %v4306 = vunpack.c.l.b16 %v3716
        %v4307 = vunpack.c.h.b16 %v3716
        %v4308 = vunpack.c.l.b16 %v3717
        %v4309 = vunpack.c.l.b16 %v3718
        %v4310 = vunpack.c.h.b16 %v3718
        %v4311 = vunpack.c.l.b16 %v3719
        %v4312 = vunpack.c.h.b16 %v3719
        %v4313 = vunpack.c.l.b16 %v3720
        %v4314 = vunpack.c.h.b16 %v3720
        %v4315 = vunpack.c.l.b16 %v3721
        %v4316 = vunpack.c.h.b16 %v3721
        %v4317 = vunpack.c.l.b16 %v3722
        %v4318 = vunpack.c.l.b16 %v3723
        %v4319 = vunpack.c.h.b16 %v3723
        %v4320 = vunpack.c.l.b16 %v3724
        %v4321 = vunpack.c.h.b16 %v3724
        %v4322 = vunpack.c.l.b16 %v3725
        %v4323 = vunpack.c.h.b16 %v3725
        %v4324 = vunpack.c.l.b16 %v3726
        %v4325 = vunpack.c.h.b16 %v3726
        %v4326 = vunpack.c.l.b16 %v3727
        %v4327 = vunpack.c.l.b16 %v3728
        %v4328 = vunpack.c.h.b16 %v3728
        %v4329 = vunpack.c.l.b16 %v3729
        %v4330 = vunpack.c.h.b16 %v3729
        %v4331 = vunpack.c.l.b16 %v3730
        %v4332 = vunpack.c.h.b16 %v3730
        %v4333 = vunpack.c.l.b16 %v3731
        %v4334 = vunpack.c.h.b16 %v3731
        %v4335 = vunpack.c.l.b16 %v3732
        %v4336 = vunpack.c.l.b16 %v3733
        %v4337 = vunpack.c.h.b16 %v3733
        %v4338 = vunpack.c.l.b16 %v3734
        %v4339 = vunpack.c.h.b16 %v3734
        %v4340 = vunpack.c.l.b16 %v3735
        %v4341 = vunpack.c.h.b16 %v3735
        %v4342 = vunpack.c.l.b16 %v3736
        %v4343 = vunpack.c.h.b16 %v3736
        %v4344 = vunpack.c.l.b16 %v3737
        %v4345 = vunpack.c.l.b16 %v3738
        %v4346 = vunpack.c.h.b16 %v3738
        %v4347 = vunpack.c.l.b16 %v3739
        %v4348 = vunpack.c.h.b16 %v3739
        %v4349 = vunpack.c.l.b16 %v3740
        %v4350 = vunpack.c.h.b16 %v3740
        %v4351 = vunpack.c.l.b16 %v3741
        %v4352 = vunpack.c.h.b16 %v3741
        %v4353 = vunpack.c.l.b16 %v3742
        %v4354 = vunpack.c.l.b16 %v3743
        %v4355 = vunpack.c.h.b16 %v3743
        %v4356 = vunpack.c.l.b16 %v3744
        %v4357 = vunpack.c.h.b16 %v3744
        %v4358 = vunpack.c.l.b16 %v3745
        %v4359 = vunpack.c.h.b16 %v3745
        %v4360 = vunpack.c.l.b16 %v3746
        %v4361 = vunpack.c.h.b16 %v3746
        %v4362 = vunpack.c.l.b16 %v3747
        %v4363 = vunpack.c.l.b16 %v3748
        %v4364 = vunpack.c.h.b16 %v3748
        %v4365 = vunpack.c.l.b16 %v3749
        %v4366 = vunpack.c.h.b16 %v3749
        %v4367 = vunpack.c.l.b16 %v3750
        %v4368 = vunpack.c.h.b16 %v3750
        %v4369 = vunpack.c.l.b16 %v3751
        %v4370 = vunpack.c.h.b16 %v3751
        %v4371 = vunpack.c.l.b16 %v3752
        %v4372 = vunpack.c.l.b16 %v3753
        %v4373 = vunpack.c.h.b16 %v3753
        %v4374 = vunpack.c.l.b16 %v3754
        %v4375 = vunpack.c.h.b16 %v3754
        %v4376 = vunpack.c.l.b16 %v3755
        %v4377 = vunpack.c.h.b16 %v3755
        %v4378 = vunpack.c.l.b16 %v3756
        %v4379 = vunpack.c.h.b16 %v3756
        %v4380 = vunpack.c.l.b16 %v3757
        %v4381 = vunpack.c.l.b16 %v3758
        %v4382 = vunpack.c.h.b16 %v3758
        %v4383 = vunpack.c.l.b16 %v3759
        %v4384 = vunpack.c.h.b16 %v3759
        %v4385 = vunpack.c.l.b16 %v3760
        %v4386 = vunpack.c.h.b16 %v3760
        %v4387 = vunpack.c.l.b16 %v3761
        %v4388 = vunpack.c.h.b16 %v3761
        %v4389 = vunpack.c.l.b16 %v3762
        %v4390 = vunpack.c.l.b16 %v3763
        %v4391 = vunpack.c.h.b16 %v3763
        %v4392 = vunpack.c.l.b16 %v3764
        %v4393 = vunpack.c.h.b16 %v3764
        %v4394 = vunpack.c.l.b16 %v3765
        %v4395 = vunpack.c.h.b16 %v3765
        %v4396 = vunpack.c.l.b16 %v3766
        %v4397 = vunpack.c.h.b16 %v3766
        %v4398 = vunpack.c.l.b16 %v3767
        %v4399 = vunpack.c.l.b16 %v3768
        %v4400 = vunpack.c.h.b16 %v3768
        %v4401 = vunpack.c.l.b16 %v3769
        %v4402 = vunpack.c.h.b16 %v3769
        %v4403 = vunpack.c.l.b16 %v3770
        %v4404 = vunpack.c.h.b16 %v3770
        %v4405 = vunpack.c.l.b16 %v3771
        %v4406 = vunpack.c.h.b16 %v3771
        %v4407 = vunpack.c.l.b16 %v3772
        %v4408 = vunpack.c.l.b16 %v3773
        %v4409 = vunpack.c.h.b16 %v3773
        %v4410 = vunpack.c.l.b16 %v3774
        %v4411 = vunpack.c.h.b16 %v3774
        %v4412 = vunpack.c.l.b16 %v3775
        %v4413 = vunpack.c.h.b16 %v3775
        %v4414 = vunpack.c.l.b16 %v3776
        %v4415 = vunpack.c.h.b16 %v3776
        %v4416 = vunpack.c.l.b16 %v3777
        %v4417 = vunpack.c.l.b16 %v3778
        %v4418 = vunpack.c.h.b16 %v3778
        %v4419 = vunpack.c.l.b16 %v3779
        %v4420 = vunpack.c.h.b16 %v3779
        %v4421 = vunpack.c.l.b16 %v3780
        %v4422 = vunpack.c.h.b16 %v3780
        %v4423 = vunpack.c.l.b16 %v3781
        %v4424 = vunpack.c.h.b16 %v3781
        %v4425 = vunpack.c.l.b16 %v3782
        %v4426 = vunpack.c.l.b16 %v3783
        %v4427 = vunpack.c.h.b16 %v3783
        %v4428 = vunpack.c.l.b16 %v3784
        %v4429 = vunpack.c.h.b16 %v3784
        %v4430 = vunpack.c.l.b16 %v3785
        %v4431 = vunpack.c.h.b16 %v3785
        %v4432 = vunpack.c.l.b16 %v3786
        %v4433 = vunpack.c.h.b16 %v3786
        %v4434 = vunpack.c.l.b16 %v3787
        %v4435 = vunpack.c.l.b16 %v3788
        %v4436 = vunpack.c.h.b16 %v3788
        %v4437 = vunpack.c.l.b16 %v3789
        %v4438 = vunpack.c.h.b16 %v3789
        %v4439 = vunpack.c.l.b16 %v3790
        %v4440 = vunpack.c.h.b16 %v3790
        %v4441 = vunpack.c.l.b16 %v3791
        %v4442 = vunpack.c.h.b16 %v3791
        %v4443 = vunpack.c.l.b16 %v3792
        %v4444 = vunpack.c.l.b16 %v3793
        %v4445 = vunpack.c.h.b16 %v3793
        %v4446 = vunpack.c.l.b16 %v3794
        %v4447 = vunpack.c.h.b16 %v3794
        %v4448 = vunpack.c.l.b16 %v3795
        %v4449 = vunpack.c.h.b16 %v3795
        %v4450 = vunpack.c.l.b16 %v3796
        %v4451 = vunpack.c.h.b16 %v3796
        %v4452 = vunpack.c.l.b16 %v3797
        %v4453 = vpack.c.b16 %v4138, %v4129
        %v4454 = vpack.c.b16 %v4139, %v4130
        %v4455 = vpack.c.b16 %v4140, %v4131
        %v4456 = vpack.c.b16 %v4141, %v4132
        %v4457 = vpack.c.b16 %v4142, %v4133
        %v4458 = vpack.c.b16 %v4143, %v4134
        %v4459 = vpack.c.b16 %v4144, %v4135
        %v4460 = vpack.c.b16 %v4145, %v4136
        %v4461 = vpack.c.b16 %v4146, %v4137
        %v4462 = vpack.c.b16 %v4156, %v4147
        %v4463 = vpack.c.b16 %v4157, %v4148
        %v4464 = vpack.c.b16 %v4158, %v4149
        %v4465 = vpack.c.b16 %v4159, %v4150
        %v4466 = vpack.c.b16 %v4160, %v4151
        %v4467 = vpack.c.b16 %v4161, %v4152
        %v4468 = vpack.c.b16 %v4162, %v4153
        %v4469 = vpack.c.b16 %v4163, %v4154
        %v4470 = vpack.c.b16 %v4164, %v4155
        %v4471 = vpack.c.b16 %v4174, %v4165
        %v4472 = vpack.c.b16 %v4175, %v4166
        %v4473 = vpack.c.b16 %v4176, %v4167
        %v4474 = vpack.c.b16 %v4177, %v4168
        %v4475 = vpack.c.b16 %v4178, %v4169
        %v4476 = vpack.c.b16 %v4179, %v4170
        %v4477 = vpack.c.b16 %v4180, %v4171
        %v4478 = vpack.c.b16 %v4181, %v4172
        %v4479 = vpack.c.b16 %v4182, %v4173
        %v4480 = vpack.c.b16 %v4192, %v4183
        %v4481 = vpack.c.b16 %v4193, %v4184
        %v4482 = vpack.c.b16 %v4194, %v4185
        %v4483 = vpack.c.b16 %v4195, %v4186
        %v4484 = vpack.c.b16 %v4196, %v4187
        %v4485 = vpack.c.b16 %v4197, %v4188
        %v4486 = vpack.c.b16 %v4198, %v4189
        %v4487 = vpack.c.b16 %v4199, %v4190
        %v4488 = vpack.c.b16 %v4200, %v4191
        %v4489 = vpack.c.b16 %v4210, %v4201
        %v4490 = vpack.c.b16 %v4211, %v4202
        %v4491 = vpack.c.b16 %v4212, %v4203
        %v4492 = vpack.c.b16 %v4213, %v4204
        %v4493 = vpack.c.b16 %v4214, %v4205
        %v4494 = vpack.c.b16 %v4215, %v4206
        %v4495 = vpack.c.b16 %v4216, %v4207
        %v4496 = vpack.c.b16 %v4217, %v4208
        %v4497 = vpack.c.b16 %v4218, %v4209
        %v4498 = vpack.c.b16 %v4228, %v4219
        %v4499 = vpack.c.b16 %v4229, %v4220
        %v4500 = vpack.c.b16 %v4230, %v4221
        %v4501 = vpack.c.b16 %v4231, %v4222
        %v4502 = vpack.c.b16 %v4232, %v4223
        %v4503 = vpack.c.b16 %v4233, %v4224
        %v4504 = vpack.c.b16 %v4234, %v4225
        %v4505 = vpack.c.b16 %v4235, %v4226
        %v4506 = vpack.c.b16 %v4236, %v4227
        %v4507 = vpack.c.b16 %v4246, %v4237
        %v4508 = vpack.c.b16 %v4247, %v4238
        %v4509 = vpack.c.b16 %v4248, %v4239
        %v4510 = vpack.c.b16 %v4249, %v4240
        %v4511 = vpack.c.b16 %v4250, %v4241
        %v4512 = vpack.c.b16 %v4251, %v4242
        %v4513 = vpack.c.b16 %v4252, %v4243
        %v4514 = vpack.c.b16 %v4253, %v4244
        %v4515 = vpack.c.b16 %v4254, %v4245
        %v4516 = vpack.c.b16 %v4264, %v4255
        %v4517 = vpack.c.b16 %v4265, %v4256
        %v4518 = vpack.c.b16 %v4266, %v4257
        %v4519 = vpack.c.b16 %v4267, %v4258
        %v4520 = vpack.c.b16 %v4268, %v4259
        %v4521 = vpack.c.b16 %v4269, %v4260
        %v4522 = vpack.c.b16 %v4270, %v4261
        %v4523 = vpack.c.b16 %v4271, %v4262
        %v4524 = vpack.c.b16 %v4272, %v4263
        %v4525 = vpack.c.b16 %v4282, %v4273
        %v4526 = vpack.c.b16 %v4283, %v4274
        %v4527 = vpack.c.b16 %v4284, %v4275
        %v4528 = vpack.c.b16 %v4285, %v4276
        %v4529 = vpack.c.b16 %v4286, %v4277
        %v4530 = vpack.c.b16 %v4287, %v4278
        %v4531 = vpack.c.b16 %v4288, %v4279
        %v4532 = vpack.c.b16 %v4289, %v4280
        %v4533 = vpack.c.b16 %v4290, %v4281
        %v4534 = vpack.c.b16 %v4300, %v4291
        %v4535 = vpack.c.b16 %v4301, %v4292
        %v4536 = vpack.c.b16 %v4302, %v4293
        %v4537 = vpack.c.b16 %v4303, %v4294
        %v4538 = vpack.c.b16 %v4304, %v4295
        %v4539 = vpack.c.b16 %v4305, %v4296
        %v4540 = vpack.c.b16 %v4306, %v4297
        %v4541 = vpack.c.b16 %v4307, %v4298
        %v4542 = vpack.c.b16 %v4308, %v4299
        %v4543 = vpack.c.b16 %v4318, %v4309
        %v4544 = vpack.c.b16 %v4319, %v4310
        %v4545 = vpack.c.b16 %v4320, %v4311
        %v4546 = vpack.c.b16 %v4321, %v4312
        %v4547 = vpack.c.b16 %v4322, %v4313
        %v4548 = vpack.c.b16 %v4323, %v4314
        %v4549 = vpack.c.b16 %v4324, %v4315
        %v4550 = vpack.c.b16 %v4325, %v4316
        %v4551 = vpack.c.b16 %v4326, %v4317
        %v4552 = vpack.c.b16 %v4336, %v4327
        %v4553 = vpack.c.b16 %v4337, %v4328
        %v4554 = vpack.c.b16 %v4338, %v4329
        %v4555 = vpack.c.b16 %v4339, %v4330
        %v4556 = vpack.c.b16 %v4340, %v4331
        %v4557 = vpack.c.b16 %v4341, %v4332
        %v4558 = vpack.c.b16 %v4342, %v4333
        %v4559 = vpack.c.b16 %v4343, %v4334
        %v4560 = vpack.c.b16 %v4344, %v4335
        %v4561 = vpack.c.b16 %v4354, %v4345
        %v4562 = vpack.c.b16 %v4355, %v4346
        %v4563 = vpack.c.b16 %v4356, %v4347
        %v4564 = vpack.c.b16 %v4357, %v4348
        %v4565 = vpack.c.b16 %v4358, %v4349
        %v4566 = vpack.c.b16 %v4359, %v4350
        %v4567 = vpack.c.b16 %v4360, %v4351
        %v4568 = vpack.c.b16 %v4361, %v4352
        %v4569 = vpack.c.b16 %v4362, %v4353
        %v4570 = vpack.c.b16 %v4372, %v4363
        %v4571 = vpack.c.b16 %v4373, %v4364
        %v4572 = vpack.c.b16 %v4374, %v4365
        %v4573 = vpack.c.b16 %v4375, %v4366
        %v4574 = vpack.c.b16 %v4376, %v4367
        %v4575 = vpack.c.b16 %v4377, %v4368
        %v4576 = vpack.c.b16 %v4378, %v4369
        %v4577 = vpack.c.b16 %v4379, %v4370
        %v4578 = vpack.c.b16 %v4380, %v4371
        %v4579 = vpack.c.b16 %v4390, %v4381
        %v4580 = vpack.c.b16 %v4391, %v4382
        %v4581 = vpack.c.b16 %v4392, %v4383
        %v4582 = vpack.c.b16 %v4393, %v4384
        %v4583 = vpack.c.b16 %v4394, %v4385
        %v4584 = vpack.c.b16 %v4395, %v4386
        %v4585 = vpack.c.b16 %v4396, %v4387
        %v4586 = vpack.c.b16 %v4397, %v4388
        %v4587 = vpack.c.b16 %v4398, %v4389
        %v4588 = vpack.c.b16 %v4408, %v4399
        %v4589 = vpack.c.b16 %v4409, %v4400
        %v4590 = vpack.c.b16 %v4410, %v4401
        %v4591 = vpack.c.b16 %v4411, %v4402
        %v4592 = vpack.c.b16 %v4412, %v4403
        %v4593 = vpack.c.b16 %v4413, %v4404
        %v4594 = vpack.c.b16 %v4414, %v4405
        %v4595 = vpack.c.b16 %v4415, %v4406
        %v4596 = vpack.c.b16 %v4416, %v4407
        %v4597 = vpack.c.b16 %v4426, %v4417
        %v4598 = vpack.c.b16 %v4427, %v4418
        %v4599 = vpack.c.b16 %v4428, %v4419
        %v4600 = vpack.c.b16 %v4429, %v4420
        %v4601 = vpack.c.b16 %v4430, %v4421
        %v4602 = vpack.c.b16 %v4431, %v4422
        %v4603 = vpack.c.b16 %v4432, %v4423
        %v4604 = vpack.c.b16 %v4433, %v4424
        %v4605 = vpack.c.b16 %v4434, %v4425
        %v4606 = vpack.c.b16 %v4444, %v4435
        %v4607 = vpack.c.b16 %v4445, %v4436
        %v4608 = vpack.c.b16 %v4446, %v4437
        %v4609 = vpack.c.b16 %v4447, %v4438
        %v4610 = vpack.c.b16 %v4448, %v4439
        %v4611 = vpack.c.b16 %v4449, %v4440
        %v4612 = vpack.c.b16 %v4450, %v4441
        %v4613 = vpack.c.b16 %v4451, %v4442
        %v4614 = vpack.c.b16 %v4452, %v4443
        %v4921 = vunpack.c.l.b16 %v3798
        %v4922 = vunpack.c.l.b16 %v3799
        %v4923 = vunpack.c.l.b16 %v3800
        %v4924 = vunpack.c.l.b16 %v3801
        %v4925 = vunpack.c.l.b16 %v3802
        %v4926 = vunpack.c.l.b16 %v3803
        %v4927 = vunpack.c.l.b16 %v3804
        %v4928 = vunpack.c.l.b16 %v3805
        %v4929 = vunpack.c.l.b16 %v3806
        %v4930 = vunpack.c.l.b16 %v3807
        %v4931 = vunpack.c.l.b16 %v3808
        %v4932 = vunpack.c.l.b16 %v3809
        %v4933 = vunpack.c.l.b16 %v3810
        %v4934 = vunpack.c.l.b16 %v3811
        %v4935 = vunpack.c.l.b16 %v3812
        %v4936 = vunpack.c.l.b16 %v3813
        %v4937 = vunpack.c.l.b16 %v3814
        %v4938 = vunpack.c.l.b16 %v3815
        %v4939 = vunpack.c.l.b16 %v3816
        %v4940 = vunpack.c.l.b16 %v3817
        %v4941 = vunpack.c.l.b16 %v3818
        %v4942 = vunpack.c.l.b16 %v3819
        %v4943 = vunpack.c.l.b16 %v3820
        %v4944 = vunpack.c.l.b16 %v3821
        %v4945 = vunpack.c.l.b16 %v3822
        %v4946 = vunpack.c.l.b16 %v3823
        %v4947 = vunpack.c.l.b16 %v3824
        %v4948 = vunpack.c.l.b16 %v3825
        %v4949 = vunpack.c.l.b16 %v3826
        %v4950 = vunpack.c.l.b16 %v3827
        %v4951 = vunpack.c.l.b16 %v3828
        %v4952 = vunpack.c.l.b16 %v3829
        %v4953 = vunpack.c.l.b16 %v3830
        %v4954 = vunpack.c.l.b16 %v3831
        %v4955 = vunpack.c.l.b16 %v3832
        %v4956 = vunpack.c.l.b16 %v3833
        %v4957 = vunpack.c.l.b16 %v3834
        %v4958 = vunpack.c.l.b16 %v3835
        %v4959 = vunpack.c.l.b16 %v3836
        %v4960 = vunpack.c.l.b16 %v3837
        %v4961 = vunpack.c.l.b16 %v3838
        %v4962 = vunpack.c.l.b16 %v3839
        %v4963 = vunpack.c.l.b16 %v3840
        %v4964 = vunpack.c.l.b16 %v3841
        %v4965 = vunpack.c.l.b16 %v3842
        %v4966 = vunpack.c.l.b16 %v3843
        %v4967 = vunpack.c.l.b16 %v3844
        %v4968 = vunpack.c.l.b16 %v3845
        %v4969 = vunpack.c.l.b16 %v3846
        %v4970 = vunpack.c.l.b16 %v3847
        %v4971 = vunpack.c.l.b16 %v3848
        %v4972 = vunpack.c.l.b16 %v3849
        %v4973 = vunpack.c.l.b16 %v3850
        %v4974 = vunpack.c.l.b16 %v3851
        %v4975 = vunpack.c.l.b16 %v3852
        %v4976 = vunpack.c.l.b16 %v3853
        %v4977 = vunpack.c.l.b16 %v3854
        %v4978 = vunpack.c.l.b16 %v3855
        %v4979 = vunpack.c.l.b16 %v3856
        %v4980 = vunpack.c.l.b16 %v3857
        %v4981 = vunpack.c.l.b16 %v3858
        %v4982 = vunpack.c.l.b16 %v3859
        %v4983 = vunpack.c.l.b16 %v3860
        %v4984 = vunpack.c.l.b16 %v3861
        %v4985 = vunpack.c.l.b16 %v3862
        %v4986 = vunpack.c.l.b16 %v3863
        %v4987 = vunpack.c.l.b16 %v3864
        %v4988 = vunpack.c.l.b16 %v3865
        %v4989 = vunpack.c.l.b16 %v3866
        %v4990 = vunpack.c.l.b16 %v3867
        %v4991 = vunpack.c.l.b16 %v3868
        %v4992 = vunpack.c.l.b16 %v3869
        %v4993 = vunpack.c.l.b16 %v3870
        %v4994 = vunpack.c.l.b16 %v3871
        %v4995 = vunpack.c.l.b16 %v3872
        %v4996 = vunpack.c.l.b16 %v3873
        %v4997 = vunpack.c.l.b16 %v3874
        %v4998 = vunpack.c.l.b16 %v3875
        %v4999 = vunpack.c.l.b16 %v3876
        %v5000 = vunpack.c.l.b16 %v3877
        %v5001 = vunpack.c.l.b16 %v3878
        %v5002 = vunpack.c.l.b16 %v3879
        %v5003 = vunpack.c.l.b16 %v3880
        %v5004 = vunpack.c.l.b16 %v3881
        %v5005 = vunpack.c.l.b16 %v3882
        %v5006 = vunpack.c.l.b16 %v3883
        %v5007 = vunpack.c.l.b16 %v3884
        %v5008 = vunpack.c.l.b16 %v3885
        %v5009 = vunpack.c.l.b16 %v3886
        %v5010 = vunpack.c.l.b16 %v3887
        %v5011 = vunpack.c.l.b16 %v3888
        %v5012 = vunpack.c.l.b16 %v3889
        %v5013 = vunpack.c.l.b16 %v3890
        %v5014 = vunpack.c.l.b16 %v3891
        %v5015 = vunpack.c.l.b16 %v3892
        %v5016 = vunpack.c.l.b16 %v3893
        %v5017 = vunpack.c.l.b16 %v3894
        %v5018 = vunpack.c.l.b16 %v3895
        %v5019 = vunpack.c.l.b16 %v3896
        %v5020 = vunpack.c.l.b16 %v3897
        %v5021 = vunpack.c.l.b16 %v3898
        %v5022 = vunpack.c.l.b16 %v3899
        %v5023 = vunpack.c.l.b16 %v3900
        %v5024 = vunpack.c.l.b16 %v3901
        %v5025 = vunpack.c.l.b16 %v3902
        %v5026 = vunpack.c.l.b16 %v3903
        %v5027 = vunpack.c.l.b16 %v3904
        %v5028 = vunpack.c.l.b16 %v3905
        %v5029 = vunpack.c.l.b16 %v3906
        %v5030 = vunpack.c.l.b16 %v3907
        %v5031 = vunpack.c.l.b16 %v3908
        %v5032 = vunpack.c.l.b16 %v3909
        %v5033 = vunpack.c.l.b16 %v3910
        %v5034 = vunpack.c.l.b16 %v3911
        %v5035 = vunpack.c.l.b16 %v3912
        %v5036 = vunpack.c.l.b16 %v3913
        %v5037 = vunpack.c.l.b16 %v3914
        %v5038 = vunpack.c.l.b16 %v3915
        %v5039 = vunpack.c.l.b16 %v3916
        %v5040 = vunpack.c.l.b16 %v3917
        %v5041 = vunpack.c.l.b16 %v3918
        %v5042 = vunpack.c.l.b16 %v3919
        %v5043 = vunpack.c.l.b16 %v3920
        %v5044 = vunpack.c.l.b16 %v3921
        %v5045 = vunpack.c.l.b16 %v3922
        %v5046 = vunpack.c.l.b16 %v3923
        %v5047 = vunpack.c.l.b16 %v3924
        %v5048 = vunpack.c.l.b16 %v3925
        %v5049 = vunpack.c.l.b16 %v3926
        %v5050 = vunpack.c.l.b16 %v3927
        %v5051 = vunpack.c.l.b16 %v3928
        %v5052 = vunpack.c.l.b16 %v3929
        %v5053 = vunpack.c.l.b16 %v3930
        %v5054 = vunpack.c.l.b16 %v3931
        %v5055 = vunpack.c.l.b16 %v3932
        %v5056 = vunpack.c.l.b16 %v3933
        %v5057 = vunpack.c.l.b16 %v3934
        %v5058 = vunpack.c.l.b16 %v3935
        %v5059 = vunpack.c.l.b16 %v3936
        %v5060 = vunpack.c.l.b16 %v3937
        %v5061 = vunpack.c.l.b16 %v3938
        %v5062 = vunpack.c.l.b16 %v3939
        %v5063 = vunpack.c.l.b16 %v3940
        %v5064 = vunpack.c.l.b16 %v3941
        %v5065 = vpack.c.b16 %v4922, %v4921
        %v5066 = vpack.c.b16 %v4924, %v4923
        %v5067 = vpack.c.b16 %v4926, %v4925
        %v5068 = vpack.c.b16 %v4928, %v4927
        %v5069 = vpack.c.b16 %v4930, %v4929
        %v5070 = vpack.c.b16 %v4932, %v4931
        %v5071 = vpack.c.b16 %v4934, %v4933
        %v5072 = vpack.c.b16 %v4936, %v4935
        %v5073 = vpack.c.b16 %v4938, %v4937
        %v5074 = vpack.c.b16 %v4940, %v4939
        %v5075 = vpack.c.b16 %v4942, %v4941
        %v5076 = vpack.c.b16 %v4944, %v4943
        %v5077 = vpack.c.b16 %v4946, %v4945
        %v5078 = vpack.c.b16 %v4948, %v4947
        %v5079 = vpack.c.b16 %v4950, %v4949
        %v5080 = vpack.c.b16 %v4952, %v4951
        %v5081 = vpack.c.b16 %v4954, %v4953
        %v5082 = vpack.c.b16 %v4956, %v4955
        %v5083 = vpack.c.b16 %v4958, %v4957
        %v5084 = vpack.c.b16 %v4960, %v4959
        %v5085 = vpack.c.b16 %v4962, %v4961
        %v5086 = vpack.c.b16 %v4964, %v4963
        %v5087 = vpack.c.b16 %v4966, %v4965
        %v5088 = vpack.c.b16 %v4968, %v4967
        %v5089 = vpack.c.b16 %v4970, %v4969
        %v5090 = vpack.c.b16 %v4972, %v4971
        %v5091 = vpack.c.b16 %v4974, %v4973
        %v5092 = vpack.c.b16 %v4976, %v4975
        %v5093 = vpack.c.b16 %v4978, %v4977
        %v5094 = vpack.c.b16 %v4980, %v4979
        %v5095 = vpack.c.b16 %v4982, %v4981
        %v5096 = vpack.c.b16 %v4984, %v4983
        %v5097 = vpack.c.b16 %v4986, %v4985
        %v5098 = vpack.c.b16 %v4988, %v4987
        %v5099 = vpack.c.b16 %v4990, %v4989
        %v5100 = vpack.c.b16 %v4992, %v4991
        %v5101 = vpack.c.b16 %v4994, %v4993
        %v5102 = vpack.c.b16 %v4996, %v4995
        %v5103 = vpack.c.b16 %v4998, %v4997
        %v5104 = vpack.c.b16 %v5000, %v4999
        %v5105 = vpack.c.b16 %v5002, %v5001
        %v5106 = vpack.c.b16 %v5004, %v5003
        %v5107 = vpack.c.b16 %v5006, %v5005
        %v5108 = vpack.c.b16 %v5008, %v5007
        %v5109 = vpack.c.b16 %v5010, %v5009
        %v5110 = vpack.c.b16 %v5012, %v5011
        %v5111 = vpack.c.b16 %v5014, %v5013
        %v5112 = vpack.c.b16 %v5016, %v5015
        %v5113 = vpack.c.b16 %v5018, %v5017
        %v5114 = vpack.c.b16 %v5020, %v5019
        %v5115 = vpack.c.b16 %v5022, %v5021
        %v5116 = vpack.c.b16 %v5024, %v5023
        %v5117 = vpack.c.b16 %v5026, %v5025
        %v5118 = vpack.c.b16 %v5028, %v5027
        %v5119 = vpack.c.b16 %v5030, %v5029
        %v5120 = vpack.c.b16 %v5032, %v5031
        %v5121 = vpack.c.b16 %v5034, %v5033
        %v5122 = vpack.c.b16 %v5036, %v5035
        %v5123 = vpack.c.b16 %v5038, %v5037
        %v5124 = vpack.c.b16 %v5040, %v5039
        %v5125 = vpack.c.b16 %v5042, %v5041
        %v5126 = vpack.c.b16 %v5044, %v5043
        %v5127 = vpack.c.b16 %v5046, %v5045
        %v5128 = vpack.c.b16 %v5048, %v5047
        %v5129 = vpack.c.b16 %v5050, %v5049
        %v5130 = vpack.c.b16 %v5052, %v5051
        %v5131 = vpack.c.b16 %v5054, %v5053
        %v5132 = vpack.c.b16 %v5056, %v5055
        %v5133 = vpack.c.b16 %v5058, %v5057
        %v5134 = vpack.c.b16 %v5060, %v5059
        %v5135 = vpack.c.b16 %v5062, %v5061
        %v5136 = vpack.c.b16 %v5064, %v5063
        %5209 = vmatprep.subr.bf16.mxu0 0
        %5210 = vmatpush1.bf16.msra.mxu0 %v5072
        %5211 = vmatprep.subr.bf16.mxu0 0
        %5212 = vmatpush1.bf16.msra.mxu0 %v5071
        %5213 = vmatprep.subr.bf16.mxu0 0
        %5214 = vmatpush1.bf16.msra.mxu0 %v5070
        %5215 = vmatprep.subr.bf16.mxu0 0
        %5216 = vmatpush1.bf16.msra.mxu0 %v5069
        %5217 = vmatprep.subr.bf16.mxu0 0
        %5218 = vmatpush1.bf16.msra.mxu0 %v5068
        %5219 = vmatprep.subr.bf16.mxu0 0
        %5220 = vmatpush1.bf16.msra.mxu0 %v5067
        %5221 = vmatprep.subr.bf16.mxu0 0
        %5222 = vmatpush1.bf16.msra.mxu0 %v5066
        %5223 = vmatprep.subr.bf16.mxu0 0
        %5224 = vmatpush1.bf16.msra.mxu0 %v5065
        %5225 = vmatprep.subr.bf16.mxu0 0
        %5226 = vmatpush2.bf16.msra.mxu0 %v5080
        %5227 = vmatprep.subr.bf16.mxu0 0
        %5228 = vmatpush2.bf16.msra.mxu0 %v5079
        %5229 = vmatprep.subr.bf16.mxu0 0
        %5230 = vmatpush2.bf16.msra.mxu0 %v5078
        %5231 = vmatprep.subr.bf16.mxu0 0
        %5232 = vmatpush2.bf16.msra.mxu0 %v5077
        %5233 = vmatprep.subr.bf16.mxu0 0
        %5234 = vmatpush2.bf16.msra.mxu0 %v5076
        %5235 = vmatprep.subr.bf16.mxu0 0
        %5236 = vmatpush2.bf16.msra.mxu0 %v5075
        %5237 = vmatprep.subr.bf16.mxu0 0
        %5238 = vmatpush2.bf16.msra.mxu0 %v5074
        %5239 = vmatprep.subr.bf16.mxu0 0
        %5240 = vmatpush2.bf16.msra.mxu0 %v5073
        %5241 = vmatprep.mubr.bf16.mxu0 %v4454
        %5242 = vmatmul.mubr.bf16.gmra.mxu0 %v4453
        %v5243 = vpop.f32.mrf.mxu0
        %v5244 = vadd.f32 %v3947, %v5243
        %v5245 = vpop.f32.mrf.mxu0
        %v5246 = vpop.f32.mrf.mxu0
        %v5247 = vadd.f32 %v3947, %v5246
        %v5248 = vpop.f32.mrf.mxu0
        %5249 = vmatprep.mubr.bf16.mxu0 %v4463
        %5250 = vmatmul.mubr.bf16.gmra.mxu0 %v4462
        %v5251 = vpop.f32.mrf.mxu0
        %v5252 = vadd.f32 %v3947, %v5251
        %v5253 = vpop.f32.mrf.mxu0
        %v5254 = vpop.f32.mrf.mxu0
        %v5255 = vadd.f32 %v3947, %v5254
        %v5256 = vpop.f32.mrf.mxu0
        %5257 = vmatprep.mubr.bf16.mxu0 %v4472
        %5258 = vmatmul.mubr.bf16.gmra.mxu0 %v4471
        %v5259 = vpop.f32.mrf.mxu0
        %v5260 = vadd.f32 %v3947, %v5259
        %v5261 = vpop.f32.mrf.mxu0
        %v5262 = vpop.f32.mrf.mxu0
        %v5263 = vadd.f32 %v3947, %v5262
        %v5264 = vpop.f32.mrf.mxu0
        %5265 = vmatprep.mubr.bf16.mxu0 %v4481
        %5266 = vmatmul.mubr.bf16.gmra.mxu0 %v4480
        %v5267 = vpop.f32.mrf.mxu0
        %v5268 = vadd.f32 %v3947, %v5267
        %v5269 = vpop.f32.mrf.mxu0
        %v5270 = vpop.f32.mrf.mxu0
        %v5271 = vadd.f32 %v3947, %v5270
        %v5272 = vpop.f32.mrf.mxu0
        %5273 = vmatprep.mubr.bf16.mxu0 %v4490
        %5274 = vmatmul.mubr.bf16.gmra.mxu0 %v4489
        %v5275 = vpop.f32.mrf.mxu0
        %v5276 = vadd.f32 %v3947, %v5275
        %v5277 = vpop.f32.mrf.mxu0
        %v5278 = vpop.f32.mrf.mxu0
        %v5279 = vadd.f32 %v3947, %v5278
        %v5280 = vpop.f32.mrf.mxu0
        %5281 = vmatprep.mubr.bf16.mxu0 %v4499
        %5282 = vmatmul.mubr.bf16.gmra.mxu0 %v4498
        %v5283 = vpop.f32.mrf.mxu0
        %v5284 = vadd.f32 %v3947, %v5283
        %v5285 = vpop.f32.mrf.mxu0
        %v5286 = vpop.f32.mrf.mxu0
        %v5287 = vadd.f32 %v3947, %v5286
        %v5288 = vpop.f32.mrf.mxu0
        %5289 = vmatprep.mubr.bf16.mxu0 %v4508
        %5290 = vmatmul.mubr.bf16.gmra.mxu0 %v4507
        %v5291 = vpop.f32.mrf.mxu0
        %v5292 = vadd.f32 %v3947, %v5291
        %v5293 = vpop.f32.mrf.mxu0
        %v5294 = vpop.f32.mrf.mxu0
        %v5295 = vadd.f32 %v3947, %v5294
        %v5296 = vpop.f32.mrf.mxu0
        %5297 = vmatprep.mubr.bf16.mxu0 %v4517
        %5298 = vmatmul.mubr.bf16.gmra.mxu0 %v4516
        %v5299 = vpop.f32.mrf.mxu0
        %v5300 = vadd.f32 %v3947, %v5299
        %v5301 = vpop.f32.mrf.mxu0
        %v5302 = vpop.f32.mrf.mxu0
        %v5303 = vadd.f32 %v3947, %v5302
        %v5304 = vpop.f32.mrf.mxu0
        %5305 = vmatprep.mubr.bf16.mxu0 %v4526
        %5306 = vmatmul.mubr.bf16.gmra.mxu0 %v4525
        %v5307 = vpop.f32.mrf.mxu0
        %v5308 = vadd.f32 %v3947, %v5307
        %v5309 = vpop.f32.mrf.mxu0
        %v5310 = vpop.f32.mrf.mxu0
        %v5311 = vadd.f32 %v3947, %v5310
        %v5312 = vpop.f32.mrf.mxu0
        %5313 = vmatprep.mubr.bf16.mxu0 %v4535
        %5314 = vmatmul.mubr.bf16.gmra.mxu0 %v4534
        %v5315 = vpop.f32.mrf.mxu0
        %v5316 = vadd.f32 %v3947, %v5315
        %v5317 = vpop.f32.mrf.mxu0
        %v5318 = vpop.f32.mrf.mxu0
        %v5319 = vadd.f32 %v3947, %v5318
        %v5320 = vpop.f32.mrf.mxu0
        %5321 = vmatprep.mubr.bf16.mxu0 %v4544
        %5322 = vmatmul.mubr.bf16.gmra.mxu0 %v4543
        %v5323 = vpop.f32.mrf.mxu0
        %v5324 = vadd.f32 %v3947, %v5323
        %v5325 = vpop.f32.mrf.mxu0
        %v5326 = vpop.f32.mrf.mxu0
        %v5327 = vadd.f32 %v3947, %v5326
        %v5328 = vpop.f32.mrf.mxu0
        %5329 = vmatprep.mubr.bf16.mxu0 %v4553
        %5330 = vmatmul.mubr.bf16.gmra.mxu0 %v4552
        %v5331 = vpop.f32.mrf.mxu0
        %v5332 = vadd.f32 %v3947, %v5331
        %v5333 = vpop.f32.mrf.mxu0
        %v5334 = vpop.f32.mrf.mxu0
        %v5335 = vadd.f32 %v3947, %v5334
        %v5336 = vpop.f32.mrf.mxu0
        %5337 = vmatprep.mubr.bf16.mxu0 %v4562
        %5338 = vmatmul.mubr.bf16.gmra.mxu0 %v4561
        %v5339 = vpop.f32.mrf.mxu0
        %v5340 = vadd.f32 %v3947, %v5339
        %v5341 = vpop.f32.mrf.mxu0
        %v5342 = vpop.f32.mrf.mxu0
        %v5343 = vadd.f32 %v3947, %v5342
        %v5344 = vpop.f32.mrf.mxu0
        %5345 = vmatprep.mubr.bf16.mxu0 %v4571
        %5346 = vmatmul.mubr.bf16.gmra.mxu0 %v4570
        %v5347 = vpop.f32.mrf.mxu0
        %v5348 = vadd.f32 %v3947, %v5347
        %v5349 = vpop.f32.mrf.mxu0
        %v5350 = vpop.f32.mrf.mxu0
        %v5351 = vadd.f32 %v3947, %v5350
        %v5352 = vpop.f32.mrf.mxu0
        %5353 = vmatprep.mubr.bf16.mxu0 %v4580
        %5354 = vmatmul.mubr.bf16.gmra.mxu0 %v4579
        %v5355 = vpop.f32.mrf.mxu0
        %v5356 = vadd.f32 %v3947, %v5355
        %v5357 = vpop.f32.mrf.mxu0
        %v5358 = vpop.f32.mrf.mxu0
        %v5359 = vadd.f32 %v3947, %v5358
        %v5360 = vpop.f32.mrf.mxu0
        %5361 = vmatprep.mubr.bf16.mxu0 %v4589
        %5362 = vmatmul.mubr.bf16.gmra.mxu0 %v4588
        %v5363 = vpop.f32.mrf.mxu0
        %v5364 = vadd.f32 %v3947, %v5363
        %v5365 = vpop.f32.mrf.mxu0
        %v5366 = vpop.f32.mrf.mxu0
        %v5367 = vadd.f32 %v3947, %v5366
        %v5368 = vpop.f32.mrf.mxu0
        %5369 = vmatprep.mubr.bf16.mxu0 %v4598
        %5370 = vmatmul.mubr.bf16.gmra.mxu0 %v4597
        %v5371 = vpop.f32.mrf.mxu0
        %v5372 = vadd.f32 %v3947, %v5371
        %v5373 = vpop.f32.mrf.mxu0
        %v5374 = vpop.f32.mrf.mxu0
        %v5375 = vadd.f32 %v3947, %v5374
        %v5376 = vpop.f32.mrf.mxu0
        %5377 = vmatprep.mubr.bf16.mxu0 %v4607
        %5378 = vmatmul.mubr.bf16.gmra.mxu0 %v4606
        %v5379 = vpop.f32.mrf.mxu0
        %v5380 = vadd.f32 %v3947, %v5379
        %v5381 = vpop.f32.mrf.mxu0
        %v5382 = vpop.f32.mrf.mxu0
        %v5383 = vadd.f32 %v3947, %v5382
        %v5384 = vpop.f32.mrf.mxu0
        %5385 = vdwg.mxu0
        %5386 = vmatprep.subr.bf16.mxu0 0
        %5387 = vmatpush1.bf16.msra.mxu0 %v5088
        %5388 = vmatprep.subr.bf16.mxu0 0
        %5389 = vmatpush1.bf16.msra.mxu0 %v5087
        %5390 = vmatprep.subr.bf16.mxu0 0
        %5391 = vmatpush1.bf16.msra.mxu0 %v5086
        %5392 = vmatprep.subr.bf16.mxu0 0
        %5393 = vmatpush1.bf16.msra.mxu0 %v5085
        %5394 = vmatprep.subr.bf16.mxu0 0
        %5395 = vmatpush1.bf16.msra.mxu0 %v5084
        %5396 = vmatprep.subr.bf16.mxu0 0
        %5397 = vmatpush1.bf16.msra.mxu0 %v5083
        %5398 = vmatprep.subr.bf16.mxu0 0
        %5399 = vmatpush1.bf16.msra.mxu0 %v5082
        %5400 = vmatprep.subr.bf16.mxu0 0
        %5401 = vmatpush1.bf16.msra.mxu0 %v5081
        %5402 = vmatprep.subr.bf16.mxu0 0
        %5403 = vmatpush2.bf16.msra.mxu0 %v5096
        %5404 = vmatprep.subr.bf16.mxu0 0
        %5405 = vmatpush2.bf16.msra.mxu0 %v5095
        %5406 = vmatprep.subr.bf16.mxu0 0
        %5407 = vmatpush2.bf16.msra.mxu0 %v5094
        %5408 = vmatprep.subr.bf16.mxu0 0
        %5409 = vmatpush2.bf16.msra.mxu0 %v5093
        %5410 = vmatprep.subr.bf16.mxu0 0
        %5411 = vmatpush2.bf16.msra.mxu0 %v5092
        %5412 = vmatprep.subr.bf16.mxu0 0
        %5413 = vmatpush2.bf16.msra.mxu0 %v5091
        %5414 = vmatprep.subr.bf16.mxu0 0
        %5415 = vmatpush2.bf16.msra.mxu0 %v5090
        %5416 = vmatprep.subr.bf16.mxu0 0
        %5417 = vmatpush2.bf16.msra.mxu0 %v5089
        %5418 = vmatprep.mubr.bf16.mxu0 %v4456
        %5419 = vmatmul.mubr.bf16.gmra.mxu0 %v4455
        %v5420 = vpop.f32.mrf.mxu0
        %v5421 = vadd.f32 %v5244, %v5420
        %v5422 = vpop.f32.mrf.mxu0
        %v5423 = vpop.f32.mrf.mxu0
        %v5424 = vadd.f32 %v5247, %v5423
        %v5425 = vpop.f32.mrf.mxu0
        %5426 = vmatprep.mubr.bf16.mxu0 %v4465
        %5427 = vmatmul.mubr.bf16.gmra.mxu0 %v4464
        %v5428 = vpop.f32.mrf.mxu0
        %v5429 = vadd.f32 %v5252, %v5428
        %v5430 = vpop.f32.mrf.mxu0
        %v5431 = vpop.f32.mrf.mxu0
        %v5432 = vadd.f32 %v5255, %v5431
        %v5433 = vpop.f32.mrf.mxu0
        %5434 = vmatprep.mubr.bf16.mxu0 %v4474
        %5435 = vmatmul.mubr.bf16.gmra.mxu0 %v4473
        %v5436 = vpop.f32.mrf.mxu0
        %v5437 = vadd.f32 %v5260, %v5436
        %v5438 = vpop.f32.mrf.mxu0
        %v5439 = vpop.f32.mrf.mxu0
        %v5440 = vadd.f32 %v5263, %v5439
        %v5441 = vpop.f32.mrf.mxu0
        %5442 = vmatprep.mubr.bf16.mxu0 %v4483
        %5443 = vmatmul.mubr.bf16.gmra.mxu0 %v4482
        %v5444 = vpop.f32.mrf.mxu0
        %v5445 = vadd.f32 %v5268, %v5444
        %v5446 = vpop.f32.mrf.mxu0
        %v5447 = vpop.f32.mrf.mxu0
        %v5448 = vadd.f32 %v5271, %v5447
        %v5449 = vpop.f32.mrf.mxu0
        %5450 = vmatprep.mubr.bf16.mxu0 %v4492
        %5451 = vmatmul.mubr.bf16.gmra.mxu0 %v4491
        %v5452 = vpop.f32.mrf.mxu0
        %v5453 = vadd.f32 %v5276, %v5452
        %v5454 = vpop.f32.mrf.mxu0
        %v5455 = vpop.f32.mrf.mxu0
        %v5456 = vadd.f32 %v5279, %v5455
        %v5457 = vpop.f32.mrf.mxu0
        %5458 = vmatprep.mubr.bf16.mxu0 %v4501
        %5459 = vmatmul.mubr.bf16.gmra.mxu0 %v4500
        %v5460 = vpop.f32.mrf.mxu0
        %v5461 = vadd.f32 %v5284, %v5460
        %v5462 = vpop.f32.mrf.mxu0
        %v5463 = vpop.f32.mrf.mxu0
        %v5464 = vadd.f32 %v5287, %v5463
        %v5465 = vpop.f32.mrf.mxu0
        %5466 = vmatprep.mubr.bf16.mxu0 %v4510
        %5467 = vmatmul.mubr.bf16.gmra.mxu0 %v4509
        %v5468 = vpop.f32.mrf.mxu0
        %v5469 = vadd.f32 %v5292, %v5468
        %v5470 = vpop.f32.mrf.mxu0
        %v5471 = vpop.f32.mrf.mxu0
        %v5472 = vadd.f32 %v5295, %v5471
        %v5473 = vpop.f32.mrf.mxu0
        %5474 = vmatprep.mubr.bf16.mxu0 %v4519
        %5475 = vmatmul.mubr.bf16.gmra.mxu0 %v4518
        %v5476 = vpop.f32.mrf.mxu0
        %v5477 = vadd.f32 %v5300, %v5476
        %v5478 = vpop.f32.mrf.mxu0
        %v5479 = vpop.f32.mrf.mxu0
        %v5480 = vadd.f32 %v5303, %v5479
        %v5481 = vpop.f32.mrf.mxu0
        %5482 = vmatprep.mubr.bf16.mxu0 %v4528
        %5483 = vmatmul.mubr.bf16.gmra.mxu0 %v4527
        %v5484 = vpop.f32.mrf.mxu0
        %v5485 = vadd.f32 %v5308, %v5484
        %v5486 = vpop.f32.mrf.mxu0
        %v5487 = vpop.f32.mrf.mxu0
        %v5488 = vadd.f32 %v5311, %v5487
        %v5489 = vpop.f32.mrf.mxu0
        %5490 = vmatprep.mubr.bf16.mxu0 %v4537
        %5491 = vmatmul.mubr.bf16.gmra.mxu0 %v4536
        %v5492 = vpop.f32.mrf.mxu0
        %v5493 = vadd.f32 %v5316, %v5492
        %v5494 = vpop.f32.mrf.mxu0
        %v5495 = vpop.f32.mrf.mxu0
        %v5496 = vadd.f32 %v5319, %v5495
        %v5497 = vpop.f32.mrf.mxu0
        %5498 = vmatprep.mubr.bf16.mxu0 %v4546
        %5499 = vmatmul.mubr.bf16.gmra.mxu0 %v4545
        %v5500 = vpop.f32.mrf.mxu0
        %v5501 = vadd.f32 %v5324, %v5500
        %v5502 = vpop.f32.mrf.mxu0
        %v5503 = vpop.f32.mrf.mxu0
        %v5504 = vadd.f32 %v5327, %v5503
        %v5505 = vpop.f32.mrf.mxu0
        %5506 = vmatprep.mubr.bf16.mxu0 %v4555
        %5507 = vmatmul.mubr.bf16.gmra.mxu0 %v4554
        %v5508 = vpop.f32.mrf.mxu0
        %v5509 = vadd.f32 %v5332, %v5508
        %v5510 = vpop.f32.mrf.mxu0
        %v5511 = vpop.f32.mrf.mxu0
        %v5512 = vadd.f32 %v5335, %v5511
        %v5513 = vpop.f32.mrf.mxu0
        %5514 = vmatprep.mubr.bf16.mxu0 %v4564
        %5515 = vmatmul.mubr.bf16.gmra.mxu0 %v4563
        %v5516 = vpop.f32.mrf.mxu0
        %v5517 = vadd.f32 %v5340, %v5516
        %v5518 = vpop.f32.mrf.mxu0
        %v5519 = vpop.f32.mrf.mxu0
        %v5520 = vadd.f32 %v5343, %v5519
        %v5521 = vpop.f32.mrf.mxu0
        %5522 = vmatprep.mubr.bf16.mxu0 %v4573
        %5523 = vmatmul.mubr.bf16.gmra.mxu0 %v4572
        %v5524 = vpop.f32.mrf.mxu0
        %v5525 = vadd.f32 %v5348, %v5524
        %v5526 = vpop.f32.mrf.mxu0
        %v5527 = vpop.f32.mrf.mxu0
        %v5528 = vadd.f32 %v5351, %v5527
        %v5529 = vpop.f32.mrf.mxu0
        %5530 = vmatprep.mubr.bf16.mxu0 %v4582
        %5531 = vmatmul.mubr.bf16.gmra.mxu0 %v4581
        %v5532 = vpop.f32.mrf.mxu0
        %v5533 = vadd.f32 %v5356, %v5532
        %v5534 = vpop.f32.mrf.mxu0
        %v5535 = vpop.f32.mrf.mxu0
        %v5536 = vadd.f32 %v5359, %v5535
        %v5537 = vpop.f32.mrf.mxu0
        %5538 = vmatprep.mubr.bf16.mxu0 %v4591
        %5539 = vmatmul.mubr.bf16.gmra.mxu0 %v4590
        %v5540 = vpop.f32.mrf.mxu0
        %v5541 = vadd.f32 %v5364, %v5540
        %v5542 = vpop.f32.mrf.mxu0
        %v5543 = vpop.f32.mrf.mxu0
        %v5544 = vadd.f32 %v5367, %v5543
        %v5545 = vpop.f32.mrf.mxu0
        %5546 = vmatprep.mubr.bf16.mxu0 %v4600
        %5547 = vmatmul.mubr.bf16.gmra.mxu0 %v4599
        %v5548 = vpop.f32.mrf.mxu0
        %v5549 = vadd.f32 %v5372, %v5548
        %v5550 = vpop.f32.mrf.mxu0
        %v5551 = vpop.f32.mrf.mxu0
        %v5552 = vadd.f32 %v5375, %v5551
        %v5553 = vpop.f32.mrf.mxu0
        %5554 = vmatprep.mubr.bf16.mxu0 %v4609
        %5555 = vmatmul.mubr.bf16.gmra.mxu0 %v4608
        %v5556 = vpop.f32.mrf.mxu0
        %v5557 = vadd.f32 %v5380, %v5556
        %v5558 = vpop.f32.mrf.mxu0
        %v5559 = vpop.f32.mrf.mxu0
        %v5560 = vadd.f32 %v5383, %v5559
        %v5561 = vpop.f32.mrf.mxu0
        %5562 = vdwg.mxu0
        %5563 = vmatprep.subr.bf16.mxu0 0
        %5564 = vmatpush1.bf16.msra.mxu0 %v5104
        %5565 = vmatprep.subr.bf16.mxu0 0
        %5566 = vmatpush1.bf16.msra.mxu0 %v5103
        %5567 = vmatprep.subr.bf16.mxu0 0
        %5568 = vmatpush1.bf16.msra.mxu0 %v5102
        %5569 = vmatprep.subr.bf16.mxu0 0
        %5570 = vmatpush1.bf16.msra.mxu0 %v5101
        %5571 = vmatprep.subr.bf16.mxu0 0
        %5572 = vmatpush1.bf16.msra.mxu0 %v5100
        %5573 = vmatprep.subr.bf16.mxu0 0
        %5574 = vmatpush1.bf16.msra.mxu0 %v5099
        %5575 = vmatprep.subr.bf16.mxu0 0
        %5576 = vmatpush1.bf16.msra.mxu0 %v5098
        %5577 = vmatprep.subr.bf16.mxu0 0
        %5578 = vmatpush1.bf16.msra.mxu0 %v5097
        %5579 = vmatprep.subr.bf16.mxu0 0
        %5580 = vmatpush2.bf16.msra.mxu0 %v5112
        %5581 = vmatprep.subr.bf16.mxu0 0
        %5582 = vmatpush2.bf16.msra.mxu0 %v5111
        %5583 = vmatprep.subr.bf16.mxu0 0
        %5584 = vmatpush2.bf16.msra.mxu0 %v5110
        %5585 = vmatprep.subr.bf16.mxu0 0
        %5586 = vmatpush2.bf16.msra.mxu0 %v5109
        %5587 = vmatprep.subr.bf16.mxu0 0
        %5588 = vmatpush2.bf16.msra.mxu0 %v5108
        %5589 = vmatprep.subr.bf16.mxu0 0
        %5590 = vmatpush2.bf16.msra.mxu0 %v5107
        %5591 = vmatprep.subr.bf16.mxu0 0
        %5592 = vmatpush2.bf16.msra.mxu0 %v5106
        %5593 = vmatprep.subr.bf16.mxu0 0
        %5594 = vmatpush2.bf16.msra.mxu0 %v5105
        %5595 = vmatprep.mubr.bf16.mxu0 %v4458
        %5596 = vmatmul.mubr.bf16.gmra.mxu0 %v4457
        %v5597 = vpop.f32.mrf.mxu0
        %v5598 = vadd.f32 %v5421, %v5597
        %v5599 = vpop.f32.mrf.mxu0
        %v5600 = vpop.f32.mrf.mxu0
        %v5601 = vadd.f32 %v5424, %v5600
        %v5602 = vpop.f32.mrf.mxu0
        %5603 = vmatprep.mubr.bf16.mxu0 %v4467
        %5604 = vmatmul.mubr.bf16.gmra.mxu0 %v4466
        %v5605 = vpop.f32.mrf.mxu0
        %v5606 = vadd.f32 %v5429, %v5605
        %v5607 = vpop.f32.mrf.mxu0
        %v5608 = vpop.f32.mrf.mxu0
        %v5609 = vadd.f32 %v5432, %v5608
        %v5610 = vpop.f32.mrf.mxu0
        %5611 = vmatprep.mubr.bf16.mxu0 %v4476
        %5612 = vmatmul.mubr.bf16.gmra.mxu0 %v4475
        %v5613 = vpop.f32.mrf.mxu0
        %v5614 = vadd.f32 %v5437, %v5613
        %v5615 = vpop.f32.mrf.mxu0
        %v5616 = vpop.f32.mrf.mxu0
        %v5617 = vadd.f32 %v5440, %v5616
        %v5618 = vpop.f32.mrf.mxu0
        %5619 = vmatprep.mubr.bf16.mxu0 %v4485
        %5620 = vmatmul.mubr.bf16.gmra.mxu0 %v4484
        %v5621 = vpop.f32.mrf.mxu0
        %v5622 = vadd.f32 %v5445, %v5621
        %v5623 = vpop.f32.mrf.mxu0
        %v5624 = vpop.f32.mrf.mxu0
        %v5625 = vadd.f32 %v5448, %v5624
        %v5626 = vpop.f32.mrf.mxu0
        %5627 = vmatprep.mubr.bf16.mxu0 %v4494
        %5628 = vmatmul.mubr.bf16.gmra.mxu0 %v4493
        %v5629 = vpop.f32.mrf.mxu0
        %v5630 = vadd.f32 %v5453, %v5629
        %v5631 = vpop.f32.mrf.mxu0
        %v5632 = vpop.f32.mrf.mxu0
        %v5633 = vadd.f32 %v5456, %v5632
        %v5634 = vpop.f32.mrf.mxu0
        %5635 = vmatprep.mubr.bf16.mxu0 %v4503
        %5636 = vmatmul.mubr.bf16.gmra.mxu0 %v4502
        %v5637 = vpop.f32.mrf.mxu0
        %v5638 = vadd.f32 %v5461, %v5637
        %v5639 = vpop.f32.mrf.mxu0
        %v5640 = vpop.f32.mrf.mxu0
        %v5641 = vadd.f32 %v5464, %v5640
        %v5642 = vpop.f32.mrf.mxu0
        %5643 = vmatprep.mubr.bf16.mxu0 %v4512
        %5644 = vmatmul.mubr.bf16.gmra.mxu0 %v4511
        %v5645 = vpop.f32.mrf.mxu0
        %v5646 = vadd.f32 %v5469, %v5645
        %v5647 = vpop.f32.mrf.mxu0
        %v5648 = vpop.f32.mrf.mxu0
        %v5649 = vadd.f32 %v5472, %v5648
        %v5650 = vpop.f32.mrf.mxu0
        %5651 = vmatprep.mubr.bf16.mxu0 %v4521
        %5652 = vmatmul.mubr.bf16.gmra.mxu0 %v4520
        %v5653 = vpop.f32.mrf.mxu0
        %v5654 = vadd.f32 %v5477, %v5653
        %v5655 = vpop.f32.mrf.mxu0
        %v5656 = vpop.f32.mrf.mxu0
        %v5657 = vadd.f32 %v5480, %v5656
        %v5658 = vpop.f32.mrf.mxu0
        %5659 = vmatprep.mubr.bf16.mxu0 %v4530
        %5660 = vmatmul.mubr.bf16.gmra.mxu0 %v4529
        %v5661 = vpop.f32.mrf.mxu0
        %v5662 = vadd.f32 %v5485, %v5661
        %v5663 = vpop.f32.mrf.mxu0
        %v5664 = vpop.f32.mrf.mxu0
        %v5665 = vadd.f32 %v5488, %v5664
        %v5666 = vpop.f32.mrf.mxu0
        %5667 = vmatprep.mubr.bf16.mxu0 %v4539
        %5668 = vmatmul.mubr.bf16.gmra.mxu0 %v4538
        %v5669 = vpop.f32.mrf.mxu0
        %v5670 = vadd.f32 %v5493, %v5669
        %v5671 = vpop.f32.mrf.mxu0
        %v5672 = vpop.f32.mrf.mxu0
        %v5673 = vadd.f32 %v5496, %v5672
        %v5674 = vpop.f32.mrf.mxu0
        %5675 = vmatprep.mubr.bf16.mxu0 %v4548
        %5676 = vmatmul.mubr.bf16.gmra.mxu0 %v4547
        %v5677 = vpop.f32.mrf.mxu0
        %v5678 = vadd.f32 %v5501, %v5677
        %v5679 = vpop.f32.mrf.mxu0
        %v5680 = vpop.f32.mrf.mxu0
        %v5681 = vadd.f32 %v5504, %v5680
        %v5682 = vpop.f32.mrf.mxu0
        %5683 = vmatprep.mubr.bf16.mxu0 %v4557
        %5684 = vmatmul.mubr.bf16.gmra.mxu0 %v4556
        %v5685 = vpop.f32.mrf.mxu0
        %v5686 = vadd.f32 %v5509, %v5685
        %v5687 = vpop.f32.mrf.mxu0
        %v5688 = vpop.f32.mrf.mxu0
        %v5689 = vadd.f32 %v5512, %v5688
        %v5690 = vpop.f32.mrf.mxu0
        %5691 = vmatprep.mubr.bf16.mxu0 %v4566
        %5692 = vmatmul.mubr.bf16.gmra.mxu0 %v4565
        %v5693 = vpop.f32.mrf.mxu0
        %v5694 = vadd.f32 %v5517, %v5693
        %v5695 = vpop.f32.mrf.mxu0
        %v5696 = vpop.f32.mrf.mxu0
        %v5697 = vadd.f32 %v5520, %v5696
        %v5698 = vpop.f32.mrf.mxu0
        %5699 = vmatprep.mubr.bf16.mxu0 %v4575
        %5700 = vmatmul.mubr.bf16.gmra.mxu0 %v4574
        %v5701 = vpop.f32.mrf.mxu0
        %v5702 = vadd.f32 %v5525, %v5701
        %v5703 = vpop.f32.mrf.mxu0
        %v5704 = vpop.f32.mrf.mxu0
        %v5705 = vadd.f32 %v5528, %v5704
        %v5706 = vpop.f32.mrf.mxu0
        %5707 = vmatprep.mubr.bf16.mxu0 %v4584
        %5708 = vmatmul.mubr.bf16.gmra.mxu0 %v4583
        %v5709 = vpop.f32.mrf.mxu0
        %v5710 = vadd.f32 %v5533, %v5709
        %v5711 = vpop.f32.mrf.mxu0
        %v5712 = vpop.f32.mrf.mxu0
        %v5713 = vadd.f32 %v5536, %v5712
        %v5714 = vpop.f32.mrf.mxu0
        %5715 = vmatprep.mubr.bf16.mxu0 %v4593
        %5716 = vmatmul.mubr.bf16.gmra.mxu0 %v4592
        %v5717 = vpop.f32.mrf.mxu0
        %v5718 = vadd.f32 %v5541, %v5717
        %v5719 = vpop.f32.mrf.mxu0
        %v5720 = vpop.f32.mrf.mxu0
        %v5721 = vadd.f32 %v5544, %v5720
        %v5722 = vpop.f32.mrf.mxu0
        %5723 = vmatprep.mubr.bf16.mxu0 %v4602
        %5724 = vmatmul.mubr.bf16.gmra.mxu0 %v4601
        %v5725 = vpop.f32.mrf.mxu0
        %v5726 = vadd.f32 %v5549, %v5725
        %v5727 = vpop.f32.mrf.mxu0
        %v5728 = vpop.f32.mrf.mxu0
        %v5729 = vadd.f32 %v5552, %v5728
        %v5730 = vpop.f32.mrf.mxu0
        %5731 = vmatprep.mubr.bf16.mxu0 %v4611
        %5732 = vmatmul.mubr.bf16.gmra.mxu0 %v4610
        %v5733 = vpop.f32.mrf.mxu0
        %v5734 = vadd.f32 %v5557, %v5733
        %v5735 = vpop.f32.mrf.mxu0
        %v5736 = vpop.f32.mrf.mxu0
        %v5737 = vadd.f32 %v5560, %v5736
        %v5738 = vpop.f32.mrf.mxu0
        %5739 = vdwg.mxu0
        %5740 = vmatprep.subr.bf16.mxu0 0
        %5741 = vmatpush1.bf16.msra.mxu0 %v5120
        %5742 = vmatprep.subr.bf16.mxu0 0
        %5743 = vmatpush1.bf16.msra.mxu0 %v5119
        %5744 = vmatprep.subr.bf16.mxu0 0
        %5745 = vmatpush1.bf16.msra.mxu0 %v5118
        %5746 = vmatprep.subr.bf16.mxu0 0
        %5747 = vmatpush1.bf16.msra.mxu0 %v5117
        %5748 = vmatprep.subr.bf16.mxu0 0
        %5749 = vmatpush1.bf16.msra.mxu0 %v5116
        %5750 = vmatprep.subr.bf16.mxu0 0
        %5751 = vmatpush1.bf16.msra.mxu0 %v5115
        %5752 = vmatprep.subr.bf16.mxu0 0
        %5753 = vmatpush1.bf16.msra.mxu0 %v5114
        %5754 = vmatprep.subr.bf16.mxu0 0
        %5755 = vmatpush1.bf16.msra.mxu0 %v5113
        %5756 = vmatprep.subr.bf16.mxu0 0
        %5757 = vmatpush2.bf16.msra.mxu0 %v5128
        %5758 = vmatprep.subr.bf16.mxu0 0
        %5759 = vmatpush2.bf16.msra.mxu0 %v5127
        %5760 = vmatprep.subr.bf16.mxu0 0
        %5761 = vmatpush2.bf16.msra.mxu0 %v5126
        %5762 = vmatprep.subr.bf16.mxu0 0
        %5763 = vmatpush2.bf16.msra.mxu0 %v5125
        %5764 = vmatprep.subr.bf16.mxu0 0
        %5765 = vmatpush2.bf16.msra.mxu0 %v5124
        %5766 = vmatprep.subr.bf16.mxu0 0
        %5767 = vmatpush2.bf16.msra.mxu0 %v5123
        %5768 = vmatprep.subr.bf16.mxu0 0
        %5769 = vmatpush2.bf16.msra.mxu0 %v5122
        %5770 = vmatprep.subr.bf16.mxu0 0
        %5771 = vmatpush2.bf16.msra.mxu0 %v5121
        %5772 = vmatprep.mubr.bf16.mxu0 %v4460
        %5773 = vmatmul.mubr.bf16.gmra.mxu0 %v4459
        %v5774 = vpop.f32.mrf.mxu0
        %v5775 = vadd.f32 %v5598, %v5774
        %v5776 = vpop.f32.mrf.mxu0
        %v5777 = vpop.f32.mrf.mxu0
        %v5778 = vadd.f32 %v5601, %v5777
        %v5779 = vpop.f32.mrf.mxu0
        %5780 = vmatprep.mubr.bf16.mxu0 %v4469
        %5781 = vmatmul.mubr.bf16.gmra.mxu0 %v4468
        %v5782 = vpop.f32.mrf.mxu0
        %v5783 = vadd.f32 %v5606, %v5782
        %v5784 = vpop.f32.mrf.mxu0
        %v5785 = vpop.f32.mrf.mxu0
        %v5786 = vadd.f32 %v5609, %v5785
        %v5787 = vpop.f32.mrf.mxu0
        %5788 = vmatprep.mubr.bf16.mxu0 %v4478
        %5789 = vmatmul.mubr.bf16.gmra.mxu0 %v4477
        %v5790 = vpop.f32.mrf.mxu0
        %v5791 = vadd.f32 %v5614, %v5790
        %v5792 = vpop.f32.mrf.mxu0
        %v5793 = vpop.f32.mrf.mxu0
        %v5794 = vadd.f32 %v5617, %v5793
        %v5795 = vpop.f32.mrf.mxu0
        %5796 = vmatprep.mubr.bf16.mxu0 %v4487
        %5797 = vmatmul.mubr.bf16.gmra.mxu0 %v4486
        %v5798 = vpop.f32.mrf.mxu0
        %v5799 = vadd.f32 %v5622, %v5798
        %v5800 = vpop.f32.mrf.mxu0
        %v5801 = vpop.f32.mrf.mxu0
        %v5802 = vadd.f32 %v5625, %v5801
        %v5803 = vpop.f32.mrf.mxu0
        %5804 = vmatprep.mubr.bf16.mxu0 %v4496
        %5805 = vmatmul.mubr.bf16.gmra.mxu0 %v4495
        %v5806 = vpop.f32.mrf.mxu0
        %v5807 = vadd.f32 %v5630, %v5806
        %v5808 = vpop.f32.mrf.mxu0
        %v5809 = vpop.f32.mrf.mxu0
        %v5810 = vadd.f32 %v5633, %v5809
        %v5811 = vpop.f32.mrf.mxu0
        %5812 = vmatprep.mubr.bf16.mxu0 %v4505
        %5813 = vmatmul.mubr.bf16.gmra.mxu0 %v4504
        %v5814 = vpop.f32.mrf.mxu0
        %v5815 = vadd.f32 %v5638, %v5814
        %v5816 = vpop.f32.mrf.mxu0
        %v5817 = vpop.f32.mrf.mxu0
        %v5818 = vadd.f32 %v5641, %v5817
        %v5819 = vpop.f32.mrf.mxu0
        %5820 = vmatprep.mubr.bf16.mxu0 %v4514
        %5821 = vmatmul.mubr.bf16.gmra.mxu0 %v4513
        %v5822 = vpop.f32.mrf.mxu0
        %v5823 = vadd.f32 %v5646, %v5822
        %v5824 = vpop.f32.mrf.mxu0
        %v5825 = vpop.f32.mrf.mxu0
        %v5826 = vadd.f32 %v5649, %v5825
        %v5827 = vpop.f32.mrf.mxu0
        %5828 = vmatprep.mubr.bf16.mxu0 %v4523
        %5829 = vmatmul.mubr.bf16.gmra.mxu0 %v4522
        %v5830 = vpop.f32.mrf.mxu0
        %v5831 = vadd.f32 %v5654, %v5830
        %v5832 = vpop.f32.mrf.mxu0
        %v5833 = vpop.f32.mrf.mxu0
        %v5834 = vadd.f32 %v5657, %v5833
        %v5835 = vpop.f32.mrf.mxu0
        %5836 = vmatprep.mubr.bf16.mxu0 %v4532
        %5837 = vmatmul.mubr.bf16.gmra.mxu0 %v4531
        %v5838 = vpop.f32.mrf.mxu0
        %v5839 = vadd.f32 %v5662, %v5838
        %v5840 = vpop.f32.mrf.mxu0
        %v5841 = vpop.f32.mrf.mxu0
        %v5842 = vadd.f32 %v5665, %v5841
        %v5843 = vpop.f32.mrf.mxu0
        %5844 = vmatprep.mubr.bf16.mxu0 %v4541
        %5845 = vmatmul.mubr.bf16.gmra.mxu0 %v4540
        %v5846 = vpop.f32.mrf.mxu0
        %v5847 = vadd.f32 %v5670, %v5846
        %v5848 = vpop.f32.mrf.mxu0
        %v5849 = vpop.f32.mrf.mxu0
        %v5850 = vadd.f32 %v5673, %v5849
        %v5851 = vpop.f32.mrf.mxu0
        %5852 = vmatprep.mubr.bf16.mxu0 %v4550
        %5853 = vmatmul.mubr.bf16.gmra.mxu0 %v4549
        %v5854 = vpop.f32.mrf.mxu0
        %v5855 = vadd.f32 %v5678, %v5854
        %v5856 = vpop.f32.mrf.mxu0
        %v5857 = vpop.f32.mrf.mxu0
        %v5858 = vadd.f32 %v5681, %v5857
        %v5859 = vpop.f32.mrf.mxu0
        %5860 = vmatprep.mubr.bf16.mxu0 %v4559
        %5861 = vmatmul.mubr.bf16.gmra.mxu0 %v4558
        %v5862 = vpop.f32.mrf.mxu0
        %v5863 = vadd.f32 %v5686, %v5862
        %v5864 = vpop.f32.mrf.mxu0
        %v5865 = vpop.f32.mrf.mxu0
        %v5866 = vadd.f32 %v5689, %v5865
        %v5867 = vpop.f32.mrf.mxu0
        %5868 = vmatprep.mubr.bf16.mxu0 %v4568
        %5869 = vmatmul.mubr.bf16.gmra.mxu0 %v4567
        %v5870 = vpop.f32.mrf.mxu0
        %v5871 = vadd.f32 %v5694, %v5870
        %v5872 = vpop.f32.mrf.mxu0
        %v5873 = vpop.f32.mrf.mxu0
        %v5874 = vadd.f32 %v5697, %v5873
        %v5875 = vpop.f32.mrf.mxu0
        %5876 = vmatprep.mubr.bf16.mxu0 %v4577
        %5877 = vmatmul.mubr.bf16.gmra.mxu0 %v4576
        %v5878 = vpop.f32.mrf.mxu0
        %v5879 = vadd.f32 %v5702, %v5878
        %v5880 = vpop.f32.mrf.mxu0
        %v5881 = vpop.f32.mrf.mxu0
        %v5882 = vadd.f32 %v5705, %v5881
        %v5883 = vpop.f32.mrf.mxu0
        %5884 = vmatprep.mubr.bf16.mxu0 %v4586
        %5885 = vmatmul.mubr.bf16.gmra.mxu0 %v4585
        %v5886 = vpop.f32.mrf.mxu0
        %v5887 = vadd.f32 %v5710, %v5886
        %v5888 = vpop.f32.mrf.mxu0
        %v5889 = vpop.f32.mrf.mxu0
        %v5890 = vadd.f32 %v5713, %v5889
        %v5891 = vpop.f32.mrf.mxu0
        %5892 = vmatprep.mubr.bf16.mxu0 %v4595
        %5893 = vmatmul.mubr.bf16.gmra.mxu0 %v4594
        %v5894 = vpop.f32.mrf.mxu0
        %v5895 = vadd.f32 %v5718, %v5894
        %v5896 = vpop.f32.mrf.mxu0
        %v5897 = vpop.f32.mrf.mxu0
        %v5898 = vadd.f32 %v5721, %v5897
        %v5899 = vpop.f32.mrf.mxu0
        %5900 = vmatprep.mubr.bf16.mxu0 %v4604
        %5901 = vmatmul.mubr.bf16.gmra.mxu0 %v4603
        %v5902 = vpop.f32.mrf.mxu0
        %v5903 = vadd.f32 %v5726, %v5902
        %v5904 = vpop.f32.mrf.mxu0
        %v5905 = vpop.f32.mrf.mxu0
        %v5906 = vadd.f32 %v5729, %v5905
        %v5907 = vpop.f32.mrf.mxu0
        %5908 = vmatprep.mubr.bf16.mxu0 %v4613
        %5909 = vmatmul.mubr.bf16.gmra.mxu0 %v4612
        %v5910 = vpop.f32.mrf.mxu0
        %v5911 = vadd.f32 %v5734, %v5910
        %v5912 = vpop.f32.mrf.mxu0
        %v5913 = vpop.f32.mrf.mxu0
        %v5914 = vadd.f32 %v5737, %v5913
        %v5915 = vpop.f32.mrf.mxu0
        %5916 = vdwg.mxu0
        %5917 = vmatprep.subr.bf16.mxu0 0
        %5918 = vmatpush1.bf16.msra.mxu0 %v5136
        %5919 = vmatprep.subr.bf16.mxu0 0
        %5920 = vmatpush1.bf16.msra.mxu0 %v5135
        %5921 = vmatprep.subr.bf16.mxu0 0
        %5922 = vmatpush1.bf16.msra.mxu0 %v5134
        %5923 = vmatprep.subr.bf16.mxu0 0
        %5924 = vmatpush1.bf16.msra.mxu0 %v5133
        %5925 = vmatprep.subr.bf16.mxu0 0
        %5926 = vmatpush1.bf16.msra.mxu0 %v5132
        %5927 = vmatprep.subr.bf16.mxu0 0
        %5928 = vmatpush1.bf16.msra.mxu0 %v5131
        %5929 = vmatprep.subr.bf16.mxu0 0
        %5930 = vmatpush1.bf16.msra.mxu0 %v5130
        %5931 = vmatprep.subr.bf16.mxu0 0
        %5932 = vmatpush1.bf16.msra.mxu0 %v5129
        %5933 = vmatprep.subr.bf16.mxu0 0
        %5934 = vmatpush2.bf16.msra.mxu0 0
        %5935 = vmatprep.subr.bf16.mxu0 0
        %5936 = vmatpush2.bf16.msra.mxu0 0
        %5937 = vmatprep.subr.bf16.mxu0 0
        %5938 = vmatpush2.bf16.msra.mxu0 0
        %5939 = vmatprep.subr.bf16.mxu0 0
        %5940 = vmatpush2.bf16.msra.mxu0 0
        %5941 = vmatprep.subr.bf16.mxu0 0
        %5942 = vmatpush2.bf16.msra.mxu0 0
        %5943 = vmatprep.subr.bf16.mxu0 0
        %5944 = vmatpush2.bf16.msra.mxu0 0
        %5945 = vmatprep.subr.bf16.mxu0 0
        %5946 = vmatpush2.bf16.msra.mxu0 0
        %5947 = vmatprep.subr.bf16.mxu0 0
        %5948 = vmatpush2.bf16.msra.mxu0 0
        %5949 = vmatprep.mubr.bf16.mxu0 0
        %5950 = vmatmul.mubr.bf16.gmra.mxu0 %v4461
        %v5951 = vpop.f32.mrf.mxu0
        %v5952 = vadd.f32 %v5775, %v5951
        %v5953 = vpop.f32.mrf.mxu0
        %v5954 = vpop.f32.mrf.mxu0
        %v5955 = vadd.f32 %v5778, %v5954
        %v5956 = vpop.f32.mrf.mxu0
        %5957 = vmatprep.mubr.bf16.mxu0 0
        %5958 = vmatmul.mubr.bf16.gmra.mxu0 %v4470
        %v5959 = vpop.f32.mrf.mxu0
        %v5960 = vadd.f32 %v5783, %v5959
        %v5961 = vpop.f32.mrf.mxu0
        %v5962 = vpop.f32.mrf.mxu0
        %v5963 = vadd.f32 %v5786, %v5962
        %v5964 = vpop.f32.mrf.mxu0
        %5965 = vmatprep.mubr.bf16.mxu0 0
        %5966 = vmatmul.mubr.bf16.gmra.mxu0 %v4479
        %v5967 = vpop.f32.mrf.mxu0
        %v5968 = vadd.f32 %v5791, %v5967
        %v5969 = vpop.f32.mrf.mxu0
        %v5970 = vpop.f32.mrf.mxu0
        %v5971 = vadd.f32 %v5794, %v5970
        %v5972 = vpop.f32.mrf.mxu0
        %5973 = vmatprep.mubr.bf16.mxu0 0
        %5974 = vmatmul.mubr.bf16.gmra.mxu0 %v4488
        %v5975 = vpop.f32.mrf.mxu0
        %v5976 = vadd.f32 %v5799, %v5975
        %v5977 = vpop.f32.mrf.mxu0
        %v5978 = vpop.f32.mrf.mxu0
        %v5979 = vadd.f32 %v5802, %v5978
        %v5980 = vpop.f32.mrf.mxu0
        %5981 = vmatprep.mubr.bf16.mxu0 0
        %5982 = vmatmul.mubr.bf16.gmra.mxu0 %v4497
        %v5983 = vpop.f32.mrf.mxu0
        %v5984 = vadd.f32 %v5807, %v5983
        %v5985 = vpop.f32.mrf.mxu0
        %v5986 = vpop.f32.mrf.mxu0
        %v5987 = vadd.f32 %v5810, %v5986
        %v5988 = vpop.f32.mrf.mxu0
        %5989 = vmatprep.mubr.bf16.mxu0 0
        %5990 = vmatmul.mubr.bf16.gmra.mxu0 %v4506
        %v5991 = vpop.f32.mrf.mxu0
        %v5992 = vadd.f32 %v5815, %v5991
        %v5993 = vpop.f32.mrf.mxu0
        %v5994 = vpop.f32.mrf.mxu0
        %v5995 = vadd.f32 %v5818, %v5994
        %v5996 = vpop.f32.mrf.mxu0
        %5997 = vmatprep.mubr.bf16.mxu0 0
        %5998 = vmatmul.mubr.bf16.gmra.mxu0 %v4515
        %v5999 = vpop.f32.mrf.mxu0
        %v6000 = vadd.f32 %v5823, %v5999
        %v6001 = vpop.f32.mrf.mxu0
        %v6002 = vpop.f32.mrf.mxu0
        %v6003 = vadd.f32 %v5826, %v6002
        %v6004 = vpop.f32.mrf.mxu0
        %6005 = vmatprep.mubr.bf16.mxu0 0
        %6006 = vmatmul.mubr.bf16.gmra.mxu0 %v4524
        %v6007 = vpop.f32.mrf.mxu0
        %v6008 = vadd.f32 %v5831, %v6007
        %v6009 = vpop.f32.mrf.mxu0
        %v6010 = vpop.f32.mrf.mxu0
        %v6011 = vadd.f32 %v5834, %v6010
        %v6012 = vpop.f32.mrf.mxu0
        %6013 = vmatprep.mubr.bf16.mxu0 0
        %6014 = vmatmul.mubr.bf16.gmra.mxu0 %v4533
        %v6015 = vpop.f32.mrf.mxu0
        %v6016 = vadd.f32 %v5839, %v6015
        %v6017 = vpop.f32.mrf.mxu0
        %v6018 = vpop.f32.mrf.mxu0
        %v6019 = vadd.f32 %v5842, %v6018
        %v6020 = vpop.f32.mrf.mxu0
        %6021 = vmatprep.mubr.bf16.mxu0 0
        %6022 = vmatmul.mubr.bf16.gmra.mxu0 %v4542
        %v6023 = vpop.f32.mrf.mxu0
        %v6024 = vadd.f32 %v5847, %v6023
        %v6025 = vpop.f32.mrf.mxu0
        %v6026 = vpop.f32.mrf.mxu0
        %v6027 = vadd.f32 %v5850, %v6026
        %v6028 = vpop.f32.mrf.mxu0
        %6029 = vmatprep.mubr.bf16.mxu0 0
        %6030 = vmatmul.mubr.bf16.gmra.mxu0 %v4551
        %v6031 = vpop.f32.mrf.mxu0
        %v6032 = vadd.f32 %v5855, %v6031
        %v6033 = vpop.f32.mrf.mxu0
        %v6034 = vpop.f32.mrf.mxu0
        %v6035 = vadd.f32 %v5858, %v6034
        %v6036 = vpop.f32.mrf.mxu0
        %6037 = vmatprep.mubr.bf16.mxu0 0
        %6038 = vmatmul.mubr.bf16.gmra.mxu0 %v4560
        %v6039 = vpop.f32.mrf.mxu0
        %v6040 = vadd.f32 %v5863, %v6039
        %v6041 = vpop.f32.mrf.mxu0
        %v6042 = vpop.f32.mrf.mxu0
        %v6043 = vadd.f32 %v5866, %v6042
        %v6044 = vpop.f32.mrf.mxu0
        %6045 = vmatprep.mubr.bf16.mxu0 0
        %6046 = vmatmul.mubr.bf16.gmra.mxu0 %v4569
        %v6047 = vpop.f32.mrf.mxu0
        %v6048 = vadd.f32 %v5871, %v6047
        %v6049 = vpop.f32.mrf.mxu0
        %v6050 = vpop.f32.mrf.mxu0
        %v6051 = vadd.f32 %v5874, %v6050
        %v6052 = vpop.f32.mrf.mxu0
        %6053 = vmatprep.mubr.bf16.mxu0 0
        %6054 = vmatmul.mubr.bf16.gmra.mxu0 %v4578
        %v6055 = vpop.f32.mrf.mxu0
        %v6056 = vadd.f32 %v5879, %v6055
        %v6057 = vpop.f32.mrf.mxu0
        %v6058 = vpop.f32.mrf.mxu0
        %v6059 = vadd.f32 %v5882, %v6058
        %v6060 = vpop.f32.mrf.mxu0
        %6061 = vmatprep.mubr.bf16.mxu0 0
        %6062 = vmatmul.mubr.bf16.gmra.mxu0 %v4587
        %v6063 = vpop.f32.mrf.mxu0
        %v6064 = vadd.f32 %v5887, %v6063
        %v6065 = vpop.f32.mrf.mxu0
        %v6066 = vpop.f32.mrf.mxu0
        %v6067 = vadd.f32 %v5890, %v6066
        %v6068 = vpop.f32.mrf.mxu0
        %6069 = vmatprep.mubr.bf16.mxu0 0
        %6070 = vmatmul.mubr.bf16.gmra.mxu0 %v4596
        %v6071 = vpop.f32.mrf.mxu0
        %v6072 = vadd.f32 %v5895, %v6071
        %v6073 = vpop.f32.mrf.mxu0
        %v6074 = vpop.f32.mrf.mxu0
        %v6075 = vadd.f32 %v5898, %v6074
        %v6076 = vpop.f32.mrf.mxu0
        %6077 = vmatprep.mubr.bf16.mxu0 0
        %6078 = vmatmul.mubr.bf16.gmra.mxu0 %v4605
        %v6079 = vpop.f32.mrf.mxu0
        %v6080 = vadd.f32 %v5903, %v6079
        %v6081 = vpop.f32.mrf.mxu0
        %v6082 = vpop.f32.mrf.mxu0
        %v6083 = vadd.f32 %v5906, %v6082
        %v6084 = vpop.f32.mrf.mxu0
        %6085 = vmatprep.mubr.bf16.mxu0 0
        %6086 = vmatmul.mubr.bf16.gmra.mxu0 %v4614
        %v6087 = vpop.f32.mrf.mxu0
        %v6088 = vadd.f32 %v5911, %v6087
        %v6089 = vpop.f32.mrf.mxu0
        %v6090 = vpop.f32.mrf.mxu0
        %v6091 = vadd.f32 %v5914, %v6090
        %v6092 = vpop.f32.mrf.mxu0
        %6093 = vdwg.mxu0
        %v6094 = vmax.f32 %v5952, 0.0
        %v6095 = vmax.f32 %v5955, 0.0
        %v6096 = vmax.f32 %v5960, 0.0
        %v6097 = vmax.f32 %v5963, 0.0
        %v6098 = vmax.f32 %v5968, 0.0
        %v6099 = vmax.f32 %v5971, 0.0
        %v6100 = vmax.f32 %v5976, 0.0
        %v6101 = vmax.f32 %v5979, 0.0
        %v6102 = vmax.f32 %v5984, 0.0
        %v6103 = vmax.f32 %v5987, 0.0
        %v6104 = vmax.f32 %v5992, 0.0
        %v6105 = vmax.f32 %v5995, 0.0
        %v6106 = vmax.f32 %v6000, 0.0
        %v6107 = vmax.f32 %v6003, 0.0
        %v6108 = vmax.f32 %v6008, 0.0
        %v6109 = vmax.f32 %v6011, 0.0
        %v6110 = vmax.f32 %v6016, 0.0
        %v6111 = vmax.f32 %v6019, 0.0
        %v6112 = vmax.f32 %v6024, 0.0
        %v6113 = vmax.f32 %v6027, 0.0
        %v6114 = vmax.f32 %v6032, 0.0
        %v6115 = vmax.f32 %v6035, 0.0
        %v6116 = vmax.f32 %v6040, 0.0
        %v6117 = vmax.f32 %v6043, 0.0
        %v6118 = vmax.f32 %v6048, 0.0
        %v6119 = vmax.f32 %v6051, 0.0
        %v6120 = vmax.f32 %v6056, 0.0
        %v6121 = vmax.f32 %v6059, 0.0
        %v6122 = vmax.f32 %v6064, 0.0
        %v6123 = vmax.f32 %v6067, 0.0
        %v6124 = vmax.f32 %v6072, 0.0
        %v6125 = vmax.f32 %v6075, 0.0
        %v6126 = vmax.f32 %v6080, 0.0
        %v6127 = vmax.f32 %v6083, 0.0
        %v6128 = vmax.f32 %v6088, 0.0
        %v6129 = vmax.f32 %v6091, 0.0
        %6130 = vst [vmem:[#allocation7] sm:$0xff] %v6094
        %6131 = vst [vmem:[#allocation7 + $0x8] sm:$0xff] %v6095
        %6132 = vst [vmem:[#allocation7 + $0x10] sm:$0xff] %v6096
        %6133 = vst [vmem:[#allocation7 + $0x18] sm:$0xff] %v6097
        %6134 = vst [vmem:[#allocation7 + $0x20] sm:$0xff] %v6098
        %6135 = vst [vmem:[#allocation7 + $0x28] sm:$0xff] %v6099
        %6136 = vst [vmem:[#allocation7 + $0x30] sm:$0xff] %v6100
        %6137 = vst [vmem:[#allocation7 + $0x38] sm:$0xff] %v6101
        %6138 = vst [vmem:[#allocation7 + $0x40] sm:$0xff] %v6102
        %6139 = vst [vmem:[#allocation7 + $0x48] sm:$0xff] %v6103
        %6140 = vst [vmem:[#allocation7 + $0x50] sm:$0xff] %v6104
        %6141 = vst [vmem:[#allocation7 + $0x58] sm:$0xff] %v6105
        %6142 = vst [vmem:[#allocation7 + $0x60] sm:$0xff] %v6106
        %6143 = vst [vmem:[#allocation7 + $0x68] sm:$0xff] %v6107
        %6144 = vst [vmem:[#allocation7 + $0x70] sm:$0xff] %v6108
        %6145 = vst [vmem:[#allocation7 + $0x78] sm:$0xff] %v6109
        %6146 = vst [vmem:[#allocation7 + $0x80] sm:$0xff] %v6110
        %6147 = vst [vmem:[#allocation7 + $0x88] sm:$0xff] %v6111
        %6148 = vst [vmem:[#allocation7 + $0x90] sm:$0xff] %v6112
        %6149 = vst [vmem:[#allocation7 + $0x98] sm:$0xff] %v6113
        %6150 = vst [vmem:[#allocation7 + $0xa0] sm:$0xff] %v6114
        %6151 = vst [vmem:[#allocation7 + $0xa8] sm:$0xff] %v6115
        %6152 = vst [vmem:[#allocation7 + $0xb0] sm:$0xff] %v6116
        %6153 = vst [vmem:[#allocation7 + $0xb8] sm:$0xff] %v6117
        %6154 = vst [vmem:[#allocation7 + $0xc0] sm:$0xff] %v6118
        %6155 = vst [vmem:[#allocation7 + $0xc8] sm:$0xff] %v6119
        %6156 = vst [vmem:[#allocation7 + $0xd0] sm:$0xff] %v6120
        %6157 = vst [vmem:[#allocation7 + $0xd8] sm:$0xff] %v6121
        %6158 = vst [vmem:[#allocation7 + $0xe0] sm:$0xff] %v6122
        %6159 = vst [vmem:[#allocation7 + $0xe8] sm:$0xff] %v6123
        %6160 = vst [vmem:[#allocation7 + $0xf0] sm:$0xff] %v6124
        %6161 = vst [vmem:[#allocation7 + $0xf8] sm:$0xff] %v6125
        %6162 = vst [vmem:[#allocation7 + $0x100] sm:$0xff] %v6126
        %6163 = vst [vmem:[#allocation7 + $0x108] sm:$0xff] %v6127
        %6164 = vst [vmem:[#allocation7 + $0x110] sm:$0xff] %v6128
        %6165 = vst [vmem:[#allocation7 + $0x118] sm:$0xff] %v6129
        %v6166 = vld [vmem:[#allocation7] ss:$2 sm:$0xff]
        %s6167 = scalar_lea.vmem [#allocation7], 1
        %v6168 = vld [vmem:[%s6167] ss:$2 sm:$0xff]
        %s6169 = scalar_lea.vmem [#allocation7], 18
        %v6170 = vld [vmem:[%s6169] ss:$2 sm:$0xff]
        %s6171 = scalar_lea.vmem [#allocation7], 19
        %v6172 = vld [vmem:[%s6171] ss:$2 sm:$0xff]
        %v6173 = vmax.f32 %v6166, %v6168
        %v6174 = vmax.f32 %v6170, %v6172
        %v6175 = vmax.f32 %v6173, %v6174
        %v6176 = vpack.c.bf16 %v6175, %v6175
        %v6178 = vunpack.c.l.b16 %v6176
        %v6179 = vpack.c.b16 %v6178, %v6178
        %v6181 = vshrl.u32 %v6179, 16
        %v6183 = vrot.slane %v6181, 6
        %v6184 = vshll.u32 %v6179, 16
        %v6186 = vrot.slane %v6184, 7
        %v6187 = vor.u32 %v6183, %v6186
        %v6188 = vrot.slane %v6187, 4
        %v6191 = vld [vmem:[#allocation3 + $0x4] sm:$0xe]
        %v6192 = vsel %vm348, %v6187, %v6191
        %6193 = vst [vmem:[#allocation3 + $0x4] sm:$0xe] %v6192
        %v6194 = vld [vmem:[#allocation3 + $0x8] sm:$0x3]
        %v6195 = vsel %vm354, %v6188, %v6194
        %6196 = vst [vmem:[#allocation3 + $0x8] sm:$0x3] %v6195
        %s6197 = scalar_lea.vmem [#allocation7], 36
        %v6198 = vld [vmem:[%s6197] ss:$2 sm:$0xff]
        %s6199 = scalar_lea.vmem [#allocation7], 37
        %v6200 = vld [vmem:[%s6199] ss:$2 sm:$0xff]
        %s6201 = scalar_lea.vmem [#allocation7], 54
        %v6202 = vld [vmem:[%s6201] ss:$2 sm:$0xff]
        %s6203 = scalar_lea.vmem [#allocation7], 55
        %v6204 = vld [vmem:[%s6203] ss:$2 sm:$0xff]
        %v6205 = vmax.f32 %v6198, %v6200
        %v6206 = vmax.f32 %v6202, %v6204
        %v6207 = vmax.f32 %v6205, %v6206
        %v6208 = vpack.c.bf16 %v6207, %v6207
        %v6210 = vunpack.c.l.b16 %v6208
        %v6211 = vpack.c.b16 %v6210, %v6210
        %v6213 = vshrl.u32 %v6211, 16
        %v6215 = vrot.slane %v6213, 5
        %v6216 = vshll.u32 %v6211, 16
        %v6218 = vrot.slane %v6216, 6
        %v6219 = vor.u32 %v6215, %v6218
        %v6220 = vrot.slane %v6219, 4
        %v6223 = vld [vmem:[#allocation3 + $0x8] sm:$0xc]
        %v6224 = vsel %vm387, %v6219, %v6223
        %6225 = vst [vmem:[#allocation3 + $0x8] sm:$0xc] %v6224
        %v6226 = vld [vmem:[#allocation3 + $0xc] sm:$0x7]
        %v6227 = vsel %vm393, %v6220, %v6226
        %6228 = vst [vmem:[#allocation3 + $0xc] sm:$0x7] %v6227
        %s6229 = scalar_lea.vmem [#allocation7], 72
        %v6230 = vld [vmem:[%s6229] ss:$2 sm:$0xff]
        %s6231 = scalar_lea.vmem [#allocation7], 73
        %v6232 = vld [vmem:[%s6231] ss:$2 sm:$0xff]
        %s6233 = scalar_lea.vmem [#allocation7], 90
        %v6234 = vld [vmem:[%s6233] ss:$2 sm:$0xff]
        %s6235 = scalar_lea.vmem [#allocation7], 91
        %v6236 = vld [vmem:[%s6235] ss:$2 sm:$0xff]
        %v6237 = vmax.f32 %v6230, %v6232
        %v6238 = vmax.f32 %v6234, %v6236
        %v6239 = vmax.f32 %v6237, %v6238
        %v6240 = vpack.c.bf16 %v6239, %v6239
        %v6242 = vunpack.c.l.b16 %v6240
        %v6243 = vpack.c.b16 %v6242, %v6242
        %v6245 = vshll.u32 %v6243, 16
        %v6247 = vrot.slane %v6245, 5
        %v6248 = vshrl.u32 %v6243, 16
        %v6250 = vrot.slane %v6248, 4
        %v6251 = vor.u32 %v6250, %v6247
        %v6252 = vrot.slane %v6251, 4
        %v6255 = vld [vmem:[#allocation3 + $0xc] sm:$0x8]
        %v6256 = vsel %vm426, %v6247, %v6255
        %6257 = vst [vmem:[#allocation3 + $0xc] sm:$0x8] %v6256
        %v6258 = vld [vmem:[#allocation3 + $0x10] sm:$0xf]
        %v6259 = vsel %vm432, %v6252, %v6258
        %6260 = vst [vmem:[#allocation3 + $0x10] sm:$0xf] %v6259
        %s6261 = scalar_lea.vmem [#allocation7], 108
        %v6262 = vld [vmem:[%s6261] ss:$2 sm:$0xff]
        %s6263 = scalar_lea.vmem [#allocation7], 109
        %v6264 = vld [vmem:[%s6263] ss:$2 sm:$0xff]
        %s6265 = scalar_lea.vmem [#allocation7], 126
        %v6266 = vld [vmem:[%s6265] ss:$2 sm:$0xff]
        %s6267 = scalar_lea.vmem [#allocation7], 127
        %v6268 = vld [vmem:[%s6267] ss:$2 sm:$0xff]
        %v6269 = vmax.f32 %v6262, %v6264
        %v6270 = vmax.f32 %v6266, %v6268
        %v6271 = vmax.f32 %v6269, %v6270
        %v6272 = vpack.c.bf16 %v6271, %v6271
        %v6274 = vunpack.c.l.b16 %v6272
        %v6275 = vpack.c.b16 %v6274, %v6274
        %v6277 = vshrl.u32 %v6275, 16
        %v6279 = vrot.slane %v6277, 7
        %v6280 = vshll.u32 %v6275, 16
        %v6282 = vor.u32 %v6279, %v6280
        %v6283 = vrot.slane %v6279, 4
        %v6286 = vld [vmem:[#allocation3 + $0x14] sm:$0xf]
        %v6287 = vsel %vm462, %v6282, %v6286
        %6288 = vst [vmem:[#allocation3 + $0x14] sm:$0xf] %v6287
        %v6289 = vld [vmem:[#allocation3 + $0x18] sm:$0x1]
        %v6290 = vsel %vm468, %v6283, %v6289
        %6291 = vst [vmem:[#allocation3 + $0x18] sm:$0x1] %v6290
        %s6292 = scalar_lea.vmem [#allocation7], 144
        %v6293 = vld [vmem:[%s6292] ss:$2 sm:$0xff]
        %s6294 = scalar_lea.vmem [#allocation7], 145
        %v6295 = vld [vmem:[%s6294] ss:$2 sm:$0xff]
        %s6296 = scalar_lea.vmem [#allocation7], 162
        %v6297 = vld [vmem:[%s6296] ss:$2 sm:$0xff]
        %s6298 = scalar_lea.vmem [#allocation7], 163
        %v6299 = vld [vmem:[%s6298] ss:$2 sm:$0xff]
        %v6300 = vmax.f32 %v6293, %v6295
        %v6301 = vmax.f32 %v6297, %v6299
        %v6302 = vmax.f32 %v6300, %v6301
        %v6303 = vpack.c.bf16 %v6302, %v6302
        %v6305 = vunpack.c.l.b16 %v6303
        %v6306 = vpack.c.b16 %v6305, %v6305
        %v6308 = vshrl.u32 %v6306, 16
        %v6310 = vrot.slane %v6308, 6
        %v6311 = vshll.u32 %v6306, 16
        %v6313 = vrot.slane %v6311, 7
        %v6314 = vor.u32 %v6310, %v6313
        %v6315 = vrot.slane %v6314, 4
        %v6318 = vld [vmem:[#allocation3 + $0x18] sm:$0xe]
        %v6319 = vsel %vm348, %v6314, %v6318
        %6320 = vst [vmem:[#allocation3 + $0x18] sm:$0xe] %v6319
        %v6321 = vld [vmem:[#allocation3 + $0x1c] sm:$0x3]
        %v6322 = vsel %vm354, %v6315, %v6321
        %6323 = vst [vmem:[#allocation3 + $0x1c] sm:$0x3] %v6322
        %s6324 = scalar_lea.vmem [#allocation7], 180
        %v6325 = vld [vmem:[%s6324] ss:$2 sm:$0xff]
        %s6326 = scalar_lea.vmem [#allocation7], 181
        %v6327 = vld [vmem:[%s6326] ss:$2 sm:$0xff]
        %s6328 = scalar_lea.vmem [#allocation7], 198
        %v6329 = vld [vmem:[%s6328] ss:$2 sm:$0xff]
        %s6330 = scalar_lea.vmem [#allocation7], 199
        %v6331 = vld [vmem:[%s6330] ss:$2 sm:$0xff]
        %v6332 = vmax.f32 %v6325, %v6327
        %v6333 = vmax.f32 %v6329, %v6331
        %v6334 = vmax.f32 %v6332, %v6333
        %v6335 = vpack.c.bf16 %v6334, %v6334
        %v6337 = vunpack.c.l.b16 %v6335
        %v6338 = vpack.c.b16 %v6337, %v6337
        %v6340 = vshrl.u32 %v6338, 16
        %v6342 = vrot.slane %v6340, 5
        %v6343 = vshll.u32 %v6338, 16
        %v6345 = vrot.slane %v6343, 6
        %v6346 = vor.u32 %v6342, %v6345
        %v6347 = vrot.slane %v6346, 4
        %v6350 = vld [vmem:[#allocation3 + $0x1c] sm:$0xc]
        %v6351 = vsel %vm387, %v6346, %v6350
        %6352 = vst [vmem:[#allocation3 + $0x1c] sm:$0xc] %v6351
        %v6353 = vld [vmem:[#allocation3 + $0x20] sm:$0x7]
        %v6354 = vsel %vm393, %v6347, %v6353
        %6355 = vst [vmem:[#allocation3 + $0x20] sm:$0x7] %v6354
        %s6356 = scalar_lea.vmem [#allocation7], 216
        %v6357 = vld [vmem:[%s6356] ss:$2 sm:$0xff]
        %s6358 = scalar_lea.vmem [#allocation7], 217
        %v6359 = vld [vmem:[%s6358] ss:$2 sm:$0xff]
        %s6360 = scalar_lea.vmem [#allocation7], 234
        %v6361 = vld [vmem:[%s6360] ss:$2 sm:$0xff]
        %s6362 = scalar_lea.vmem [#allocation7], 235
        %v6363 = vld [vmem:[%s6362] ss:$2 sm:$0xff]
        %v6364 = vmax.f32 %v6357, %v6359
        %v6365 = vmax.f32 %v6361, %v6363
        %v6366 = vmax.f32 %v6364, %v6365
        %v6367 = vpack.c.bf16 %v6366, %v6366
        %v6369 = vunpack.c.l.b16 %v6367
        %v6370 = vpack.c.b16 %v6369, %v6369
        %v6372 = vshll.u32 %v6370, 16
        %v6374 = vrot.slane %v6372, 5
        %v6375 = vshrl.u32 %v6370, 16
        %v6377 = vrot.slane %v6375, 4
        %v6378 = vor.u32 %v6377, %v6374
        %v6379 = vrot.slane %v6378, 4
        %v6382 = vld [vmem:[#allocation3 + $0x20] sm:$0x8]
        %v6383 = vsel %vm426, %v6374, %v6382
        %6384 = vst [vmem:[#allocation3 + $0x20] sm:$0x8] %v6383
        %v6385 = vld [vmem:[#allocation3 + $0x24] sm:$0xf]
        %v6386 = vsel %vm432, %v6379, %v6385
        %6387 = vst [vmem:[#allocation3 + $0x24] sm:$0xf] %v6386
        %s6388 = scalar_lea.vmem [#allocation7], 252
        %v6389 = vld [vmem:[%s6388] ss:$2 sm:$0xff]
        %s6390 = scalar_lea.vmem [#allocation7], 253
        %v6391 = vld [vmem:[%s6390] ss:$2 sm:$0xff]
        %s6392 = scalar_lea.vmem [#allocation7], 270
        %v6393 = vld [vmem:[%s6392] ss:$2 sm:$0xff]
        %s6394 = scalar_lea.vmem [#allocation7], 271
        %v6395 = vld [vmem:[%s6394] ss:$2 sm:$0xff]
        %v6396 = vmax.f32 %v6389, %v6391
        %v6397 = vmax.f32 %v6393, %v6395
        %v6398 = vmax.f32 %v6396, %v6397
        %v6399 = vpack.c.bf16 %v6398, %v6398
        %v6401 = vunpack.c.l.b16 %v6399
        %v6402 = vpack.c.b16 %v6401, %v6401
        %v6404 = vshrl.u32 %v6402, 16
        %v6406 = vrot.slane %v6404, 7
        %v6407 = vshll.u32 %v6402, 16
        %v6409 = vor.u32 %v6406, %v6407
        %v6410 = vrot.slane %v6406, 4
        %v6413 = vld [vmem:[#allocation3 + $0x28] sm:$0xf]
        %v6414 = vsel %vm462, %v6409, %v6413
        %6415 = vst [vmem:[#allocation3 + $0x28] sm:$0xf] %v6414
        %v6416 = vld [vmem:[#allocation3 + $0x2c] sm:$0x1]
        %v6417 = vsel %vm468, %v6410, %v6416
        %6418 = vst [vmem:[#allocation3 + $0x2c] sm:$0x1] %v6417
        %v6419 = vld [vmem:[#allocation3] sm:$0xf]
        %v6420 = vld [vmem:[#allocation3 + $0x4] sm:$0xf]
        %v6421 = vld [vmem:[#allocation3 + $0x8] sm:$0xf]
        %v6422 = vld [vmem:[#allocation3 + $0xc] sm:$0xf]
        %v6423 = vld [vmem:[#allocation3 + $0x10] sm:$0xf]
        %v6424 = vld [vmem:[#allocation3 + $0x14] sm:$0xf]
        %v6425 = vld [vmem:[#allocation3 + $0x18] sm:$0xf]
        %v6426 = vld [vmem:[#allocation3 + $0x1c] sm:$0xf]
        %v6427 = vld [vmem:[#allocation3 + $0x20] sm:$0xf]
        %v6428 = vld [vmem:[#allocation3 + $0x24] sm:$0xf]
        %6429 = vst [vmem:[#allocation6] sm:$0xf] %v6419
        %6430 = vst [vmem:[#allocation6 + $0x24] sm:$0xf] %v6420
        %6431 = vst [vmem:[#allocation6 + $0x48] sm:$0xf] %v6421
        %6432 = vst [vmem:[#allocation6 + $0x6c] sm:$0xf] %v6422
        %6433 = vst [vmem:[#allocation6 + $0x90] sm:$0xf] %v6423
        %6434 = vst [vmem:[#allocation6 + $0xb4] sm:$0xf] %v6424
        %6435 = vst [vmem:[#allocation6 + $0xd8] sm:$0xf] %v6425
        %6436 = vst [vmem:[#allocation6 + $0xfc] sm:$0xf] %v6426
        %6437 = vst [vmem:[#allocation6 + $0x120] sm:$0xf] %v6427
        %6438 = vst [vmem:[#allocation6 + $0x144] sm:$0xf] %v6428
        %v6439 = vld [vmem:[#allocation3] sm:$0xf]
        %v6440 = vld [vmem:[#allocation3 + $0x4] sm:$0xf]
        %v6441 = vld [vmem:[#allocation3 + $0x8] sm:$0xf]
        %v6442 = vld [vmem:[#allocation3 + $0xc] sm:$0xf]
        %v6443 = vld [vmem:[#allocation3 + $0x10] sm:$0xf]
        %v6444 = vld [vmem:[#allocation3 + $0x14] sm:$0xf]
        %v6445 = vld [vmem:[#allocation3 + $0x18] sm:$0xf]
        %v6446 = vld [vmem:[#allocation3 + $0x1c] sm:$0xf]
        %v6447 = vld [vmem:[#allocation3 + $0x20] sm:$0xf]
        %v6448 = vld [vmem:[#allocation3 + $0x24] sm:$0xf]
        %v6449 = vld [vmem:[#allocation3 + $0x28] sm:$0x1]
        %v6451 = vshrl.u32 %v6439, 16
        %v6453 = vrot.slane %v6451, 4
        %v6454 = vshll.u32 %v6439, 16
        %v6456 = vrot.slane %v6454, 5
        %v6457 = vor.u32 %v6453, %v6456
        %v6458 = vrot.slane %v6457, 4
        %v6460 = vshll.u32 %v6440, 16
        %v6462 = vrot.slane %v6460, 5
        %v6463 = vsel %vm401, %v6458, %v6462
        %v6464 = vshrl.u32 %v6440, 16
        %v6466 = vrot.slane %v6464, 4
        %v6467 = vor.u32 %v6466, %v6462
        %v6468 = vrot.slane %v6467, 4
        %v6470 = vshll.u32 %v6441, 16
        %v6472 = vrot.slane %v6470, 5
        %v6473 = vsel %vm401, %v6468, %v6472
        %v6474 = vshrl.u32 %v6441, 16
        %v6476 = vrot.slane %v6474, 4
        %v6477 = vor.u32 %v6476, %v6472
        %v6478 = vrot.slane %v6477, 4
        %v6480 = vshll.u32 %v6442, 16
        %v6482 = vrot.slane %v6480, 5
        %v6483 = vsel %vm401, %v6478, %v6482
        %v6484 = vshrl.u32 %v6442, 16
        %v6486 = vrot.slane %v6484, 4
        %v6487 = vor.u32 %v6486, %v6482
        %v6488 = vrot.slane %v6487, 4
        %v6490 = vshll.u32 %v6443, 16
        %v6492 = vrot.slane %v6490, 5
        %v6493 = vsel %vm401, %v6488, %v6492
        %v6494 = vshrl.u32 %v6443, 16
        %v6496 = vrot.slane %v6494, 4
        %v6497 = vor.u32 %v6496, %v6492
        %v6498 = vrot.slane %v6497, 4
        %v6500 = vshll.u32 %v6444, 16
        %v6502 = vrot.slane %v6500, 5
        %v6503 = vsel %vm401, %v6498, %v6502
        %v6504 = vshrl.u32 %v6444, 16
        %v6506 = vrot.slane %v6504, 4
        %v6507 = vor.u32 %v6506, %v6502
        %v6508 = vrot.slane %v6507, 4
        %v6510 = vshll.u32 %v6445, 16
        %v6512 = vrot.slane %v6510, 5
        %v6513 = vsel %vm401, %v6508, %v6512
        %v6514 = vshrl.u32 %v6445, 16
        %v6516 = vrot.slane %v6514, 4
        %v6517 = vor.u32 %v6516, %v6512
        %v6518 = vrot.slane %v6517, 4
        %v6520 = vshll.u32 %v6446, 16
        %v6522 = vrot.slane %v6520, 5
        %v6523 = vsel %vm401, %v6518, %v6522
        %v6524 = vshrl.u32 %v6446, 16
        %v6526 = vrot.slane %v6524, 4
        %v6527 = vor.u32 %v6526, %v6522
        %v6528 = vrot.slane %v6527, 4
        %v6530 = vshll.u32 %v6447, 16
        %v6532 = vrot.slane %v6530, 5
        %v6533 = vsel %vm401, %v6528, %v6532
        %v6534 = vshrl.u32 %v6447, 16
        %v6536 = vrot.slane %v6534, 4
        %v6537 = vor.u32 %v6536, %v6532
        %v6538 = vrot.slane %v6537, 4
        %v6540 = vshll.u32 %v6448, 16
        %v6542 = vrot.slane %v6540, 5
        %v6543 = vsel %vm401, %v6538, %v6542
        %v6544 = vshrl.u32 %v6448, 16
        %v6546 = vrot.slane %v6544, 4
        %v6547 = vor.u32 %v6546, %v6542
        %v6548 = vrot.slane %v6547, 4
        %v6550 = vshll.u32 %v6449, 16
        %v6552 = vrot.slane %v6550, 5
        %v6553 = vsel %vm401, %v6548, %v6552
        %6564 = vst [vmem:[#allocation6 + $0x4] sm:$0xf] %v6463
        %6565 = vst [vmem:[#allocation6 + $0x28] sm:$0xf] %v6473
        %6566 = vst [vmem:[#allocation6 + $0x4c] sm:$0xf] %v6483
        %6567 = vst [vmem:[#allocation6 + $0x70] sm:$0xf] %v6493
        %6568 = vst [vmem:[#allocation6 + $0x94] sm:$0xf] %v6503
        %6569 = vst [vmem:[#allocation6 + $0xb8] sm:$0xf] %v6513
        %6570 = vst [vmem:[#allocation6 + $0xdc] sm:$0xf] %v6523
        %6571 = vst [vmem:[#allocation6 + $0x100] sm:$0xf] %v6533
        %6572 = vst [vmem:[#allocation6 + $0x124] sm:$0xf] %v6543
        %6573 = vst [vmem:[#allocation6 + $0x148] sm:$0xf] %v6553
        %v6574 = vld [vmem:[#allocation3] sm:$0xe]
        %v6575 = vld [vmem:[#allocation3 + $0x4] sm:$0xf]
        %v6576 = vld [vmem:[#allocation3 + $0x8] sm:$0xf]
        %v6577 = vld [vmem:[#allocation3 + $0xc] sm:$0xf]
        %v6578 = vld [vmem:[#allocation3 + $0x10] sm:$0xf]
        %v6579 = vld [vmem:[#allocation3 + $0x14] sm:$0xf]
        %v6580 = vld [vmem:[#allocation3 + $0x18] sm:$0xf]
        %v6581 = vld [vmem:[#allocation3 + $0x1c] sm:$0xf]
        %v6582 = vld [vmem:[#allocation3 + $0x20] sm:$0xf]
        %v6583 = vld [vmem:[#allocation3 + $0x24] sm:$0xf]
        %v6584 = vld [vmem:[#allocation3 + $0x28] sm:$0x1]
        %v6596 = vrot.slane %v6574, 5
        %v6597 = vrot.slane %v6596, 4
        %v6598 = vrot.slane %v6575, 5
        %v6599 = vsel %vm1458, %v6597, %v6598
        %v6600 = vrot.slane %v6598, 4
        %v6601 = vrot.slane %v6576, 5
        %v6602 = vsel %vm1458, %v6600, %v6601
        %v6603 = vrot.slane %v6601, 4
        %v6604 = vrot.slane %v6577, 5
        %v6605 = vsel %vm1458, %v6603, %v6604
        %v6606 = vrot.slane %v6604, 4
        %v6607 = vrot.slane %v6578, 5
        %v6608 = vsel %vm1458, %v6606, %v6607
        %v6609 = vrot.slane %v6607, 4
        %v6610 = vrot.slane %v6579, 5
        %v6611 = vsel %vm1458, %v6609, %v6610
        %v6612 = vrot.slane %v6610, 4
        %v6613 = vrot.slane %v6580, 5
        %v6614 = vsel %vm1458, %v6612, %v6613
        %v6615 = vrot.slane %v6613, 4
        %v6616 = vrot.slane %v6581, 5
        %v6617 = vsel %vm1458, %v6615, %v6616
        %v6618 = vrot.slane %v6616, 4
        %v6619 = vrot.slane %v6582, 5
        %v6620 = vsel %vm1458, %v6618, %v6619
        %v6621 = vrot.slane %v6619, 4
        %v6622 = vrot.slane %v6583, 5
        %v6623 = vsel %vm1458, %v6621, %v6622
        %v6624 = vrot.slane %v6622, 4
        %v6625 = vrot.slane %v6584, 5
        %v6626 = vsel %vm1458, %v6624, %v6625
        %6637 = vst [vmem:[#allocation6 + $0x8] sm:$0xf] %v6599
        %6638 = vst [vmem:[#allocation6 + $0x2c] sm:$0xf] %v6602
        %6639 = vst [vmem:[#allocation6 + $0x50] sm:$0xf] %v6605
        %6640 = vst [vmem:[#allocation6 + $0x74] sm:$0xf] %v6608
        %6641 = vst [vmem:[#allocation6 + $0x98] sm:$0xf] %v6611
        %6642 = vst [vmem:[#allocation6 + $0xbc] sm:$0xf] %v6614
        %6643 = vst [vmem:[#allocation6 + $0xe0] sm:$0xf] %v6617
        %6644 = vst [vmem:[#allocation6 + $0x104] sm:$0xf] %v6620
        %6645 = vst [vmem:[#allocation6 + $0x128] sm:$0xf] %v6623
        %6646 = vst [vmem:[#allocation6 + $0x14c] sm:$0xf] %v6626
        %v6647 = vld [vmem:[#allocation3 + $0x4] sm:$0xe]
        %v6648 = vld [vmem:[#allocation3 + $0x8] sm:$0xf]
        %v6649 = vld [vmem:[#allocation3 + $0xc] sm:$0xf]
        %v6650 = vld [vmem:[#allocation3 + $0x10] sm:$0xf]
        %v6651 = vld [vmem:[#allocation3 + $0x14] sm:$0xf]
        %v6652 = vld [vmem:[#allocation3 + $0x18] sm:$0xf]
        %v6653 = vld [vmem:[#allocation3 + $0x1c] sm:$0xf]
        %v6654 = vld [vmem:[#allocation3 + $0x20] sm:$0xf]
        %v6655 = vld [vmem:[#allocation3 + $0x24] sm:$0xf]
        %v6656 = vld [vmem:[#allocation3 + $0x28] sm:$0xf]
        %v6657 = vld [vmem:[#allocation3 + $0x2c] sm:$0x1]
        %v6669 = vrot.slane %v6647, 5
        %v6670 = vrot.slane %v6669, 4
        %v6671 = vrot.slane %v6648, 5
        %v6672 = vsel %vm1458, %v6670, %v6671
        %v6673 = vrot.slane %v6671, 4
        %v6674 = vrot.slane %v6649, 5
        %v6675 = vsel %vm1458, %v6673, %v6674
        %v6676 = vrot.slane %v6674, 4
        %v6677 = vrot.slane %v6650, 5
        %v6678 = vsel %vm1458, %v6676, %v6677
        %v6679 = vrot.slane %v6677, 4
        %v6680 = vrot.slane %v6651, 5
        %v6681 = vsel %vm1458, %v6679, %v6680
        %v6682 = vrot.slane %v6680, 4
        %v6683 = vrot.slane %v6652, 5
        %v6684 = vsel %vm1458, %v6682, %v6683
        %v6685 = vrot.slane %v6683, 4
        %v6686 = vrot.slane %v6653, 5
        %v6687 = vsel %vm1458, %v6685, %v6686
        %v6688 = vrot.slane %v6686, 4
        %v6689 = vrot.slane %v6654, 5
        %v6690 = vsel %vm1458, %v6688, %v6689
        %v6691 = vrot.slane %v6689, 4
        %v6692 = vrot.slane %v6655, 5
        %v6693 = vsel %vm1458, %v6691, %v6692
        %v6694 = vrot.slane %v6692, 4
        %v6695 = vrot.slane %v6656, 5
        %v6696 = vsel %vm1458, %v6694, %v6695
        %v6697 = vrot.slane %v6695, 4
        %v6698 = vrot.slane %v6657, 5
        %v6699 = vsel %vm1458, %v6697, %v6698
        %6710 = vst [vmem:[#allocation6 + $0xc] sm:$0xf] %v6672
        %6711 = vst [vmem:[#allocation6 + $0x30] sm:$0xf] %v6675
        %6712 = vst [vmem:[#allocation6 + $0x54] sm:$0xf] %v6678
        %6713 = vst [vmem:[#allocation6 + $0x78] sm:$0xf] %v6681
        %6714 = vst [vmem:[#allocation6 + $0x9c] sm:$0xf] %v6684
        %6715 = vst [vmem:[#allocation6 + $0xc0] sm:$0xf] %v6687
        %6716 = vst [vmem:[#allocation6 + $0xe4] sm:$0xf] %v6690
        %6717 = vst [vmem:[#allocation6 + $0x108] sm:$0xf] %v6693
        %6718 = vst [vmem:[#allocation6 + $0x12c] sm:$0xf] %v6696
        %6719 = vst [vmem:[#allocation6 + $0x150] sm:$0xf] %v6699
        %v6720 = vld [vmem:[#allocation3 + $0x4] sm:$0xe]
        %v6721 = vld [vmem:[#allocation3 + $0x8] sm:$0xf]
        %v6722 = vld [vmem:[#allocation3 + $0xc] sm:$0xf]
        %v6723 = vld [vmem:[#allocation3 + $0x10] sm:$0xf]
        %v6724 = vld [vmem:[#allocation3 + $0x14] sm:$0xf]
        %v6725 = vld [vmem:[#allocation3 + $0x18] sm:$0xf]
        %v6726 = vld [vmem:[#allocation3 + $0x1c] sm:$0xf]
        %v6727 = vld [vmem:[#allocation3 + $0x20] sm:$0xf]
        %v6728 = vld [vmem:[#allocation3 + $0x24] sm:$0xf]
        %v6729 = vld [vmem:[#allocation3 + $0x28] sm:$0xf]
        %v6730 = vld [vmem:[#allocation3 + $0x2c] sm:$0x3]
        %v6732 = vshrl.u32 %v6720, 16
        %v6734 = vrot.slane %v6732, 5
        %v6735 = vshll.u32 %v6720, 16
        %v6737 = vrot.slane %v6735, 6
        %v6738 = vor.u32 %v6734, %v6737
        %v6739 = vrot.slane %v6738, 4
        %v6741 = vshrl.u32 %v6721, 16
        %v6743 = vrot.slane %v6741, 5
        %v6744 = vshll.u32 %v6721, 16
        %v6746 = vrot.slane %v6744, 6
        %v6747 = vor.u32 %v6743, %v6746
        %v6748 = vsel %vm362, %v6739, %v6747
        %v6749 = vrot.slane %v6747, 4
        %v6751 = vshrl.u32 %v6722, 16
        %v6753 = vrot.slane %v6751, 5
        %v6754 = vshll.u32 %v6722, 16
        %v6756 = vrot.slane %v6754, 6
        %v6757 = vor.u32 %v6753, %v6756
        %v6758 = vsel %vm362, %v6749, %v6757
        %v6759 = vrot.slane %v6757, 4
        %v6761 = vshrl.u32 %v6723, 16
        %v6763 = vrot.slane %v6761, 5
        %v6764 = vshll.u32 %v6723, 16
        %v6766 = vrot.slane %v6764, 6
        %v6767 = vor.u32 %v6763, %v6766
        %v6768 = vsel %vm362, %v6759, %v6767
        %v6769 = vrot.slane %v6767, 4
        %v6771 = vshrl.u32 %v6724, 16
        %v6773 = vrot.slane %v6771, 5
        %v6774 = vshll.u32 %v6724, 16
        %v6776 = vrot.slane %v6774, 6
        %v6777 = vor.u32 %v6773, %v6776
        %v6778 = vsel %vm362, %v6769, %v6777
        %v6779 = vrot.slane %v6777, 4
        %v6781 = vshrl.u32 %v6725, 16
        %v6783 = vrot.slane %v6781, 5
        %v6784 = vshll.u32 %v6725, 16
        %v6786 = vrot.slane %v6784, 6
        %v6787 = vor.u32 %v6783, %v6786
        %v6788 = vsel %vm362, %v6779, %v6787
        %v6789 = vrot.slane %v6787, 4
        %v6791 = vshrl.u32 %v6726, 16
        %v6793 = vrot.slane %v6791, 5
        %v6794 = vshll.u32 %v6726, 16
        %v6796 = vrot.slane %v6794, 6
        %v6797 = vor.u32 %v6793, %v6796
        %v6798 = vsel %vm362, %v6789, %v6797
        %v6799 = vrot.slane %v6797, 4
        %v6801 = vshrl.u32 %v6727, 16
        %v6803 = vrot.slane %v6801, 5
        %v6804 = vshll.u32 %v6727, 16
        %v6806 = vrot.slane %v6804, 6
        %v6807 = vor.u32 %v6803, %v6806
        %v6808 = vsel %vm362, %v6799, %v6807
        %v6809 = vrot.slane %v6807, 4
        %v6811 = vshrl.u32 %v6728, 16
        %v6813 = vrot.slane %v6811, 5
        %v6814 = vshll.u32 %v6728, 16
        %v6816 = vrot.slane %v6814, 6
        %v6817 = vor.u32 %v6813, %v6816
        %v6818 = vsel %vm362, %v6809, %v6817
        %v6819 = vrot.slane %v6817, 4
        %v6821 = vshrl.u32 %v6729, 16
        %v6823 = vrot.slane %v6821, 5
        %v6824 = vshll.u32 %v6729, 16
        %v6826 = vrot.slane %v6824, 6
        %v6827 = vor.u32 %v6823, %v6826
        %v6828 = vsel %vm362, %v6819, %v6827
        %v6829 = vrot.slane %v6827, 4
        %v6831 = vshrl.u32 %v6730, 16
        %v6833 = vrot.slane %v6831, 5
        %v6834 = vshll.u32 %v6730, 16
        %v6836 = vrot.slane %v6834, 6
        %v6837 = vor.u32 %v6833, %v6836
        %v6838 = vsel %vm362, %v6829, %v6837
        %6849 = vst [vmem:[#allocation6 + $0x10] sm:$0xf] %v6748
        %6850 = vst [vmem:[#allocation6 + $0x34] sm:$0xf] %v6758
        %6851 = vst [vmem:[#allocation6 + $0x58] sm:$0xf] %v6768
        %6852 = vst [vmem:[#allocation6 + $0x7c] sm:$0xf] %v6778
        %6853 = vst [vmem:[#allocation6 + $0xa0] sm:$0xf] %v6788
        %6854 = vst [vmem:[#allocation6 + $0xc4] sm:$0xf] %v6798
        %6855 = vst [vmem:[#allocation6 + $0xe8] sm:$0xf] %v6808
        %6856 = vst [vmem:[#allocation6 + $0x10c] sm:$0xf] %v6818
        %6857 = vst [vmem:[#allocation6 + $0x130] sm:$0xf] %v6828
        %6858 = vst [vmem:[#allocation6 + $0x154] sm:$0xf] %v6838
        %v6859 = vld [vmem:[#allocation3 + $0x4] sm:$0xc]
        %v6860 = vld [vmem:[#allocation3 + $0x8] sm:$0xf]
        %v6861 = vld [vmem:[#allocation3 + $0xc] sm:$0xf]
        %v6862 = vld [vmem:[#allocation3 + $0x10] sm:$0xf]
        %v6863 = vld [vmem:[#allocation3 + $0x14] sm:$0xf]
        %v6864 = vld [vmem:[#allocation3 + $0x18] sm:$0xf]
        %v6865 = vld [vmem:[#allocation3 + $0x1c] sm:$0xf]
        %v6866 = vld [vmem:[#allocation3 + $0x20] sm:$0xf]
        %v6867 = vld [vmem:[#allocation3 + $0x24] sm:$0xf]
        %v6868 = vld [vmem:[#allocation3 + $0x28] sm:$0xf]
        %v6869 = vld [vmem:[#allocation3 + $0x2c] sm:$0x3]
        %v6881 = vrot.slane %v6859, 6
        %v6882 = vrot.slane %v6881, 4
        %v6883 = vrot.slane %v6860, 6
        %v6884 = vsel %vm2447, %v6882, %v6883
        %v6885 = vrot.slane %v6883, 4
        %v6886 = vrot.slane %v6861, 6
        %v6887 = vsel %vm2447, %v6885, %v6886
        %v6888 = vrot.slane %v6886, 4
        %v6889 = vrot.slane %v6862, 6
        %v6890 = vsel %vm2447, %v6888, %v6889
        %v6891 = vrot.slane %v6889, 4
        %v6892 = vrot.slane %v6863, 6
        %v6893 = vsel %vm2447, %v6891, %v6892
        %v6894 = vrot.slane %v6892, 4
        %v6895 = vrot.slane %v6864, 6
        %v6896 = vsel %vm2447, %v6894, %v6895
        %v6897 = vrot.slane %v6895, 4
        %v6898 = vrot.slane %v6865, 6
        %v6899 = vsel %vm2447, %v6897, %v6898
        %v6900 = vrot.slane %v6898, 4
        %v6901 = vrot.slane %v6866, 6
        %v6902 = vsel %vm2447, %v6900, %v6901
        %v6903 = vrot.slane %v6901, 4
        %v6904 = vrot.slane %v6867, 6
        %v6905 = vsel %vm2447, %v6903, %v6904
        %v6906 = vrot.slane %v6904, 4
        %v6907 = vrot.slane %v6868, 6
        %v6908 = vsel %vm2447, %v6906, %v6907
        %v6909 = vrot.slane %v6907, 4
        %v6910 = vrot.slane %v6869, 6
        %v6911 = vsel %vm2447, %v6909, %v6910
        %6922 = vst [vmem:[#allocation6 + $0x14] sm:$0xf] %v6884
        %6923 = vst [vmem:[#allocation6 + $0x38] sm:$0xf] %v6887
        %6924 = vst [vmem:[#allocation6 + $0x5c] sm:$0xf] %v6890
        %6925 = vst [vmem:[#allocation6 + $0x80] sm:$0xf] %v6893
        %6926 = vst [vmem:[#allocation6 + $0xa4] sm:$0xf] %v6896
        %6927 = vst [vmem:[#allocation6 + $0xc8] sm:$0xf] %v6899
        %6928 = vst [vmem:[#allocation6 + $0xec] sm:$0xf] %v6902
        %6929 = vst [vmem:[#allocation6 + $0x110] sm:$0xf] %v6905
        %6930 = vst [vmem:[#allocation6 + $0x134] sm:$0xf] %v6908
        %6931 = vst [vmem:[#allocation6 + $0x158] sm:$0xf] %v6911
        %v6932 = vld [vmem:[#allocation3 + $0x8] sm:$0xc]
        %v6933 = vld [vmem:[#allocation3 + $0xc] sm:$0xf]
        %v6934 = vld [vmem:[#allocation3 + $0x10] sm:$0xf]
        %v6935 = vld [vmem:[#allocation3 + $0x14] sm:$0xf]
        %v6936 = vld [vmem:[#allocation3 + $0x18] sm:$0xf]
        %v6937 = vld [vmem:[#allocation3 + $0x1c] sm:$0xf]
        %v6938 = vld [vmem:[#allocation3 + $0x20] sm:$0xf]
        %v6939 = vld [vmem:[#allocation3 + $0x24] sm:$0xf]
        %v6940 = vld [vmem:[#allocation3 + $0x28] sm:$0xf]
        %v6941 = vld [vmem:[#allocation3 + $0x2c] sm:$0xf]
        %v6942 = vld [vmem:[#allocation3 + $0x30] sm:$0x3]
        %v6954 = vrot.slane %v6932, 6
        %v6955 = vrot.slane %v6954, 4
        %v6956 = vrot.slane %v6933, 6
        %v6957 = vsel %vm2447, %v6955, %v6956
        %v6958 = vrot.slane %v6956, 4
        %v6959 = vrot.slane %v6934, 6
        %v6960 = vsel %vm2447, %v6958, %v6959
        %v6961 = vrot.slane %v6959, 4
        %v6962 = vrot.slane %v6935, 6
        %v6963 = vsel %vm2447, %v6961, %v6962
        %v6964 = vrot.slane %v6962, 4
        %v6965 = vrot.slane %v6936, 6
        %v6966 = vsel %vm2447, %v6964, %v6965
        %v6967 = vrot.slane %v6965, 4
        %v6968 = vrot.slane %v6937, 6
        %v6969 = vsel %vm2447, %v6967, %v6968
        %v6970 = vrot.slane %v6968, 4
        %v6971 = vrot.slane %v6938, 6
        %v6972 = vsel %vm2447, %v6970, %v6971
        %v6973 = vrot.slane %v6971, 4
        %v6974 = vrot.slane %v6939, 6
        %v6975 = vsel %vm2447, %v6973, %v6974
        %v6976 = vrot.slane %v6974, 4
        %v6977 = vrot.slane %v6940, 6
        %v6978 = vsel %vm2447, %v6976, %v6977
        %v6979 = vrot.slane %v6977, 4
        %v6980 = vrot.slane %v6941, 6
        %v6981 = vsel %vm2447, %v6979, %v6980
        %v6982 = vrot.slane %v6980, 4
        %v6983 = vrot.slane %v6942, 6
        %v6984 = vsel %vm2447, %v6982, %v6983
        %6995 = vst [vmem:[#allocation6 + $0x18] sm:$0xf] %v6957
        %6996 = vst [vmem:[#allocation6 + $0x3c] sm:$0xf] %v6960
        %6997 = vst [vmem:[#allocation6 + $0x60] sm:$0xf] %v6963
        %6998 = vst [vmem:[#allocation6 + $0x84] sm:$0xf] %v6966
        %6999 = vst [vmem:[#allocation6 + $0xa8] sm:$0xf] %v6969
        %7000 = vst [vmem:[#allocation6 + $0xcc] sm:$0xf] %v6972
        %7001 = vst [vmem:[#allocation6 + $0xf0] sm:$0xf] %v6975
        %7002 = vst [vmem:[#allocation6 + $0x114] sm:$0xf] %v6978
        %7003 = vst [vmem:[#allocation6 + $0x138] sm:$0xf] %v6981
        %7004 = vst [vmem:[#allocation6 + $0x15c] sm:$0xf] %v6984
        %v7005 = vld [vmem:[#allocation3 + $0x8] sm:$0xc]
        %v7006 = vld [vmem:[#allocation3 + $0xc] sm:$0xf]
        %v7007 = vld [vmem:[#allocation3 + $0x10] sm:$0xf]
        %v7008 = vld [vmem:[#allocation3 + $0x14] sm:$0xf]
        %v7009 = vld [vmem:[#allocation3 + $0x18] sm:$0xf]
        %v7010 = vld [vmem:[#allocation3 + $0x1c] sm:$0xf]
        %v7011 = vld [vmem:[#allocation3 + $0x20] sm:$0xf]
        %v7012 = vld [vmem:[#allocation3 + $0x24] sm:$0xf]
        %v7013 = vld [vmem:[#allocation3 + $0x28] sm:$0xf]
        %v7014 = vld [vmem:[#allocation3 + $0x2c] sm:$0xf]
        %v7015 = vld [vmem:[#allocation3 + $0x30] sm:$0x7]
        %v7017 = vshrl.u32 %v7005, 16
        %v7019 = vrot.slane %v7017, 6
        %v7020 = vshll.u32 %v7005, 16
        %v7022 = vrot.slane %v7020, 7
        %v7023 = vor.u32 %v7019, %v7022
        %v7024 = vrot.slane %v7023, 4
        %v7026 = vshrl.u32 %v7006, 16
        %v7028 = vrot.slane %v7026, 6
        %v7029 = vshll.u32 %v7006, 16
        %v7031 = vrot.slane %v7029, 7
        %v7032 = vor.u32 %v7028, %v7031
        %v7033 = vsel %vm323, %v7024, %v7032
        %v7034 = vrot.slane %v7032, 4
        %v7036 = vshrl.u32 %v7007, 16
        %v7038 = vrot.slane %v7036, 6
        %v7039 = vshll.u32 %v7007, 16
        %v7041 = vrot.slane %v7039, 7
        %v7042 = vor.u32 %v7038, %v7041
        %v7043 = vsel %vm323, %v7034, %v7042
        %v7044 = vrot.slane %v7042, 4
        %v7046 = vshrl.u32 %v7008, 16
        %v7048 = vrot.slane %v7046, 6
        %v7049 = vshll.u32 %v7008, 16
        %v7051 = vrot.slane %v7049, 7
        %v7052 = vor.u32 %v7048, %v7051
        %v7053 = vsel %vm323, %v7044, %v7052
        %v7054 = vrot.slane %v7052, 4
        %v7056 = vshrl.u32 %v7009, 16
        %v7058 = vrot.slane %v7056, 6
        %v7059 = vshll.u32 %v7009, 16
        %v7061 = vrot.slane %v7059, 7
        %v7062 = vor.u32 %v7058, %v7061
        %v7063 = vsel %vm323, %v7054, %v7062
        %v7064 = vrot.slane %v7062, 4
        %v7066 = vshrl.u32 %v7010, 16
        %v7068 = vrot.slane %v7066, 6
        %v7069 = vshll.u32 %v7010, 16
        %v7071 = vrot.slane %v7069, 7
        %v7072 = vor.u32 %v7068, %v7071
        %v7073 = vsel %vm323, %v7064, %v7072
        %v7074 = vrot.slane %v7072, 4
        %v7076 = vshrl.u32 %v7011, 16
        %v7078 = vrot.slane %v7076, 6
        %v7079 = vshll.u32 %v7011, 16
        %v7081 = vrot.slane %v7079, 7
        %v7082 = vor.u32 %v7078, %v7081
        %v7083 = vsel %vm323, %v7074, %v7082
        %v7084 = vrot.slane %v7082, 4
        %v7086 = vshrl.u32 %v7012, 16
        %v7088 = vrot.slane %v7086, 6
        %v7089 = vshll.u32 %v7012, 16
        %v7091 = vrot.slane %v7089, 7
        %v7092 = vor.u32 %v7088, %v7091
        %v7093 = vsel %vm323, %v7084, %v7092
        %v7094 = vrot.slane %v7092, 4
        %v7096 = vshrl.u32 %v7013, 16
        %v7098 = vrot.slane %v7096, 6
        %v7099 = vshll.u32 %v7013, 16
        %v7101 = vrot.slane %v7099, 7
        %v7102 = vor.u32 %v7098, %v7101
        %v7103 = vsel %vm323, %v7094, %v7102
        %v7104 = vrot.slane %v7102, 4
        %v7106 = vshrl.u32 %v7014, 16
        %v7108 = vrot.slane %v7106, 6
        %v7109 = vshll.u32 %v7014, 16
        %v7111 = vrot.slane %v7109, 7
        %v7112 = vor.u32 %v7108, %v7111
        %v7113 = vsel %vm323, %v7104, %v7112
        %v7114 = vrot.slane %v7112, 4
        %v7116 = vshrl.u32 %v7015, 16
        %v7118 = vrot.slane %v7116, 6
        %v7119 = vshll.u32 %v7015, 16
        %v7121 = vrot.slane %v7119, 7
        %v7122 = vor.u32 %v7118, %v7121
        %v7123 = vsel %vm323, %v7114, %v7122
        %7134 = vst [vmem:[#allocation6 + $0x1c] sm:$0xf] %v7033
        %7135 = vst [vmem:[#allocation6 + $0x40] sm:$0xf] %v7043
        %7136 = vst [vmem:[#allocation6 + $0x64] sm:$0xf] %v7053
        %7137 = vst [vmem:[#allocation6 + $0x88] sm:$0xf] %v7063
        %7138 = vst [vmem:[#allocation6 + $0xac] sm:$0xf] %v7073
        %7139 = vst [vmem:[#allocation6 + $0xd0] sm:$0xf] %v7083
        %7140 = vst [vmem:[#allocation6 + $0xf4] sm:$0xf] %v7093
        %7141 = vst [vmem:[#allocation6 + $0x118] sm:$0xf] %v7103
        %7142 = vst [vmem:[#allocation6 + $0x13c] sm:$0xf] %v7113
        %7143 = vst [vmem:[#allocation6 + $0x160] sm:$0xf] %v7123
        %v7144 = vld [vmem:[#allocation3 + $0x8] sm:$0x8]
        %v7145 = vld [vmem:[#allocation3 + $0xc] sm:$0xf]
        %v7146 = vld [vmem:[#allocation3 + $0x10] sm:$0xf]
        %v7147 = vld [vmem:[#allocation3 + $0x14] sm:$0xf]
        %v7148 = vld [vmem:[#allocation3 + $0x18] sm:$0xf]
        %v7149 = vld [vmem:[#allocation3 + $0x1c] sm:$0xf]
        %v7150 = vld [vmem:[#allocation3 + $0x20] sm:$0xf]
        %v7151 = vld [vmem:[#allocation3 + $0x24] sm:$0xf]
        %v7152 = vld [vmem:[#allocation3 + $0x28] sm:$0xf]
        %v7153 = vld [vmem:[#allocation3 + $0x2c] sm:$0xf]
        %v7154 = vld [vmem:[#allocation3 + $0x30] sm:$0x7]
        %v7166 = vrot.slane %v7144, 7
        %v7167 = vrot.slane %v7166, 4
        %v7168 = vrot.slane %v7145, 7
        %v7169 = vsel %vm3436, %v7167, %v7168
        %v7170 = vrot.slane %v7168, 4
        %v7171 = vrot.slane %v7146, 7
        %v7172 = vsel %vm3436, %v7170, %v7171
        %v7173 = vrot.slane %v7171, 4
        %v7174 = vrot.slane %v7147, 7
        %v7175 = vsel %vm3436, %v7173, %v7174
        %v7176 = vrot.slane %v7174, 4
        %v7177 = vrot.slane %v7148, 7
        %v7178 = vsel %vm3436, %v7176, %v7177
        %v7179 = vrot.slane %v7177, 4
        %v7180 = vrot.slane %v7149, 7
        %v7181 = vsel %vm3436, %v7179, %v7180
        %v7182 = vrot.slane %v7180, 4
        %v7183 = vrot.slane %v7150, 7
        %v7184 = vsel %vm3436, %v7182, %v7183
        %v7185 = vrot.slane %v7183, 4
        %v7186 = vrot.slane %v7151, 7
        %v7187 = vsel %vm3436, %v7185, %v7186
        %v7188 = vrot.slane %v7186, 4
        %v7189 = vrot.slane %v7152, 7
        %v7190 = vsel %vm3436, %v7188, %v7189
        %v7191 = vrot.slane %v7189, 4
        %v7192 = vrot.slane %v7153, 7
        %v7193 = vsel %vm3436, %v7191, %v7192
        %v7194 = vrot.slane %v7192, 4
        %v7195 = vrot.slane %v7154, 7
        %v7196 = vsel %vm3436, %v7194, %v7195
        %7207 = vst [vmem:[#allocation6 + $0x20] sm:$0xf] %v7169
        %7208 = vst [vmem:[#allocation6 + $0x44] sm:$0xf] %v7172
        %7209 = vst [vmem:[#allocation6 + $0x68] sm:$0xf] %v7175
        %7210 = vst [vmem:[#allocation6 + $0x8c] sm:$0xf] %v7178
        %7211 = vst [vmem:[#allocation6 + $0xb0] sm:$0xf] %v7181
        %7212 = vst [vmem:[#allocation6 + $0xd4] sm:$0xf] %v7184
        %7213 = vst [vmem:[#allocation6 + $0xf8] sm:$0xf] %v7187
        %7214 = vst [vmem:[#allocation6 + $0x11c] sm:$0xf] %v7190
        %7215 = vst [vmem:[#allocation6 + $0x140] sm:$0xf] %v7193
        %7216 = vst [vmem:[#allocation6 + $0x164] sm:$0xf] %v7196
        %v7217 = vld [vmem:[#allocation6] sm:$0xff]
        %v7218 = vld [vmem:[#allocation6 + $0x8] sm:$0xff]
        %v7219 = vld [vmem:[#allocation6 + $0x10] sm:$0xff]
        %v7220 = vld [vmem:[#allocation6 + $0x18] sm:$0xff]
        %v7221 = vld [vmem:[#allocation6 + $0x20] sm:$0xf]
        %v7222 = vld [vmem:[#allocation6 + $0x24] sm:$0xff]
        %v7223 = vld [vmem:[#allocation6 + $0x2c] sm:$0xff]
        %v7224 = vld [vmem:[#allocation6 + $0x34] sm:$0xff]
        %v7225 = vld [vmem:[#allocation6 + $0x3c] sm:$0xff]
        %v7226 = vld [vmem:[#allocation6 + $0x44] sm:$0xf]
        %v7227 = vld [vmem:[#allocation6 + $0x48] sm:$0xff]
        %v7228 = vld [vmem:[#allocation6 + $0x50] sm:$0xff]
        %v7229 = vld [vmem:[#allocation6 + $0x58] sm:$0xff]
        %v7230 = vld [vmem:[#allocation6 + $0x60] sm:$0xff]
        %v7231 = vld [vmem:[#allocation6 + $0x68] sm:$0xf]
        %v7232 = vld [vmem:[#allocation6 + $0x6c] sm:$0xff]
        %v7233 = vld [vmem:[#allocation6 + $0x74] sm:$0xff]
        %v7234 = vld [vmem:[#allocation6 + $0x7c] sm:$0xff]
        %v7235 = vld [vmem:[#allocation6 + $0x84] sm:$0xff]
        %v7236 = vld [vmem:[#allocation6 + $0x8c] sm:$0xf]
        %v7237 = vld [vmem:[#allocation6 + $0x90] sm:$0xff]
        %v7238 = vld [vmem:[#allocation6 + $0x98] sm:$0xff]
        %v7239 = vld [vmem:[#allocation6 + $0xa0] sm:$0xff]
        %v7240 = vld [vmem:[#allocation6 + $0xa8] sm:$0xff]
        %v7241 = vld [vmem:[#allocation6 + $0xb0] sm:$0xf]
        %v7242 = vld [vmem:[#allocation6 + $0xb4] sm:$0xff]
        %v7243 = vld [vmem:[#allocation6 + $0xbc] sm:$0xff]
        %v7244 = vld [vmem:[#allocation6 + $0xc4] sm:$0xff]
        %v7245 = vld [vmem:[#allocation6 + $0xcc] sm:$0xff]
        %v7246 = vld [vmem:[#allocation6 + $0xd4] sm:$0xf]
        %v7247 = vld [vmem:[#allocation6 + $0xd8] sm:$0xff]
        %v7248 = vld [vmem:[#allocation6 + $0xe0] sm:$0xff]
        %v7249 = vld [vmem:[#allocation6 + $0xe8] sm:$0xff]
        %v7250 = vld [vmem:[#allocation6 + $0xf0] sm:$0xff]
        %v7251 = vld [vmem:[#allocation6 + $0xf8] sm:$0xf]
        %v7252 = vld [vmem:[#allocation6 + $0xfc] sm:$0xff]
        %v7253 = vld [vmem:[#allocation6 + $0x104] sm:$0xff]
        %v7254 = vld [vmem:[#allocation6 + $0x10c] sm:$0xff]
        %v7255 = vld [vmem:[#allocation6 + $0x114] sm:$0xff]
        %v7256 = vld [vmem:[#allocation6 + $0x11c] sm:$0xf]
        %v7257 = vld [vmem:[#allocation6 + $0x120] sm:$0xff]
        %v7258 = vld [vmem:[#allocation6 + $0x128] sm:$0xff]
        %v7259 = vld [vmem:[#allocation6 + $0x130] sm:$0xff]
        %v7260 = vld [vmem:[#allocation6 + $0x138] sm:$0xff]
        %v7261 = vld [vmem:[#allocation6 + $0x140] sm:$0xf]
        %v7262 = vld [vmem:[#allocation6 + $0x144] sm:$0xff]
        %v7263 = vld [vmem:[#allocation6 + $0x14c] sm:$0xff]
        %v7264 = vld [vmem:[#allocation6 + $0x154] sm:$0xff]
        %v7265 = vld [vmem:[#allocation6 + $0x15c] sm:$0xff]
        %v7266 = vld [vmem:[#allocation6 + $0x164] sm:$0xf]
        %s7267 = scalar_lea.vmem [#allocation8], 576
        %v7268 = vld [vmem:[%s7267] sm:$0xf]
        %v7269 = vld [vmem:[%s7267 + $0x4] sm:$0xf]
        %v7270 = vld [vmem:[%s7267 + $0x8] sm:$0xf]
        %v7271 = vld [vmem:[%s7267 + $0xc] sm:$0xf]
        %v7272 = vld [vmem:[%s7267 + $0x10] sm:$0xf]
        %v7273 = vld [vmem:[%s7267 + $0x14] sm:$0xf]
        %v7274 = vld [vmem:[%s7267 + $0x18] sm:$0xf]
        %v7275 = vld [vmem:[%s7267 + $0x1c] sm:$0xf]
        %v7276 = vld [vmem:[%s7267 + $0x20] sm:$0xf]
        %v7277 = vld [vmem:[%s7267 + $0x24] sm:$0xf]
        %v7278 = vld [vmem:[%s7267 + $0x28] sm:$0xf]
        %v7279 = vld [vmem:[%s7267 + $0x2c] sm:$0xf]
        %v7280 = vld [vmem:[%s7267 + $0x30] sm:$0xf]
        %v7281 = vld [vmem:[%s7267 + $0x34] sm:$0xf]
        %v7282 = vld [vmem:[%s7267 + $0x38] sm:$0xf]
        %v7283 = vld [vmem:[%s7267 + $0x3c] sm:$0xf]
        %v7284 = vld [vmem:[%s7267 + $0x40] sm:$0xf]
        %v7285 = vld [vmem:[%s7267 + $0x44] sm:$0xf]
        %v7286 = vld [vmem:[%s7267 + $0x48] sm:$0xf]
        %v7287 = vld [vmem:[%s7267 + $0x4c] sm:$0xf]
        %v7288 = vld [vmem:[%s7267 + $0x50] sm:$0xf]
        %v7289 = vld [vmem:[%s7267 + $0x54] sm:$0xf]
        %v7290 = vld [vmem:[%s7267 + $0x58] sm:$0xf]
        %v7291 = vld [vmem:[%s7267 + $0x5c] sm:$0xf]
        %v7292 = vld [vmem:[%s7267 + $0x60] sm:$0xf]
        %v7293 = vld [vmem:[%s7267 + $0x64] sm:$0xf]
        %v7294 = vld [vmem:[%s7267 + $0x68] sm:$0xf]
        %v7295 = vld [vmem:[%s7267 + $0x6c] sm:$0xf]
        %v7296 = vld [vmem:[%s7267 + $0x70] sm:$0xf]
        %v7297 = vld [vmem:[%s7267 + $0x74] sm:$0xf]
        %v7298 = vld [vmem:[%s7267 + $0x78] sm:$0xf]
        %v7299 = vld [vmem:[%s7267 + $0x7c] sm:$0xf]
        %v7300 = vld [vmem:[%s7267 + $0x80] sm:$0xf]
        %v7301 = vld [vmem:[%s7267 + $0x84] sm:$0xf]
        %v7302 = vld [vmem:[%s7267 + $0x88] sm:$0xf]
        %v7303 = vld [vmem:[%s7267 + $0x8c] sm:$0xf]
        %v7304 = vld [vmem:[%s7267 + $0x90] sm:$0xf]
        %v7305 = vld [vmem:[%s7267 + $0x94] sm:$0xf]
        %v7306 = vld [vmem:[%s7267 + $0x98] sm:$0xf]
        %v7307 = vld [vmem:[%s7267 + $0x9c] sm:$0xf]
        %v7308 = vld [vmem:[%s7267 + $0xa0] sm:$0xf]
        %v7309 = vld [vmem:[%s7267 + $0xa4] sm:$0xf]
        %v7310 = vld [vmem:[%s7267 + $0xa8] sm:$0xf]
        %v7311 = vld [vmem:[%s7267 + $0xac] sm:$0xf]
        %v7312 = vld [vmem:[%s7267 + $0xb0] sm:$0xf]
        %v7313 = vld [vmem:[%s7267 + $0xb4] sm:$0xf]
        %v7314 = vld [vmem:[%s7267 + $0xb8] sm:$0xf]
        %v7315 = vld [vmem:[%s7267 + $0xbc] sm:$0xf]
        %v7316 = vld [vmem:[%s7267 + $0xc0] sm:$0xf]
        %v7317 = vld [vmem:[%s7267 + $0xc4] sm:$0xf]
        %v7318 = vld [vmem:[%s7267 + $0xc8] sm:$0xf]
        %v7319 = vld [vmem:[%s7267 + $0xcc] sm:$0xf]
        %v7320 = vld [vmem:[%s7267 + $0xd0] sm:$0xf]
        %v7321 = vld [vmem:[%s7267 + $0xd4] sm:$0xf]
        %v7322 = vld [vmem:[%s7267 + $0xd8] sm:$0xf]
        %v7323 = vld [vmem:[%s7267 + $0xdc] sm:$0xf]
        %v7324 = vld [vmem:[%s7267 + $0xe0] sm:$0xf]
        %v7325 = vld [vmem:[%s7267 + $0xe4] sm:$0xf]
        %v7326 = vld [vmem:[%s7267 + $0xe8] sm:$0xf]
        %v7327 = vld [vmem:[%s7267 + $0xec] sm:$0xf]
        %v7328 = vld [vmem:[%s7267 + $0xf0] sm:$0xf]
        %v7329 = vld [vmem:[%s7267 + $0xf4] sm:$0xf]
        %v7330 = vld [vmem:[%s7267 + $0xf8] sm:$0xf]
        %v7331 = vld [vmem:[%s7267 + $0xfc] sm:$0xf]
        %v7332 = vld [vmem:[%s7267 + $0x100] sm:$0xf]
        %v7333 = vld [vmem:[%s7267 + $0x104] sm:$0xf]
        %v7334 = vld [vmem:[%s7267 + $0x108] sm:$0xf]
        %v7335 = vld [vmem:[%s7267 + $0x10c] sm:$0xf]
        %v7336 = vld [vmem:[%s7267 + $0x110] sm:$0xf]
        %v7337 = vld [vmem:[%s7267 + $0x114] sm:$0xf]
        %v7338 = vld [vmem:[%s7267 + $0x118] sm:$0xf]
        %v7339 = vld [vmem:[%s7267 + $0x11c] sm:$0xf]
        %v7340 = vld [vmem:[%s7267 + $0x120] sm:$0xf]
        %v7341 = vld [vmem:[%s7267 + $0x124] sm:$0xf]
        %v7342 = vld [vmem:[%s7267 + $0x128] sm:$0xf]
        %v7343 = vld [vmem:[%s7267 + $0x12c] sm:$0xf]
        %v7344 = vld [vmem:[%s7267 + $0x130] sm:$0xf]
        %v7345 = vld [vmem:[%s7267 + $0x134] sm:$0xf]
        %v7346 = vld [vmem:[%s7267 + $0x138] sm:$0xf]
        %v7347 = vld [vmem:[%s7267 + $0x13c] sm:$0xf]
        %v7348 = vld [vmem:[%s7267 + $0x140] sm:$0xf]
        %v7349 = vld [vmem:[%s7267 + $0x144] sm:$0xf]
        %v7350 = vld [vmem:[%s7267 + $0x148] sm:$0xf]
        %v7351 = vld [vmem:[%s7267 + $0x14c] sm:$0xf]
        %v7352 = vld [vmem:[%s7267 + $0x150] sm:$0xf]
        %v7353 = vld [vmem:[%s7267 + $0x154] sm:$0xf]
        %v7354 = vld [vmem:[%s7267 + $0x158] sm:$0xf]
        %v7355 = vld [vmem:[%s7267 + $0x15c] sm:$0xf]
        %v7356 = vld [vmem:[%s7267 + $0x160] sm:$0xf]
        %v7357 = vld [vmem:[%s7267 + $0x164] sm:$0xf]
        %v7358 = vld [vmem:[%s7267 + $0x168] sm:$0xf]
        %v7359 = vld [vmem:[%s7267 + $0x16c] sm:$0xf]
        %v7360 = vld [vmem:[%s7267 + $0x170] sm:$0xf]
        %v7361 = vld [vmem:[%s7267 + $0x174] sm:$0xf]
        %v7362 = vld [vmem:[%s7267 + $0x178] sm:$0xf]
        %v7363 = vld [vmem:[%s7267 + $0x17c] sm:$0xf]
        %v7364 = vld [vmem:[%s7267 + $0x180] sm:$0xf]
        %v7365 = vld [vmem:[%s7267 + $0x184] sm:$0xf]
        %v7366 = vld [vmem:[%s7267 + $0x188] sm:$0xf]
        %v7367 = vld [vmem:[%s7267 + $0x18c] sm:$0xf]
        %v7368 = vld [vmem:[%s7267 + $0x190] sm:$0xf]
        %v7369 = vld [vmem:[%s7267 + $0x194] sm:$0xf]
        %v7370 = vld [vmem:[%s7267 + $0x198] sm:$0xf]
        %v7371 = vld [vmem:[%s7267 + $0x19c] sm:$0xf]
        %v7372 = vld [vmem:[%s7267 + $0x1a0] sm:$0xf]
        %v7373 = vld [vmem:[%s7267 + $0x1a4] sm:$0xf]
        %v7374 = vld [vmem:[%s7267 + $0x1a8] sm:$0xf]
        %v7375 = vld [vmem:[%s7267 + $0x1ac] sm:$0xf]
        %v7376 = vld [vmem:[%s7267 + $0x1b0] sm:$0xf]
        %v7377 = vld [vmem:[%s7267 + $0x1b4] sm:$0xf]
        %v7378 = vld [vmem:[%s7267 + $0x1b8] sm:$0xf]
        %v7379 = vld [vmem:[%s7267 + $0x1bc] sm:$0xf]
        %v7380 = vld [vmem:[%s7267 + $0x1c0] sm:$0xf]
        %v7381 = vld [vmem:[%s7267 + $0x1c4] sm:$0xf]
        %v7382 = vld [vmem:[%s7267 + $0x1c8] sm:$0xf]
        %v7383 = vld [vmem:[%s7267 + $0x1cc] sm:$0xf]
        %v7384 = vld [vmem:[%s7267 + $0x1d0] sm:$0xf]
        %v7385 = vld [vmem:[%s7267 + $0x1d4] sm:$0xf]
        %v7386 = vld [vmem:[%s7267 + $0x1d8] sm:$0xf]
        %v7387 = vld [vmem:[%s7267 + $0x1dc] sm:$0xf]
        %v7388 = vld [vmem:[%s7267 + $0x1e0] sm:$0xf]
        %v7389 = vld [vmem:[%s7267 + $0x1e4] sm:$0xf]
        %v7390 = vld [vmem:[%s7267 + $0x1e8] sm:$0xf]
        %v7391 = vld [vmem:[%s7267 + $0x1ec] sm:$0xf]
        %v7392 = vld [vmem:[%s7267 + $0x1f0] sm:$0xf]
        %v7393 = vld [vmem:[%s7267 + $0x1f4] sm:$0xf]
        %v7394 = vld [vmem:[%s7267 + $0x1f8] sm:$0xf]
        %v7395 = vld [vmem:[%s7267 + $0x1fc] sm:$0xf]
        %v7396 = vld [vmem:[%s7267 + $0x200] sm:$0xf]
        %v7397 = vld [vmem:[%s7267 + $0x204] sm:$0xf]
        %v7398 = vld [vmem:[%s7267 + $0x208] sm:$0xf]
        %v7399 = vld [vmem:[%s7267 + $0x20c] sm:$0xf]
        %v7400 = vld [vmem:[%s7267 + $0x210] sm:$0xf]
        %v7401 = vld [vmem:[%s7267 + $0x214] sm:$0xf]
        %v7402 = vld [vmem:[%s7267 + $0x218] sm:$0xf]
        %v7403 = vld [vmem:[%s7267 + $0x21c] sm:$0xf]
        %v7404 = vld [vmem:[%s7267 + $0x220] sm:$0xf]
        %v7405 = vld [vmem:[%s7267 + $0x224] sm:$0xf]
        %v7406 = vld [vmem:[%s7267 + $0x228] sm:$0xf]
        %v7407 = vld [vmem:[%s7267 + $0x22c] sm:$0xf]
        %v7408 = vld [vmem:[%s7267 + $0x230] sm:$0xf]
        %v7409 = vld [vmem:[%s7267 + $0x234] sm:$0xf]
        %v7410 = vld [vmem:[%s7267 + $0x238] sm:$0xf]
        %v7411 = vld [vmem:[%s7267 + $0x23c] sm:$0xf]
        %s7412 = scalar_lea.vmem %s2, 1
        %v7413 = vld [vmem:[%s7412] sm:$0x1]
        %v7415 = vlaneseq
        %v7416 = vshrl.u32 %v7415, 7
        %v7417 = vsub.s32 0, %v7416
        %v7418 = vrot.slane %v7413, %v7417
        %v7470 = vunpack.c.l.b16 %v7217
        %v7471 = vunpack.c.h.b16 %v7217
        %v7472 = vunpack.c.l.b16 %v7218
        %v7473 = vunpack.c.h.b16 %v7218
        %v7474 = vunpack.c.l.b16 %v7219
        %v7475 = vunpack.c.h.b16 %v7219
        %v7476 = vunpack.c.l.b16 %v7220
        %v7477 = vunpack.c.h.b16 %v7220
        %v7478 = vunpack.c.l.b16 %v7221
        %v7479 = vunpack.c.l.b16 %v7222
        %v7480 = vunpack.c.h.b16 %v7222
        %v7481 = vunpack.c.l.b16 %v7223
        %v7482 = vunpack.c.h.b16 %v7223
        %v7483 = vunpack.c.l.b16 %v7224
        %v7484 = vunpack.c.h.b16 %v7224
        %v7485 = vunpack.c.l.b16 %v7225
        %v7486 = vunpack.c.h.b16 %v7225
        %v7487 = vunpack.c.l.b16 %v7226
        %v7488 = vunpack.c.l.b16 %v7227
        %v7489 = vunpack.c.h.b16 %v7227
        %v7490 = vunpack.c.l.b16 %v7228
        %v7491 = vunpack.c.h.b16 %v7228
        %v7492 = vunpack.c.l.b16 %v7229
        %v7493 = vunpack.c.h.b16 %v7229
        %v7494 = vunpack.c.l.b16 %v7230
        %v7495 = vunpack.c.h.b16 %v7230
        %v7496 = vunpack.c.l.b16 %v7231
        %v7497 = vunpack.c.l.b16 %v7232
        %v7498 = vunpack.c.h.b16 %v7232
        %v7499 = vunpack.c.l.b16 %v7233
        %v7500 = vunpack.c.h.b16 %v7233
        %v7501 = vunpack.c.l.b16 %v7234
        %v7502 = vunpack.c.h.b16 %v7234
        %v7503 = vunpack.c.l.b16 %v7235
        %v7504 = vunpack.c.h.b16 %v7235
        %v7505 = vunpack.c.l.b16 %v7236
        %v7506 = vunpack.c.l.b16 %v7237
        %v7507 = vunpack.c.h.b16 %v7237
        %v7508 = vunpack.c.l.b16 %v7238
        %v7509 = vunpack.c.h.b16 %v7238
        %v7510 = vunpack.c.l.b16 %v7239
        %v7511 = vunpack.c.h.b16 %v7239
        %v7512 = vunpack.c.l.b16 %v7240
        %v7513 = vunpack.c.h.b16 %v7240
        %v7514 = vunpack.c.l.b16 %v7241
        %v7515 = vunpack.c.l.b16 %v7242
        %v7516 = vunpack.c.h.b16 %v7242
        %v7517 = vunpack.c.l.b16 %v7243
        %v7518 = vunpack.c.h.b16 %v7243
        %v7519 = vunpack.c.l.b16 %v7244
        %v7520 = vunpack.c.h.b16 %v7244
        %v7521 = vunpack.c.l.b16 %v7245
        %v7522 = vunpack.c.h.b16 %v7245
        %v7523 = vunpack.c.l.b16 %v7246
        %v7524 = vunpack.c.l.b16 %v7247
        %v7525 = vunpack.c.h.b16 %v7247
        %v7526 = vunpack.c.l.b16 %v7248
        %v7527 = vunpack.c.h.b16 %v7248
        %v7528 = vunpack.c.l.b16 %v7249
        %v7529 = vunpack.c.h.b16 %v7249
        %v7530 = vunpack.c.l.b16 %v7250
        %v7531 = vunpack.c.h.b16 %v7250
        %v7532 = vunpack.c.l.b16 %v7251
        %v7533 = vunpack.c.l.b16 %v7252
        %v7534 = vunpack.c.h.b16 %v7252
        %v7535 = vunpack.c.l.b16 %v7253
        %v7536 = vunpack.c.h.b16 %v7253
        %v7537 = vunpack.c.l.b16 %v7254
        %v7538 = vunpack.c.h.b16 %v7254
        %v7539 = vunpack.c.l.b16 %v7255
        %v7540 = vunpack.c.h.b16 %v7255
        %v7541 = vunpack.c.l.b16 %v7256
        %v7542 = vunpack.c.l.b16 %v7257
        %v7543 = vunpack.c.h.b16 %v7257
        %v7544 = vunpack.c.l.b16 %v7258
        %v7545 = vunpack.c.h.b16 %v7258
        %v7546 = vunpack.c.l.b16 %v7259
        %v7547 = vunpack.c.h.b16 %v7259
        %v7548 = vunpack.c.l.b16 %v7260
        %v7549 = vunpack.c.h.b16 %v7260
        %v7550 = vunpack.c.l.b16 %v7261
        %v7551 = vunpack.c.l.b16 %v7262
        %v7552 = vunpack.c.h.b16 %v7262
        %v7553 = vunpack.c.l.b16 %v7263
        %v7554 = vunpack.c.h.b16 %v7263
        %v7555 = vunpack.c.l.b16 %v7264
        %v7556 = vunpack.c.h.b16 %v7264
        %v7557 = vunpack.c.l.b16 %v7265
        %v7558 = vunpack.c.h.b16 %v7265
        %v7559 = vunpack.c.l.b16 %v7266
        %v7560 = vpack.c.b16 %v7479, %v7470
        %v7561 = vpack.c.b16 %v7480, %v7471
        %v7562 = vpack.c.b16 %v7481, %v7472
        %v7563 = vpack.c.b16 %v7482, %v7473
        %v7564 = vpack.c.b16 %v7483, %v7474
        %v7565 = vpack.c.b16 %v7484, %v7475
        %v7566 = vpack.c.b16 %v7485, %v7476
        %v7567 = vpack.c.b16 %v7486, %v7477
        %v7568 = vpack.c.b16 %v7487, %v7478
        %v7569 = vpack.c.b16 %v7497, %v7488
        %v7570 = vpack.c.b16 %v7498, %v7489
        %v7571 = vpack.c.b16 %v7499, %v7490
        %v7572 = vpack.c.b16 %v7500, %v7491
        %v7573 = vpack.c.b16 %v7501, %v7492
        %v7574 = vpack.c.b16 %v7502, %v7493
        %v7575 = vpack.c.b16 %v7503, %v7494
        %v7576 = vpack.c.b16 %v7504, %v7495
        %v7577 = vpack.c.b16 %v7505, %v7496
        %v7578 = vpack.c.b16 %v7515, %v7506
        %v7579 = vpack.c.b16 %v7516, %v7507
        %v7580 = vpack.c.b16 %v7517, %v7508
        %v7581 = vpack.c.b16 %v7518, %v7509
        %v7582 = vpack.c.b16 %v7519, %v7510
        %v7583 = vpack.c.b16 %v7520, %v7511
        %v7584 = vpack.c.b16 %v7521, %v7512
        %v7585 = vpack.c.b16 %v7522, %v7513
        %v7586 = vpack.c.b16 %v7523, %v7514
        %v7587 = vpack.c.b16 %v7533, %v7524
        %v7588 = vpack.c.b16 %v7534, %v7525
        %v7589 = vpack.c.b16 %v7535, %v7526
        %v7590 = vpack.c.b16 %v7536, %v7527
        %v7591 = vpack.c.b16 %v7537, %v7528
        %v7592 = vpack.c.b16 %v7538, %v7529
        %v7593 = vpack.c.b16 %v7539, %v7530
        %v7594 = vpack.c.b16 %v7540, %v7531
        %v7595 = vpack.c.b16 %v7541, %v7532
        %v7596 = vpack.c.b16 %v7551, %v7542
        %v7597 = vpack.c.b16 %v7552, %v7543
        %v7598 = vpack.c.b16 %v7553, %v7544
        %v7599 = vpack.c.b16 %v7554, %v7545
        %v7600 = vpack.c.b16 %v7555, %v7546
        %v7601 = vpack.c.b16 %v7556, %v7547
        %v7602 = vpack.c.b16 %v7557, %v7548
        %v7603 = vpack.c.b16 %v7558, %v7549
        %v7604 = vpack.c.b16 %v7559, %v7550
        %v7794 = vunpack.c.l.b16 %v7268
        %v7795 = vunpack.c.l.b16 %v7269
        %v7796 = vunpack.c.l.b16 %v7270
        %v7797 = vunpack.c.l.b16 %v7271
        %v7798 = vunpack.c.l.b16 %v7272
        %v7799 = vunpack.c.l.b16 %v7273
        %v7800 = vunpack.c.l.b16 %v7274
        %v7801 = vunpack.c.l.b16 %v7275
        %v7802 = vunpack.c.l.b16 %v7276
        %v7803 = vunpack.c.l.b16 %v7277
        %v7804 = vunpack.c.l.b16 %v7278
        %v7805 = vunpack.c.l.b16 %v7279
        %v7806 = vunpack.c.l.b16 %v7280
        %v7807 = vunpack.c.l.b16 %v7281
        %v7808 = vunpack.c.l.b16 %v7282
        %v7809 = vunpack.c.l.b16 %v7283
        %v7810 = vunpack.c.l.b16 %v7284
        %v7811 = vunpack.c.l.b16 %v7285
        %v7812 = vunpack.c.l.b16 %v7286
        %v7813 = vunpack.c.l.b16 %v7287
        %v7814 = vunpack.c.l.b16 %v7288
        %v7815 = vunpack.c.l.b16 %v7289
        %v7816 = vunpack.c.l.b16 %v7290
        %v7817 = vunpack.c.l.b16 %v7291
        %v7818 = vunpack.c.l.b16 %v7292
        %v7819 = vunpack.c.l.b16 %v7293
        %v7820 = vunpack.c.l.b16 %v7294
        %v7821 = vunpack.c.l.b16 %v7295
        %v7822 = vunpack.c.l.b16 %v7296
        %v7823 = vunpack.c.l.b16 %v7297
        %v7824 = vunpack.c.l.b16 %v7298
        %v7825 = vunpack.c.l.b16 %v7299
        %v7826 = vunpack.c.l.b16 %v7300
        %v7827 = vunpack.c.l.b16 %v7301
        %v7828 = vunpack.c.l.b16 %v7302
        %v7829 = vunpack.c.l.b16 %v7303
        %v7830 = vunpack.c.l.b16 %v7304
        %v7831 = vunpack.c.l.b16 %v7305
        %v7832 = vunpack.c.l.b16 %v7306
        %v7833 = vunpack.c.l.b16 %v7307
        %v7834 = vunpack.c.l.b16 %v7308
        %v7835 = vunpack.c.l.b16 %v7309
        %v7836 = vunpack.c.l.b16 %v7310
        %v7837 = vunpack.c.l.b16 %v7311
        %v7838 = vunpack.c.l.b16 %v7312
        %v7839 = vunpack.c.l.b16 %v7313
        %v7840 = vunpack.c.l.b16 %v7314
        %v7841 = vunpack.c.l.b16 %v7315
        %v7842 = vunpack.c.l.b16 %v7316
        %v7843 = vunpack.c.l.b16 %v7317
        %v7844 = vunpack.c.l.b16 %v7318
        %v7845 = vunpack.c.l.b16 %v7319
        %v7846 = vunpack.c.l.b16 %v7320
        %v7847 = vunpack.c.l.b16 %v7321
        %v7848 = vunpack.c.l.b16 %v7322
        %v7849 = vunpack.c.l.b16 %v7323
        %v7850 = vunpack.c.l.b16 %v7324
        %v7851 = vunpack.c.l.b16 %v7325
        %v7852 = vunpack.c.l.b16 %v7326
        %v7853 = vunpack.c.l.b16 %v7327
        %v7854 = vunpack.c.l.b16 %v7328
        %v7855 = vunpack.c.l.b16 %v7329
        %v7856 = vunpack.c.l.b16 %v7330
        %v7857 = vunpack.c.l.b16 %v7331
        %v7858 = vunpack.c.l.b16 %v7332
        %v7859 = vunpack.c.l.b16 %v7333
        %v7860 = vunpack.c.l.b16 %v7334
        %v7861 = vunpack.c.l.b16 %v7335
        %v7862 = vunpack.c.l.b16 %v7336
        %v7863 = vunpack.c.l.b16 %v7337
        %v7864 = vunpack.c.l.b16 %v7338
        %v7865 = vunpack.c.l.b16 %v7339
        %v7866 = vunpack.c.l.b16 %v7340
        %v7867 = vunpack.c.l.b16 %v7341
        %v7868 = vunpack.c.l.b16 %v7342
        %v7869 = vunpack.c.l.b16 %v7343
        %v7870 = vunpack.c.l.b16 %v7344
        %v7871 = vunpack.c.l.b16 %v7345
        %v7872 = vunpack.c.l.b16 %v7346
        %v7873 = vunpack.c.l.b16 %v7347
        %v7874 = vunpack.c.l.b16 %v7348
        %v7875 = vunpack.c.l.b16 %v7349
        %v7876 = vunpack.c.l.b16 %v7350
        %v7877 = vunpack.c.l.b16 %v7351
        %v7878 = vunpack.c.l.b16 %v7352
        %v7879 = vunpack.c.l.b16 %v7353
        %v7880 = vunpack.c.l.b16 %v7354
        %v7881 = vunpack.c.l.b16 %v7355
        %v7882 = vunpack.c.l.b16 %v7356
        %v7883 = vunpack.c.l.b16 %v7357
        %v7884 = vunpack.c.l.b16 %v7358
        %v7885 = vunpack.c.l.b16 %v7359
        %v7886 = vunpack.c.l.b16 %v7360
        %v7887 = vunpack.c.l.b16 %v7361
        %v7888 = vunpack.c.l.b16 %v7362
        %v7889 = vunpack.c.l.b16 %v7363
        %v7890 = vunpack.c.l.b16 %v7364
        %v7891 = vunpack.c.l.b16 %v7365
        %v7892 = vunpack.c.l.b16 %v7366
        %v7893 = vunpack.c.l.b16 %v7367
        %v7894 = vunpack.c.l.b16 %v7368
        %v7895 = vunpack.c.l.b16 %v7369
        %v7896 = vunpack.c.l.b16 %v7370
        %v7897 = vunpack.c.l.b16 %v7371
        %v7898 = vunpack.c.l.b16 %v7372
        %v7899 = vunpack.c.l.b16 %v7373
        %v7900 = vunpack.c.l.b16 %v7374
        %v7901 = vunpack.c.l.b16 %v7375
        %v7902 = vunpack.c.l.b16 %v7376
        %v7903 = vunpack.c.l.b16 %v7377
        %v7904 = vunpack.c.l.b16 %v7378
        %v7905 = vunpack.c.l.b16 %v7379
        %v7906 = vunpack.c.l.b16 %v7380
        %v7907 = vunpack.c.l.b16 %v7381
        %v7908 = vunpack.c.l.b16 %v7382
        %v7909 = vunpack.c.l.b16 %v7383
        %v7910 = vunpack.c.l.b16 %v7384
        %v7911 = vunpack.c.l.b16 %v7385
        %v7912 = vunpack.c.l.b16 %v7386
        %v7913 = vunpack.c.l.b16 %v7387
        %v7914 = vunpack.c.l.b16 %v7388
        %v7915 = vunpack.c.l.b16 %v7389
        %v7916 = vunpack.c.l.b16 %v7390
        %v7917 = vunpack.c.l.b16 %v7391
        %v7918 = vunpack.c.l.b16 %v7392
        %v7919 = vunpack.c.l.b16 %v7393
        %v7920 = vunpack.c.l.b16 %v7394
        %v7921 = vunpack.c.l.b16 %v7395
        %v7922 = vunpack.c.l.b16 %v7396
        %v7923 = vunpack.c.l.b16 %v7397
        %v7924 = vunpack.c.l.b16 %v7398
        %v7925 = vunpack.c.l.b16 %v7399
        %v7926 = vunpack.c.l.b16 %v7400
        %v7927 = vunpack.c.l.b16 %v7401
        %v7928 = vunpack.c.l.b16 %v7402
        %v7929 = vunpack.c.l.b16 %v7403
        %v7930 = vunpack.c.l.b16 %v7404
        %v7931 = vunpack.c.l.b16 %v7405
        %v7932 = vunpack.c.l.b16 %v7406
        %v7933 = vunpack.c.l.b16 %v7407
        %v7934 = vunpack.c.l.b16 %v7408
        %v7935 = vunpack.c.l.b16 %v7409
        %v7936 = vunpack.c.l.b16 %v7410
        %v7937 = vunpack.c.l.b16 %v7411
        %v7938 = vpack.c.b16 %v7795, %v7794
        %v7939 = vpack.c.b16 %v7797, %v7796
        %v7940 = vpack.c.b16 %v7799, %v7798
        %v7941 = vpack.c.b16 %v7801, %v7800
        %v7942 = vpack.c.b16 %v7803, %v7802
        %v7943 = vpack.c.b16 %v7805, %v7804
        %v7944 = vpack.c.b16 %v7807, %v7806
        %v7945 = vpack.c.b16 %v7809, %v7808
        %v7946 = vpack.c.b16 %v7811, %v7810
        %v7947 = vpack.c.b16 %v7813, %v7812
        %v7948 = vpack.c.b16 %v7815, %v7814
        %v7949 = vpack.c.b16 %v7817, %v7816
        %v7950 = vpack.c.b16 %v7819, %v7818
        %v7951 = vpack.c.b16 %v7821, %v7820
        %v7952 = vpack.c.b16 %v7823, %v7822
        %v7953 = vpack.c.b16 %v7825, %v7824
        %v7954 = vpack.c.b16 %v7827, %v7826
        %v7955 = vpack.c.b16 %v7829, %v7828
        %v7956 = vpack.c.b16 %v7831, %v7830
        %v7957 = vpack.c.b16 %v7833, %v7832
        %v7958 = vpack.c.b16 %v7835, %v7834
        %v7959 = vpack.c.b16 %v7837, %v7836
        %v7960 = vpack.c.b16 %v7839, %v7838
        %v7961 = vpack.c.b16 %v7841, %v7840
        %v7962 = vpack.c.b16 %v7843, %v7842
        %v7963 = vpack.c.b16 %v7845, %v7844
        %v7964 = vpack.c.b16 %v7847, %v7846
        %v7965 = vpack.c.b16 %v7849, %v7848
        %v7966 = vpack.c.b16 %v7851, %v7850
        %v7967 = vpack.c.b16 %v7853, %v7852
        %v7968 = vpack.c.b16 %v7855, %v7854
        %v7969 = vpack.c.b16 %v7857, %v7856
        %v7970 = vpack.c.b16 %v7859, %v7858
        %v7971 = vpack.c.b16 %v7861, %v7860
        %v7972 = vpack.c.b16 %v7863, %v7862
        %v7973 = vpack.c.b16 %v7865, %v7864
        %v7974 = vpack.c.b16 %v7867, %v7866
        %v7975 = vpack.c.b16 %v7869, %v7868
        %v7976 = vpack.c.b16 %v7871, %v7870
        %v7977 = vpack.c.b16 %v7873, %v7872
        %v7978 = vpack.c.b16 %v7875, %v7874
        %v7979 = vpack.c.b16 %v7877, %v7876
        %v7980 = vpack.c.b16 %v7879, %v7878
        %v7981 = vpack.c.b16 %v7881, %v7880
        %v7982 = vpack.c.b16 %v7883, %v7882
        %v7983 = vpack.c.b16 %v7885, %v7884
        %v7984 = vpack.c.b16 %v7887, %v7886
        %v7985 = vpack.c.b16 %v7889, %v7888
        %v7986 = vpack.c.b16 %v7891, %v7890
        %v7987 = vpack.c.b16 %v7893, %v7892
        %v7988 = vpack.c.b16 %v7895, %v7894
        %v7989 = vpack.c.b16 %v7897, %v7896
        %v7990 = vpack.c.b16 %v7899, %v7898
        %v7991 = vpack.c.b16 %v7901, %v7900
        %v7992 = vpack.c.b16 %v7903, %v7902
        %v7993 = vpack.c.b16 %v7905, %v7904
        %v7994 = vpack.c.b16 %v7907, %v7906
        %v7995 = vpack.c.b16 %v7909, %v7908
        %v7996 = vpack.c.b16 %v7911, %v7910
        %v7997 = vpack.c.b16 %v7913, %v7912
        %v7998 = vpack.c.b16 %v7915, %v7914
        %v7999 = vpack.c.b16 %v7917, %v7916
        %v8000 = vpack.c.b16 %v7919, %v7918
        %v8001 = vpack.c.b16 %v7921, %v7920
        %v8002 = vpack.c.b16 %v7923, %v7922
        %v8003 = vpack.c.b16 %v7925, %v7924
        %v8004 = vpack.c.b16 %v7927, %v7926
        %v8005 = vpack.c.b16 %v7929, %v7928
        %v8006 = vpack.c.b16 %v7931, %v7930
        %v8007 = vpack.c.b16 %v7933, %v7932
        %v8008 = vpack.c.b16 %v7935, %v7934
        %v8009 = vpack.c.b16 %v7937, %v7936
        %8082 = vmatprep.subr.bf16.mxu0 0
        %8083 = vmatpush1.bf16.msra.mxu0 %v7945
        %8084 = vmatprep.subr.bf16.mxu0 0
        %8085 = vmatpush1.bf16.msra.mxu0 %v7944
        %8086 = vmatprep.subr.bf16.mxu0 0
        %8087 = vmatpush1.bf16.msra.mxu0 %v7943
        %8088 = vmatprep.subr.bf16.mxu0 0
        %8089 = vmatpush1.bf16.msra.mxu0 %v7942
        %8090 = vmatprep.subr.bf16.mxu0 0
        %8091 = vmatpush1.bf16.msra.mxu0 %v7941
        %8092 = vmatprep.subr.bf16.mxu0 0
        %8093 = vmatpush1.bf16.msra.mxu0 %v7940
        %8094 = vmatprep.subr.bf16.mxu0 0
        %8095 = vmatpush1.bf16.msra.mxu0 %v7939
        %8096 = vmatprep.subr.bf16.mxu0 0
        %8097 = vmatpush1.bf16.msra.mxu0 %v7938
        %8098 = vmatprep.subr.bf16.mxu0 0
        %8099 = vmatpush2.bf16.msra.mxu0 %v7953
        %8100 = vmatprep.subr.bf16.mxu0 0
        %8101 = vmatpush2.bf16.msra.mxu0 %v7952
        %8102 = vmatprep.subr.bf16.mxu0 0
        %8103 = vmatpush2.bf16.msra.mxu0 %v7951
        %8104 = vmatprep.subr.bf16.mxu0 0
        %8105 = vmatpush2.bf16.msra.mxu0 %v7950
        %8106 = vmatprep.subr.bf16.mxu0 0
        %8107 = vmatpush2.bf16.msra.mxu0 %v7949
        %8108 = vmatprep.subr.bf16.mxu0 0
        %8109 = vmatpush2.bf16.msra.mxu0 %v7948
        %8110 = vmatprep.subr.bf16.mxu0 0
        %8111 = vmatpush2.bf16.msra.mxu0 %v7947
        %8112 = vmatprep.subr.bf16.mxu0 0
        %8113 = vmatpush2.bf16.msra.mxu0 %v7946
        %8114 = vmatprep.mubr.bf16.mxu0 %v7561
        %8115 = vmatmul.mubr.bf16.gmra.mxu0 %v7560
        %v8116 = vpop.f32.mrf.mxu0
        %v8117 = vadd.f32 %v7418, %v8116
        %v8118 = vpop.f32.mrf.mxu0
        %v8119 = vpop.f32.mrf.mxu0
        %v8120 = vadd.f32 %v7418, %v8119
        %v8121 = vpop.f32.mrf.mxu0
        %8122 = vmatprep.mubr.bf16.mxu0 %v7570
        %8123 = vmatmul.mubr.bf16.gmra.mxu0 %v7569
        %v8124 = vpop.f32.mrf.mxu0
        %v8125 = vadd.f32 %v7418, %v8124
        %v8126 = vpop.f32.mrf.mxu0
        %v8127 = vpop.f32.mrf.mxu0
        %v8128 = vadd.f32 %v7418, %v8127
        %v8129 = vpop.f32.mrf.mxu0
        %8130 = vmatprep.mubr.bf16.mxu0 %v7579
        %8131 = vmatmul.mubr.bf16.gmra.mxu0 %v7578
        %v8132 = vpop.f32.mrf.mxu0
        %v8133 = vadd.f32 %v7418, %v8132
        %v8134 = vpop.f32.mrf.mxu0
        %v8135 = vpop.f32.mrf.mxu0
        %v8136 = vadd.f32 %v7418, %v8135
        %v8137 = vpop.f32.mrf.mxu0
        %8138 = vmatprep.mubr.bf16.mxu0 %v7588
        %8139 = vmatmul.mubr.bf16.gmra.mxu0 %v7587
        %v8140 = vpop.f32.mrf.mxu0
        %v8141 = vadd.f32 %v7418, %v8140
        %v8142 = vpop.f32.mrf.mxu0
        %v8143 = vpop.f32.mrf.mxu0
        %v8144 = vadd.f32 %v7418, %v8143
        %v8145 = vpop.f32.mrf.mxu0
        %8146 = vmatprep.mubr.bf16.mxu0 %v7597
        %8147 = vmatmul.mubr.bf16.gmra.mxu0 %v7596
        %v8148 = vpop.f32.mrf.mxu0
        %v8149 = vadd.f32 %v7418, %v8148
        %v8150 = vpop.f32.mrf.mxu0
        %v8151 = vpop.f32.mrf.mxu0
        %v8152 = vadd.f32 %v7418, %v8151
        %v8153 = vpop.f32.mrf.mxu0
        %8154 = vdwg.mxu0
        %8155 = vmatprep.subr.bf16.mxu0 0
        %8156 = vmatpush1.bf16.msra.mxu0 %v7961
        %8157 = vmatprep.subr.bf16.mxu0 0
        %8158 = vmatpush1.bf16.msra.mxu0 %v7960
        %8159 = vmatprep.subr.bf16.mxu0 0
        %8160 = vmatpush1.bf16.msra.mxu0 %v7959
        %8161 = vmatprep.subr.bf16.mxu0 0
        %8162 = vmatpush1.bf16.msra.mxu0 %v7958
        %8163 = vmatprep.subr.bf16.mxu0 0
        %8164 = vmatpush1.bf16.msra.mxu0 %v7957
        %8165 = vmatprep.subr.bf16.mxu0 0
        %8166 = vmatpush1.bf16.msra.mxu0 %v7956
        %8167 = vmatprep.subr.bf16.mxu0 0
        %8168 = vmatpush1.bf16.msra.mxu0 %v7955
        %8169 = vmatprep.subr.bf16.mxu0 0
        %8170 = vmatpush1.bf16.msra.mxu0 %v7954
        %8171 = vmatprep.subr.bf16.mxu0 0
        %8172 = vmatpush2.bf16.msra.mxu0 %v7969
        %8173 = vmatprep.subr.bf16.mxu0 0
        %8174 = vmatpush2.bf16.msra.mxu0 %v7968
        %8175 = vmatprep.subr.bf16.mxu0 0
        %8176 = vmatpush2.bf16.msra.mxu0 %v7967
        %8177 = vmatprep.subr.bf16.mxu0 0
        %8178 = vmatpush2.bf16.msra.mxu0 %v7966
        %8179 = vmatprep.subr.bf16.mxu0 0
        %8180 = vmatpush2.bf16.msra.mxu0 %v7965
        %8181 = vmatprep.subr.bf16.mxu0 0
        %8182 = vmatpush2.bf16.msra.mxu0 %v7964
        %8183 = vmatprep.subr.bf16.mxu0 0
        %8184 = vmatpush2.bf16.msra.mxu0 %v7963
        %8185 = vmatprep.subr.bf16.mxu0 0
        %8186 = vmatpush2.bf16.msra.mxu0 %v7962
        %8187 = vmatprep.mubr.bf16.mxu0 %v7563
        %8188 = vmatmul.mubr.bf16.gmra.mxu0 %v7562
        %v8189 = vpop.f32.mrf.mxu0
        %v8190 = vadd.f32 %v8117, %v8189
        %v8191 = vpop.f32.mrf.mxu0
        %v8192 = vpop.f32.mrf.mxu0
        %v8193 = vadd.f32 %v8120, %v8192
        %v8194 = vpop.f32.mrf.mxu0
        %8195 = vmatprep.mubr.bf16.mxu0 %v7572
        %8196 = vmatmul.mubr.bf16.gmra.mxu0 %v7571
        %v8197 = vpop.f32.mrf.mxu0
        %v8198 = vadd.f32 %v8125, %v8197
        %v8199 = vpop.f32.mrf.mxu0
        %v8200 = vpop.f32.mrf.mxu0
        %v8201 = vadd.f32 %v8128, %v8200
        %v8202 = vpop.f32.mrf.mxu0
        %8203 = vmatprep.mubr.bf16.mxu0 %v7581
        %8204 = vmatmul.mubr.bf16.gmra.mxu0 %v7580
        %v8205 = vpop.f32.mrf.mxu0
        %v8206 = vadd.f32 %v8133, %v8205
        %v8207 = vpop.f32.mrf.mxu0
        %v8208 = vpop.f32.mrf.mxu0
        %v8209 = vadd.f32 %v8136, %v8208
        %v8210 = vpop.f32.mrf.mxu0
        %8211 = vmatprep.mubr.bf16.mxu0 %v7590
        %8212 = vmatmul.mubr.bf16.gmra.mxu0 %v7589
        %v8213 = vpop.f32.mrf.mxu0
        %v8214 = vadd.f32 %v8141, %v8213
        %v8215 = vpop.f32.mrf.mxu0
        %v8216 = vpop.f32.mrf.mxu0
        %v8217 = vadd.f32 %v8144, %v8216
        %v8218 = vpop.f32.mrf.mxu0
        %8219 = vmatprep.mubr.bf16.mxu0 %v7599
        %8220 = vmatmul.mubr.bf16.gmra.mxu0 %v7598
        %v8221 = vpop.f32.mrf.mxu0
        %v8222 = vadd.f32 %v8149, %v8221
        %v8223 = vpop.f32.mrf.mxu0
        %v8224 = vpop.f32.mrf.mxu0
        %v8225 = vadd.f32 %v8152, %v8224
        %v8226 = vpop.f32.mrf.mxu0
        %8227 = vdwg.mxu0
        %8228 = vmatprep.subr.bf16.mxu0 0
        %8229 = vmatpush1.bf16.msra.mxu0 %v7977
        %8230 = vmatprep.subr.bf16.mxu0 0
        %8231 = vmatpush1.bf16.msra.mxu0 %v7976
        %8232 = vmatprep.subr.bf16.mxu0 0
        %8233 = vmatpush1.bf16.msra.mxu0 %v7975
        %8234 = vmatprep.subr.bf16.mxu0 0
        %8235 = vmatpush1.bf16.msra.mxu0 %v7974
        %8236 = vmatprep.subr.bf16.mxu0 0
        %8237 = vmatpush1.bf16.msra.mxu0 %v7973
        %8238 = vmatprep.subr.bf16.mxu0 0
        %8239 = vmatpush1.bf16.msra.mxu0 %v7972
        %8240 = vmatprep.subr.bf16.mxu0 0
        %8241 = vmatpush1.bf16.msra.mxu0 %v7971
        %8242 = vmatprep.subr.bf16.mxu0 0
        %8243 = vmatpush1.bf16.msra.mxu0 %v7970
        %8244 = vmatprep.subr.bf16.mxu0 0
        %8245 = vmatpush2.bf16.msra.mxu0 %v7985
        %8246 = vmatprep.subr.bf16.mxu0 0
        %8247 = vmatpush2.bf16.msra.mxu0 %v7984
        %8248 = vmatprep.subr.bf16.mxu0 0
        %8249 = vmatpush2.bf16.msra.mxu0 %v7983
        %8250 = vmatprep.subr.bf16.mxu0 0
        %8251 = vmatpush2.bf16.msra.mxu0 %v7982
        %8252 = vmatprep.subr.bf16.mxu0 0
        %8253 = vmatpush2.bf16.msra.mxu0 %v7981
        %8254 = vmatprep.subr.bf16.mxu0 0
        %8255 = vmatpush2.bf16.msra.mxu0 %v7980
        %8256 = vmatprep.subr.bf16.mxu0 0
        %8257 = vmatpush2.bf16.msra.mxu0 %v7979
        %8258 = vmatprep.subr.bf16.mxu0 0
        %8259 = vmatpush2.bf16.msra.mxu0 %v7978
        %8260 = vmatprep.mubr.bf16.mxu0 %v7565
        %8261 = vmatmul.mubr.bf16.gmra.mxu0 %v7564
        %v8262 = vpop.f32.mrf.mxu0
        %v8263 = vadd.f32 %v8190, %v8262
        %v8264 = vpop.f32.mrf.mxu0
        %v8265 = vpop.f32.mrf.mxu0
        %v8266 = vadd.f32 %v8193, %v8265
        %v8267 = vpop.f32.mrf.mxu0
        %8268 = vmatprep.mubr.bf16.mxu0 %v7574
        %8269 = vmatmul.mubr.bf16.gmra.mxu0 %v7573
        %v8270 = vpop.f32.mrf.mxu0
        %v8271 = vadd.f32 %v8198, %v8270
        %v8272 = vpop.f32.mrf.mxu0
        %v8273 = vpop.f32.mrf.mxu0
        %v8274 = vadd.f32 %v8201, %v8273
        %v8275 = vpop.f32.mrf.mxu0
        %8276 = vmatprep.mubr.bf16.mxu0 %v7583
        %8277 = vmatmul.mubr.bf16.gmra.mxu0 %v7582
        %v8278 = vpop.f32.mrf.mxu0
        %v8279 = vadd.f32 %v8206, %v8278
        %v8280 = vpop.f32.mrf.mxu0
        %v8281 = vpop.f32.mrf.mxu0
        %v8282 = vadd.f32 %v8209, %v8281
        %v8283 = vpop.f32.mrf.mxu0
        %8284 = vmatprep.mubr.bf16.mxu0 %v7592
        %8285 = vmatmul.mubr.bf16.gmra.mxu0 %v7591
        %v8286 = vpop.f32.mrf.mxu0
        %v8287 = vadd.f32 %v8214, %v8286
        %v8288 = vpop.f32.mrf.mxu0
        %v8289 = vpop.f32.mrf.mxu0
        %v8290 = vadd.f32 %v8217, %v8289
        %v8291 = vpop.f32.mrf.mxu0
        %8292 = vmatprep.mubr.bf16.mxu0 %v7601
        %8293 = vmatmul.mubr.bf16.gmra.mxu0 %v7600
        %v8294 = vpop.f32.mrf.mxu0
        %v8295 = vadd.f32 %v8222, %v8294
        %v8296 = vpop.f32.mrf.mxu0
        %v8297 = vpop.f32.mrf.mxu0
        %v8298 = vadd.f32 %v8225, %v8297
        %v8299 = vpop.f32.mrf.mxu0
        %8300 = vdwg.mxu0
        %8301 = vmatprep.subr.bf16.mxu0 0
        %8302 = vmatpush1.bf16.msra.mxu0 %v7993
        %8303 = vmatprep.subr.bf16.mxu0 0
        %8304 = vmatpush1.bf16.msra.mxu0 %v7992
        %8305 = vmatprep.subr.bf16.mxu0 0
        %8306 = vmatpush1.bf16.msra.mxu0 %v7991
        %8307 = vmatprep.subr.bf16.mxu0 0
        %8308 = vmatpush1.bf16.msra.mxu0 %v7990
        %8309 = vmatprep.subr.bf16.mxu0 0
        %8310 = vmatpush1.bf16.msra.mxu0 %v7989
        %8311 = vmatprep.subr.bf16.mxu0 0
        %8312 = vmatpush1.bf16.msra.mxu0 %v7988
        %8313 = vmatprep.subr.bf16.mxu0 0
        %8314 = vmatpush1.bf16.msra.mxu0 %v7987
        %8315 = vmatprep.subr.bf16.mxu0 0
        %8316 = vmatpush1.bf16.msra.mxu0 %v7986
        %8317 = vmatprep.subr.bf16.mxu0 0
        %8318 = vmatpush2.bf16.msra.mxu0 %v8001
        %8319 = vmatprep.subr.bf16.mxu0 0
        %8320 = vmatpush2.bf16.msra.mxu0 %v8000
        %8321 = vmatprep.subr.bf16.mxu0 0
        %8322 = vmatpush2.bf16.msra.mxu0 %v7999
        %8323 = vmatprep.subr.bf16.mxu0 0
        %8324 = vmatpush2.bf16.msra.mxu0 %v7998
        %8325 = vmatprep.subr.bf16.mxu0 0
        %8326 = vmatpush2.bf16.msra.mxu0 %v7997
        %8327 = vmatprep.subr.bf16.mxu0 0
        %8328 = vmatpush2.bf16.msra.mxu0 %v7996
        %8329 = vmatprep.subr.bf16.mxu0 0
        %8330 = vmatpush2.bf16.msra.mxu0 %v7995
        %8331 = vmatprep.subr.bf16.mxu0 0
        %8332 = vmatpush2.bf16.msra.mxu0 %v7994
        %8333 = vmatprep.mubr.bf16.mxu0 %v7567
        %8334 = vmatmul.mubr.bf16.gmra.mxu0 %v7566
        %v8335 = vpop.f32.mrf.mxu0
        %v8336 = vadd.f32 %v8263, %v8335
        %v8337 = vpop.f32.mrf.mxu0
        %v8338 = vpop.f32.mrf.mxu0
        %v8339 = vadd.f32 %v8266, %v8338
        %v8340 = vpop.f32.mrf.mxu0
        %8341 = vmatprep.mubr.bf16.mxu0 %v7576
        %8342 = vmatmul.mubr.bf16.gmra.mxu0 %v7575
        %v8343 = vpop.f32.mrf.mxu0
        %v8344 = vadd.f32 %v8271, %v8343
        %v8345 = vpop.f32.mrf.mxu0
        %v8346 = vpop.f32.mrf.mxu0
        %v8347 = vadd.f32 %v8274, %v8346
        %v8348 = vpop.f32.mrf.mxu0
        %8349 = vmatprep.mubr.bf16.mxu0 %v7585
        %8350 = vmatmul.mubr.bf16.gmra.mxu0 %v7584
        %v8351 = vpop.f32.mrf.mxu0
        %v8352 = vadd.f32 %v8279, %v8351
        %v8353 = vpop.f32.mrf.mxu0
        %v8354 = vpop.f32.mrf.mxu0
        %v8355 = vadd.f32 %v8282, %v8354
        %v8356 = vpop.f32.mrf.mxu0
        %8357 = vmatprep.mubr.bf16.mxu0 %v7594
        %8358 = vmatmul.mubr.bf16.gmra.mxu0 %v7593
        %v8359 = vpop.f32.mrf.mxu0
        %v8360 = vadd.f32 %v8287, %v8359
        %v8361 = vpop.f32.mrf.mxu0
        %v8362 = vpop.f32.mrf.mxu0
        %v8363 = vadd.f32 %v8290, %v8362
        %v8364 = vpop.f32.mrf.mxu0
        %8365 = vmatprep.mubr.bf16.mxu0 %v7603
        %8366 = vmatmul.mubr.bf16.gmra.mxu0 %v7602
        %v8367 = vpop.f32.mrf.mxu0
        %v8368 = vadd.f32 %v8295, %v8367
        %v8369 = vpop.f32.mrf.mxu0
        %v8370 = vpop.f32.mrf.mxu0
        %v8371 = vadd.f32 %v8298, %v8370
        %v8372 = vpop.f32.mrf.mxu0
        %8373 = vdwg.mxu0
        %8374 = vmatprep.subr.bf16.mxu0 0
        %8375 = vmatpush1.bf16.msra.mxu0 %v8009
        %8376 = vmatprep.subr.bf16.mxu0 0
        %8377 = vmatpush1.bf16.msra.mxu0 %v8008
        %8378 = vmatprep.subr.bf16.mxu0 0
        %8379 = vmatpush1.bf16.msra.mxu0 %v8007
        %8380 = vmatprep.subr.bf16.mxu0 0
        %8381 = vmatpush1.bf16.msra.mxu0 %v8006
        %8382 = vmatprep.subr.bf16.mxu0 0
        %8383 = vmatpush1.bf16.msra.mxu0 %v8005
        %8384 = vmatprep.subr.bf16.mxu0 0
        %8385 = vmatpush1.bf16.msra.mxu0 %v8004
        %8386 = vmatprep.subr.bf16.mxu0 0
        %8387 = vmatpush1.bf16.msra.mxu0 %v8003
        %8388 = vmatprep.subr.bf16.mxu0 0
        %8389 = vmatpush1.bf16.msra.mxu0 %v8002
        %8390 = vmatprep.subr.bf16.mxu0 0
        %8391 = vmatpush2.bf16.msra.mxu0 0
        %8392 = vmatprep.subr.bf16.mxu0 0
        %8393 = vmatpush2.bf16.msra.mxu0 0
        %8394 = vmatprep.subr.bf16.mxu0 0
        %8395 = vmatpush2.bf16.msra.mxu0 0
        %8396 = vmatprep.subr.bf16.mxu0 0
        %8397 = vmatpush2.bf16.msra.mxu0 0
        %8398 = vmatprep.subr.bf16.mxu0 0
        %8399 = vmatpush2.bf16.msra.mxu0 0
        %8400 = vmatprep.subr.bf16.mxu0 0
        %8401 = vmatpush2.bf16.msra.mxu0 0
        %8402 = vmatprep.subr.bf16.mxu0 0
        %8403 = vmatpush2.bf16.msra.mxu0 0
        %8404 = vmatprep.subr.bf16.mxu0 0
        %8405 = vmatpush2.bf16.msra.mxu0 0
        %8406 = vmatprep.mubr.bf16.mxu0 0
        %8407 = vmatmul.mubr.bf16.gmra.mxu0 %v7568
        %v8408 = vpop.f32.mrf.mxu0
        %v8409 = vadd.f32 %v8336, %v8408
        %v8410 = vpop.f32.mrf.mxu0
        %v8411 = vpop.f32.mrf.mxu0
        %v8412 = vadd.f32 %v8339, %v8411
        %v8413 = vpop.f32.mrf.mxu0
        %8414 = vmatprep.mubr.bf16.mxu0 0
        %8415 = vmatmul.mubr.bf16.gmra.mxu0 %v7577
        %v8416 = vpop.f32.mrf.mxu0
        %v8417 = vadd.f32 %v8344, %v8416
        %v8418 = vpop.f32.mrf.mxu0
        %v8419 = vpop.f32.mrf.mxu0
        %v8420 = vadd.f32 %v8347, %v8419
        %v8421 = vpop.f32.mrf.mxu0
        %8422 = vmatprep.mubr.bf16.mxu0 0
        %8423 = vmatmul.mubr.bf16.gmra.mxu0 %v7586
        %v8424 = vpop.f32.mrf.mxu0
        %v8425 = vadd.f32 %v8352, %v8424
        %v8426 = vpop.f32.mrf.mxu0
        %v8427 = vpop.f32.mrf.mxu0
        %v8428 = vadd.f32 %v8355, %v8427
        %v8429 = vpop.f32.mrf.mxu0
        %8430 = vmatprep.mubr.bf16.mxu0 0
        %8431 = vmatmul.mubr.bf16.gmra.mxu0 %v7595
        %v8432 = vpop.f32.mrf.mxu0
        %v8433 = vadd.f32 %v8360, %v8432
        %v8434 = vpop.f32.mrf.mxu0
        %v8435 = vpop.f32.mrf.mxu0
        %v8436 = vadd.f32 %v8363, %v8435
        %v8437 = vpop.f32.mrf.mxu0
        %8438 = vmatprep.mubr.bf16.mxu0 0
        %8439 = vmatmul.mubr.bf16.gmra.mxu0 %v7604
        %v8440 = vpop.f32.mrf.mxu0
        %v8441 = vadd.f32 %v8368, %v8440
        %v8442 = vpop.f32.mrf.mxu0
        %v8443 = vpop.f32.mrf.mxu0
        %v8444 = vadd.f32 %v8371, %v8443
        %v8445 = vpop.f32.mrf.mxu0
        %8446 = vdwg.mxu0
        %v8447 = vmax.f32 %v8409, 0.0
        %v8448 = vmax.f32 %v8412, 0.0
        %v8449 = vmax.f32 %v8417, 0.0
        %v8450 = vmax.f32 %v8420, 0.0
        %v8451 = vmax.f32 %v8425, 0.0
        %v8452 = vmax.f32 %v8428, 0.0
        %v8453 = vmax.f32 %v8433, 0.0
        %v8454 = vmax.f32 %v8436, 0.0
        %v8455 = vmax.f32 %v8441, 0.0
        %v8456 = vmax.f32 %v8444, 0.0
        %8457 = vst [vmem:[#allocation7] sm:$0xff] %v8447
        %8458 = vst [vmem:[#allocation7 + $0x8] sm:$0xff] %v8448
        %8459 = vst [vmem:[#allocation7 + $0x10] sm:$0xff] %v8449
        %8460 = vst [vmem:[#allocation7 + $0x18] sm:$0xff] %v8450
        %8461 = vst [vmem:[#allocation7 + $0x20] sm:$0xff] %v8451
        %8462 = vst [vmem:[#allocation7 + $0x28] sm:$0xff] %v8452
        %8463 = vst [vmem:[#allocation7 + $0x30] sm:$0xff] %v8453
        %8464 = vst [vmem:[#allocation7 + $0x38] sm:$0xff] %v8454
        %8465 = vst [vmem:[#allocation7 + $0x40] sm:$0xff] %v8455
        %8466 = vst [vmem:[#allocation7 + $0x48] sm:$0xff] %v8456
        %v8467 = vld [vmem:[#allocation7] ss:$2 sm:$0xf]
        %v8468 = vld [vmem:[%s6167] ss:$2 sm:$0xf]
        %s8469 = scalar_lea.vmem [#allocation7], 10
        %v8470 = vld [vmem:[%s8469] ss:$2 sm:$0xf]
        %s8471 = scalar_lea.vmem [#allocation7], 11
        %v8472 = vld [vmem:[%s8471] ss:$2 sm:$0xf]
        %v8473 = vmax.f32 %v8467, %v8468
        %v8474 = vmax.f32 %v8470, %v8472
        %v8475 = vmax.f32 %v8473, %v8474
        %v8476 = vpack.c.bf16 %v8475, %v8475
        %v8478 = vunpack.c.l.b16 %v8476
        %v8479 = vpack.c.b16 %v8478, %v8478
        %v8481 = vshll.u32 %v8479, 16
        %v8483 = vrot.slane %v8481, 5
        %v8484 = vshrl.u32 %v8479, 16
        %v8486 = vrot.slane %v8484, 4
        %v8487 = vor.u32 %v8486, %v8483
        %v8488 = vrot.slane %v8487, 4
        %v8491 = vld [vmem:[#allocation4] sm:$0x8]
        %v8492 = vsel %vm426, %v8483, %v8491
        %8493 = vst [vmem:[#allocation4] sm:$0x8] %v8492
        %v8494 = vld [vmem:[#allocation4 + $0x4] sm:$0x3]
        %v8495 = vsel %vm354, %v8488, %v8494
        %8496 = vst [vmem:[#allocation4 + $0x4] sm:$0x3] %v8495
        %s8497 = scalar_lea.vmem [#allocation7], 20
        %v8498 = vld [vmem:[%s8497] ss:$2 sm:$0xf]
        %s8499 = scalar_lea.vmem [#allocation7], 21
        %v8500 = vld [vmem:[%s8499] ss:$2 sm:$0xf]
        %s8501 = scalar_lea.vmem [#allocation7], 30
        %v8502 = vld [vmem:[%s8501] ss:$2 sm:$0xf]
        %s8503 = scalar_lea.vmem [#allocation7], 31
        %v8504 = vld [vmem:[%s8503] ss:$2 sm:$0xf]
        %v8505 = vmax.f32 %v8498, %v8500
        %v8506 = vmax.f32 %v8502, %v8504
        %v8507 = vmax.f32 %v8505, %v8506
        %v8508 = vpack.c.bf16 %v8507, %v8507
        %v8510 = vunpack.c.l.b16 %v8508
        %v8511 = vpack.c.b16 %v8510, %v8510
        %v8513 = vshrl.u32 %v8511, 16
        %v8515 = vrot.slane %v8513, 5
        %v8516 = vshll.u32 %v8511, 16
        %v8518 = vrot.slane %v8516, 6
        %v8519 = vor.u32 %v8515, %v8518
        %v8520 = vrot.slane %v8515, 4
        %v8523 = vld [vmem:[#allocation4 + $0x4] sm:$0xc]
        %v8524 = vsel %vm387, %v8519, %v8523
        %8525 = vst [vmem:[#allocation4 + $0x4] sm:$0xc] %v8524
        %v8526 = vld [vmem:[#allocation4 + $0x8] sm:$0x1]
        %v8527 = vsel %vm468, %v8520, %v8526
        %8528 = vst [vmem:[#allocation4 + $0x8] sm:$0x1] %v8527
        %s8529 = scalar_lea.vmem [#allocation7], 40
        %v8530 = vld [vmem:[%s8529] ss:$2 sm:$0xf]
        %s8531 = scalar_lea.vmem [#allocation7], 41
        %v8532 = vld [vmem:[%s8531] ss:$2 sm:$0xf]
        %s8533 = scalar_lea.vmem [#allocation7], 50
        %v8534 = vld [vmem:[%s8533] ss:$2 sm:$0xf]
        %s8535 = scalar_lea.vmem [#allocation7], 51
        %v8536 = vld [vmem:[%s8535] ss:$2 sm:$0xf]
        %v8537 = vmax.f32 %v8530, %v8532
        %v8538 = vmax.f32 %v8534, %v8536
        %v8539 = vmax.f32 %v8537, %v8538
        %v8540 = vpack.c.bf16 %v8539, %v8539
        %v8542 = vunpack.c.l.b16 %v8540
        %v8543 = vpack.c.b16 %v8542, %v8542
        %v8545 = vshrl.u32 %v8543, 16
        %v8547 = vrot.slane %v8545, 6
        %v8548 = vshll.u32 %v8543, 16
        %v8550 = vrot.slane %v8548, 7
        %v8551 = vor.u32 %v8547, %v8550
        %vm8553 = vsmask.f32 3334
        %vm8554 = vmand %vm346, %vm8553
        %v8555 = vld [vmem:[#allocation4 + $0x8] sm:$0xe]
        %v8556 = vsel %vm8554, %v8551, %v8555
        %8557 = vst [vmem:[#allocation4 + $0x8] sm:$0xe] %v8556
        %s8558 = scalar_lea.vmem [#allocation7], 60
        %v8559 = vld [vmem:[%s8558] ss:$2 sm:$0xf]
        %s8560 = scalar_lea.vmem [#allocation7], 61
        %v8561 = vld [vmem:[%s8560] ss:$2 sm:$0xf]
        %s8562 = scalar_lea.vmem [#allocation7], 70
        %v8563 = vld [vmem:[%s8562] ss:$2 sm:$0xf]
        %s8564 = scalar_lea.vmem [#allocation7], 71
        %v8565 = vld [vmem:[%s8564] ss:$2 sm:$0xf]
        %v8566 = vmax.f32 %v8559, %v8561
        %v8567 = vmax.f32 %v8563, %v8565
        %v8568 = vmax.f32 %v8566, %v8567
        %v8569 = vpack.c.bf16 %v8568, %v8568
        %v8571 = vunpack.c.l.b16 %v8569
        %v8572 = vpack.c.b16 %v8571, %v8571
        %v8574 = vshrl.u32 %v8572, 16
        %v8576 = vrot.slane %v8574, 7
        %v8577 = vshll.u32 %v8572, 16
        %v8579 = vor.u32 %v8576, %v8577
        %vm8581 = vsmask.f32 2306
        %vm8582 = vmand %vm392, %vm8581
        %v8583 = vld [vmem:[#allocation4 + $0xc] sm:$0x7]
        %v8584 = vsel %vm8582, %v8579, %v8583
        %8585 = vst [vmem:[#allocation4 + $0xc] sm:$0x7] %v8584
        %v8586 = vld [vmem:[#allocation4] sm:$0xf]
        %v8587 = vld [vmem:[#allocation4 + $0x4] sm:$0xf]
        %v8588 = vld [vmem:[#allocation4 + $0x8] sm:$0xf]
        %8589 = vst [vmem:[#allocation6] sm:$0xf] %v8586
        %8590 = vst [vmem:[#allocation6 + $0x24] sm:$0xf] %v8587
        %8591 = vst [vmem:[#allocation6 + $0x48] sm:$0xf] %v8588
        %v8592 = vld [vmem:[#allocation4] sm:$0xf]
        %v8593 = vld [vmem:[#allocation4 + $0x4] sm:$0xf]
        %v8594 = vld [vmem:[#allocation4 + $0x8] sm:$0xf]
        %v8595 = vld [vmem:[#allocation4 + $0xc] sm:$0x1]
        %v8597 = vshrl.u32 %v8592, 16
        %v8599 = vrot.slane %v8597, 4
        %v8600 = vshll.u32 %v8592, 16
        %v8602 = vrot.slane %v8600, 5
        %v8603 = vor.u32 %v8599, %v8602
        %v8604 = vrot.slane %v8603, 4
        %v8606 = vshll.u32 %v8593, 16
        %v8608 = vrot.slane %v8606, 5
        %v8609 = vsel %vm401, %v8604, %v8608
        %v8610 = vshrl.u32 %v8593, 16
        %v8612 = vrot.slane %v8610, 4
        %v8613 = vor.u32 %v8612, %v8608
        %v8614 = vrot.slane %v8613, 4
        %v8616 = vshll.u32 %v8594, 16
        %v8618 = vrot.slane %v8616, 5
        %v8619 = vsel %vm401, %v8614, %v8618
        %v8620 = vshrl.u32 %v8594, 16
        %v8622 = vrot.slane %v8620, 4
        %v8623 = vor.u32 %v8622, %v8618
        %v8624 = vrot.slane %v8623, 4
        %v8626 = vshll.u32 %v8595, 16
        %v8628 = vrot.slane %v8626, 5
        %v8629 = vsel %vm401, %v8624, %v8628
        %8633 = vst [vmem:[#allocation6 + $0x4] sm:$0xf] %v8609
        %8634 = vst [vmem:[#allocation6 + $0x28] sm:$0xf] %v8619
        %8635 = vst [vmem:[#allocation6 + $0x4c] sm:$0xf] %v8629
        %v8636 = vld [vmem:[#allocation4] sm:$0xe]
        %v8637 = vld [vmem:[#allocation4 + $0x4] sm:$0xf]
        %v8638 = vld [vmem:[#allocation4 + $0x8] sm:$0xf]
        %v8639 = vld [vmem:[#allocation4 + $0xc] sm:$0x1]
        %v8644 = vrot.slane %v8636, 5
        %v8645 = vrot.slane %v8644, 4
        %v8646 = vrot.slane %v8637, 5
        %v8647 = vsel %vm1458, %v8645, %v8646
        %v8648 = vrot.slane %v8646, 4
        %v8649 = vrot.slane %v8638, 5
        %v8650 = vsel %vm1458, %v8648, %v8649
        %v8651 = vrot.slane %v8649, 4
        %v8652 = vrot.slane %v8639, 5
        %v8653 = vsel %vm1458, %v8651, %v8652
        %8657 = vst [vmem:[#allocation6 + $0x8] sm:$0xf] %v8647
        %8658 = vst [vmem:[#allocation6 + $0x2c] sm:$0xf] %v8650
        %8659 = vst [vmem:[#allocation6 + $0x50] sm:$0xf] %v8653
        %v8660 = vld [vmem:[#allocation4] sm:$0x8]
        %v8661 = vld [vmem:[#allocation4 + $0x4] sm:$0xf]
        %v8662 = vld [vmem:[#allocation4 + $0x8] sm:$0xf]
        %v8663 = vld [vmem:[#allocation4 + $0xc] sm:$0x7]
        %v8668 = vrot.slane %v8660, 7
        %v8669 = vrot.slane %v8668, 4
        %v8670 = vrot.slane %v8661, 7
        %v8671 = vsel %vm3436, %v8669, %v8670
        %v8672 = vrot.slane %v8670, 4
        %v8673 = vrot.slane %v8662, 7
        %v8674 = vsel %vm3436, %v8672, %v8673
        %v8675 = vrot.slane %v8673, 4
        %v8676 = vrot.slane %v8663, 7
        %v8677 = vsel %vm3436, %v8675, %v8676
        %8681 = vst [vmem:[#allocation6 + $0xc] sm:$0xf] %v8671
        %8682 = vst [vmem:[#allocation6 + $0x30] sm:$0xf] %v8674
        %8683 = vst [vmem:[#allocation6 + $0x54] sm:$0xf] %v8677
        %v8684 = vld [vmem:[#allocation4] sm:$0x8]
        %v8685 = vld [vmem:[#allocation4 + $0x4] sm:$0xf]
        %v8686 = vld [vmem:[#allocation4 + $0x8] sm:$0xf]
        %v8687 = vld [vmem:[#allocation4 + $0xc] sm:$0xf]
        %v8689 = vshrl.u32 %v8684, 16
        %v8691 = vrot.slane %v8689, 7
        %v8692 = vrot.slane %v8691, 4
        %v8694 = vshrl.u32 %v8685, 16
        %v8696 = vrot.slane %v8694, 7
        %v8697 = vshll.u32 %v8685, 16
        %v8699 = vor.u32 %v8696, %v8697
        %v8700 = vsel %vm440, %v8692, %v8699
        %v8701 = vrot.slane %v8696, 4
        %v8703 = vshrl.u32 %v8686, 16
        %v8705 = vrot.slane %v8703, 7
        %v8706 = vshll.u32 %v8686, 16
        %v8708 = vor.u32 %v8705, %v8706
        %v8709 = vsel %vm440, %v8701, %v8708
        %v8710 = vrot.slane %v8705, 4
        %v8712 = vshrl.u32 %v8687, 16
        %v8714 = vrot.slane %v8712, 7
        %v8715 = vshll.u32 %v8687, 16
        %v8717 = vor.u32 %v8714, %v8715
        %v8718 = vsel %vm440, %v8710, %v8717
        %8722 = vst [vmem:[#allocation6 + $0x10] sm:$0xf] %v8700
        %8723 = vst [vmem:[#allocation6 + $0x34] sm:$0xf] %v8709
        %8724 = vst [vmem:[#allocation6 + $0x58] sm:$0xf] %v8718
        %v8725 = vld [vmem:[#allocation4 + $0x4] sm:$0xf]
        %v8726 = vld [vmem:[#allocation4 + $0x8] sm:$0xf]
        %v8727 = vld [vmem:[#allocation4 + $0xc] sm:$0xf]
        %8728 = vst [vmem:[#allocation6 + $0x14] sm:$0xf] %v8725
        %8729 = vst [vmem:[#allocation6 + $0x38] sm:$0xf] %v8726
        %8730 = vst [vmem:[#allocation6 + $0x5c] sm:$0xf] %v8727
        %v8731 = vld [vmem:[#allocation4 + $0x4] sm:$0xc]
        %v8732 = vld [vmem:[#allocation4 + $0x8] sm:$0xf]
        %v8733 = vld [vmem:[#allocation4 + $0xc] sm:$0xf]
        %v8734 = vld [vmem:[#allocation4 + $0x10] sm:$0x3]
        %v8739 = vrot.slane %v8731, 6
        %v8740 = vrot.slane %v8739, 4
        %v8741 = vrot.slane %v8732, 6
        %v8742 = vsel %vm2447, %v8740, %v8741
        %v8743 = vrot.slane %v8741, 4
        %v8744 = vrot.slane %v8733, 6
        %v8745 = vsel %vm2447, %v8743, %v8744
        %v8746 = vrot.slane %v8744, 4
        %v8747 = vrot.slane %v8734, 6
        %v8748 = vsel %vm2447, %v8746, %v8747
        %8752 = vst [vmem:[#allocation6 + $0x18] sm:$0xf] %v8742
        %8753 = vst [vmem:[#allocation6 + $0x3c] sm:$0xf] %v8745
        %8754 = vst [vmem:[#allocation6 + $0x60] sm:$0xf] %v8748
        %v8755 = vld [vmem:[#allocation4 + $0x4] sm:$0xc]
        %v8756 = vld [vmem:[#allocation4 + $0x8] sm:$0xf]
        %v8757 = vld [vmem:[#allocation4 + $0xc] sm:$0xf]
        %v8758 = vld [vmem:[#allocation4 + $0x10] sm:$0x7]
        %v8760 = vshrl.u32 %v8755, 16
        %v8762 = vrot.slane %v8760, 6
        %v8763 = vshll.u32 %v8755, 16
        %v8765 = vrot.slane %v8763, 7
        %v8766 = vor.u32 %v8762, %v8765
        %v8767 = vrot.slane %v8766, 4
        %v8769 = vshrl.u32 %v8756, 16
        %v8771 = vrot.slane %v8769, 6
        %v8772 = vshll.u32 %v8756, 16
        %v8774 = vrot.slane %v8772, 7
        %v8775 = vor.u32 %v8771, %v8774
        %v8776 = vsel %vm323, %v8767, %v8775
        %v8777 = vrot.slane %v8775, 4
        %v8779 = vshrl.u32 %v8757, 16
        %v8781 = vrot.slane %v8779, 6
        %v8782 = vshll.u32 %v8757, 16
        %v8784 = vrot.slane %v8782, 7
        %v8785 = vor.u32 %v8781, %v8784
        %v8786 = vsel %vm323, %v8777, %v8785
        %v8787 = vrot.slane %v8785, 4
        %v8789 = vshrl.u32 %v8758, 16
        %v8791 = vrot.slane %v8789, 6
        %v8792 = vshll.u32 %v8758, 16
        %v8794 = vrot.slane %v8792, 7
        %v8795 = vor.u32 %v8791, %v8794
        %v8796 = vsel %vm323, %v8787, %v8795
        %8800 = vst [vmem:[#allocation6 + $0x1c] sm:$0xf] %v8776
        %8801 = vst [vmem:[#allocation6 + $0x40] sm:$0xf] %v8786
        %8802 = vst [vmem:[#allocation6 + $0x64] sm:$0xf] %v8796
        %v8803 = vld [vmem:[#allocation4 + $0x4] sm:$0x8]
        %v8804 = vld [vmem:[#allocation4 + $0x8] sm:$0xf]
        %v8805 = vld [vmem:[#allocation4 + $0xc] sm:$0xf]
        %v8806 = vld [vmem:[#allocation4 + $0x10] sm:$0x7]
        %v8811 = vrot.slane %v8803, 7
        %v8812 = vrot.slane %v8811, 4
        %v8813 = vrot.slane %v8804, 7
        %v8814 = vsel %vm3436, %v8812, %v8813
        %v8815 = vrot.slane %v8813, 4
        %v8816 = vrot.slane %v8805, 7
        %v8817 = vsel %vm3436, %v8815, %v8816
        %v8818 = vrot.slane %v8816, 4
        %v8819 = vrot.slane %v8806, 7
        %v8820 = vsel %vm3436, %v8818, %v8819
        %8824 = vst [vmem:[#allocation6 + $0x20] sm:$0xf] %v8814
        %8825 = vst [vmem:[#allocation6 + $0x44] sm:$0xf] %v8817
        %8826 = vst [vmem:[#allocation6 + $0x68] sm:$0xf] %v8820
        %v8827 = vld [vmem:[#allocation6] sm:$0xff]
        %v8828 = vld [vmem:[#allocation6 + $0x8] sm:$0xff]
        %v8829 = vld [vmem:[#allocation6 + $0x10] sm:$0xff]
        %v8830 = vld [vmem:[#allocation6 + $0x18] sm:$0xff]
        %v8831 = vld [vmem:[#allocation6 + $0x20] sm:$0xf]
        %v8832 = vld [vmem:[#allocation6 + $0x24] sm:$0xff]
        %v8833 = vld [vmem:[#allocation6 + $0x2c] sm:$0xff]
        %v8834 = vld [vmem:[#allocation6 + $0x34] sm:$0xff]
        %v8835 = vld [vmem:[#allocation6 + $0x3c] sm:$0xff]
        %v8836 = vld [vmem:[#allocation6 + $0x44] sm:$0xf]
        %v8837 = vld [vmem:[#allocation6 + $0x48] sm:$0xff]
        %v8838 = vld [vmem:[#allocation6 + $0x50] sm:$0xff]
        %v8839 = vld [vmem:[#allocation6 + $0x58] sm:$0xff]
        %v8840 = vld [vmem:[#allocation6 + $0x60] sm:$0xff]
        %v8841 = vld [vmem:[#allocation6 + $0x68] sm:$0xf]
        %s8842 = scalar_lea.vmem [#allocation8], 1152
        %v8843 = vld [vmem:[%s8842] sm:$0xf]
        %v8844 = vld [vmem:[%s8842 + $0x4] sm:$0xf]
        %v8845 = vld [vmem:[%s8842 + $0x8] sm:$0xf]
        %v8846 = vld [vmem:[%s8842 + $0xc] sm:$0xf]
        %v8847 = vld [vmem:[%s8842 + $0x10] sm:$0xf]
        %v8848 = vld [vmem:[%s8842 + $0x14] sm:$0xf]
        %v8849 = vld [vmem:[%s8842 + $0x18] sm:$0xf]
        %v8850 = vld [vmem:[%s8842 + $0x1c] sm:$0xf]
        %v8851 = vld [vmem:[%s8842 + $0x20] sm:$0xf]
        %v8852 = vld [vmem:[%s8842 + $0x24] sm:$0xf]
        %v8853 = vld [vmem:[%s8842 + $0x28] sm:$0xf]
        %v8854 = vld [vmem:[%s8842 + $0x2c] sm:$0xf]
        %v8855 = vld [vmem:[%s8842 + $0x30] sm:$0xf]
        %v8856 = vld [vmem:[%s8842 + $0x34] sm:$0xf]
        %v8857 = vld [vmem:[%s8842 + $0x38] sm:$0xf]
        %v8858 = vld [vmem:[%s8842 + $0x3c] sm:$0xf]
        %v8859 = vld [vmem:[%s8842 + $0x40] sm:$0xf]
        %v8860 = vld [vmem:[%s8842 + $0x44] sm:$0xf]
        %v8861 = vld [vmem:[%s8842 + $0x48] sm:$0xf]
        %v8862 = vld [vmem:[%s8842 + $0x4c] sm:$0xf]
        %v8863 = vld [vmem:[%s8842 + $0x50] sm:$0xf]
        %v8864 = vld [vmem:[%s8842 + $0x54] sm:$0xf]
        %v8865 = vld [vmem:[%s8842 + $0x58] sm:$0xf]
        %v8866 = vld [vmem:[%s8842 + $0x5c] sm:$0xf]
        %v8867 = vld [vmem:[%s8842 + $0x60] sm:$0xf]
        %v8868 = vld [vmem:[%s8842 + $0x64] sm:$0xf]
        %v8869 = vld [vmem:[%s8842 + $0x68] sm:$0xf]
        %v8870 = vld [vmem:[%s8842 + $0x6c] sm:$0xf]
        %v8871 = vld [vmem:[%s8842 + $0x70] sm:$0xf]
        %v8872 = vld [vmem:[%s8842 + $0x74] sm:$0xf]
        %v8873 = vld [vmem:[%s8842 + $0x78] sm:$0xf]
        %v8874 = vld [vmem:[%s8842 + $0x7c] sm:$0xf]
        %v8875 = vld [vmem:[%s8842 + $0x80] sm:$0xf]
        %v8876 = vld [vmem:[%s8842 + $0x84] sm:$0xf]
        %v8877 = vld [vmem:[%s8842 + $0x88] sm:$0xf]
        %v8878 = vld [vmem:[%s8842 + $0x8c] sm:$0xf]
        %v8879 = vld [vmem:[%s8842 + $0x90] sm:$0xf]
        %v8880 = vld [vmem:[%s8842 + $0x94] sm:$0xf]
        %v8881 = vld [vmem:[%s8842 + $0x98] sm:$0xf]
        %v8882 = vld [vmem:[%s8842 + $0x9c] sm:$0xf]
        %v8883 = vld [vmem:[%s8842 + $0xa0] sm:$0xf]
        %v8884 = vld [vmem:[%s8842 + $0xa4] sm:$0xf]
        %v8885 = vld [vmem:[%s8842 + $0xa8] sm:$0xf]
        %v8886 = vld [vmem:[%s8842 + $0xac] sm:$0xf]
        %v8887 = vld [vmem:[%s8842 + $0xb0] sm:$0xf]
        %v8888 = vld [vmem:[%s8842 + $0xb4] sm:$0xf]
        %v8889 = vld [vmem:[%s8842 + $0xb8] sm:$0xf]
        %v8890 = vld [vmem:[%s8842 + $0xbc] sm:$0xf]
        %v8891 = vld [vmem:[%s8842 + $0xc0] sm:$0xf]
        %v8892 = vld [vmem:[%s8842 + $0xc4] sm:$0xf]
        %v8893 = vld [vmem:[%s8842 + $0xc8] sm:$0xf]
        %v8894 = vld [vmem:[%s8842 + $0xcc] sm:$0xf]
        %v8895 = vld [vmem:[%s8842 + $0xd0] sm:$0xf]
        %v8896 = vld [vmem:[%s8842 + $0xd4] sm:$0xf]
        %v8897 = vld [vmem:[%s8842 + $0xd8] sm:$0xf]
        %v8898 = vld [vmem:[%s8842 + $0xdc] sm:$0xf]
        %v8899 = vld [vmem:[%s8842 + $0xe0] sm:$0xf]
        %v8900 = vld [vmem:[%s8842 + $0xe4] sm:$0xf]
        %v8901 = vld [vmem:[%s8842 + $0xe8] sm:$0xf]
        %v8902 = vld [vmem:[%s8842 + $0xec] sm:$0xf]
        %v8903 = vld [vmem:[%s8842 + $0xf0] sm:$0xf]
        %v8904 = vld [vmem:[%s8842 + $0xf4] sm:$0xf]
        %v8905 = vld [vmem:[%s8842 + $0xf8] sm:$0xf]
        %v8906 = vld [vmem:[%s8842 + $0xfc] sm:$0xf]
        %v8907 = vld [vmem:[%s8842 + $0x100] sm:$0xf]
        %v8908 = vld [vmem:[%s8842 + $0x104] sm:$0xf]
        %v8909 = vld [vmem:[%s8842 + $0x108] sm:$0xf]
        %v8910 = vld [vmem:[%s8842 + $0x10c] sm:$0xf]
        %v8911 = vld [vmem:[%s8842 + $0x110] sm:$0xf]
        %v8912 = vld [vmem:[%s8842 + $0x114] sm:$0xf]
        %v8913 = vld [vmem:[%s8842 + $0x118] sm:$0xf]
        %v8914 = vld [vmem:[%s8842 + $0x11c] sm:$0xf]
        %v8915 = vld [vmem:[%s8842 + $0x120] sm:$0xf]
        %v8916 = vld [vmem:[%s8842 + $0x124] sm:$0xf]
        %v8917 = vld [vmem:[%s8842 + $0x128] sm:$0xf]
        %v8918 = vld [vmem:[%s8842 + $0x12c] sm:$0xf]
        %v8919 = vld [vmem:[%s8842 + $0x130] sm:$0xf]
        %v8920 = vld [vmem:[%s8842 + $0x134] sm:$0xf]
        %v8921 = vld [vmem:[%s8842 + $0x138] sm:$0xf]
        %v8922 = vld [vmem:[%s8842 + $0x13c] sm:$0xf]
        %v8923 = vld [vmem:[%s8842 + $0x140] sm:$0xf]
        %v8924 = vld [vmem:[%s8842 + $0x144] sm:$0xf]
        %v8925 = vld [vmem:[%s8842 + $0x148] sm:$0xf]
        %v8926 = vld [vmem:[%s8842 + $0x14c] sm:$0xf]
        %v8927 = vld [vmem:[%s8842 + $0x150] sm:$0xf]
        %v8928 = vld [vmem:[%s8842 + $0x154] sm:$0xf]
        %v8929 = vld [vmem:[%s8842 + $0x158] sm:$0xf]
        %v8930 = vld [vmem:[%s8842 + $0x15c] sm:$0xf]
        %v8931 = vld [vmem:[%s8842 + $0x160] sm:$0xf]
        %v8932 = vld [vmem:[%s8842 + $0x164] sm:$0xf]
        %v8933 = vld [vmem:[%s8842 + $0x168] sm:$0xf]
        %v8934 = vld [vmem:[%s8842 + $0x16c] sm:$0xf]
        %v8935 = vld [vmem:[%s8842 + $0x170] sm:$0xf]
        %v8936 = vld [vmem:[%s8842 + $0x174] sm:$0xf]
        %v8937 = vld [vmem:[%s8842 + $0x178] sm:$0xf]
        %v8938 = vld [vmem:[%s8842 + $0x17c] sm:$0xf]
        %v8939 = vld [vmem:[%s8842 + $0x180] sm:$0xf]
        %v8940 = vld [vmem:[%s8842 + $0x184] sm:$0xf]
        %v8941 = vld [vmem:[%s8842 + $0x188] sm:$0xf]
        %v8942 = vld [vmem:[%s8842 + $0x18c] sm:$0xf]
        %v8943 = vld [vmem:[%s8842 + $0x190] sm:$0xf]
        %v8944 = vld [vmem:[%s8842 + $0x194] sm:$0xf]
        %v8945 = vld [vmem:[%s8842 + $0x198] sm:$0xf]
        %v8946 = vld [vmem:[%s8842 + $0x19c] sm:$0xf]
        %v8947 = vld [vmem:[%s8842 + $0x1a0] sm:$0xf]
        %v8948 = vld [vmem:[%s8842 + $0x1a4] sm:$0xf]
        %v8949 = vld [vmem:[%s8842 + $0x1a8] sm:$0xf]
        %v8950 = vld [vmem:[%s8842 + $0x1ac] sm:$0xf]
        %v8951 = vld [vmem:[%s8842 + $0x1b0] sm:$0xf]
        %v8952 = vld [vmem:[%s8842 + $0x1b4] sm:$0xf]
        %v8953 = vld [vmem:[%s8842 + $0x1b8] sm:$0xf]
        %v8954 = vld [vmem:[%s8842 + $0x1bc] sm:$0xf]
        %v8955 = vld [vmem:[%s8842 + $0x1c0] sm:$0xf]
        %v8956 = vld [vmem:[%s8842 + $0x1c4] sm:$0xf]
        %v8957 = vld [vmem:[%s8842 + $0x1c8] sm:$0xf]
        %v8958 = vld [vmem:[%s8842 + $0x1cc] sm:$0xf]
        %v8959 = vld [vmem:[%s8842 + $0x1d0] sm:$0xf]
        %v8960 = vld [vmem:[%s8842 + $0x1d4] sm:$0xf]
        %v8961 = vld [vmem:[%s8842 + $0x1d8] sm:$0xf]
        %v8962 = vld [vmem:[%s8842 + $0x1dc] sm:$0xf]
        %v8963 = vld [vmem:[%s8842 + $0x1e0] sm:$0xf]
        %v8964 = vld [vmem:[%s8842 + $0x1e4] sm:$0xf]
        %v8965 = vld [vmem:[%s8842 + $0x1e8] sm:$0xf]
        %v8966 = vld [vmem:[%s8842 + $0x1ec] sm:$0xf]
        %v8967 = vld [vmem:[%s8842 + $0x1f0] sm:$0xf]
        %v8968 = vld [vmem:[%s8842 + $0x1f4] sm:$0xf]
        %v8969 = vld [vmem:[%s8842 + $0x1f8] sm:$0xf]
        %v8970 = vld [vmem:[%s8842 + $0x1fc] sm:$0xf]
        %v8971 = vld [vmem:[%s8842 + $0x200] sm:$0xf]
        %v8972 = vld [vmem:[%s8842 + $0x204] sm:$0xf]
        %v8973 = vld [vmem:[%s8842 + $0x208] sm:$0xf]
        %v8974 = vld [vmem:[%s8842 + $0x20c] sm:$0xf]
        %v8975 = vld [vmem:[%s8842 + $0x210] sm:$0xf]
        %v8976 = vld [vmem:[%s8842 + $0x214] sm:$0xf]
        %v8977 = vld [vmem:[%s8842 + $0x218] sm:$0xf]
        %v8978 = vld [vmem:[%s8842 + $0x21c] sm:$0xf]
        %v8979 = vld [vmem:[%s8842 + $0x220] sm:$0xf]
        %v8980 = vld [vmem:[%s8842 + $0x224] sm:$0xf]
        %v8981 = vld [vmem:[%s8842 + $0x228] sm:$0xf]
        %v8982 = vld [vmem:[%s8842 + $0x22c] sm:$0xf]
        %v8983 = vld [vmem:[%s8842 + $0x230] sm:$0xf]
        %v8984 = vld [vmem:[%s8842 + $0x234] sm:$0xf]
        %v8985 = vld [vmem:[%s8842 + $0x238] sm:$0xf]
        %v8986 = vld [vmem:[%s8842 + $0x23c] sm:$0xf]
        %s8987 = scalar_lea.vmem %s2, 2
        %v8988 = vld [vmem:[%s8987] sm:$0x1]
        %v8990 = vlaneseq
        %v8991 = vshrl.u32 %v8990, 7
        %v8992 = vsub.s32 0, %v8991
        %v8993 = vrot.slane %v8988, %v8992
        %v9010 = vunpack.c.l.b16 %v8827
        %v9011 = vunpack.c.h.b16 %v8827
        %v9012 = vunpack.c.l.b16 %v8828
        %v9013 = vunpack.c.h.b16 %v8828
        %v9014 = vunpack.c.l.b16 %v8829
        %v9015 = vunpack.c.h.b16 %v8829
        %v9016 = vunpack.c.l.b16 %v8830
        %v9017 = vunpack.c.h.b16 %v8830
        %v9018 = vunpack.c.l.b16 %v8831
        %v9019 = vunpack.c.l.b16 %v8832
        %v9020 = vunpack.c.h.b16 %v8832
        %v9021 = vunpack.c.l.b16 %v8833
        %v9022 = vunpack.c.h.b16 %v8833
        %v9023 = vunpack.c.l.b16 %v8834
        %v9024 = vunpack.c.h.b16 %v8834
        %v9025 = vunpack.c.l.b16 %v8835
        %v9026 = vunpack.c.h.b16 %v8835
        %v9027 = vunpack.c.l.b16 %v8836
        %v9028 = vunpack.c.l.b16 %v8837
        %v9029 = vunpack.c.h.b16 %v8837
        %v9030 = vunpack.c.l.b16 %v8838
        %v9031 = vunpack.c.h.b16 %v8838
        %v9032 = vunpack.c.l.b16 %v8839
        %v9033 = vunpack.c.h.b16 %v8839
        %v9034 = vunpack.c.l.b16 %v8840
        %v9035 = vunpack.c.h.b16 %v8840
        %v9036 = vunpack.c.l.b16 %v8841
        %v9037 = vpack.c.b16 %v9019, %v9010
        %v9038 = vpack.c.b16 %v9020, %v9011
        %v9039 = vpack.c.b16 %v9021, %v9012
        %v9040 = vpack.c.b16 %v9022, %v9013
        %v9041 = vpack.c.b16 %v9023, %v9014
        %v9042 = vpack.c.b16 %v9024, %v9015
        %v9043 = vpack.c.b16 %v9025, %v9016
        %v9044 = vpack.c.b16 %v9026, %v9017
        %v9045 = vpack.c.b16 %v9027, %v9018
        %v9046 = vpack.c.b16 %v9028, %v9028
        %v9047 = vpack.c.b16 %v9029, %v9029
        %v9048 = vpack.c.b16 %v9030, %v9030
        %v9049 = vpack.c.b16 %v9031, %v9031
        %v9050 = vpack.c.b16 %v9032, %v9032
        %v9051 = vpack.c.b16 %v9033, %v9033
        %v9052 = vpack.c.b16 %v9034, %v9034
        %v9053 = vpack.c.b16 %v9035, %v9035
        %v9054 = vpack.c.b16 %v9036, %v9036
        %v9217 = vunpack.c.l.b16 %v8843
        %v9218 = vunpack.c.l.b16 %v8844
        %v9219 = vunpack.c.l.b16 %v8845
        %v9220 = vunpack.c.l.b16 %v8846
        %v9221 = vunpack.c.l.b16 %v8847
        %v9222 = vunpack.c.l.b16 %v8848
        %v9223 = vunpack.c.l.b16 %v8849
        %v9224 = vunpack.c.l.b16 %v8850
        %v9225 = vunpack.c.l.b16 %v8851
        %v9226 = vunpack.c.l.b16 %v8852
        %v9227 = vunpack.c.l.b16 %v8853
        %v9228 = vunpack.c.l.b16 %v8854
        %v9229 = vunpack.c.l.b16 %v8855
        %v9230 = vunpack.c.l.b16 %v8856
        %v9231 = vunpack.c.l.b16 %v8857
        %v9232 = vunpack.c.l.b16 %v8858
        %v9233 = vunpack.c.l.b16 %v8859
        %v9234 = vunpack.c.l.b16 %v8860
        %v9235 = vunpack.c.l.b16 %v8861
        %v9236 = vunpack.c.l.b16 %v8862
        %v9237 = vunpack.c.l.b16 %v8863
        %v9238 = vunpack.c.l.b16 %v8864
        %v9239 = vunpack.c.l.b16 %v8865
        %v9240 = vunpack.c.l.b16 %v8866
        %v9241 = vunpack.c.l.b16 %v8867
        %v9242 = vunpack.c.l.b16 %v8868
        %v9243 = vunpack.c.l.b16 %v8869
        %v9244 = vunpack.c.l.b16 %v8870
        %v9245 = vunpack.c.l.b16 %v8871
        %v9246 = vunpack.c.l.b16 %v8872
        %v9247 = vunpack.c.l.b16 %v8873
        %v9248 = vunpack.c.l.b16 %v8874
        %v9249 = vunpack.c.l.b16 %v8875
        %v9250 = vunpack.c.l.b16 %v8876
        %v9251 = vunpack.c.l.b16 %v8877
        %v9252 = vunpack.c.l.b16 %v8878
        %v9253 = vunpack.c.l.b16 %v8879
        %v9254 = vunpack.c.l.b16 %v8880
        %v9255 = vunpack.c.l.b16 %v8881
        %v9256 = vunpack.c.l.b16 %v8882
        %v9257 = vunpack.c.l.b16 %v8883
        %v9258 = vunpack.c.l.b16 %v8884
        %v9259 = vunpack.c.l.b16 %v8885
        %v9260 = vunpack.c.l.b16 %v8886
        %v9261 = vunpack.c.l.b16 %v8887
        %v9262 = vunpack.c.l.b16 %v8888
        %v9263 = vunpack.c.l.b16 %v8889
        %v9264 = vunpack.c.l.b16 %v8890
        %v9265 = vunpack.c.l.b16 %v8891
        %v9266 = vunpack.c.l.b16 %v8892
        %v9267 = vunpack.c.l.b16 %v8893
        %v9268 = vunpack.c.l.b16 %v8894
        %v9269 = vunpack.c.l.b16 %v8895
        %v9270 = vunpack.c.l.b16 %v8896
        %v9271 = vunpack.c.l.b16 %v8897
        %v9272 = vunpack.c.l.b16 %v8898
        %v9273 = vunpack.c.l.b16 %v8899
        %v9274 = vunpack.c.l.b16 %v8900
        %v9275 = vunpack.c.l.b16 %v8901
        %v9276 = vunpack.c.l.b16 %v8902
        %v9277 = vunpack.c.l.b16 %v8903
        %v9278 = vunpack.c.l.b16 %v8904
        %v9279 = vunpack.c.l.b16 %v8905
        %v9280 = vunpack.c.l.b16 %v8906
        %v9281 = vunpack.c.l.b16 %v8907
        %v9282 = vunpack.c.l.b16 %v8908
        %v9283 = vunpack.c.l.b16 %v8909
        %v9284 = vunpack.c.l.b16 %v8910
        %v9285 = vunpack.c.l.b16 %v8911
        %v9286 = vunpack.c.l.b16 %v8912
        %v9287 = vunpack.c.l.b16 %v8913
        %v9288 = vunpack.c.l.b16 %v8914
        %v9289 = vunpack.c.l.b16 %v8915
        %v9290 = vunpack.c.l.b16 %v8916
        %v9291 = vunpack.c.l.b16 %v8917
        %v9292 = vunpack.c.l.b16 %v8918
        %v9293 = vunpack.c.l.b16 %v8919
        %v9294 = vunpack.c.l.b16 %v8920
        %v9295 = vunpack.c.l.b16 %v8921
        %v9296 = vunpack.c.l.b16 %v8922
        %v9297 = vunpack.c.l.b16 %v8923
        %v9298 = vunpack.c.l.b16 %v8924
        %v9299 = vunpack.c.l.b16 %v8925
        %v9300 = vunpack.c.l.b16 %v8926
        %v9301 = vunpack.c.l.b16 %v8927
        %v9302 = vunpack.c.l.b16 %v8928
        %v9303 = vunpack.c.l.b16 %v8929
        %v9304 = vunpack.c.l.b16 %v8930
        %v9305 = vunpack.c.l.b16 %v8931
        %v9306 = vunpack.c.l.b16 %v8932
        %v9307 = vunpack.c.l.b16 %v8933
        %v9308 = vunpack.c.l.b16 %v8934
        %v9309 = vunpack.c.l.b16 %v8935
        %v9310 = vunpack.c.l.b16 %v8936
        %v9311 = vunpack.c.l.b16 %v8937
        %v9312 = vunpack.c.l.b16 %v8938
        %v9313 = vunpack.c.l.b16 %v8939
        %v9314 = vunpack.c.l.b16 %v8940
        %v9315 = vunpack.c.l.b16 %v8941
        %v9316 = vunpack.c.l.b16 %v8942
        %v9317 = vunpack.c.l.b16 %v8943
        %v9318 = vunpack.c.l.b16 %v8944
        %v9319 = vunpack.c.l.b16 %v8945
        %v9320 = vunpack.c.l.b16 %v8946
        %v9321 = vunpack.c.l.b16 %v8947
        %v9322 = vunpack.c.l.b16 %v8948
        %v9323 = vunpack.c.l.b16 %v8949
        %v9324 = vunpack.c.l.b16 %v8950
        %v9325 = vunpack.c.l.b16 %v8951
        %v9326 = vunpack.c.l.b16 %v8952
        %v9327 = vunpack.c.l.b16 %v8953
        %v9328 = vunpack.c.l.b16 %v8954
        %v9329 = vunpack.c.l.b16 %v8955
        %v9330 = vunpack.c.l.b16 %v8956
        %v9331 = vunpack.c.l.b16 %v8957
        %v9332 = vunpack.c.l.b16 %v8958
        %v9333 = vunpack.c.l.b16 %v8959
        %v9334 = vunpack.c.l.b16 %v8960
        %v9335 = vunpack.c.l.b16 %v8961
        %v9336 = vunpack.c.l.b16 %v8962
        %v9337 = vunpack.c.l.b16 %v8963
        %v9338 = vunpack.c.l.b16 %v8964
        %v9339 = vunpack.c.l.b16 %v8965
        %v9340 = vunpack.c.l.b16 %v8966
        %v9341 = vunpack.c.l.b16 %v8967
        %v9342 = vunpack.c.l.b16 %v8968
        %v9343 = vunpack.c.l.b16 %v8969
        %v9344 = vunpack.c.l.b16 %v8970
        %v9345 = vunpack.c.l.b16 %v8971
        %v9346 = vunpack.c.l.b16 %v8972
        %v9347 = vunpack.c.l.b16 %v8973
        %v9348 = vunpack.c.l.b16 %v8974
        %v9349 = vunpack.c.l.b16 %v8975
        %v9350 = vunpack.c.l.b16 %v8976
        %v9351 = vunpack.c.l.b16 %v8977
        %v9352 = vunpack.c.l.b16 %v8978
        %v9353 = vunpack.c.l.b16 %v8979
        %v9354 = vunpack.c.l.b16 %v8980
        %v9355 = vunpack.c.l.b16 %v8981
        %v9356 = vunpack.c.l.b16 %v8982
        %v9357 = vunpack.c.l.b16 %v8983
        %v9358 = vunpack.c.l.b16 %v8984
        %v9359 = vunpack.c.l.b16 %v8985
        %v9360 = vunpack.c.l.b16 %v8986
        %v9361 = vpack.c.b16 %v9218, %v9217
        %v9362 = vpack.c.b16 %v9220, %v9219
        %v9363 = vpack.c.b16 %v9222, %v9221
        %v9364 = vpack.c.b16 %v9224, %v9223
        %v9365 = vpack.c.b16 %v9226, %v9225
        %v9366 = vpack.c.b16 %v9228, %v9227
        %v9367 = vpack.c.b16 %v9230, %v9229
        %v9368 = vpack.c.b16 %v9232, %v9231
        %v9369 = vpack.c.b16 %v9234, %v9233
        %v9370 = vpack.c.b16 %v9236, %v9235
        %v9371 = vpack.c.b16 %v9238, %v9237
        %v9372 = vpack.c.b16 %v9240, %v9239
        %v9373 = vpack.c.b16 %v9242, %v9241
        %v9374 = vpack.c.b16 %v9244, %v9243
        %v9375 = vpack.c.b16 %v9246, %v9245
        %v9376 = vpack.c.b16 %v9248, %v9247
        %v9377 = vpack.c.b16 %v9250, %v9249
        %v9378 = vpack.c.b16 %v9252, %v9251
        %v9379 = vpack.c.b16 %v9254, %v9253
        %v9380 = vpack.c.b16 %v9256, %v9255
        %v9381 = vpack.c.b16 %v9258, %v9257
        %v9382 = vpack.c.b16 %v9260, %v9259
        %v9383 = vpack.c.b16 %v9262, %v9261
        %v9384 = vpack.c.b16 %v9264, %v9263
        %v9385 = vpack.c.b16 %v9266, %v9265
        %v9386 = vpack.c.b16 %v9268, %v9267
        %v9387 = vpack.c.b16 %v9270, %v9269
        %v9388 = vpack.c.b16 %v9272, %v9271
        %v9389 = vpack.c.b16 %v9274, %v9273
        %v9390 = vpack.c.b16 %v9276, %v9275
        %v9391 = vpack.c.b16 %v9278, %v9277
        %v9392 = vpack.c.b16 %v9280, %v9279
        %v9393 = vpack.c.b16 %v9282, %v9281
        %v9394 = vpack.c.b16 %v9284, %v9283
        %v9395 = vpack.c.b16 %v9286, %v9285
        %v9396 = vpack.c.b16 %v9288, %v9287
        %v9397 = vpack.c.b16 %v9290, %v9289
        %v9398 = vpack.c.b16 %v9292, %v9291
        %v9399 = vpack.c.b16 %v9294, %v9293
        %v9400 = vpack.c.b16 %v9296, %v9295
        %v9401 = vpack.c.b16 %v9298, %v9297
        %v9402 = vpack.c.b16 %v9300, %v9299
        %v9403 = vpack.c.b16 %v9302, %v9301
        %v9404 = vpack.c.b16 %v9304, %v9303
        %v9405 = vpack.c.b16 %v9306, %v9305
        %v9406 = vpack.c.b16 %v9308, %v9307
        %v9407 = vpack.c.b16 %v9310, %v9309
        %v9408 = vpack.c.b16 %v9312, %v9311
        %v9409 = vpack.c.b16 %v9314, %v9313
        %v9410 = vpack.c.b16 %v9316, %v9315
        %v9411 = vpack.c.b16 %v9318, %v9317
        %v9412 = vpack.c.b16 %v9320, %v9319
        %v9413 = vpack.c.b16 %v9322, %v9321
        %v9414 = vpack.c.b16 %v9324, %v9323
        %v9415 = vpack.c.b16 %v9326, %v9325
        %v9416 = vpack.c.b16 %v9328, %v9327
        %v9417 = vpack.c.b16 %v9330, %v9329
        %v9418 = vpack.c.b16 %v9332, %v9331
        %v9419 = vpack.c.b16 %v9334, %v9333
        %v9420 = vpack.c.b16 %v9336, %v9335
        %v9421 = vpack.c.b16 %v9338, %v9337
        %v9422 = vpack.c.b16 %v9340, %v9339
        %v9423 = vpack.c.b16 %v9342, %v9341
        %v9424 = vpack.c.b16 %v9344, %v9343
        %v9425 = vpack.c.b16 %v9346, %v9345
        %v9426 = vpack.c.b16 %v9348, %v9347
        %v9427 = vpack.c.b16 %v9350, %v9349
        %v9428 = vpack.c.b16 %v9352, %v9351
        %v9429 = vpack.c.b16 %v9354, %v9353
        %v9430 = vpack.c.b16 %v9356, %v9355
        %v9431 = vpack.c.b16 %v9358, %v9357
        %v9432 = vpack.c.b16 %v9360, %v9359
        %9505 = vmatprep.subr.bf16.mxu0 0
        %9506 = vmatpush1.bf16.msra.mxu0 %v9368
        %9507 = vmatprep.subr.bf16.mxu0 0
        %9508 = vmatpush1.bf16.msra.mxu0 %v9367
        %9509 = vmatprep.subr.bf16.mxu0 0
        %9510 = vmatpush1.bf16.msra.mxu0 %v9366
        %9511 = vmatprep.subr.bf16.mxu0 0
        %9512 = vmatpush1.bf16.msra.mxu0 %v9365
        %9513 = vmatprep.subr.bf16.mxu0 0
        %9514 = vmatpush1.bf16.msra.mxu0 %v9364
        %9515 = vmatprep.subr.bf16.mxu0 0
        %9516 = vmatpush1.bf16.msra.mxu0 %v9363
        %9517 = vmatprep.subr.bf16.mxu0 0
        %9518 = vmatpush1.bf16.msra.mxu0 %v9362
        %9519 = vmatprep.subr.bf16.mxu0 0
        %9520 = vmatpush1.bf16.msra.mxu0 %v9361
        %9521 = vmatprep.subr.bf16.mxu0 0
        %9522 = vmatpush2.bf16.msra.mxu0 %v9376
        %9523 = vmatprep.subr.bf16.mxu0 0
        %9524 = vmatpush2.bf16.msra.mxu0 %v9375
        %9525 = vmatprep.subr.bf16.mxu0 0
        %9526 = vmatpush2.bf16.msra.mxu0 %v9374
        %9527 = vmatprep.subr.bf16.mxu0 0
        %9528 = vmatpush2.bf16.msra.mxu0 %v9373
        %9529 = vmatprep.subr.bf16.mxu0 0
        %9530 = vmatpush2.bf16.msra.mxu0 %v9372
        %9531 = vmatprep.subr.bf16.mxu0 0
        %9532 = vmatpush2.bf16.msra.mxu0 %v9371
        %9533 = vmatprep.subr.bf16.mxu0 0
        %9534 = vmatpush2.bf16.msra.mxu0 %v9370
        %9535 = vmatprep.subr.bf16.mxu0 0
        %9536 = vmatpush2.bf16.msra.mxu0 %v9369
        %9537 = vmatprep.mubr.bf16.mxu0 %v9038
        %9538 = vmatmul.mubr.bf16.gmra.mxu0 %v9037
        %v9539 = vpop.f32.mrf.mxu0
        %v9540 = vadd.f32 %v8993, %v9539
        %v9541 = vpop.f32.mrf.mxu0
        %v9542 = vpop.f32.mrf.mxu0
        %v9543 = vadd.f32 %v8993, %v9542
        %v9544 = vpop.f32.mrf.mxu0
        %9545 = vmatprep.mubr.bf16.mxu0 %v9047
        %9546 = vmatmul.mubr.bf16.gmra.mxu0 %v9046
        %v9547 = vpop.f32.mrf.mxu0
        %v9548 = vadd.f32 %v8993, %v9547
        %v9549 = vpop.f32.mrf.mxu0
        %v9550 = vpop.f32.mrf.mxu0
        %v9551 = vpop.f32.mrf.mxu0
        %9552 = vdwg.mxu0
        %9553 = vmatprep.subr.bf16.mxu0 0
        %9554 = vmatpush1.bf16.msra.mxu0 %v9384
        %9555 = vmatprep.subr.bf16.mxu0 0
        %9556 = vmatpush1.bf16.msra.mxu0 %v9383
        %9557 = vmatprep.subr.bf16.mxu0 0
        %9558 = vmatpush1.bf16.msra.mxu0 %v9382
        %9559 = vmatprep.subr.bf16.mxu0 0
        %9560 = vmatpush1.bf16.msra.mxu0 %v9381
        %9561 = vmatprep.subr.bf16.mxu0 0
        %9562 = vmatpush1.bf16.msra.mxu0 %v9380
        %9563 = vmatprep.subr.bf16.mxu0 0
        %9564 = vmatpush1.bf16.msra.mxu0 %v9379
        %9565 = vmatprep.subr.bf16.mxu0 0
        %9566 = vmatpush1.bf16.msra.mxu0 %v9378
        %9567 = vmatprep.subr.bf16.mxu0 0
        %9568 = vmatpush1.bf16.msra.mxu0 %v9377
        %9569 = vmatprep.subr.bf16.mxu0 0
        %9570 = vmatpush2.bf16.msra.mxu0 %v9392
        %9571 = vmatprep.subr.bf16.mxu0 0
        %9572 = vmatpush2.bf16.msra.mxu0 %v9391
        %9573 = vmatprep.subr.bf16.mxu0 0
        %9574 = vmatpush2.bf16.msra.mxu0 %v9390
        %9575 = vmatprep.subr.bf16.mxu0 0
        %9576 = vmatpush2.bf16.msra.mxu0 %v9389
        %9577 = vmatprep.subr.bf16.mxu0 0
        %9578 = vmatpush2.bf16.msra.mxu0 %v9388
        %9579 = vmatprep.subr.bf16.mxu0 0
        %9580 = vmatpush2.bf16.msra.mxu0 %v9387
        %9581 = vmatprep.subr.bf16.mxu0 0
        %9582 = vmatpush2.bf16.msra.mxu0 %v9386
        %9583 = vmatprep.subr.bf16.mxu0 0
        %9584 = vmatpush2.bf16.msra.mxu0 %v9385
        %9585 = vmatprep.mubr.bf16.mxu0 %v9040
        %9586 = vmatmul.mubr.bf16.gmra.mxu0 %v9039
        %v9587 = vpop.f32.mrf.mxu0
        %v9588 = vadd.f32 %v9540, %v9587
        %v9589 = vpop.f32.mrf.mxu0
        %v9590 = vpop.f32.mrf.mxu0
        %v9591 = vadd.f32 %v9543, %v9590
        %v9592 = vpop.f32.mrf.mxu0
        %9593 = vmatprep.mubr.bf16.mxu0 %v9049
        %9594 = vmatmul.mubr.bf16.gmra.mxu0 %v9048
        %v9595 = vpop.f32.mrf.mxu0
        %v9596 = vadd.f32 %v9548, %v9595
        %v9597 = vpop.f32.mrf.mxu0
        %v9598 = vpop.f32.mrf.mxu0
        %v9599 = vpop.f32.mrf.mxu0
        %9600 = vdwg.mxu0
        %9601 = vmatprep.subr.bf16.mxu0 0
        %9602 = vmatpush1.bf16.msra.mxu0 %v9400
        %9603 = vmatprep.subr.bf16.mxu0 0
        %9604 = vmatpush1.bf16.msra.mxu0 %v9399
        %9605 = vmatprep.subr.bf16.mxu0 0
        %9606 = vmatpush1.bf16.msra.mxu0 %v9398
        %9607 = vmatprep.subr.bf16.mxu0 0
        %9608 = vmatpush1.bf16.msra.mxu0 %v9397
        %9609 = vmatprep.subr.bf16.mxu0 0
        %9610 = vmatpush1.bf16.msra.mxu0 %v9396
        %9611 = vmatprep.subr.bf16.mxu0 0
        %9612 = vmatpush1.bf16.msra.mxu0 %v9395
        %9613 = vmatprep.subr.bf16.mxu0 0
        %9614 = vmatpush1.bf16.msra.mxu0 %v9394
        %9615 = vmatprep.subr.bf16.mxu0 0
        %9616 = vmatpush1.bf16.msra.mxu0 %v9393
        %9617 = vmatprep.subr.bf16.mxu0 0
        %9618 = vmatpush2.bf16.msra.mxu0 %v9408
        %9619 = vmatprep.subr.bf16.mxu0 0
        %9620 = vmatpush2.bf16.msra.mxu0 %v9407
        %9621 = vmatprep.subr.bf16.mxu0 0
        %9622 = vmatpush2.bf16.msra.mxu0 %v9406
        %9623 = vmatprep.subr.bf16.mxu0 0
        %9624 = vmatpush2.bf16.msra.mxu0 %v9405
        %9625 = vmatprep.subr.bf16.mxu0 0
        %9626 = vmatpush2.bf16.msra.mxu0 %v9404
        %9627 = vmatprep.subr.bf16.mxu0 0
        %9628 = vmatpush2.bf16.msra.mxu0 %v9403
        %9629 = vmatprep.subr.bf16.mxu0 0
        %9630 = vmatpush2.bf16.msra.mxu0 %v9402
        %9631 = vmatprep.subr.bf16.mxu0 0
        %9632 = vmatpush2.bf16.msra.mxu0 %v9401
        %9633 = vmatprep.mubr.bf16.mxu0 %v9042
        %9634 = vmatmul.mubr.bf16.gmra.mxu0 %v9041
        %v9635 = vpop.f32.mrf.mxu0
        %v9636 = vadd.f32 %v9588, %v9635
        %v9637 = vpop.f32.mrf.mxu0
        %v9638 = vpop.f32.mrf.mxu0
        %v9639 = vadd.f32 %v9591, %v9638
        %v9640 = vpop.f32.mrf.mxu0
        %9641 = vmatprep.mubr.bf16.mxu0 %v9051
        %9642 = vmatmul.mubr.bf16.gmra.mxu0 %v9050
        %v9643 = vpop.f32.mrf.mxu0
        %v9644 = vadd.f32 %v9596, %v9643
        %v9645 = vpop.f32.mrf.mxu0
        %v9646 = vpop.f32.mrf.mxu0
        %v9647 = vpop.f32.mrf.mxu0
        %9648 = vdwg.mxu0
        %9649 = vmatprep.subr.bf16.mxu0 0
        %9650 = vmatpush1.bf16.msra.mxu0 %v9416
        %9651 = vmatprep.subr.bf16.mxu0 0
        %9652 = vmatpush1.bf16.msra.mxu0 %v9415
        %9653 = vmatprep.subr.bf16.mxu0 0
        %9654 = vmatpush1.bf16.msra.mxu0 %v9414
        %9655 = vmatprep.subr.bf16.mxu0 0
        %9656 = vmatpush1.bf16.msra.mxu0 %v9413
        %9657 = vmatprep.subr.bf16.mxu0 0
        %9658 = vmatpush1.bf16.msra.mxu0 %v9412
        %9659 = vmatprep.subr.bf16.mxu0 0
        %9660 = vmatpush1.bf16.msra.mxu0 %v9411
        %9661 = vmatprep.subr.bf16.mxu0 0
        %9662 = vmatpush1.bf16.msra.mxu0 %v9410
        %9663 = vmatprep.subr.bf16.mxu0 0
        %9664 = vmatpush1.bf16.msra.mxu0 %v9409
        %9665 = vmatprep.subr.bf16.mxu0 0
        %9666 = vmatpush2.bf16.msra.mxu0 %v9424
        %9667 = vmatprep.subr.bf16.mxu0 0
        %9668 = vmatpush2.bf16.msra.mxu0 %v9423
        %9669 = vmatprep.subr.bf16.mxu0 0
        %9670 = vmatpush2.bf16.msra.mxu0 %v9422
        %9671 = vmatprep.subr.bf16.mxu0 0
        %9672 = vmatpush2.bf16.msra.mxu0 %v9421
        %9673 = vmatprep.subr.bf16.mxu0 0
        %9674 = vmatpush2.bf16.msra.mxu0 %v9420
        %9675 = vmatprep.subr.bf16.mxu0 0
        %9676 = vmatpush2.bf16.msra.mxu0 %v9419
        %9677 = vmatprep.subr.bf16.mxu0 0
        %9678 = vmatpush2.bf16.msra.mxu0 %v9418
        %9679 = vmatprep.subr.bf16.mxu0 0
        %9680 = vmatpush2.bf16.msra.mxu0 %v9417
        %9681 = vmatprep.mubr.bf16.mxu0 %v9044
        %9682 = vmatmul.mubr.bf16.gmra.mxu0 %v9043
        %v9683 = vpop.f32.mrf.mxu0
        %v9684 = vadd.f32 %v9636, %v9683
        %v9685 = vpop.f32.mrf.mxu0
        %v9686 = vpop.f32.mrf.mxu0
        %v9687 = vadd.f32 %v9639, %v9686
        %v9688 = vpop.f32.mrf.mxu0
        %9689 = vmatprep.mubr.bf16.mxu0 %v9053
        %9690 = vmatmul.mubr.bf16.gmra.mxu0 %v9052
        %v9691 = vpop.f32.mrf.mxu0
        %v9692 = vadd.f32 %v9644, %v9691
        %v9693 = vpop.f32.mrf.mxu0
        %v9694 = vpop.f32.mrf.mxu0
        %v9695 = vpop.f32.mrf.mxu0
        %9696 = vdwg.mxu0
        %9697 = vmatprep.subr.bf16.mxu0 0
        %9698 = vmatpush1.bf16.msra.mxu0 %v9432
        %9699 = vmatprep.subr.bf16.mxu0 0
        %9700 = vmatpush1.bf16.msra.mxu0 %v9431
        %9701 = vmatprep.subr.bf16.mxu0 0
        %9702 = vmatpush1.bf16.msra.mxu0 %v9430
        %9703 = vmatprep.subr.bf16.mxu0 0
        %9704 = vmatpush1.bf16.msra.mxu0 %v9429
        %9705 = vmatprep.subr.bf16.mxu0 0
        %9706 = vmatpush1.bf16.msra.mxu0 %v9428
        %9707 = vmatprep.subr.bf16.mxu0 0
        %9708 = vmatpush1.bf16.msra.mxu0 %v9427
        %9709 = vmatprep.subr.bf16.mxu0 0
        %9710 = vmatpush1.bf16.msra.mxu0 %v9426
        %9711 = vmatprep.subr.bf16.mxu0 0
        %9712 = vmatpush1.bf16.msra.mxu0 %v9425
        %9713 = vmatprep.subr.bf16.mxu0 0
        %9714 = vmatpush2.bf16.msra.mxu0 0
        %9715 = vmatprep.subr.bf16.mxu0 0
        %9716 = vmatpush2.bf16.msra.mxu0 0
        %9717 = vmatprep.subr.bf16.mxu0 0
        %9718 = vmatpush2.bf16.msra.mxu0 0
        %9719 = vmatprep.subr.bf16.mxu0 0
        %9720 = vmatpush2.bf16.msra.mxu0 0
        %9721 = vmatprep.subr.bf16.mxu0 0
        %9722 = vmatpush2.bf16.msra.mxu0 0
        %9723 = vmatprep.subr.bf16.mxu0 0
        %9724 = vmatpush2.bf16.msra.mxu0 0
        %9725 = vmatprep.subr.bf16.mxu0 0
        %9726 = vmatpush2.bf16.msra.mxu0 0
        %9727 = vmatprep.subr.bf16.mxu0 0
        %9728 = vmatpush2.bf16.msra.mxu0 0
        %9729 = vmatprep.mubr.bf16.mxu0 0
        %9730 = vmatmul.mubr.bf16.gmra.mxu0 %v9045
        %v9731 = vpop.f32.mrf.mxu0
        %v9732 = vadd.f32 %v9684, %v9731
        %v9733 = vpop.f32.mrf.mxu0
        %v9734 = vpop.f32.mrf.mxu0
        %v9735 = vadd.f32 %v9687, %v9734
        %v9736 = vpop.f32.mrf.mxu0
        %9737 = vmatprep.mubr.bf16.mxu0 0
        %9738 = vmatmul.mubr.bf16.gmra.mxu0 %v9054
        %v9739 = vpop.f32.mrf.mxu0
        %v9740 = vadd.f32 %v9692, %v9739
        %v9741 = vpop.f32.mrf.mxu0
        %v9742 = vpop.f32.mrf.mxu0
        %v9743 = vpop.f32.mrf.mxu0
        %9744 = vdwg.mxu0
        %v9745 = vmax.f32 %v9732, 0.0
        %v9746 = vmax.f32 %v9735, 0.0
        %v9747 = vmax.f32 %v9740, 0.0
        %9748 = vst [vmem:[#allocation7] sm:$0xff] %v9745
        %9749 = vst [vmem:[#allocation7 + $0x8] sm:$0xff] %v9746
        %9750 = vst [vmem:[#allocation7 + $0x10] sm:$0xff] %v9747
        %v9751 = vld [vmem:[#allocation7] ss:$2 sm:$0x3]
        %v9752 = vld [vmem:[%s6167] ss:$2 sm:$0x3]
        %s9753 = scalar_lea.vmem [#allocation7], 6
        %v9754 = vld [vmem:[%s9753] ss:$2 sm:$0x3]
        %s9755 = scalar_lea.vmem [#allocation7], 7
        %v9756 = vld [vmem:[%s9755] ss:$2 sm:$0x3]
        %v9757 = vmax.f32 %v9751, %v9752
        %v9758 = vmax.f32 %v9754, %v9756
        %v9759 = vmax.f32 %v9757, %v9758
        %v9760 = vpack.c.bf16 %v9759, %v9759
        %v9762 = vunpack.c.l.b16 %v9760
        %v9763 = vpack.c.b16 %v9762, %v9762
        %v9765 = vshrl.u32 %v9763, 16
        %v9767 = vrot.slane %v9765, 5
        %v9768 = vshll.u32 %v9763, 16
        %v9770 = vrot.slane %v9768, 6
        %v9771 = vor.u32 %v9767, %v9770
        %vm9773 = vsmask.f32 3338
        %vm9774 = vmand %vm385, %vm9773
        %v9775 = vld [vmem:[#allocation5] sm:$0xc]
        %v9776 = vsel %vm9774, %v9771, %v9775
        %9777 = vst [vmem:[#allocation5] sm:$0xc] %v9776
        %s9778 = scalar_lea.vmem [#allocation7], 12
        %v9779 = vld [vmem:[%s9778] ss:$2 sm:$0x3]
        %s9780 = scalar_lea.vmem [#allocation7], 13
        %v9781 = vld [vmem:[%s9780] ss:$2 sm:$0x3]
        %v9782 = vld [vmem:[%s6169] ss:$2 sm:$0x3]
        %v9783 = vld [vmem:[%s6171] ss:$2 sm:$0x3]
        %v9784 = vmax.f32 %v9779, %v9781
        %v9785 = vmax.f32 %v9782, %v9783
        %v9786 = vmax.f32 %v9784, %v9785
        %v9787 = vpack.c.bf16 %v9786, %v9786
        %v9789 = vunpack.c.l.b16 %v9787
        %v9790 = vpack.c.b16 %v9789, %v9789
        %v9792 = vshrl.u32 %v9790, 16
        %v9794 = vrot.slane %v9792, 7
        %v9795 = vshll.u32 %v9790, 16
        %v9797 = vor.u32 %v9794, %v9795
        %vm9799 = vsmask.f32 1282
        %vm9800 = vmand %vm353, %vm9799
        %v9801 = vld [vmem:[#allocation5 + $0x4] sm:$0x3]
        %v9802 = vsel %vm9800, %v9797, %v9801
        %9803 = vst [vmem:[#allocation5 + $0x4] sm:$0x3] %v9802
        %v9804 = vld [vmem:[#allocation5] sm:$0xf]
        %9805 = vst [vmem:[#allocation6] sm:$0xf] %v9804
        %v9806 = vld [vmem:[#allocation5] sm:$0xf]
        %v9807 = vld [vmem:[#allocation5 + $0x4] sm:$0x1]
        %v9809 = vshrl.u32 %v9806, 16
        %v9811 = vrot.slane %v9809, 4
        %v9812 = vshll.u32 %v9806, 16
        %v9814 = vrot.slane %v9812, 5
        %v9815 = vor.u32 %v9811, %v9814
        %v9816 = vrot.slane %v9815, 4
        %v9818 = vshll.u32 %v9807, 16
        %v9820 = vrot.slane %v9818, 5
        %v9821 = vsel %vm401, %v9816, %v9820
        %9823 = vst [vmem:[#allocation6 + $0x4] sm:$0xf] %v9821
        %v9824 = vld [vmem:[#allocation5] sm:$0xe]
        %v9825 = vld [vmem:[#allocation5 + $0x4] sm:$0x1]
        %v9828 = vrot.slane %v9824, 5
        %v9829 = vrot.slane %v9828, 4
        %v9830 = vrot.slane %v9825, 5
        %v9831 = vsel %vm1458, %v9829, %v9830
        %9833 = vst [vmem:[#allocation6 + $0x8] sm:$0xf] %v9831
        %v9834 = vld [vmem:[#allocation5] sm:$0xc]
        %v9835 = vld [vmem:[#allocation5 + $0x4] sm:$0x3]
        %v9838 = vrot.slane %v9834, 6
        %v9839 = vrot.slane %v9838, 4
        %v9840 = vrot.slane %v9835, 6
        %v9841 = vsel %vm2447, %v9839, %v9840
        %9843 = vst [vmem:[#allocation6 + $0xc] sm:$0xf] %v9841
        %v9844 = vld [vmem:[#allocation5] sm:$0xc]
        %v9845 = vld [vmem:[#allocation5 + $0x4] sm:$0x7]
        %v9847 = vshrl.u32 %v9844, 16
        %v9849 = vrot.slane %v9847, 6
        %v9850 = vshll.u32 %v9844, 16
        %v9852 = vrot.slane %v9850, 7
        %v9853 = vor.u32 %v9849, %v9852
        %v9854 = vrot.slane %v9853, 4
        %v9856 = vshrl.u32 %v9845, 16
        %v9858 = vrot.slane %v9856, 6
        %v9859 = vshll.u32 %v9845, 16
        %v9861 = vrot.slane %v9859, 7
        %v9862 = vor.u32 %v9858, %v9861
        %v9863 = vsel %vm323, %v9854, %v9862
        %9865 = vst [vmem:[#allocation6 + $0x10] sm:$0xf] %v9863
        %v9866 = vld [vmem:[#allocation5] sm:$0x8]
        %v9867 = vld [vmem:[#allocation5 + $0x4] sm:$0x7]
        %v9870 = vrot.slane %v9866, 7
        %v9871 = vrot.slane %v9870, 4
        %v9872 = vrot.slane %v9867, 7
        %v9873 = vsel %vm3436, %v9871, %v9872
        %9875 = vst [vmem:[#allocation6 + $0x14] sm:$0xf] %v9873
        %v9876 = vld [vmem:[#allocation5 + $0x4] sm:$0xf]
        %9877 = vst [vmem:[#allocation6 + $0x18] sm:$0xf] %v9876
        %v9878 = vld [vmem:[#allocation5 + $0x4] sm:$0xf]
        %v9879 = vld [vmem:[#allocation5 + $0x8] sm:$0x1]
        %v9881 = vshrl.u32 %v9878, 16
        %v9883 = vrot.slane %v9881, 4
        %v9884 = vshll.u32 %v9878, 16
        %v9886 = vrot.slane %v9884, 5
        %v9887 = vor.u32 %v9883, %v9886
        %v9888 = vrot.slane %v9887, 4
        %v9890 = vshll.u32 %v9879, 16
        %v9892 = vrot.slane %v9890, 5
        %v9893 = vsel %vm401, %v9888, %v9892
        %9895 = vst [vmem:[#allocation6 + $0x1c] sm:$0xf] %v9893
        %v9896 = vld [vmem:[#allocation5 + $0x4] sm:$0xe]
        %v9897 = vld [vmem:[#allocation5 + $0x8] sm:$0x1]
        %v9900 = vrot.slane %v9896, 5
        %v9901 = vrot.slane %v9900, 4
        %v9902 = vrot.slane %v9897, 5
        %v9903 = vsel %vm1458, %v9901, %v9902
        %9905 = vst [vmem:[#allocation6 + $0x20] sm:$0xf] %v9903
        %v9906 = vld [vmem:[#allocation6] sm:$0xff]
        %v9907 = vld [vmem:[#allocation6 + $0x8] sm:$0xff]
        %v9908 = vld [vmem:[#allocation6 + $0x10] sm:$0xff]
        %v9909 = vld [vmem:[#allocation6 + $0x18] sm:$0xff]
        %v9910 = vld [vmem:[#allocation6 + $0x20] sm:$0xf]
        %s9911 = scalar_lea.vmem [#allocation8], 1728
        %v9912 = vld [vmem:[%s9911] sm:$0xf]
        %v9913 = vld [vmem:[%s9911 + $0x4] sm:$0xf]
        %v9914 = vld [vmem:[%s9911 + $0x8] sm:$0xf]
        %v9915 = vld [vmem:[%s9911 + $0xc] sm:$0xf]
        %v9916 = vld [vmem:[%s9911 + $0x10] sm:$0xf]
        %v9917 = vld [vmem:[%s9911 + $0x14] sm:$0xf]
        %v9918 = vld [vmem:[%s9911 + $0x18] sm:$0xf]
        %v9919 = vld [vmem:[%s9911 + $0x1c] sm:$0xf]
        %v9920 = vld [vmem:[%s9911 + $0x20] sm:$0xf]
        %v9921 = vld [vmem:[%s9911 + $0x24] sm:$0xf]
        %v9922 = vld [vmem:[%s9911 + $0x28] sm:$0xf]
        %v9923 = vld [vmem:[%s9911 + $0x2c] sm:$0xf]
        %v9924 = vld [vmem:[%s9911 + $0x30] sm:$0xf]
        %v9925 = vld [vmem:[%s9911 + $0x34] sm:$0xf]
        %v9926 = vld [vmem:[%s9911 + $0x38] sm:$0xf]
        %v9927 = vld [vmem:[%s9911 + $0x3c] sm:$0xf]
        %v9928 = vld [vmem:[%s9911 + $0x40] sm:$0xf]
        %v9929 = vld [vmem:[%s9911 + $0x44] sm:$0xf]
        %v9930 = vld [vmem:[%s9911 + $0x48] sm:$0xf]
        %v9931 = vld [vmem:[%s9911 + $0x4c] sm:$0xf]
        %v9932 = vld [vmem:[%s9911 + $0x50] sm:$0xf]
        %v9933 = vld [vmem:[%s9911 + $0x54] sm:$0xf]
        %v9934 = vld [vmem:[%s9911 + $0x58] sm:$0xf]
        %v9935 = vld [vmem:[%s9911 + $0x5c] sm:$0xf]
        %v9936 = vld [vmem:[%s9911 + $0x60] sm:$0xf]
        %v9937 = vld [vmem:[%s9911 + $0x64] sm:$0xf]
        %v9938 = vld [vmem:[%s9911 + $0x68] sm:$0xf]
        %v9939 = vld [vmem:[%s9911 + $0x6c] sm:$0xf]
        %v9940 = vld [vmem:[%s9911 + $0x70] sm:$0xf]
        %v9941 = vld [vmem:[%s9911 + $0x74] sm:$0xf]
        %v9942 = vld [vmem:[%s9911 + $0x78] sm:$0xf]
        %v9943 = vld [vmem:[%s9911 + $0x7c] sm:$0xf]
        %v9944 = vld [vmem:[%s9911 + $0x80] sm:$0xf]
        %v9945 = vld [vmem:[%s9911 + $0x84] sm:$0xf]
        %v9946 = vld [vmem:[%s9911 + $0x88] sm:$0xf]
        %v9947 = vld [vmem:[%s9911 + $0x8c] sm:$0xf]
        %v9948 = vld [vmem:[%s9911 + $0x90] sm:$0xf]
        %v9949 = vld [vmem:[%s9911 + $0x94] sm:$0xf]
        %v9950 = vld [vmem:[%s9911 + $0x98] sm:$0xf]
        %v9951 = vld [vmem:[%s9911 + $0x9c] sm:$0xf]
        %v9952 = vld [vmem:[%s9911 + $0xa0] sm:$0xf]
        %v9953 = vld [vmem:[%s9911 + $0xa4] sm:$0xf]
        %v9954 = vld [vmem:[%s9911 + $0xa8] sm:$0xf]
        %v9955 = vld [vmem:[%s9911 + $0xac] sm:$0xf]
        %v9956 = vld [vmem:[%s9911 + $0xb0] sm:$0xf]
        %v9957 = vld [vmem:[%s9911 + $0xb4] sm:$0xf]
        %v9958 = vld [vmem:[%s9911 + $0xb8] sm:$0xf]
        %v9959 = vld [vmem:[%s9911 + $0xbc] sm:$0xf]
        %v9960 = vld [vmem:[%s9911 + $0xc0] sm:$0xf]
        %v9961 = vld [vmem:[%s9911 + $0xc4] sm:$0xf]
        %v9962 = vld [vmem:[%s9911 + $0xc8] sm:$0xf]
        %v9963 = vld [vmem:[%s9911 + $0xcc] sm:$0xf]
        %v9964 = vld [vmem:[%s9911 + $0xd0] sm:$0xf]
        %v9965 = vld [vmem:[%s9911 + $0xd4] sm:$0xf]
        %v9966 = vld [vmem:[%s9911 + $0xd8] sm:$0xf]
        %v9967 = vld [vmem:[%s9911 + $0xdc] sm:$0xf]
        %v9968 = vld [vmem:[%s9911 + $0xe0] sm:$0xf]
        %v9969 = vld [vmem:[%s9911 + $0xe4] sm:$0xf]
        %v9970 = vld [vmem:[%s9911 + $0xe8] sm:$0xf]
        %v9971 = vld [vmem:[%s9911 + $0xec] sm:$0xf]
        %v9972 = vld [vmem:[%s9911 + $0xf0] sm:$0xf]
        %v9973 = vld [vmem:[%s9911 + $0xf4] sm:$0xf]
        %v9974 = vld [vmem:[%s9911 + $0xf8] sm:$0xf]
        %v9975 = vld [vmem:[%s9911 + $0xfc] sm:$0xf]
        %v9976 = vld [vmem:[%s9911 + $0x100] sm:$0xf]
        %v9977 = vld [vmem:[%s9911 + $0x104] sm:$0xf]
        %v9978 = vld [vmem:[%s9911 + $0x108] sm:$0xf]
        %v9979 = vld [vmem:[%s9911 + $0x10c] sm:$0xf]
        %v9980 = vld [vmem:[%s9911 + $0x110] sm:$0xf]
        %v9981 = vld [vmem:[%s9911 + $0x114] sm:$0xf]
        %v9982 = vld [vmem:[%s9911 + $0x118] sm:$0xf]
        %v9983 = vld [vmem:[%s9911 + $0x11c] sm:$0xf]
        %v9984 = vld [vmem:[%s9911 + $0x120] sm:$0xf]
        %v9985 = vld [vmem:[%s9911 + $0x124] sm:$0xf]
        %v9986 = vld [vmem:[%s9911 + $0x128] sm:$0xf]
        %v9987 = vld [vmem:[%s9911 + $0x12c] sm:$0xf]
        %v9988 = vld [vmem:[%s9911 + $0x130] sm:$0xf]
        %v9989 = vld [vmem:[%s9911 + $0x134] sm:$0xf]
        %v9990 = vld [vmem:[%s9911 + $0x138] sm:$0xf]
        %v9991 = vld [vmem:[%s9911 + $0x13c] sm:$0xf]
        %v9992 = vld [vmem:[%s9911 + $0x140] sm:$0xf]
        %v9993 = vld [vmem:[%s9911 + $0x144] sm:$0xf]
        %v9994 = vld [vmem:[%s9911 + $0x148] sm:$0xf]
        %v9995 = vld [vmem:[%s9911 + $0x14c] sm:$0xf]
        %v9996 = vld [vmem:[%s9911 + $0x150] sm:$0xf]
        %v9997 = vld [vmem:[%s9911 + $0x154] sm:$0xf]
        %v9998 = vld [vmem:[%s9911 + $0x158] sm:$0xf]
        %v9999 = vld [vmem:[%s9911 + $0x15c] sm:$0xf]
        %v10000 = vld [vmem:[%s9911 + $0x160] sm:$0xf]
        %v10001 = vld [vmem:[%s9911 + $0x164] sm:$0xf]
        %v10002 = vld [vmem:[%s9911 + $0x168] sm:$0xf]
        %v10003 = vld [vmem:[%s9911 + $0x16c] sm:$0xf]
        %v10004 = vld [vmem:[%s9911 + $0x170] sm:$0xf]
        %v10005 = vld [vmem:[%s9911 + $0x174] sm:$0xf]
        %v10006 = vld [vmem:[%s9911 + $0x178] sm:$0xf]
        %v10007 = vld [vmem:[%s9911 + $0x17c] sm:$0xf]
        %v10008 = vld [vmem:[%s9911 + $0x180] sm:$0xf]
        %v10009 = vld [vmem:[%s9911 + $0x184] sm:$0xf]
        %v10010 = vld [vmem:[%s9911 + $0x188] sm:$0xf]
        %v10011 = vld [vmem:[%s9911 + $0x18c] sm:$0xf]
        %v10012 = vld [vmem:[%s9911 + $0x190] sm:$0xf]
        %v10013 = vld [vmem:[%s9911 + $0x194] sm:$0xf]
        %v10014 = vld [vmem:[%s9911 + $0x198] sm:$0xf]
        %v10015 = vld [vmem:[%s9911 + $0x19c] sm:$0xf]
        %v10016 = vld [vmem:[%s9911 + $0x1a0] sm:$0xf]
        %v10017 = vld [vmem:[%s9911 + $0x1a4] sm:$0xf]
        %v10018 = vld [vmem:[%s9911 + $0x1a8] sm:$0xf]
        %v10019 = vld [vmem:[%s9911 + $0x1ac] sm:$0xf]
        %v10020 = vld [vmem:[%s9911 + $0x1b0] sm:$0xf]
        %v10021 = vld [vmem:[%s9911 + $0x1b4] sm:$0xf]
        %v10022 = vld [vmem:[%s9911 + $0x1b8] sm:$0xf]
        %v10023 = vld [vmem:[%s9911 + $0x1bc] sm:$0xf]
        %v10024 = vld [vmem:[%s9911 + $0x1c0] sm:$0xf]
        %v10025 = vld [vmem:[%s9911 + $0x1c4] sm:$0xf]
        %v10026 = vld [vmem:[%s9911 + $0x1c8] sm:$0xf]
        %v10027 = vld [vmem:[%s9911 + $0x1cc] sm:$0xf]
        %v10028 = vld [vmem:[%s9911 + $0x1d0] sm:$0xf]
        %v10029 = vld [vmem:[%s9911 + $0x1d4] sm:$0xf]
        %v10030 = vld [vmem:[%s9911 + $0x1d8] sm:$0xf]
        %v10031 = vld [vmem:[%s9911 + $0x1dc] sm:$0xf]
        %v10032 = vld [vmem:[%s9911 + $0x1e0] sm:$0xf]
        %v10033 = vld [vmem:[%s9911 + $0x1e4] sm:$0xf]
        %v10034 = vld [vmem:[%s9911 + $0x1e8] sm:$0xf]
        %v10035 = vld [vmem:[%s9911 + $0x1ec] sm:$0xf]
        %v10036 = vld [vmem:[%s9911 + $0x1f0] sm:$0xf]
        %v10037 = vld [vmem:[%s9911 + $0x1f4] sm:$0xf]
        %v10038 = vld [vmem:[%s9911 + $0x1f8] sm:$0xf]
        %v10039 = vld [vmem:[%s9911 + $0x1fc] sm:$0xf]
        %v10040 = vld [vmem:[%s9911 + $0x200] sm:$0xf]
        %v10041 = vld [vmem:[%s9911 + $0x204] sm:$0xf]
        %v10042 = vld [vmem:[%s9911 + $0x208] sm:$0xf]
        %v10043 = vld [vmem:[%s9911 + $0x20c] sm:$0xf]
        %v10044 = vld [vmem:[%s9911 + $0x210] sm:$0xf]
        %v10045 = vld [vmem:[%s9911 + $0x214] sm:$0xf]
        %v10046 = vld [vmem:[%s9911 + $0x218] sm:$0xf]
        %v10047 = vld [vmem:[%s9911 + $0x21c] sm:$0xf]
        %v10048 = vld [vmem:[%s9911 + $0x220] sm:$0xf]
        %v10049 = vld [vmem:[%s9911 + $0x224] sm:$0xf]
        %v10050 = vld [vmem:[%s9911 + $0x228] sm:$0xf]
        %v10051 = vld [vmem:[%s9911 + $0x22c] sm:$0xf]
        %v10052 = vld [vmem:[%s9911 + $0x230] sm:$0xf]
        %v10053 = vld [vmem:[%s9911 + $0x234] sm:$0xf]
        %v10054 = vld [vmem:[%s9911 + $0x238] sm:$0xf]
        %v10055 = vld [vmem:[%s9911 + $0x23c] sm:$0xf]
        %s10056 = scalar_lea.vmem %s2, 3
        %v10057 = vld [vmem:[%s10056] sm:$0x1]
        %v10059 = vlaneseq
        %v10060 = vshrl.u32 %v10059, 7
        %v10061 = vsub.s32 0, %v10060
        %v10062 = vrot.slane %v10057, %v10061
        %v10069 = vunpack.c.l.b16 %v9906
        %v10070 = vunpack.c.h.b16 %v9906
        %v10071 = vunpack.c.l.b16 %v9907
        %v10072 = vunpack.c.h.b16 %v9907
        %v10073 = vunpack.c.l.b16 %v9908
        %v10074 = vunpack.c.h.b16 %v9908
        %v10075 = vunpack.c.l.b16 %v9909
        %v10076 = vunpack.c.h.b16 %v9909
        %v10077 = vunpack.c.l.b16 %v9910
        %v10078 = vpack.c.b16 %v10069, %v10069
        %v10079 = vpack.c.b16 %v10070, %v10070
        %v10080 = vpack.c.b16 %v10071, %v10071
        %v10081 = vpack.c.b16 %v10072, %v10072
        %v10082 = vpack.c.b16 %v10073, %v10073
        %v10083 = vpack.c.b16 %v10074, %v10074
        %v10084 = vpack.c.b16 %v10075, %v10075
        %v10085 = vpack.c.b16 %v10076, %v10076
        %v10086 = vpack.c.b16 %v10077, %v10077
        %v10240 = vunpack.c.l.b16 %v9912
        %v10241 = vunpack.c.l.b16 %v9913
        %v10242 = vunpack.c.l.b16 %v9914
        %v10243 = vunpack.c.l.b16 %v9915
        %v10244 = vunpack.c.l.b16 %v9916
        %v10245 = vunpack.c.l.b16 %v9917
        %v10246 = vunpack.c.l.b16 %v9918
        %v10247 = vunpack.c.l.b16 %v9919
        %v10248 = vunpack.c.l.b16 %v9920
        %v10249 = vunpack.c.l.b16 %v9921
        %v10250 = vunpack.c.l.b16 %v9922
        %v10251 = vunpack.c.l.b16 %v9923
        %v10252 = vunpack.c.l.b16 %v9924
        %v10253 = vunpack.c.l.b16 %v9925
        %v10254 = vunpack.c.l.b16 %v9926
        %v10255 = vunpack.c.l.b16 %v9927
        %v10256 = vunpack.c.l.b16 %v9928
        %v10257 = vunpack.c.l.b16 %v9929
        %v10258 = vunpack.c.l.b16 %v9930
        %v10259 = vunpack.c.l.b16 %v9931
        %v10260 = vunpack.c.l.b16 %v9932
        %v10261 = vunpack.c.l.b16 %v9933
        %v10262 = vunpack.c.l.b16 %v9934
        %v10263 = vunpack.c.l.b16 %v9935
        %v10264 = vunpack.c.l.b16 %v9936
        %v10265 = vunpack.c.l.b16 %v9937
        %v10266 = vunpack.c.l.b16 %v9938
        %v10267 = vunpack.c.l.b16 %v9939
        %v10268 = vunpack.c.l.b16 %v9940
        %v10269 = vunpack.c.l.b16 %v9941
        %v10270 = vunpack.c.l.b16 %v9942
        %v10271 = vunpack.c.l.b16 %v9943
        %v10272 = vunpack.c.l.b16 %v9944
        %v10273 = vunpack.c.l.b16 %v9945
        %v10274 = vunpack.c.l.b16 %v9946
        %v10275 = vunpack.c.l.b16 %v9947
        %v10276 = vunpack.c.l.b16 %v9948
        %v10277 = vunpack.c.l.b16 %v9949
        %v10278 = vunpack.c.l.b16 %v9950
        %v10279 = vunpack.c.l.b16 %v9951
        %v10280 = vunpack.c.l.b16 %v9952
        %v10281 = vunpack.c.l.b16 %v9953
        %v10282 = vunpack.c.l.b16 %v9954
        %v10283 = vunpack.c.l.b16 %v9955
        %v10284 = vunpack.c.l.b16 %v9956
        %v10285 = vunpack.c.l.b16 %v9957
        %v10286 = vunpack.c.l.b16 %v9958
        %v10287 = vunpack.c.l.b16 %v9959
        %v10288 = vunpack.c.l.b16 %v9960
        %v10289 = vunpack.c.l.b16 %v9961
        %v10290 = vunpack.c.l.b16 %v9962
        %v10291 = vunpack.c.l.b16 %v9963
        %v10292 = vunpack.c.l.b16 %v9964
        %v10293 = vunpack.c.l.b16 %v9965
        %v10294 = vunpack.c.l.b16 %v9966
        %v10295 = vunpack.c.l.b16 %v9967
        %v10296 = vunpack.c.l.b16 %v9968
        %v10297 = vunpack.c.l.b16 %v9969
        %v10298 = vunpack.c.l.b16 %v9970
        %v10299 = vunpack.c.l.b16 %v9971
        %v10300 = vunpack.c.l.b16 %v9972
        %v10301 = vunpack.c.l.b16 %v9973
        %v10302 = vunpack.c.l.b16 %v9974
        %v10303 = vunpack.c.l.b16 %v9975
        %v10304 = vunpack.c.l.b16 %v9976
        %v10305 = vunpack.c.l.b16 %v9977
        %v10306 = vunpack.c.l.b16 %v9978
        %v10307 = vunpack.c.l.b16 %v9979
        %v10308 = vunpack.c.l.b16 %v9980
        %v10309 = vunpack.c.l.b16 %v9981
        %v10310 = vunpack.c.l.b16 %v9982
        %v10311 = vunpack.c.l.b16 %v9983
        %v10312 = vunpack.c.l.b16 %v9984
        %v10313 = vunpack.c.l.b16 %v9985
        %v10314 = vunpack.c.l.b16 %v9986
        %v10315 = vunpack.c.l.b16 %v9987
        %v10316 = vunpack.c.l.b16 %v9988
        %v10317 = vunpack.c.l.b16 %v9989
        %v10318 = vunpack.c.l.b16 %v9990
        %v10319 = vunpack.c.l.b16 %v9991
        %v10320 = vunpack.c.l.b16 %v9992
        %v10321 = vunpack.c.l.b16 %v9993
        %v10322 = vunpack.c.l.b16 %v9994
        %v10323 = vunpack.c.l.b16 %v9995
        %v10324 = vunpack.c.l.b16 %v9996
        %v10325 = vunpack.c.l.b16 %v9997
        %v10326 = vunpack.c.l.b16 %v9998
        %v10327 = vunpack.c.l.b16 %v9999
        %v10328 = vunpack.c.l.b16 %v10000
        %v10329 = vunpack.c.l.b16 %v10001
        %v10330 = vunpack.c.l.b16 %v10002
        %v10331 = vunpack.c.l.b16 %v10003
        %v10332 = vunpack.c.l.b16 %v10004
        %v10333 = vunpack.c.l.b16 %v10005
        %v10334 = vunpack.c.l.b16 %v10006
        %v10335 = vunpack.c.l.b16 %v10007
        %v10336 = vunpack.c.l.b16 %v10008
        %v10337 = vunpack.c.l.b16 %v10009
        %v10338 = vunpack.c.l.b16 %v10010
        %v10339 = vunpack.c.l.b16 %v10011
        %v10340 = vunpack.c.l.b16 %v10012
        %v10341 = vunpack.c.l.b16 %v10013
        %v10342 = vunpack.c.l.b16 %v10014
        %v10343 = vunpack.c.l.b16 %v10015
        %v10344 = vunpack.c.l.b16 %v10016
        %v10345 = vunpack.c.l.b16 %v10017
        %v10346 = vunpack.c.l.b16 %v10018
        %v10347 = vunpack.c.l.b16 %v10019
        %v10348 = vunpack.c.l.b16 %v10020
        %v10349 = vunpack.c.l.b16 %v10021
        %v10350 = vunpack.c.l.b16 %v10022
        %v10351 = vunpack.c.l.b16 %v10023
        %v10352 = vunpack.c.l.b16 %v10024
        %v10353 = vunpack.c.l.b16 %v10025
        %v10354 = vunpack.c.l.b16 %v10026
        %v10355 = vunpack.c.l.b16 %v10027
        %v10356 = vunpack.c.l.b16 %v10028
        %v10357 = vunpack.c.l.b16 %v10029
        %v10358 = vunpack.c.l.b16 %v10030
        %v10359 = vunpack.c.l.b16 %v10031
        %v10360 = vunpack.c.l.b16 %v10032
        %v10361 = vunpack.c.l.b16 %v10033
        %v10362 = vunpack.c.l.b16 %v10034
        %v10363 = vunpack.c.l.b16 %v10035
        %v10364 = vunpack.c.l.b16 %v10036
        %v10365 = vunpack.c.l.b16 %v10037
        %v10366 = vunpack.c.l.b16 %v10038
        %v10367 = vunpack.c.l.b16 %v10039
        %v10368 = vunpack.c.l.b16 %v10040
        %v10369 = vunpack.c.l.b16 %v10041
        %v10370 = vunpack.c.l.b16 %v10042
        %v10371 = vunpack.c.l.b16 %v10043
        %v10372 = vunpack.c.l.b16 %v10044
        %v10373 = vunpack.c.l.b16 %v10045
        %v10374 = vunpack.c.l.b16 %v10046
        %v10375 = vunpack.c.l.b16 %v10047
        %v10376 = vunpack.c.l.b16 %v10048
        %v10377 = vunpack.c.l.b16 %v10049
        %v10378 = vunpack.c.l.b16 %v10050
        %v10379 = vunpack.c.l.b16 %v10051
        %v10380 = vunpack.c.l.b16 %v10052
        %v10381 = vunpack.c.l.b16 %v10053
        %v10382 = vunpack.c.l.b16 %v10054
        %v10383 = vunpack.c.l.b16 %v10055
        %v10384 = vpack.c.b16 %v10241, %v10240
        %v10385 = vpack.c.b16 %v10243, %v10242
        %v10386 = vpack.c.b16 %v10245, %v10244
        %v10387 = vpack.c.b16 %v10247, %v10246
        %v10388 = vpack.c.b16 %v10249, %v10248
        %v10389 = vpack.c.b16 %v10251, %v10250
        %v10390 = vpack.c.b16 %v10253, %v10252
        %v10391 = vpack.c.b16 %v10255, %v10254
        %v10392 = vpack.c.b16 %v10257, %v10256
        %v10393 = vpack.c.b16 %v10259, %v10258
        %v10394 = vpack.c.b16 %v10261, %v10260
        %v10395 = vpack.c.b16 %v10263, %v10262
        %v10396 = vpack.c.b16 %v10265, %v10264
        %v10397 = vpack.c.b16 %v10267, %v10266
        %v10398 = vpack.c.b16 %v10269, %v10268
        %v10399 = vpack.c.b16 %v10271, %v10270
        %v10400 = vpack.c.b16 %v10273, %v10272
        %v10401 = vpack.c.b16 %v10275, %v10274
        %v10402 = vpack.c.b16 %v10277, %v10276
        %v10403 = vpack.c.b16 %v10279, %v10278
        %v10404 = vpack.c.b16 %v10281, %v10280
        %v10405 = vpack.c.b16 %v10283, %v10282
        %v10406 = vpack.c.b16 %v10285, %v10284
        %v10407 = vpack.c.b16 %v10287, %v10286
        %v10408 = vpack.c.b16 %v10289, %v10288
        %v10409 = vpack.c.b16 %v10291, %v10290
        %v10410 = vpack.c.b16 %v10293, %v10292
        %v10411 = vpack.c.b16 %v10295, %v10294
        %v10412 = vpack.c.b16 %v10297, %v10296
        %v10413 = vpack.c.b16 %v10299, %v10298
        %v10414 = vpack.c.b16 %v10301, %v10300
        %v10415 = vpack.c.b16 %v10303, %v10302
        %v10416 = vpack.c.b16 %v10305, %v10304
        %v10417 = vpack.c.b16 %v10307, %v10306
        %v10418 = vpack.c.b16 %v10309, %v10308
        %v10419 = vpack.c.b16 %v10311, %v10310
        %v10420 = vpack.c.b16 %v10313, %v10312
        %v10421 = vpack.c.b16 %v10315, %v10314
        %v10422 = vpack.c.b16 %v10317, %v10316
        %v10423 = vpack.c.b16 %v10319, %v10318
        %v10424 = vpack.c.b16 %v10321, %v10320
        %v10425 = vpack.c.b16 %v10323, %v10322
        %v10426 = vpack.c.b16 %v10325, %v10324
        %v10427 = vpack.c.b16 %v10327, %v10326
        %v10428 = vpack.c.b16 %v10329, %v10328
        %v10429 = vpack.c.b16 %v10331, %v10330
        %v10430 = vpack.c.b16 %v10333, %v10332
        %v10431 = vpack.c.b16 %v10335, %v10334
        %v10432 = vpack.c.b16 %v10337, %v10336
        %v10433 = vpack.c.b16 %v10339, %v10338
        %v10434 = vpack.c.b16 %v10341, %v10340
        %v10435 = vpack.c.b16 %v10343, %v10342
        %v10436 = vpack.c.b16 %v10345, %v10344
        %v10437 = vpack.c.b16 %v10347, %v10346
        %v10438 = vpack.c.b16 %v10349, %v10348
        %v10439 = vpack.c.b16 %v10351, %v10350
        %v10440 = vpack.c.b16 %v10353, %v10352
        %v10441 = vpack.c.b16 %v10355, %v10354
        %v10442 = vpack.c.b16 %v10357, %v10356
        %v10443 = vpack.c.b16 %v10359, %v10358
        %v10444 = vpack.c.b16 %v10361, %v10360
        %v10445 = vpack.c.b16 %v10363, %v10362
        %v10446 = vpack.c.b16 %v10365, %v10364
        %v10447 = vpack.c.b16 %v10367, %v10366
        %v10448 = vpack.c.b16 %v10369, %v10368
        %v10449 = vpack.c.b16 %v10371, %v10370
        %v10450 = vpack.c.b16 %v10373, %v10372
        %v10451 = vpack.c.b16 %v10375, %v10374
        %v10452 = vpack.c.b16 %v10377, %v10376
        %v10453 = vpack.c.b16 %v10379, %v10378
        %v10454 = vpack.c.b16 %v10381, %v10380
        %v10455 = vpack.c.b16 %v10383, %v10382
        %10528 = vmatprep.subr.bf16.mxu0 0
        %10529 = vmatpush1.bf16.msra.mxu0 %v10391
        %10530 = vmatprep.subr.bf16.mxu0 0
        %10531 = vmatpush1.bf16.msra.mxu0 %v10390
        %10532 = vmatprep.subr.bf16.mxu0 0
        %10533 = vmatpush1.bf16.msra.mxu0 %v10389
        %10534 = vmatprep.subr.bf16.mxu0 0
        %10535 = vmatpush1.bf16.msra.mxu0 %v10388
        %10536 = vmatprep.subr.bf16.mxu0 0
        %10537 = vmatpush1.bf16.msra.mxu0 %v10387
        %10538 = vmatprep.subr.bf16.mxu0 0
        %10539 = vmatpush1.bf16.msra.mxu0 %v10386
        %10540 = vmatprep.subr.bf16.mxu0 0
        %10541 = vmatpush1.bf16.msra.mxu0 %v10385
        %10542 = vmatprep.subr.bf16.mxu0 0
        %10543 = vmatpush1.bf16.msra.mxu0 %v10384
        %10544 = vmatprep.subr.bf16.mxu0 0
        %10545 = vmatpush2.bf16.msra.mxu0 %v10399
        %10546 = vmatprep.subr.bf16.mxu0 0
        %10547 = vmatpush2.bf16.msra.mxu0 %v10398
        %10548 = vmatprep.subr.bf16.mxu0 0
        %10549 = vmatpush2.bf16.msra.mxu0 %v10397
        %10550 = vmatprep.subr.bf16.mxu0 0
        %10551 = vmatpush2.bf16.msra.mxu0 %v10396
        %10552 = vmatprep.subr.bf16.mxu0 0
        %10553 = vmatpush2.bf16.msra.mxu0 %v10395
        %10554 = vmatprep.subr.bf16.mxu0 0
        %10555 = vmatpush2.bf16.msra.mxu0 %v10394
        %10556 = vmatprep.subr.bf16.mxu0 0
        %10557 = vmatpush2.bf16.msra.mxu0 %v10393
        %10558 = vmatprep.subr.bf16.mxu0 0
        %10559 = vmatpush2.bf16.msra.mxu0 %v10392
        %10560 = vmatprep.mubr.bf16.mxu0 %v10079
        %10561 = vmatmul.mubr.bf16.gmra.mxu0 %v10078
        %v10562 = vpop.f32.mrf.mxu0
        %v10563 = vadd.f32 %v10062, %v10562
        %v10564 = vpop.f32.mrf.mxu0
        %v10565 = vpop.f32.mrf.mxu0
        %v10566 = vpop.f32.mrf.mxu0
        %10567 = vdwg.mxu0
        %10568 = vmatprep.subr.bf16.mxu0 0
        %10569 = vmatpush1.bf16.msra.mxu0 %v10407
        %10570 = vmatprep.subr.bf16.mxu0 0
        %10571 = vmatpush1.bf16.msra.mxu0 %v10406
        %10572 = vmatprep.subr.bf16.mxu0 0
        %10573 = vmatpush1.bf16.msra.mxu0 %v10405
        %10574 = vmatprep.subr.bf16.mxu0 0
        %10575 = vmatpush1.bf16.msra.mxu0 %v10404
        %10576 = vmatprep.subr.bf16.mxu0 0
        %10577 = vmatpush1.bf16.msra.mxu0 %v10403
        %10578 = vmatprep.subr.bf16.mxu0 0
        %10579 = vmatpush1.bf16.msra.mxu0 %v10402
        %10580 = vmatprep.subr.bf16.mxu0 0
        %10581 = vmatpush1.bf16.msra.mxu0 %v10401
        %10582 = vmatprep.subr.bf16.mxu0 0
        %10583 = vmatpush1.bf16.msra.mxu0 %v10400
        %10584 = vmatprep.subr.bf16.mxu0 0
        %10585 = vmatpush2.bf16.msra.mxu0 %v10415
        %10586 = vmatprep.subr.bf16.mxu0 0
        %10587 = vmatpush2.bf16.msra.mxu0 %v10414
        %10588 = vmatprep.subr.bf16.mxu0 0
        %10589 = vmatpush2.bf16.msra.mxu0 %v10413
        %10590 = vmatprep.subr.bf16.mxu0 0
        %10591 = vmatpush2.bf16.msra.mxu0 %v10412
        %10592 = vmatprep.subr.bf16.mxu0 0
        %10593 = vmatpush2.bf16.msra.mxu0 %v10411
        %10594 = vmatprep.subr.bf16.mxu0 0
        %10595 = vmatpush2.bf16.msra.mxu0 %v10410
        %10596 = vmatprep.subr.bf16.mxu0 0
        %10597 = vmatpush2.bf16.msra.mxu0 %v10409
        %10598 = vmatprep.subr.bf16.mxu0 0
        %10599 = vmatpush2.bf16.msra.mxu0 %v10408
        %10600 = vmatprep.mubr.bf16.mxu0 %v10081
        %10601 = vmatmul.mubr.bf16.gmra.mxu0 %v10080
        %v10602 = vpop.f32.mrf.mxu0
        %v10603 = vadd.f32 %v10563, %v10602
        %v10604 = vpop.f32.mrf.mxu0
        %v10605 = vpop.f32.mrf.mxu0
        %v10606 = vpop.f32.mrf.mxu0
        %10607 = vdwg.mxu0
        %10608 = vmatprep.subr.bf16.mxu0 0
        %10609 = vmatpush1.bf16.msra.mxu0 %v10423
        %10610 = vmatprep.subr.bf16.mxu0 0
        %10611 = vmatpush1.bf16.msra.mxu0 %v10422
        %10612 = vmatprep.subr.bf16.mxu0 0
        %10613 = vmatpush1.bf16.msra.mxu0 %v10421
        %10614 = vmatprep.subr.bf16.mxu0 0
        %10615 = vmatpush1.bf16.msra.mxu0 %v10420
        %10616 = vmatprep.subr.bf16.mxu0 0
        %10617 = vmatpush1.bf16.msra.mxu0 %v10419
        %10618 = vmatprep.subr.bf16.mxu0 0
        %10619 = vmatpush1.bf16.msra.mxu0 %v10418
        %10620 = vmatprep.subr.bf16.mxu0 0
        %10621 = vmatpush1.bf16.msra.mxu0 %v10417
        %10622 = vmatprep.subr.bf16.mxu0 0
        %10623 = vmatpush1.bf16.msra.mxu0 %v10416
        %10624 = vmatprep.subr.bf16.mxu0 0
        %10625 = vmatpush2.bf16.msra.mxu0 %v10431
        %10626 = vmatprep.subr.bf16.mxu0 0
        %10627 = vmatpush2.bf16.msra.mxu0 %v10430
        %10628 = vmatprep.subr.bf16.mxu0 0
        %10629 = vmatpush2.bf16.msra.mxu0 %v10429
        %10630 = vmatprep.subr.bf16.mxu0 0
        %10631 = vmatpush2.bf16.msra.mxu0 %v10428
        %10632 = vmatprep.subr.bf16.mxu0 0
        %10633 = vmatpush2.bf16.msra.mxu0 %v10427
        %10634 = vmatprep.subr.bf16.mxu0 0
        %10635 = vmatpush2.bf16.msra.mxu0 %v10426
        %10636 = vmatprep.subr.bf16.mxu0 0
        %10637 = vmatpush2.bf16.msra.mxu0 %v10425
        %10638 = vmatprep.subr.bf16.mxu0 0
        %10639 = vmatpush2.bf16.msra.mxu0 %v10424
        %10640 = vmatprep.mubr.bf16.mxu0 %v10083
        %10641 = vmatmul.mubr.bf16.gmra.mxu0 %v10082
        %v10642 = vpop.f32.mrf.mxu0
        %v10643 = vadd.f32 %v10603, %v10642
        %v10644 = vpop.f32.mrf.mxu0
        %v10645 = vpop.f32.mrf.mxu0
        %v10646 = vpop.f32.mrf.mxu0
        %10647 = vdwg.mxu0
        %10648 = vmatprep.subr.bf16.mxu0 0
        %10649 = vmatpush1.bf16.msra.mxu0 %v10439
        %10650 = vmatprep.subr.bf16.mxu0 0
        %10651 = vmatpush1.bf16.msra.mxu0 %v10438
        %10652 = vmatprep.subr.bf16.mxu0 0
        %10653 = vmatpush1.bf16.msra.mxu0 %v10437
        %10654 = vmatprep.subr.bf16.mxu0 0
        %10655 = vmatpush1.bf16.msra.mxu0 %v10436
        %10656 = vmatprep.subr.bf16.mxu0 0
        %10657 = vmatpush1.bf16.msra.mxu0 %v10435
        %10658 = vmatprep.subr.bf16.mxu0 0
        %10659 = vmatpush1.bf16.msra.mxu0 %v10434
        %10660 = vmatprep.subr.bf16.mxu0 0
        %10661 = vmatpush1.bf16.msra.mxu0 %v10433
        %10662 = vmatprep.subr.bf16.mxu0 0
        %10663 = vmatpush1.bf16.msra.mxu0 %v10432
        %10664 = vmatprep.subr.bf16.mxu0 0
        %10665 = vmatpush2.bf16.msra.mxu0 %v10447
        %10666 = vmatprep.subr.bf16.mxu0 0
        %10667 = vmatpush2.bf16.msra.mxu0 %v10446
        %10668 = vmatprep.subr.bf16.mxu0 0
        %10669 = vmatpush2.bf16.msra.mxu0 %v10445
        %10670 = vmatprep.subr.bf16.mxu0 0
        %10671 = vmatpush2.bf16.msra.mxu0 %v10444
        %10672 = vmatprep.subr.bf16.mxu0 0
        %10673 = vmatpush2.bf16.msra.mxu0 %v10443
        %10674 = vmatprep.subr.bf16.mxu0 0
        %10675 = vmatpush2.bf16.msra.mxu0 %v10442
        %10676 = vmatprep.subr.bf16.mxu0 0
        %10677 = vmatpush2.bf16.msra.mxu0 %v10441
        %10678 = vmatprep.subr.bf16.mxu0 0
        %10679 = vmatpush2.bf16.msra.mxu0 %v10440
        %10680 = vmatprep.mubr.bf16.mxu0 %v10085
        %10681 = vmatmul.mubr.bf16.gmra.mxu0 %v10084
        %v10682 = vpop.f32.mrf.mxu0
        %v10683 = vadd.f32 %v10643, %v10682
        %v10684 = vpop.f32.mrf.mxu0
        %v10685 = vpop.f32.mrf.mxu0
        %v10686 = vpop.f32.mrf.mxu0
        %10687 = vdwg.mxu0
        %10688 = vmatprep.subr.bf16.mxu0 0
        %10689 = vmatpush1.bf16.msra.mxu0 %v10455
        %10690 = vmatprep.subr.bf16.mxu0 0
        %10691 = vmatpush1.bf16.msra.mxu0 %v10454
        %10692 = vmatprep.subr.bf16.mxu0 0
        %10693 = vmatpush1.bf16.msra.mxu0 %v10453
        %10694 = vmatprep.subr.bf16.mxu0 0
        %10695 = vmatpush1.bf16.msra.mxu0 %v10452
        %10696 = vmatprep.subr.bf16.mxu0 0
        %10697 = vmatpush1.bf16.msra.mxu0 %v10451
        %10698 = vmatprep.subr.bf16.mxu0 0
        %10699 = vmatpush1.bf16.msra.mxu0 %v10450
        %10700 = vmatprep.subr.bf16.mxu0 0
        %10701 = vmatpush1.bf16.msra.mxu0 %v10449
        %10702 = vmatprep.subr.bf16.mxu0 0
        %10703 = vmatpush1.bf16.msra.mxu0 %v10448
        %10704 = vmatprep.subr.bf16.mxu0 0
        %10705 = vmatpush2.bf16.msra.mxu0 0
        %10706 = vmatprep.subr.bf16.mxu0 0
        %10707 = vmatpush2.bf16.msra.mxu0 0
        %10708 = vmatprep.subr.bf16.mxu0 0
        %10709 = vmatpush2.bf16.msra.mxu0 0
        %10710 = vmatprep.subr.bf16.mxu0 0
        %10711 = vmatpush2.bf16.msra.mxu0 0
        %10712 = vmatprep.subr.bf16.mxu0 0
        %10713 = vmatpush2.bf16.msra.mxu0 0
        %10714 = vmatprep.subr.bf16.mxu0 0
        %10715 = vmatpush2.bf16.msra.mxu0 0
        %10716 = vmatprep.subr.bf16.mxu0 0
        %10717 = vmatpush2.bf16.msra.mxu0 0
        %10718 = vmatprep.subr.bf16.mxu0 0
        %10719 = vmatpush2.bf16.msra.mxu0 0
        %10720 = vmatprep.mubr.bf16.mxu0 0
        %10721 = vmatmul.mubr.bf16.gmra.mxu0 %v10086
        %v10722 = vpop.f32.mrf.mxu0
        %v10723 = vadd.f32 %v10683, %v10722
        %v10724 = vpop.f32.mrf.mxu0
        %v10725 = vpop.f32.mrf.mxu0
        %v10726 = vpop.f32.mrf.mxu0
        %10727 = vdwg.mxu0
        %v10728 = vmax.f32 %v10723, 0.0
        %10729 = vst [vmem:[#allocation7] sm:$0xff] %v10728
        %v10730 = vld [vmem:[#allocation7] sm:$0x1]
        %v10731 = vld [vmem:[#allocation7 + $0x1] sm:$0x1]
        %v10732 = vadd.f32 %v10730, %v10731
        %v10733 = vld [vmem:[#allocation7 + $0x4] sm:$0x1]
        %v10734 = vadd.f32 %v10732, %v10733
        %v10735 = vld [vmem:[#allocation7 + $0x5] sm:$0x1]
        %v10736 = vadd.f32 %v10734, %v10735
        %v10737 = vmul.f32 %v10736, 0.25
        %v10738 = vpack.c.bf16 %v10737, %v10737
        %v10739 = vld [vmem:[#allocation11] sm:$0xf]
        %v10740 = vld [vmem:[#allocation11 + $0x4] sm:$0xf]
        %v10741 = vld [vmem:[#allocation11 + $0x8] sm:$0xf]
        %v10742 = vld [vmem:[#allocation11 + $0xc] sm:$0xf]
        %v10743 = vld [vmem:[#allocation11 + $0x10] sm:$0xf]
        %v10744 = vld [vmem:[#allocation11 + $0x14] sm:$0xf]
        %v10745 = vld [vmem:[#allocation11 + $0x18] sm:$0xf]
        %v10746 = vld [vmem:[#allocation11 + $0x1c] sm:$0xf]
        %v10747 = vld [vmem:[#allocation11 + $0x20] sm:$0xf]
        %v10748 = vld [vmem:[#allocation11 + $0x24] sm:$0xf]
        %v10749 = vld [vmem:[#allocation11 + $0x28] sm:$0xf]
        %v10750 = vld [vmem:[#allocation11 + $0x2c] sm:$0xf]
        %v10751 = vld [vmem:[#allocation11 + $0x30] sm:$0xf]
        %v10752 = vld [vmem:[#allocation11 + $0x34] sm:$0xf]
        %v10753 = vld [vmem:[#allocation11 + $0x38] sm:$0xf]
        %v10754 = vld [vmem:[#allocation11 + $0x3c] sm:$0xf]
        %v10755 = vld [vmem:[%s4] sm:$0x1]
        %v10772 = vunpack.c.l.b16 %v10739
        %v10773 = vunpack.c.l.b16 %v10740
        %v10774 = vunpack.c.l.b16 %v10741
        %v10775 = vunpack.c.l.b16 %v10742
        %v10776 = vunpack.c.l.b16 %v10743
        %v10777 = vunpack.c.l.b16 %v10744
        %v10778 = vunpack.c.l.b16 %v10745
        %v10779 = vunpack.c.l.b16 %v10746
        %v10780 = vunpack.c.l.b16 %v10747
        %v10781 = vunpack.c.l.b16 %v10748
        %v10782 = vunpack.c.l.b16 %v10749
        %v10783 = vunpack.c.l.b16 %v10750
        %v10784 = vunpack.c.l.b16 %v10751
        %v10785 = vunpack.c.l.b16 %v10752
        %v10786 = vunpack.c.l.b16 %v10753
        %v10787 = vunpack.c.l.b16 %v10754
        %v10788 = vpack.c.b16 %v10773, %v10772
        %v10789 = vpack.c.b16 %v10775, %v10774
        %v10790 = vpack.c.b16 %v10777, %v10776
        %v10791 = vpack.c.b16 %v10779, %v10778
        %v10792 = vpack.c.b16 %v10781, %v10780
        %v10793 = vpack.c.b16 %v10783, %v10782
        %v10794 = vpack.c.b16 %v10785, %v10784
        %v10795 = vpack.c.b16 %v10787, %v10786
        %10804 = vmatprep.subr.bf16.mxu0 0
        %10805 = vmatpush1.bf16.msra.mxu0 %v10795
        %10806 = vmatprep.subr.bf16.mxu0 0
        %10807 = vmatpush1.bf16.msra.mxu0 %v10794
        %10808 = vmatprep.subr.bf16.mxu0 0
        %10809 = vmatpush1.bf16.msra.mxu0 %v10793
        %10810 = vmatprep.subr.bf16.mxu0 0
        %10811 = vmatpush1.bf16.msra.mxu0 %v10792
        %10812 = vmatprep.subr.bf16.mxu0 0
        %10813 = vmatpush1.bf16.msra.mxu0 %v10791
        %10814 = vmatprep.subr.bf16.mxu0 0
        %10815 = vmatpush1.bf16.msra.mxu0 %v10790
        %10816 = vmatprep.subr.bf16.mxu0 0
        %10817 = vmatpush1.bf16.msra.mxu0 %v10789
        %10818 = vmatprep.subr.bf16.mxu0 0
        %10819 = vmatpush1.bf16.msra.mxu0 %v10788
        %10820 = vmatprep.subr.bf16.mxu0 0
        %10821 = vmatpush2.bf16.msra.mxu0 0
        %10822 = vmatprep.subr.bf16.mxu0 0
        %10823 = vmatpush2.bf16.msra.mxu0 0
        %10824 = vmatprep.subr.bf16.mxu0 0
        %10825 = vmatpush2.bf16.msra.mxu0 0
        %10826 = vmatprep.subr.bf16.mxu0 0
        %10827 = vmatpush2.bf16.msra.mxu0 0
        %10828 = vmatprep.subr.bf16.mxu0 0
        %10829 = vmatpush2.bf16.msra.mxu0 0
        %10830 = vmatprep.subr.bf16.mxu0 0
        %10831 = vmatpush2.bf16.msra.mxu0 0
        %10832 = vmatprep.subr.bf16.mxu0 0
        %10833 = vmatpush2.bf16.msra.mxu0 0
        %10834 = vmatprep.subr.bf16.mxu0 0
        %10835 = vmatpush2.bf16.msra.mxu0 0
        %10836 = vmatprep.mubr.bf16.mxu0 0
        %10837 = vmatmul.mubr.bf16.gmra.mxu0 %v10738
        %v10838 = vpop.f32.mrf.mxu0
        %v10839 = vadd.f32 %v10755, %v10838
        %v10840 = vpop.f32.mrf.mxu0
        %v10841 = vpop.f32.mrf.mxu0
        %v10842 = vpop.f32.mrf.mxu0
        %10843 = vdwg.mxu0
        %10844 = vst [vmem:[%s246] sm:$0x1] %v10839
        %s10845 = sand.u32 %s139, 1
        %s10846 = scalar_lea.sflag [#allocation10], %s10845
        %s10847 = sand.u32 %s139, 1
        %s10848 = scalar_lea.vmem [#allocation13], %s10847
        // Predicated region
        $region49: #{a_call__.1} parent=39 // pred_check
          %p10849 = pneg %p149
        $region50: #{a_call__.1} parent=39 // pred_check_branch
          %10851 = sbr.rel (%p10849) target = $region52
        $region51: #{a_call__.1} parent=39 // pred_region
          %s10853 = ssub.s32 16, 16
          %10854 = vsyncadd %s10846, %s10853
          %s10855 = smul.addr %s21, 16
          %s10856 = scalar_lea.hbm %s5, %s10855
          %s10858 = sshll.u32 %s10848, 4
          %s10859 = int_to_ptr.vmem [resolvable:$true] %s10858
          %10861 = dma.vmem_to_hbm [thread:$0]  %s10859, 16, %s10856, %s10846
        $region52: #{a_call__.1} parent=39 // pred_fallthru
          _
      $region40: #{a_call__.1} parent=5 // pred_fallthru
        _
      %p10862 = scmp.le.s32.totalorder 2, %s16
      // Predicated region
      $region53: #{a_call__.1} parent=5 // pred_check
        %p10863 = pneg %p10862
      $region54: #{a_call__.1} parent=5 // pred_check_branch
        %10865 = sbr.rel (%p10863) target = $region56
      $region55: #{a_call__.1} parent=5 // pred_region
        %s10866 = ssub.s32 %s16, 2
        // Predicated region
        $region57: #{a_call__.1} parent=55 // pred_check
          %p10867 = pneg %p155
        $region58: #{a_call__.1} parent=55 // pred_check_branch
          %10869 = sbr.rel (%p10867) target = $region60
        $region59: #{a_call__.1} parent=55 // pred_region
          %s10870 = sand.u32 %s140, 1
          %s10871 = scalar_lea.sflag [#allocation10], %s10870
          %s10872 = sand.u32 %s140, 1
          %s10873 = scalar_lea.vmem [#allocation13], %s10872
          %10874 = dma.done %s10871, 16
        $region60: #{a_call__.1} parent=55 // pred_fallthru
          _
      $region56: #{a_call__.1} parent=5 // pred_fallthru
        _
    $region6: #{a_call__.1} parent=1 // loop_footer
      %s20 = sadd.s32 1, %s16
    $region7: #{a_call__.1} parent=1 // loop_footer_branch
      %15 = sbr.rel target = $region3
    $region8: #{a_call__.1} parent=1 // loop_exit
      _
    %10875 = vsyncpa [#allocation9], 1
    %s10876 = scalar_lea.sflag [#allocation9], 1
    %10877 = vsyncpa %s10876, 1
    %10878 = vsyncpa [#allocation12], 1
    %10879 = vsyncpa [#allocation10], 1
    %s10880 = scalar_lea.sflag [#allocation10], 1
    %10881 = vsyncpa %s10880, 1

</llo_original>
